<compile_context>
chip_gen: v7x
topology: tpu7x:2x2x1
jax: 0.10.0
libtpu: 0.0.40
codegen_flags: <defaults>
</compile_context>

<pallas_src>
import jax
import jax.numpy as jnp
from jax import lax
from jax.experimental import pallas as pl
from jax.experimental.pallas import tpu as pltpu

# ----------------------- model hyperparameters (small) -----------------------
NUM_CLASSES = 4
INPUT_SENSORS = 16          # small stand-in for 248
INPUT_TIME_STEPS = 64       # small stand-in for 2227
LSTM_HIDDEN = 32            # small stand-in for 64
NUM_LSTM_LAYERS = 2
BATCH = 2
BN_EPS = 1e-5
LANE = 128


def conv_out(n, k, s, p):
    return (n + 2 * p - k) // s + 1


# conv1: Conv2d(1, 64, k=(3,15), s=(2,4), p=(2,12))
C1_OUT, C1_K, C1_S, C1_P = 64, (3, 15), (2, 4), (2, 12)
# conv2: Conv2d(64, 32, k=(5,7), s=(1,2), p=(1,7))
C2_OUT, C2_K, C2_S, C2_P = 32, (5, 7), (1, 2), (1, 7)

H1 = conv_out(INPUT_SENSORS, C1_K[0], C1_S[0], C1_P[0])
W1 = conv_out(INPUT_TIME_STEPS, C1_K[1], C1_S[1], C1_P[1])
H2 = conv_out(H1, C2_K[0], C2_S[0], C2_P[0])
W2 = conv_out(W1, C2_K[1], C2_S[1], C2_P[1])

LSTM_INPUT_SIZE = C2_OUT * H2     # cnn_channels * reduced_sensors
SEQ_LEN = W2                      # reduced_time


def _round_up(x, m):
    return (x + m - 1) // m * m


# ----------------------- generation-specific sizing ---------------------------
def _vmem_capacity_bytes():
    try:
        return int(pltpu.get_tpu_info().vmem_capacity_bytes)
    except Exception:
        return 64 * 1024 * 1024   # conservative fallback (v7x per-TC VMEM)


VMEM_CAP = _vmem_capacity_bytes()
# <= ~56 MiB on 64 MiB (v7x) parts, ~100 MiB on 128 MiB (v5e/v6e) parts.
VMEM_LIMIT_BYTES = int(min(VMEM_CAP * 7 // 8, 100 * 1024 * 1024))
CONV1_TM = 4096                                            # K=45: tiles are tiny
CONV2_TM = 2048 if VMEM_CAP >= 96 * 1024 * 1024 else 1024  # bf16 (tm, C1*kh*kw)
LINEAR_TM = 1024


# ------------------------------ Pallas kernels -------------------------------
def _mm_affine_relu_kernel(p_ref, w_ref, scale_ref, shift_ref, o_ref):
    # bf16 (TM, K) @ (K, Np) conv-as-matmul on the MXU, f32 accumulate,
    # fused (conv-bias + BN(eval)) affine + ReLU in f32, bf16 lane-dense store.
    acc = jnp.dot(p_ref[...], w_ref[...], preferred_element_type=jnp.float32)
    y = jnp.maximum(acc * scale_ref[...] + shift_ref[...], 0.0)
    o_ref[...] = y.astype(o_ref.dtype)


def conv_mm_bn_relu(patches, w, scale, shift, tm):
    """Row-tiled conv matmul with fused BN(eval)+ReLU.

    patches: (M, K) bf16; w: (K, N) f32; scale/shift: (N,) f32.
    Output channels are zero-padded to a multiple of 128 (zero scale/shift in
    the padding -> padded channels stay exactly 0 after ReLU) so every row-tile
    store is an unmasked lane-dense vst.  Returns (M, Np) bf16.
    """
    M, K = patches.shape
    N = w.shape[1]
    Np = _round_up(N, LANE)
    wp = jnp.pad(w.astype(jnp.bfloat16), ((0, 0), (0, Np - N)))
    scp = jnp.pad(scale.astype(jnp.float32), (0, Np - N))[None, :]
    shp = jnp.pad(shift.astype(jnp.float32), (0, Np - N))[None, :]

    tm = min(tm, _round_up(M, 256))
    Mp = _round_up(M, tm)
    if Mp != M:
        patches = jnp.pad(patches, ((0, Mp - M), (0, 0)))

    out = pl.pallas_call(
        _mm_affine_relu_kernel,
        out_shape=jax.ShapeDtypeStruct((Mp, Np), jnp.bfloat16),
        grid=(Mp // tm,),
        in_specs=[
            pl.BlockSpec((tm, K), lambda i: (i, 0)),
            pl.BlockSpec((K, Np), lambda i: (0, 0)),
            pl.BlockSpec((1, Np), lambda i: (0, 0)),
            pl.BlockSpec((1, Np), lambda i: (0, 0)),
        ],
        out_specs=pl.BlockSpec((tm, Np), lambda i: (i, 0)),
        compiler_params=pltpu.CompilerParams(
            dimension_semantics=("parallel",),
            vmem_limit_bytes=VMEM_LIMIT_BYTES),
    )(patches, wp, scp, shp)
    return out[:M]


def _mm_bias_kernel(x_ref, w_ref, b_ref, o_ref):
    o_ref[...] = (jnp.dot(x_ref[...], w_ref[...], preferred_element_type=jnp.float32)
                  + b_ref[...])


def linear_bias_bf16(x, w, b, tm=LINEAR_TM):
    """Row-tiled x @ w + b with bf16 MXU operands, f32 accumulate/output."""
    M, K = x.shape
    N = w.shape[1]
    xb = x.astype(jnp.bfloat16)
    wb = w.astype(jnp.bfloat16)
    tm = min(tm, _round_up(M, 256))
    Mp = _round_up(M, tm)
    if Mp != M:
        xb = jnp.pad(xb, ((0, Mp - M), (0, 0)))
    out = pl.pallas_call(
        _mm_bias_kernel,
        out_shape=jax.ShapeDtypeStruct((Mp, N), jnp.float32),
        grid=(Mp // tm,),
        in_specs=[
            pl.BlockSpec((tm, K), lambda i: (i, 0)),
            pl.BlockSpec((K, N), lambda i: (0, 0)),
            pl.BlockSpec((1, N), lambda i: (0, 0)),
        ],
        out_specs=pl.BlockSpec((tm, N), lambda i: (i, 0)),
        compiler_params=pltpu.CompilerParams(
            dimension_semantics=("parallel",),
            vmem_limit_bytes=VMEM_LIMIT_BYTES),
    )(xb, wb, b)
    return out[:M]


def _lstm_step_pair(xp_ref, whh_ref, h, c, t, T, H):
    """One fused forward+backward LSTM step.

    h, c: (B, 2H) with [:, :H] = forward state, [:, H:] = backward state.
    Forward consumes the precomputed projection at time t, backward at T-1-t.
    The two recurrent matmuls are fused into a single (B,2H)@(2H,8H)
    block-diagonal MXU push; gate order i, f, g, o (PyTorch), math in f32.
    """
    xf = xp_ref[pl.ds(t, 1), :, 0:4 * H][0]               # (B, 4H) fwd pre-acts
    xb = xp_ref[pl.ds(T - 1 - t, 1), :, 4 * H:8 * H][0]   # (B, 4H) bwd pre-acts
    rec = jnp.dot(h, whh_ref[...], preferred_element_type=jnp.float32)  # (B, 8H)

    def cell(xg, rg, c_d):
        g = xg + rg
        i = jax.nn.sigmoid(g[:, 0:H])
        f = jax.nn.sigmoid(g[:, H:2 * H])
        gg = jnp.tanh(g[:, 2 * H:3 * H])
        o = jax.nn.sigmoid(g[:, 3 * H:4 * H])
        c_new = f * c_d + i * gg
        h_new = o * jnp.tanh(c_new)
        return h_new, c_new

    hf, cf = cell(xf, rec[:, 0:4 * H], c[:, 0:H])
    hb, cb = cell(xb, rec[:, 4 * H:8 * H], c[:, H:2 * H])
    h_new = jnp.concatenate([hf, hb], axis=1)
    c_new = jnp.concatenate([cf, cb], axis=1)
    return h_new, c_new


def _bilstm_seq_kernel(xp_ref, whh_ref, o_ref):
    """Whole-sequence BiLSTM layer: single invocation, lax.fori_loop over T.

    xp_ref: (T, B, 8H) hoisted input projections ([:, :, :4H] fwd, [:, :, 4H:]
    bwd); o_ref: (T, B, 2H) VMEM-resident output written directly per step.
    """
    T, B = xp_ref.shape[0], xp_ref.shape[1]
    H = whh_ref.shape[0] // 2

    def step(t, carry):
        h, c = carry
        h_new, c_new = _lstm_step_pair(xp_ref, whh_ref, h, c, t, T, H)
        # forward output belongs to time t, backward output to time T-1-t.
        o_ref[pl.ds(t, 1), :, 0:H] = h_new[None, :, 0:H]
        o_ref[pl.ds(T - 1 - t, 1), :, H:2 * H] = h_new[None, :, H:2 * H]
        return h_new, c_new

    h0 = jnp.zeros((B, 2 * H), jnp.float32)
    c0 = jnp.zeros((B, 2 * H), jnp.float32)
    lax.fori_loop(0, T, step, (h0, c0))


def _bilstm_head_kernel(xp_ref, whh_ref, w1_ref, b1_ref, w2_ref, b2_ref, o_ref):
    """Last BiLSTM layer fused with the classifier MLP.

    lstm_out[:, -1, :] = [h_fwd after step T-1, h_bwd after its FIRST step]
    so only (B, 2H) is kept; the (T,B,2H) slab is never written to HBM.
    """
    T, B = xp_ref.shape[0], xp_ref.shape[1]
    H = whh_ref.shape[0] // 2

    h0 = jnp.zeros((B, 2 * H), jnp.float32)
    c0 = jnp.zeros((B, 2 * H), jnp.float32)

    # Peel step 0 to capture the backward state at sequence position T-1.
    h1, c1 = _lstm_step_pair(xp_ref, whh_ref, h0, c0, 0, T, H)
    hb_last = h1[:, H:2 * H]

    def step(t, carry):
        h, c = carry
        return _lstm_step_pair(xp_ref, whh_ref, h, c, t, T, H)

    h_fin, _ = lax.fori_loop(1, T, step, (h1, c1))

    # classifier epilogue: Linear(2H,H) -> ReLU -> Linear(H,num_classes)
    last = jnp.concatenate([h_fin[:, 0:H], hb_last], axis=1)       # (B, 2H)
    hid = jnp.dot(last, w1_ref[...], preferred_element_type=jnp.float32) + b1_ref[...]
    hid = jnp.maximum(hid, 0.0)
    o_ref[...] = jnp.dot(hid, w2_ref[...], preferred_element_type=jnp.float32) + b2_ref[...]


# --------------------------- BiLSTM layer wrappers -----------------------------
def _block_diag(a, b):
    h, g = a.shape
    z = jnp.zeros((h, g), a.dtype)
    return jnp.concatenate(
        [jnp.concatenate([a, z], axis=1), jnp.concatenate([z, b], axis=1)], axis=0)


def _lstm_input_projection(x_tm, wih_f, wih_b, b_f, b_b):
    """Hoisted x @ W_ih + b for both directions in one tiled matmul."""
    T, B, Din = x_tm.shape
    H4 = wih_f.shape[1]
    w_cat = jnp.concatenate([wih_f, wih_b], axis=1)       # (Din, 8H)
    b_cat = jnp.concatenate([b_f, b_b], axis=1)           # (1, 8H)
    xp = linear_bias_bf16(x_tm.reshape(T * B, Din), w_cat, b_cat)
    return xp.reshape(T, B, 2 * H4)                       # (T, B, 8H) f32


def bilstm_seq_layer(x_tm, wih_f, wih_b, whh_f, whh_b, b_f, b_b):
    """(T, B, Din) time-major -> (T, B, 2H) time-major (PyTorch bi-LSTM)."""
    T, B, _ = x_tm.shape
    H = whh_f.shape[0]
    xp = _lstm_input_projection(x_tm, wih_f, wih_b, b_f, b_b)
    whh_bd = _block_diag(whh_f, whh_b)                     # (2H, 8H)
    return pl.pallas_call(
        _bilstm_seq_kernel,
        out_shape=jax.ShapeDtypeStruct((T, B, 2 * H), jnp.float32),
        compiler_params=pltpu.CompilerParams(vmem_limit_bytes=VMEM_LIMIT_BYTES),
    )(xp, whh_bd)


def bilstm_head_layer(x_tm, wih_f, wih_b, whh_f, whh_b, b_f, b_b,
                      fc1_w, fc1_b, fc2_w, fc2_b):
    """Last BiLSTM layer + classifier MLP fused; returns (B, num_classes)."""
    T, B, _ = x_tm.shape
    xp = _lstm_input_projection(x_tm, wih_f, wih_b, b_f, b_b)
    whh_bd = _block_diag(whh_f, whh_b)
    n_out = fc2_w.shape[1]
    return pl.pallas_call(
        _bilstm_head_kernel,
        out_shape=jax.ShapeDtypeStruct((B, n_out), jnp.float32),
        compiler_params=pltpu.CompilerParams(vmem_limit_bytes=VMEM_LIMIT_BYTES),
    )(xp, whh_bd, fc1_w, fc1_b, fc2_w, fc2_b)


# --------------------------------- glue ops -----------------------------------
def im2col(x, kh, kw, sh, sw, ph, pw):
    """x: NCHW -> patches (B*Ho*Wo, C*kh*kw), column order (C, kh, kw)."""
    B, C, H, W = x.shape
    Ho = (H + 2 * ph - kh) // sh + 1
    Wo = (W + 2 * pw - kw) // sw + 1
    xp = jnp.pad(x, ((0, 0), (0, 0), (ph, ph), (pw, pw)))
    cols = []
    for i in range(kh):
        for j in range(kw):
            cols.append(xp[:, :, i:i + sh * (Ho - 1) + 1:sh, j:j + sw * (Wo - 1) + 1:sw])
    p = jnp.stack(cols, axis=0).reshape(kh, kw, B, C, Ho, Wo)
    p = p.transpose(2, 4, 5, 3, 0, 1)                    # (B, Ho, Wo, C, kh, kw)
    return p.reshape(B * Ho * Wo, C * kh * kw), Ho, Wo


def bn_affine_with_bias(gamma, beta, mean, var, conv_bias):
    """Fold conv bias + BatchNorm(eval) into a single (scale, shift) affine."""
    scale = gamma / jnp.sqrt(var + BN_EPS)
    shift = beta + (conv_bias - mean) * scale
    return scale, shift


# ------------------------------ parameter init --------------------------------
def init_params(key):
    p = {}
    keys = iter(jax.random.split(key, 64))

    def unif(shape, bound):
        return jax.random.uniform(next(keys), shape, jnp.float32, -bound, bound)

    # conv1
    fan1 = 1 * C1_K[0] * C1_K[1]
    p["conv1_w"] = unif((C1_OUT, 1, C1_K[0], C1_K[1]), 1.0 / jnp.sqrt(fan1))
    p["conv1_b"] = unif((C1_OUT,), 1.0 / jnp.sqrt(fan1))
    p["bn1_gamma"] = jax.random.uniform(next(keys), (C1_OUT,), jnp.float32, 0.5, 1.5)
    p["bn1_beta"] = unif((C1_OUT,), 0.1)
    p["bn1_mean"] = unif((C1_OUT,), 0.1)
    p["bn1_var"] = jax.random.uniform(next(keys), (C1_OUT,), jnp.float32, 0.5, 1.5)

    # conv2
    fan2 = C1_OUT * C2_K[0] * C2_K[1]
    p["conv2_w"] = unif((C2_OUT, C1_OUT, C2_K[0], C2_K[1]), 1.0 / jnp.sqrt(fan2))
    p["conv2_b"] = unif((C2_OUT,), 1.0 / jnp.sqrt(fan2))
    p["bn2_gamma"] = jax.random.uniform(next(keys), (C2_OUT,), jnp.float32, 0.5, 1.5)
    p["bn2_beta"] = unif((C2_OUT,), 0.1)
    p["bn2_mean"] = unif((C2_OUT,), 0.1)
    p["bn2_var"] = jax.random.uniform(next(keys), (C2_OUT,), jnp.float32, 0.5, 1.5)

    # LSTM (2 layers, bidirectional); weights stored pre-transposed (Din, 4H)/(H, 4H),
    # biases fused (b_ih + b_hh). Gate order: i, f, g, o (PyTorch).
    H = LSTM_HIDDEN
    s = 1.0 / jnp.sqrt(H)
    for layer in range(NUM_LSTM_LAYERS):
        d_in = LSTM_INPUT_SIZE if layer == 0 else 2 * H
        for suff in ("", "_rev"):
            p[f"wih_l{layer}{suff}"] = unif((d_in, 4 * H), s)
            p[f"whh_l{layer}{suff}"] = unif((H, 4 * H), s)
            p[f"b_l{layer}{suff}"] = unif((1, 4 * H), s) + unif((1, 4 * H), s)

    # classifier: Linear(2H, H), ReLU, Linear(H, num_classes)
    p["fc1_w"] = unif((2 * H, H), 1.0 / jnp.sqrt(2 * H))
    p["fc1_b"] = unif((H,), 1.0 / jnp.sqrt(2 * H))
    p["fc2_w"] = unif((H, NUM_CLASSES), 1.0 / jnp.sqrt(H))
    p["fc2_b"] = unif((NUM_CLASSES,), 1.0 / jnp.sqrt(H))
    return p


# --------------------------------- forward ------------------------------------
@jax.jit
def forward(params, x):
    """x: (B, 1, sensors, time_steps) float32 -> (B, num_classes)."""
    B = x.shape[0]
    xb = x.astype(jnp.bfloat16)   # bf16 MXU operand stream for the convs

    # ---- CNN block 1 (conv -> BN(eval) -> ReLU), Dropout2d = identity ----
    p1, h1, w1 = im2col(xb, *C1_K, *C1_S, *C1_P)
    wmat1 = params["conv1_w"].reshape(C1_OUT, -1).T
    sc1, sh1 = bn_affine_with_bias(params["bn1_gamma"], params["bn1_beta"],
                                   params["bn1_mean"], params["bn1_var"],
                                   params["conv1_b"])
    y1p = conv_mm_bn_relu(p1, wmat1, sc1, sh1, CONV1_TM)           # (M1, 128) bf16
    # strip the lane-padding channels, fused with the NCHW transpose
    y1 = y1p.reshape(B, h1, w1, -1)[..., :C1_OUT].transpose(0, 3, 1, 2)

    # ---- CNN block 2 ----
    p2, h2, w2 = im2col(y1, *C2_K, *C2_S, *C2_P)
    wmat2 = params["conv2_w"].reshape(C2_OUT, -1).T
    sc2, sh2 = bn_affine_with_bias(params["bn2_gamma"], params["bn2_beta"],
                                   params["bn2_mean"], params["bn2_var"],
                                   params["conv2_b"])
    y2p = conv_mm_bn_relu(p2, wmat2, sc2, sh2, CONV2_TM)           # (M2, 128) bf16
    y2 = y2p.reshape(B, h2, w2, -1)[..., :C2_OUT]                  # (B, H', T, C)

    # permute(0,3,1,2).view(B, T, C*H') -> feature order (channel major, sensor minor)
    seq = y2.transpose(0, 2, 3, 1).reshape(B, w2, C2_OUT * h2)     # (B, T, F) bf16

    # ---- bidirectional 2-layer LSTM (inter-layer dropout = identity in eval) ----
    inp = seq.transpose(1, 0, 2)                                   # (T, B, F) time-major
    for layer in range(NUM_LSTM_LAYERS - 1):
        inp = bilstm_seq_layer(inp,
                               params[f"wih_l{layer}"], params[f"wih_l{layer}_rev"],
                               params[f"whh_l{layer}"], params[f"whh_l{layer}_rev"],
                               params[f"b_l{layer}"], params[f"b_l{layer}_rev"])

    # ---- last LSTM layer fused with the classifier head (Dropout = identity) ----
    L = NUM_LSTM_LAYERS - 1
    return bilstm_head_layer(inp,
                             params[f"wih_l{L}"], params[f"wih_l{L}_rev"],
                             params[f"whh_l{L}"], params[f"whh_l{L}_rev"],
                             params[f"b_l{L}"], params[f"b_l{L}_rev"],
                             params["fc1_w"], params["fc1_b"][None, :],
                             params["fc2_w"], params["fc2_b"][None, :])


# ----------------------------------- main --------------------------------------
if __name__ == "__main__":
    key = jax.random.PRNGKey(0)
    k_param, k_x = jax.random.split(key)
    params = init_params(k_param)
    x = jax.random.normal(k_x, (BATCH, 1, INPUT_SENSORS, INPUT_TIME_STEPS), jnp.float32)

    out = forward(params, x)
    jax.block_until_ready(out)
    assert out.shape == (BATCH, NUM_CLASSES)
    print("KERNEL_OK")
</pallas_src>

<mosaic_0001>
module attributes {stable_mosaic.version = 11 : i64} {
  func.func @_mm_affine_relu_kernel(%arg0: i32, %arg1: memref<512x45xbf16, #tpu.memory_space<vmem>>, %arg2: memref<45x128xbf16, #tpu.memory_space<vmem>>, %arg3: memref<1x128xf32, #tpu.memory_space<vmem>>, %arg4: memref<1x128xf32, #tpu.memory_space<vmem>>, %arg5: memref<512x128xbf16, #tpu.memory_space<vmem>>) attributes {dimension_semantics = [#tpu.dimension_semantics<parallel>], iteration_bounds = array<i64: 1>, scalar_prefetch = 0 : i64, scratch_operands = 0 : i64, tpu.core_type = #tpu.core_type<tc>, window_params = [{transform_indices = @transform_0, window_bounds = array<i64: 512, 45>}, {pipeline_mode = #tpu.pipeline_mode<synchronous>, transform_indices = @transform_1, window_bounds = array<i64: 45, 128>}, {pipeline_mode = #tpu.pipeline_mode<synchronous>, transform_indices = @transform_2, window_bounds = array<i64: 1, 128>}, {pipeline_mode = #tpu.pipeline_mode<synchronous>, transform_indices = @transform_3, window_bounds = array<i64: 1, 128>}, {transform_indices = @transform_4, window_bounds = array<i64: 512, 128>}]} {
    %c0 = arith.constant 0 : index
    %c0_0 = arith.constant 0 : index
    %0 = vector.load %arg1[%c0, %c0_0] : memref<512x45xbf16, #tpu.memory_space<vmem>>, vector<512x45xbf16>
    %c0_1 = arith.constant 0 : index
    %c0_2 = arith.constant 0 : index
    %1 = vector.load %arg2[%c0_1, %c0_2] : memref<45x128xbf16, #tpu.memory_space<vmem>>, vector<45x128xbf16>
    %cst = arith.constant dense<0.000000e+00> : vector<512x128xf32>
    %2 = tpu.matmul %0, %1, %cst {dimension_numbers = #tpu.dot_dimension_numbers<[1], [0], [0], [1], [0, 0, 1, 1], [], []>} : vector<512x45xbf16>, vector<45x128xbf16>, vector<512x128xf32> -> vector<512x128xf32>
    %c0_3 = arith.constant 0 : index
    %c0_4 = arith.constant 0 : index
    %3 = vector.load %arg3[%c0_3, %c0_4] : memref<1x128xf32, #tpu.memory_space<vmem>>, vector<1x128xf32>
    %4 = vector.broadcast %3 : vector<1x128xf32> to vector<512x128xf32>
    %5 = arith.mulf %2, %4 : vector<512x128xf32>
    %c0_5 = arith.constant 0 : index
    %c0_6 = arith.constant 0 : index
    %6 = vector.load %arg4[%c0_5, %c0_6] : memref<1x128xf32, #tpu.memory_space<vmem>>, vector<1x128xf32>
    %7 = vector.broadcast %6 : vector<1x128xf32> to vector<512x128xf32>
    %8 = arith.addf %5, %7 : vector<512x128xf32>
    %cst_7 = arith.constant 0.000000e+00 : f32
    %9 = vector.broadcast %cst_7 : f32 to vector<512x128xf32>
    %10 = arith.maximumf %8, %9 : vector<512x128xf32>
    %11 = arith.truncf %10 : vector<512x128xf32> to vector<512x128xbf16>
    %c0_8 = arith.constant 0 : index
    %c0_9 = arith.constant 0 : index
    %12 = vector.load %arg5[%c0_8, %c0_9] : memref<512x128xbf16, #tpu.memory_space<vmem>>, vector<512x128xbf16>
    tpu.vector_store %arg5[%c0_8, %c0_9], %11 {strides = array<i32>} : memref<512x128xbf16, #tpu.memory_space<vmem>>, vector<512x128xbf16>,
    return
  }
  func.func @transform_0(%arg0: i32) -> (i32, i32) {
    %c0_i32 = arith.constant 0 : i32
    %c0_i32_0 = arith.constant 0 : i32
    return %arg0, %c0_i32 : i32, i32
  }
  func.func @transform_1(%arg0: i32) -> (i32, i32) {
    %c0_i32 = arith.constant 0 : i32
    %c0_i32_0 = arith.constant 0 : i32
    %c0_i32_1 = arith.constant 0 : i32
    return %c0_i32, %c0_i32_0 : i32, i32
  }
  func.func @transform_2(%arg0: i32) -> (i32, i32) {
    %c0_i32 = arith.constant 0 : i32
    %c0_i32_0 = arith.constant 0 : i32
    %c0_i32_1 = arith.constant 0 : i32
    return %c0_i32, %c0_i32_0 : i32, i32
  }
  func.func @transform_3(%arg0: i32) -> (i32, i32) {
    %c0_i32 = arith.constant 0 : i32
    %c0_i32_0 = arith.constant 0 : i32
    %c0_i32_1 = arith.constant 0 : i32
    return %c0_i32, %c0_i32_0 : i32, i32
  }
  func.func @transform_4(%arg0: i32) -> (i32, i32) {
    %c0_i32 = arith.constant 0 : i32
    %c0_i32_0 = arith.constant 0 : i32
    return %arg0, %c0_i32 : i32, i32
  }
}

module attributes {stable_mosaic.version = 11 : i64} {
  func.func @_mm_affine_relu_kernel(%arg0: i32, %arg1: memref<256x2240xbf16, #tpu.memory_space<vmem>>, %arg2: memref<2240x128xbf16, #tpu.memory_space<vmem>>, %arg3: memref<1x128xf32, #tpu.memory_space<vmem>>, %arg4: memref<1x128xf32, #tpu.memory_space<vmem>>, %arg5: memref<256x128xbf16, #tpu.memory_space<vmem>>) attributes {dimension_semantics = [#tpu.dimension_semantics<parallel>], iteration_bounds = array<i64: 1>, scalar_prefetch = 0 : i64, scratch_operands = 0 : i64, tpu.core_type = #tpu.core_type<tc>, window_params = [{transform_indices = @transform_0, window_bounds = array<i64: 256, 2240>}, {pipeline_mode = #tpu.pipeline_mode<synchronous>, transform_indices = @transform_1, window_bounds = array<i64: 2240, 128>}, {pipeline_mode = #tpu.pipeline_mode<synchronous>, transform_indices = @transform_2, window_bounds = array<i64: 1, 128>}, {pipeline_mode = #tpu.pipeline_mode<synchronous>, transform_indices = @transform_3, window_bounds = array<i64: 1, 128>}, {transform_indices = @transform_4, window_bounds = array<i64: 256, 128>}]} {
    %c0 = arith.constant 0 : index
    %c0_0 = arith.constant 0 : index
    %0 = vector.load %arg1[%c0, %c0_0] : memref<256x2240xbf16, #tpu.memory_space<vmem>>, vector<256x2240xbf16>
    %c0_1 = arith.constant 0 : index
    %c0_2 = arith.constant 0 : index
    %1 = vector.load %arg2[%c0_1, %c0_2] : memref<2240x128xbf16, #tpu.memory_space<vmem>>, vector<2240x128xbf16>
    %cst = arith.constant dense<0.000000e+00> : vector<256x128xf32>
    %2 = tpu.matmul %0, %1, %cst {dimension_numbers = #tpu.dot_dimension_numbers<[1], [0], [0], [1], [0, 0, 1, 1], [], []>} : vector<256x2240xbf16>, vector<2240x128xbf16>, vector<256x128xf32> -> vector<256x128xf32>
    %c0_3 = arith.constant 0 : index
    %c0_4 = arith.constant 0 : index
    %3 = vector.load %arg3[%c0_3, %c0_4] : memref<1x128xf32, #tpu.memory_space<vmem>>, vector<1x128xf32>
    %4 = vector.broadcast %3 : vector<1x128xf32> to vector<256x128xf32>
    %5 = arith.mulf %2, %4 : vector<256x128xf32>
    %c0_5 = arith.constant 0 : index
    %c0_6 = arith.constant 0 : index
    %6 = vector.load %arg4[%c0_5, %c0_6] : memref<1x128xf32, #tpu.memory_space<vmem>>, vector<1x128xf32>
    %7 = vector.broadcast %6 : vector<1x128xf32> to vector<256x128xf32>
    %8 = arith.addf %5, %7 : vector<256x128xf32>
    %cst_7 = arith.constant 0.000000e+00 : f32
    %9 = vector.broadcast %cst_7 : f32 to vector<256x128xf32>
    %10 = arith.maximumf %8, %9 : vector<256x128xf32>
    %11 = arith.truncf %10 : vector<256x128xf32> to vector<256x128xbf16>
    %c0_8 = arith.constant 0 : index
    %c0_9 = arith.constant 0 : index
    %12 = vector.load %arg5[%c0_8, %c0_9] : memref<256x128xbf16, #tpu.memory_space<vmem>>, vector<256x128xbf16>
    tpu.vector_store %arg5[%c0_8, %c0_9], %11 {strides = array<i32>} : memref<256x128xbf16, #tpu.memory_space<vmem>>, vector<256x128xbf16>,
    return
  }
  func.func @transform_0(%arg0: i32) -> (i32, i32) {
    %c0_i32 = arith.constant 0 : i32
    %c0_i32_0 = arith.constant 0 : i32
    return %arg0, %c0_i32 : i32, i32
  }
  func.func @transform_1(%arg0: i32) -> (i32, i32) {
    %c0_i32 = arith.constant 0 : i32
    %c0_i32_0 = arith.constant 0 : i32
    %c0_i32_1 = arith.constant 0 : i32
    return %c0_i32, %c0_i32_0 : i32, i32
  }
  func.func @transform_2(%arg0: i32) -> (i32, i32) {
    %c0_i32 = arith.constant 0 : i32
    %c0_i32_0 = arith.constant 0 : i32
    %c0_i32_1 = arith.constant 0 : i32
    return %c0_i32, %c0_i32_0 : i32, i32
  }
  func.func @transform_3(%arg0: i32) -> (i32, i32) {
    %c0_i32 = arith.constant 0 : i32
    %c0_i32_0 = arith.constant 0 : i32
    %c0_i32_1 = arith.constant 0 : i32
    return %c0_i32, %c0_i32_0 : i32, i32
  }
  func.func @transform_4(%arg0: i32) -> (i32, i32) {
    %c0_i32 = arith.constant 0 : i32
    %c0_i32_0 = arith.constant 0 : i32
    return %arg0, %c0_i32 : i32, i32
  }
}

module attributes {stable_mosaic.version = 11 : i64} {
  func.func @_mm_bias_kernel(%arg0: i32, %arg1: memref<256x224xbf16, #tpu.memory_space<vmem>>, %arg2: memref<224x256xbf16, #tpu.memory_space<vmem>>, %arg3: memref<1x256xf32, #tpu.memory_space<vmem>>, %arg4: memref<256x256xf32, #tpu.memory_space<vmem>>) attributes {dimension_semantics = [#tpu.dimension_semantics<parallel>], iteration_bounds = array<i64: 1>, scalar_prefetch = 0 : i64, scratch_operands = 0 : i64, tpu.core_type = #tpu.core_type<tc>, window_params = [{transform_indices = @transform_0, window_bounds = array<i64: 256, 224>}, {pipeline_mode = #tpu.pipeline_mode<synchronous>, transform_indices = @transform_1, window_bounds = array<i64: 224, 256>}, {pipeline_mode = #tpu.pipeline_mode<synchronous>, transform_indices = @transform_2, window_bounds = array<i64: 1, 256>}, {transform_indices = @transform_3, window_bounds = array<i64: 256, 256>}]} {
    %c0 = arith.constant 0 : index
    %c0_0 = arith.constant 0 : index
    %0 = vector.load %arg1[%c0, %c0_0] : memref<256x224xbf16, #tpu.memory_space<vmem>>, vector<256x224xbf16>
    %c0_1 = arith.constant 0 : index
    %c0_2 = arith.constant 0 : index
    %1 = vector.load %arg2[%c0_1, %c0_2] : memref<224x256xbf16, #tpu.memory_space<vmem>>, vector<224x256xbf16>
    %cst = arith.constant dense<0.000000e+00> : vector<256x256xf32>
    %2 = tpu.matmul %0, %1, %cst {dimension_numbers = #tpu.dot_dimension_numbers<[1], [0], [0], [1], [0, 0, 1, 1], [], []>} : vector<256x224xbf16>, vector<224x256xbf16>, vector<256x256xf32> -> vector<256x256xf32>
    %c0_3 = arith.constant 0 : index
    %c0_4 = arith.constant 0 : index
    %3 = vector.load %arg3[%c0_3, %c0_4] : memref<1x256xf32, #tpu.memory_space<vmem>>, vector<1x256xf32>
    %4 = vector.broadcast %3 : vector<1x256xf32> to vector<256x256xf32>
    %5 = arith.addf %2, %4 : vector<256x256xf32>
    %c0_5 = arith.constant 0 : index
    %c0_6 = arith.constant 0 : index
    %6 = vector.load %arg4[%c0_5, %c0_6] : memref<256x256xf32, #tpu.memory_space<vmem>>, vector<256x256xf32>
    tpu.vector_store %arg4[%c0_5, %c0_6], %5 {strides = array<i32>} : memref<256x256xf32, #tpu.memory_space<vmem>>, vector<256x256xf32>,
    return
  }
  func.func @transform_0(%arg0: i32) -> (i32, i32) {
    %c0_i32 = arith.constant 0 : i32
    %c0_i32_0 = arith.constant 0 : i32
    return %arg0, %c0_i32 : i32, i32
  }
  func.func @transform_1(%arg0: i32) -> (i32, i32) {
    %c0_i32 = arith.constant 0 : i32
    %c0_i32_0 = arith.constant 0 : i32
    %c0_i32_1 = arith.constant 0 : i32
    return %c0_i32, %c0_i32_0 : i32, i32
  }
  func.func @transform_2(%arg0: i32) -> (i32, i32) {
    %c0_i32 = arith.constant 0 : i32
    %c0_i32_0 = arith.constant 0 : i32
    %c0_i32_1 = arith.constant 0 : i32
    return %c0_i32, %c0_i32_0 : i32, i32
  }
  func.func @transform_3(%arg0: i32) -> (i32, i32) {
    %c0_i32 = arith.constant 0 : i32
    %c0_i32_0 = arith.constant 0 : i32
    return %arg0, %c0_i32 : i32, i32
  }
}

module attributes {stable_mosaic.version = 11 : i64} {
  func.func @_bilstm_seq_kernel(%arg0: memref<14x2x256xf32, #tpu.memory_space<vmem>>, %arg1: memref<64x256xf32, #tpu.memory_space<vmem>>, %arg2: memref<14x2x64xf32, #tpu.memory_space<vmem>>) attributes {dimension_semantics = [], scalar_prefetch = 0 : i64, scratch_operands = 0 : i64, tpu.core_type = #tpu.core_type<tc>} {
    %cst = arith.constant 0.000000e+00 : f32
    %0 = vector.broadcast %cst : f32 to vector<2x64xf32>
    %cst_0 = arith.constant 0.000000e+00 : f32
    %1 = vector.broadcast %cst_0 : f32 to vector<2x64xf32>
    %c0_i32 = arith.constant 0 : i32
    %c14_i32 = arith.constant 14 : i32
    %2 = arith.addi %c0_i32, %c14_i32 : i32
    %c1_i32 = arith.constant 1 : i32
    %3:2 = scf.for %arg3 = %c0_i32 to %2 step %c1_i32 iter_args(%arg4 = %0, %arg5 = %1) -> (vector<2x64xf32>, vector<2x64xf32>)  : i32 {
      %4 = arith.index_cast %arg3 : i32 to index
      %c0 = arith.constant 0 : index
      %c0_2 = arith.constant 0 : index
      %5 = vector.load %arg0[%4, %c0, %c0_2] : memref<14x2x256xf32, #tpu.memory_space<vmem>>, vector<1x2x128xf32>
      %6 = vector.shape_cast %5 : vector<1x2x128xf32> to vector<2x128xf32>
      %c13_i32 = arith.constant 13 : i32
      %7 = arith.subi %c13_i32, %arg3 : i32
      %8 = arith.index_cast %7 : i32 to index
      %c0_3 = arith.constant 0 : index
      %c128 = arith.constant 128 : index
      %9 = vector.load %arg0[%8, %c0_3, %c128] : memref<14x2x256xf32, #tpu.memory_space<vmem>>, vector<1x2x128xf32>
      %10 = vector.shape_cast %9 : vector<1x2x128xf32> to vector<2x128xf32>
      %c0_4 = arith.constant 0 : index
      %c0_5 = arith.constant 0 : index
      %11 = vector.load %arg1[%c0_4, %c0_5] : memref<64x256xf32, #tpu.memory_space<vmem>>, vector<64x256xf32>
      %cst_6 = arith.constant dense<0.000000e+00> : vector<2x256xf32>
      %12 = tpu.matmul %arg4, %11, %cst_6 {dimension_numbers = #tpu.dot_dimension_numbers<[1], [0], [0], [1], [0, 0, 1, 1], [], []>} : vector<2x64xf32>, vector<64x256xf32>, vector<2x256xf32> -> vector<2x256xf32>
      %13 = vector.extract_strided_slice %12 {offsets = [0, 0], sizes = [2, 128], strides = [1, 1]} : vector<2x256xf32> to vector<2x128xf32>
      %14 = vector.extract_strided_slice %arg5 {offsets = [0, 0], sizes = [2, 32], strides = [1, 1]} : vector<2x64xf32> to vector<2x32xf32>
      %15 = arith.addf %6, %13 : vector<2x128xf32>
      %16 = vector.extract_strided_slice %15 {offsets = [0, 0], sizes = [2, 32], strides = [1, 1]} : vector<2x128xf32> to vector<2x32xf32>
      %17 = arith.negf %16 : vector<2x32xf32>
      %18 = math.exp %17 : vector<2x32xf32>
      %cst_7 = arith.constant 1.000000e+00 : f32
      %19 = vector.broadcast %cst_7 : f32 to vector<2x32xf32>
      %20 = arith.addf %19, %18 : vector<2x32xf32>
      %21 = arith.divf %19, %20 : vector<2x32xf32>
      %22 = vector.extract_strided_slice %15 {offsets = [0, 32], sizes = [2, 32], strides = [1, 1]} : vector<2x128xf32> to vector<2x32xf32>
      %23 = arith.negf %22 : vector<2x32xf32>
      %24 = math.exp %23 : vector<2x32xf32>
      %cst_8 = arith.constant 1.000000e+00 : f32
      %25 = vector.broadcast %cst_8 : f32 to vector<2x32xf32>
      %26 = arith.addf %25, %24 : vector<2x32xf32>
      %27 = arith.divf %25, %26 : vector<2x32xf32>
      %28 = vector.extract_strided_slice %15 {offsets = [0, 64], sizes = [2, 32], strides = [1, 1]} : vector<2x128xf32> to vector<2x32xf32>
      %29 = math.tanh %28 : vector<2x32xf32>
      %30 = vector.extract_strided_slice %15 {offsets = [0, 96], sizes = [2, 32], strides = [1, 1]} : vector<2x128xf32> to vector<2x32xf32>
      %31 = arith.negf %30 : vector<2x32xf32>
      %32 = math.exp %31 : vector<2x32xf32>
      %cst_9 = arith.constant 1.000000e+00 : f32
      %33 = vector.broadcast %cst_9 : f32 to vector<2x32xf32>
      %34 = arith.addf %33, %32 : vector<2x32xf32>
      %35 = arith.divf %33, %34 : vector<2x32xf32>
      %36 = arith.mulf %27, %14 : vector<2x32xf32>
      %37 = arith.mulf %21, %29 : vector<2x32xf32>
      %38 = arith.addf %36, %37 : vector<2x32xf32>
      %39 = math.tanh %38 : vector<2x32xf32>
      %40 = arith.mulf %35, %39 : vector<2x32xf32>
      %41 = vector.extract_strided_slice %12 {offsets = [0, 128], sizes = [2, 128], strides = [1, 1]} : vector<2x256xf32> to vector<2x128xf32>
      %42 = vector.extract_strided_slice %arg5 {offsets = [0, 32], sizes = [2, 32], strides = [1, 1]} : vector<2x64xf32> to vector<2x32xf32>
      %43 = arith.addf %10, %41 : vector<2x128xf32>
      %44 = vector.extract_strided_slice %43 {offsets = [0, 0], sizes = [2, 32], strides = [1, 1]} : vector<2x128xf32> to vector<2x32xf32>
      %45 = arith.negf %44 : vector<2x32xf32>
      %46 = math.exp %45 : vector<2x32xf32>
      %cst_10 = arith.constant 1.000000e+00 : f32
      %47 = vector.broadcast %cst_10 : f32 to vector<2x32xf32>
      %48 = arith.addf %47, %46 : vector<2x32xf32>
      %49 = arith.divf %47, %48 : vector<2x32xf32>
      %50 = vector.extract_strided_slice %43 {offsets = [0, 32], sizes = [2, 32], strides = [1, 1]} : vector<2x128xf32> to vector<2x32xf32>
      %51 = arith.negf %50 : vector<2x32xf32>
      %52 = math.exp %51 : vector<2x32xf32>
      %cst_11 = arith.constant 1.000000e+00 : f32
      %53 = vector.broadcast %cst_11 : f32 to vector<2x32xf32>
      %54 = arith.addf %53, %52 : vector<2x32xf32>
      %55 = arith.divf %53, %54 : vector<2x32xf32>
      %56 = vector.extract_strided_slice %43 {offsets = [0, 64], sizes = [2, 32], strides = [1, 1]} : vector<2x128xf32> to vector<2x32xf32>
      %57 = math.tanh %56 : vector<2x32xf32>
      %58 = vector.extract_strided_slice %43 {offsets = [0, 96], sizes = [2, 32], strides = [1, 1]} : vector<2x128xf32> to vector<2x32xf32>
      %59 = arith.negf %58 : vector<2x32xf32>
      %60 = math.exp %59 : vector<2x32xf32>
      %cst_12 = arith.constant 1.000000e+00 : f32
      %61 = vector.broadcast %cst_12 : f32 to vector<2x32xf32>
      %62 = arith.addf %61, %60 : vector<2x32xf32>
      %63 = arith.divf %61, %62 : vector<2x32xf32>
      %64 = arith.mulf %55, %42 : vector<2x32xf32>
      %65 = arith.mulf %49, %57 : vector<2x32xf32>
      %66 = arith.addf %64, %65 : vector<2x32xf32>
      %67 = math.tanh %66 : vector<2x32xf32>
      %68 = arith.mulf %63, %67 : vector<2x32xf32>
      %69 = tpu.concatenate %40, %68 in 1 : vector<2x32xf32>, vector<2x32xf32> -> vector<2x64xf32>
      %70 = tpu.concatenate %38, %66 in 1 : vector<2x32xf32>, vector<2x32xf32> -> vector<2x64xf32>
      %71 = vector.extract_strided_slice %69 {offsets = [0, 0], sizes = [2, 32], strides = [1, 1]} : vector<2x64xf32> to vector<2x32xf32>
      %72 = vector.shape_cast %71 : vector<2x32xf32> to vector<1x2x32xf32>
      %73 = arith.index_cast %arg3 : i32 to index
      %c0_13 = arith.constant 0 : index
      %c0_14 = arith.constant 0 : index
      %74 = vector.load %arg2[%73, %c0_13, %c0_14] : memref<14x2x64xf32, #tpu.memory_space<vmem>>, vector<1x2x32xf32>
      tpu.vector_store %arg2[%73, %c0_13, %c0_14], %72 {strides = array<i32>} : memref<14x2x64xf32, #tpu.memory_space<vmem>>, vector<1x2x32xf32>,
      %75 = vector.extract_strided_slice %69 {offsets = [0, 32], sizes = [2, 32], strides = [1, 1]} : vector<2x64xf32> to vector<2x32xf32>
      %76 = vector.shape_cast %75 : vector<2x32xf32> to vector<1x2x32xf32>
      %c13_i32_15 = arith.constant 13 : i32
      %77 = arith.subi %c13_i32_15, %arg3 : i32
      %78 = arith.index_cast %77 : i32 to index
      %c0_16 = arith.constant 0 : index
      %c32 = arith.constant 32 : index
      %79 = vector.load %arg2[%78, %c0_16, %c32] : memref<14x2x64xf32, #tpu.memory_space<vmem>>, vector<1x2x32xf32>
      tpu.vector_store %arg2[%78, %c0_16, %c32], %76 {strides = array<i32>} : memref<14x2x64xf32, #tpu.memory_space<vmem>>, vector<1x2x32xf32>,
      scf.yield %69, %70 : vector<2x64xf32>, vector<2x64xf32>
    }
    %c14_i32_1 = arith.constant 14 : i32
    return
  }
}

module attributes {stable_mosaic.version = 11 : i64} {
  func.func @_mm_bias_kernel(%arg0: i32, %arg1: memref<256x64xbf16, #tpu.memory_space<vmem>>, %arg2: memref<64x256xbf16, #tpu.memory_space<vmem>>, %arg3: memref<1x256xf32, #tpu.memory_space<vmem>>, %arg4: memref<256x256xf32, #tpu.memory_space<vmem>>) attributes {dimension_semantics = [#tpu.dimension_semantics<parallel>], iteration_bounds = array<i64: 1>, scalar_prefetch = 0 : i64, scratch_operands = 0 : i64, tpu.core_type = #tpu.core_type<tc>, window_params = [{transform_indices = @transform_0, window_bounds = array<i64: 256, 64>}, {pipeline_mode = #tpu.pipeline_mode<synchronous>, transform_indices = @transform_1, window_bounds = array<i64: 64, 256>}, {pipeline_mode = #tpu.pipeline_mode<synchronous>, transform_indices = @transform_2, window_bounds = array<i64: 1, 256>}, {transform_indices = @transform_3, window_bounds = array<i64: 256, 256>}]} {
    %c0 = arith.constant 0 : index
    %c0_0 = arith.constant 0 : index
    %0 = vector.load %arg1[%c0, %c0_0] : memref<256x64xbf16, #tpu.memory_space<vmem>>, vector<256x64xbf16>
    %c0_1 = arith.constant 0 : index
    %c0_2 = arith.constant 0 : index
    %1 = vector.load %arg2[%c0_1, %c0_2] : memref<64x256xbf16, #tpu.memory_space<vmem>>, vector<64x256xbf16>
    %cst = arith.constant dense<0.000000e+00> : vector<256x256xf32>
    %2 = tpu.matmul %0, %1, %cst {dimension_numbers = #tpu.dot_dimension_numbers<[1], [0], [0], [1], [0, 0, 1, 1], [], []>} : vector<256x64xbf16>, vector<64x256xbf16>, vector<256x256xf32> -> vector<256x256xf32>
    %c0_3 = arith.constant 0 : index
    %c0_4 = arith.constant 0 : index
    %3 = vector.load %arg3[%c0_3, %c0_4] : memref<1x256xf32, #tpu.memory_space<vmem>>, vector<1x256xf32>
    %4 = vector.broadcast %3 : vector<1x256xf32> to vector<256x256xf32>
    %5 = arith.addf %2, %4 : vector<256x256xf32>
    %c0_5 = arith.constant 0 : index
    %c0_6 = arith.constant 0 : index
    %6 = vector.load %arg4[%c0_5, %c0_6] : memref<256x256xf32, #tpu.memory_space<vmem>>, vector<256x256xf32>
    tpu.vector_store %arg4[%c0_5, %c0_6], %5 {strides = array<i32>} : memref<256x256xf32, #tpu.memory_space<vmem>>, vector<256x256xf32>,
    return
  }
  func.func @transform_0(%arg0: i32) -> (i32, i32) {
    %c0_i32 = arith.constant 0 : i32
    %c0_i32_0 = arith.constant 0 : i32
    return %arg0, %c0_i32 : i32, i32
  }
  func.func @transform_1(%arg0: i32) -> (i32, i32) {
    %c0_i32 = arith.constant 0 : i32
    %c0_i32_0 = arith.constant 0 : i32
    %c0_i32_1 = arith.constant 0 : i32
    return %c0_i32, %c0_i32_0 : i32, i32
  }
  func.func @transform_2(%arg0: i32) -> (i32, i32) {
    %c0_i32 = arith.constant 0 : i32
    %c0_i32_0 = arith.constant 0 : i32
    %c0_i32_1 = arith.constant 0 : i32
    return %c0_i32, %c0_i32_0 : i32, i32
  }
  func.func @transform_3(%arg0: i32) -> (i32, i32) {
    %c0_i32 = arith.constant 0 : i32
    %c0_i32_0 = arith.constant 0 : i32
    return %arg0, %c0_i32 : i32, i32
  }
}

module attributes {stable_mosaic.version = 11 : i64} {
  func.func @_bilstm_head_kernel(%arg0: memref<14x2x256xf32, #tpu.memory_space<vmem>>, %arg1: memref<64x256xf32, #tpu.memory_space<vmem>>, %arg2: memref<64x32xf32, #tpu.memory_space<vmem>>, %arg3: memref<1x32xf32, #tpu.memory_space<vmem>>, %arg4: memref<32x4xf32, #tpu.memory_space<vmem>>, %arg5: memref<1x4xf32, #tpu.memory_space<vmem>>, %arg6: memref<2x4xf32, #tpu.memory_space<vmem>>) attributes {dimension_semantics = [], scalar_prefetch = 0 : i64, scratch_operands = 0 : i64, tpu.core_type = #tpu.core_type<tc>} {
    %cst = arith.constant 0.000000e+00 : f32
    %0 = vector.broadcast %cst : f32 to vector<2x64xf32>
    %cst_0 = arith.constant 0.000000e+00 : f32
    %1 = vector.broadcast %cst_0 : f32 to vector<2x64xf32>
    %c0 = arith.constant 0 : index
    %c0_1 = arith.constant 0 : index
    %c0_2 = arith.constant 0 : index
    %2 = vector.load %arg0[%c0, %c0_1, %c0_2] : memref<14x2x256xf32, #tpu.memory_space<vmem>>, vector<1x2x128xf32>
    %3 = vector.shape_cast %2 : vector<1x2x128xf32> to vector<2x128xf32>
    %c13 = arith.constant 13 : index
    %c0_3 = arith.constant 0 : index
    %c128 = arith.constant 128 : index
    %4 = vector.load %arg0[%c13, %c0_3, %c128] : memref<14x2x256xf32, #tpu.memory_space<vmem>>, vector<1x2x128xf32>
    %5 = vector.shape_cast %4 : vector<1x2x128xf32> to vector<2x128xf32>
    %c0_4 = arith.constant 0 : index
    %c0_5 = arith.constant 0 : index
    %6 = vector.load %arg1[%c0_4, %c0_5] : memref<64x256xf32, #tpu.memory_space<vmem>>, vector<64x256xf32>
    %cst_6 = arith.constant dense<0.000000e+00> : vector<2x256xf32>
    %7 = tpu.matmul %0, %6, %cst_6 {dimension_numbers = #tpu.dot_dimension_numbers<[1], [0], [0], [1], [0, 0, 1, 1], [], []>} : vector<2x64xf32>, vector<64x256xf32>, vector<2x256xf32> -> vector<2x256xf32>
    %8 = vector.extract_strided_slice %7 {offsets = [0, 0], sizes = [2, 128], strides = [1, 1]} : vector<2x256xf32> to vector<2x128xf32>
    %9 = vector.extract_strided_slice %1 {offsets = [0, 0], sizes = [2, 32], strides = [1, 1]} : vector<2x64xf32> to vector<2x32xf32>
    %10 = arith.addf %3, %8 : vector<2x128xf32>
    %11 = vector.extract_strided_slice %10 {offsets = [0, 0], sizes = [2, 32], strides = [1, 1]} : vector<2x128xf32> to vector<2x32xf32>
    %12 = arith.negf %11 : vector<2x32xf32>
    %13 = math.exp %12 : vector<2x32xf32>
    %cst_7 = arith.constant 1.000000e+00 : f32
    %14 = vector.broadcast %cst_7 : f32 to vector<2x32xf32>
    %15 = arith.addf %14, %13 : vector<2x32xf32>
    %16 = arith.divf %14, %15 : vector<2x32xf32>
    %17 = vector.extract_strided_slice %10 {offsets = [0, 32], sizes = [2, 32], strides = [1, 1]} : vector<2x128xf32> to vector<2x32xf32>
    %18 = arith.negf %17 : vector<2x32xf32>
    %19 = math.exp %18 : vector<2x32xf32>
    %cst_8 = arith.constant 1.000000e+00 : f32
    %20 = vector.broadcast %cst_8 : f32 to vector<2x32xf32>
    %21 = arith.addf %20, %19 : vector<2x32xf32>
    %22 = arith.divf %20, %21 : vector<2x32xf32>
    %23 = vector.extract_strided_slice %10 {offsets = [0, 64], sizes = [2, 32], strides = [1, 1]} : vector<2x128xf32> to vector<2x32xf32>
    %24 = math.tanh %23 : vector<2x32xf32>
    %25 = vector.extract_strided_slice %10 {offsets = [0, 96], sizes = [2, 32], strides = [1, 1]} : vector<2x128xf32> to vector<2x32xf32>
    %26 = arith.negf %25 : vector<2x32xf32>
    %27 = math.exp %26 : vector<2x32xf32>
    %cst_9 = arith.constant 1.000000e+00 : f32
    %28 = vector.broadcast %cst_9 : f32 to vector<2x32xf32>
    %29 = arith.addf %28, %27 : vector<2x32xf32>
    %30 = arith.divf %28, %29 : vector<2x32xf32>
    %31 = arith.mulf %22, %9 : vector<2x32xf32>
    %32 = arith.mulf %16, %24 : vector<2x32xf32>
    %33 = arith.addf %31, %32 : vector<2x32xf32>
    %34 = math.tanh %33 : vector<2x32xf32>
    %35 = arith.mulf %30, %34 : vector<2x32xf32>
    %36 = vector.extract_strided_slice %7 {offsets = [0, 128], sizes = [2, 128], strides = [1, 1]} : vector<2x256xf32> to vector<2x128xf32>
    %37 = vector.extract_strided_slice %1 {offsets = [0, 32], sizes = [2, 32], strides = [1, 1]} : vector<2x64xf32> to vector<2x32xf32>
    %38 = arith.addf %5, %36 : vector<2x128xf32>
    %39 = vector.extract_strided_slice %38 {offsets = [0, 0], sizes = [2, 32], strides = [1, 1]} : vector<2x128xf32> to vector<2x32xf32>
    %40 = arith.negf %39 : vector<2x32xf32>
    %41 = math.exp %40 : vector<2x32xf32>
    %cst_10 = arith.constant 1.000000e+00 : f32
    %42 = vector.broadcast %cst_10 : f32 to vector<2x32xf32>
    %43 = arith.addf %42, %41 : vector<2x32xf32>
    %44 = arith.divf %42, %43 : vector<2x32xf32>
    %45 = vector.extract_strided_slice %38 {offsets = [0, 32], sizes = [2, 32], strides = [1, 1]} : vector<2x128xf32> to vector<2x32xf32>
    %46 = arith.negf %45 : vector<2x32xf32>
    %47 = math.exp %46 : vector<2x32xf32>
    %cst_11 = arith.constant 1.000000e+00 : f32
    %48 = vector.broadcast %cst_11 : f32 to vector<2x32xf32>
    %49 = arith.addf %48, %47 : vector<2x32xf32>
    %50 = arith.divf %48, %49 : vector<2x32xf32>
    %51 = vector.extract_strided_slice %38 {offsets = [0, 64], sizes = [2, 32], strides = [1, 1]} : vector<2x128xf32> to vector<2x32xf32>
    %52 = math.tanh %51 : vector<2x32xf32>
    %53 = vector.extract_strided_slice %38 {offsets = [0, 96], sizes = [2, 32], strides = [1, 1]} : vector<2x128xf32> to vector<2x32xf32>
    %54 = arith.negf %53 : vector<2x32xf32>
    %55 = math.exp %54 : vector<2x32xf32>
    %cst_12 = arith.constant 1.000000e+00 : f32
    %56 = vector.broadcast %cst_12 : f32 to vector<2x32xf32>
    %57 = arith.addf %56, %55 : vector<2x32xf32>
    %58 = arith.divf %56, %57 : vector<2x32xf32>
    %59 = arith.mulf %50, %37 : vector<2x32xf32>
    %60 = arith.mulf %44, %52 : vector<2x32xf32>
    %61 = arith.addf %59, %60 : vector<2x32xf32>
    %62 = math.tanh %61 : vector<2x32xf32>
    %63 = arith.mulf %58, %62 : vector<2x32xf32>
    %64 = tpu.concatenate %35, %63 in 1 : vector<2x32xf32>, vector<2x32xf32> -> vector<2x64xf32>
    %65 = tpu.concatenate %33, %61 in 1 : vector<2x32xf32>, vector<2x32xf32> -> vector<2x64xf32>
    %66 = vector.extract_strided_slice %64 {offsets = [0, 32], sizes = [2, 32], strides = [1, 1]} : vector<2x64xf32> to vector<2x32xf32>
    %c1_i32 = arith.constant 1 : i32
    %c13_i32 = arith.constant 13 : i32
    %67 = arith.addi %c1_i32, %c13_i32 : i32
    %c1_i32_13 = arith.constant 1 : i32
    %68:2 = scf.for %arg7 = %c1_i32 to %67 step %c1_i32_13 iter_args(%arg8 = %64, %arg9 = %65) -> (vector<2x64xf32>, vector<2x64xf32>)  : i32 {
      %84 = arith.index_cast %arg7 : i32 to index
      %c0_28 = arith.constant 0 : index
      %c0_29 = arith.constant 0 : index
      %85 = vector.load %arg0[%84, %c0_28, %c0_29] : memref<14x2x256xf32, #tpu.memory_space<vmem>>, vector<1x2x128xf32>
      %86 = vector.shape_cast %85 : vector<1x2x128xf32> to vector<2x128xf32>
      %c13_i32_30 = arith.constant 13 : i32
      %87 = arith.subi %c13_i32_30, %arg7 : i32
      %88 = arith.index_cast %87 : i32 to index
      %c0_31 = arith.constant 0 : index
      %c128_32 = arith.constant 128 : index
      %89 = vector.load %arg0[%88, %c0_31, %c128_32] : memref<14x2x256xf32, #tpu.memory_space<vmem>>, vector<1x2x128xf32>
      %90 = vector.shape_cast %89 : vector<1x2x128xf32> to vector<2x128xf32>
      %c0_33 = arith.constant 0 : index
      %c0_34 = arith.constant 0 : index
      %91 = vector.load %arg1[%c0_33, %c0_34] : memref<64x256xf32, #tpu.memory_space<vmem>>, vector<64x256xf32>
      %cst_35 = arith.constant dense<0.000000e+00> : vector<2x256xf32>
      %92 = tpu.matmul %arg8, %91, %cst_35 {dimension_numbers = #tpu.dot_dimension_numbers<[1], [0], [0], [1], [0, 0, 1, 1], [], []>} : vector<2x64xf32>, vector<64x256xf32>, vector<2x256xf32> -> vector<2x256xf32>
      %93 = vector.extract_strided_slice %92 {offsets = [0, 0], sizes = [2, 128], strides = [1, 1]} : vector<2x256xf32> to vector<2x128xf32>
      %94 = vector.extract_strided_slice %arg9 {offsets = [0, 0], sizes = [2, 32], strides = [1, 1]} : vector<2x64xf32> to vector<2x32xf32>
      %95 = arith.addf %86, %93 : vector<2x128xf32>
      %96 = vector.extract_strided_slice %95 {offsets = [0, 0], sizes = [2, 32], strides = [1, 1]} : vector<2x128xf32> to vector<2x32xf32>
      %97 = arith.negf %96 : vector<2x32xf32>
      %98 = math.exp %97 : vector<2x32xf32>
      %cst_36 = arith.constant 1.000000e+00 : f32
      %99 = vector.broadcast %cst_36 : f32 to vector<2x32xf32>
      %100 = arith.addf %99, %98 : vector<2x32xf32>
      %101 = arith.divf %99, %100 : vector<2x32xf32>
      %102 = vector.extract_strided_slice %95 {offsets = [0, 32], sizes = [2, 32], strides = [1, 1]} : vector<2x128xf32> to vector<2x32xf32>
      %103 = arith.negf %102 : vector<2x32xf32>
      %104 = math.exp %103 : vector<2x32xf32>
      %cst_37 = arith.constant 1.000000e+00 : f32
      %105 = vector.broadcast %cst_37 : f32 to vector<2x32xf32>
      %106 = arith.addf %105, %104 : vector<2x32xf32>
      %107 = arith.divf %105, %106 : vector<2x32xf32>
      %108 = vector.extract_strided_slice %95 {offsets = [0, 64], sizes = [2, 32], strides = [1, 1]} : vector<2x128xf32> to vector<2x32xf32>
      %109 = math.tanh %108 : vector<2x32xf32>
      %110 = vector.extract_strided_slice %95 {offsets = [0, 96], sizes = [2, 32], strides = [1, 1]} : vector<2x128xf32> to vector<2x32xf32>
      %111 = arith.negf %110 : vector<2x32xf32>
      %112 = math.exp %111 : vector<2x32xf32>
      %cst_38 = arith.constant 1.000000e+00 : f32
      %113 = vector.broadcast %cst_38 : f32 to vector<2x32xf32>
      %114 = arith.addf %113, %112 : vector<2x32xf32>
      %115 = arith.divf %113, %114 : vector<2x32xf32>
      %116 = arith.mulf %107, %94 : vector<2x32xf32>
      %117 = arith.mulf %101, %109 : vector<2x32xf32>
      %118 = arith.addf %116, %117 : vector<2x32xf32>
      %119 = math.tanh %118 : vector<2x32xf32>
      %120 = arith.mulf %115, %119 : vector<2x32xf32>
      %121 = vector.extract_strided_slice %92 {offsets = [0, 128], sizes = [2, 128], strides = [1, 1]} : vector<2x256xf32> to vector<2x128xf32>
      %122 = vector.extract_strided_slice %arg9 {offsets = [0, 32], sizes = [2, 32], strides = [1, 1]} : vector<2x64xf32> to vector<2x32xf32>
      %123 = arith.addf %90, %121 : vector<2x128xf32>
      %124 = vector.extract_strided_slice %123 {offsets = [0, 0], sizes = [2, 32], strides = [1, 1]} : vector<2x128xf32> to vector<2x32xf32>
      %125 = arith.negf %124 : vector<2x32xf32>
      %126 = math.exp %125 : vector<2x32xf32>
      %cst_39 = arith.constant 1.000000e+00 : f32
      %127 = vector.broadcast %cst_39 : f32 to vector<2x32xf32>
      %128 = arith.addf %127, %126 : vector<2x32xf32>
      %129 = arith.divf %127, %128 : vector<2x32xf32>
      %130 = vector.extract_strided_slice %123 {offsets = [0, 32], sizes = [2, 32], strides = [1, 1]} : vector<2x128xf32> to vector<2x32xf32>
      %131 = arith.negf %130 : vector<2x32xf32>
      %132 = math.exp %131 : vector<2x32xf32>
      %cst_40 = arith.constant 1.000000e+00 : f32
      %133 = vector.broadcast %cst_40 : f32 to vector<2x32xf32>
      %134 = arith.addf %133, %132 : vector<2x32xf32>
      %135 = arith.divf %133, %134 : vector<2x32xf32>
      %136 = vector.extract_strided_slice %123 {offsets = [0, 64], sizes = [2, 32], strides = [1, 1]} : vector<2x128xf32> to vector<2x32xf32>
      %137 = math.tanh %136 : vector<2x32xf32>
      %138 = vector.extract_strided_slice %123 {offsets = [0, 96], sizes = [2, 32], strides = [1, 1]} : vector<2x128xf32> to vector<2x32xf32>
      %139 = arith.negf %138 : vector<2x32xf32>
      %140 = math.exp %139 : vector<2x32xf32>
      %cst_41 = arith.constant 1.000000e+00 : f32
      %141 = vector.broadcast %cst_41 : f32 to vector<2x32xf32>
      %142 = arith.addf %141, %140 : vector<2x32xf32>
      %143 = arith.divf %141, %142 : vector<2x32xf32>
      %144 = arith.mulf %135, %122 : vector<2x32xf32>
      %145 = arith.mulf %129, %137 : vector<2x32xf32>
      %146 = arith.addf %144, %145 : vector<2x32xf32>
      %147 = math.tanh %146 : vector<2x32xf32>
      %148 = arith.mulf %143, %147 : vector<2x32xf32>
      %149 = tpu.concatenate %120, %148 in 1 : vector<2x32xf32>, vector<2x32xf32> -> vector<2x64xf32>
      %150 = tpu.concatenate %118, %146 in 1 : vector<2x32xf32>, vector<2x32xf32> -> vector<2x64xf32>
      scf.yield %149, %150 : vector<2x64xf32>, vector<2x64xf32>
    }
    %c13_i32_14 = arith.constant 13 : i32
    %69 = vector.extract_strided_slice %68#0 {offsets = [0, 0], sizes = [2, 32], strides = [1, 1]} : vector<2x64xf32> to vector<2x32xf32>
    %70 = tpu.concatenate %69, %66 in 1 : vector<2x32xf32>, vector<2x32xf32> -> vector<2x64xf32>
    %c0_15 = arith.constant 0 : index
    %c0_16 = arith.constant 0 : index
    %71 = vector.load %arg2[%c0_15, %c0_16] : memref<64x32xf32, #tpu.memory_space<vmem>>, vector<64x32xf32>
    %cst_17 = arith.constant dense<0.000000e+00> : vector<2x32xf32>
    %72 = tpu.matmul %70, %71, %cst_17 {dimension_numbers = #tpu.dot_dimension_numbers<[1], [0], [0], [1], [0, 0, 1, 1], [], []>} : vector<2x64xf32>, vector<64x32xf32>, vector<2x32xf32> -> vector<2x32xf32>
    %c0_18 = arith.constant 0 : index
    %c0_19 = arith.constant 0 : index
    %73 = vector.load %arg3[%c0_18, %c0_19] : memref<1x32xf32, #tpu.memory_space<vmem>>, vector<1x32xf32>
    %74 = vector.broadcast %73 : vector<1x32xf32> to vector<2x32xf32>
    %75 = arith.addf %72, %74 : vector<2x32xf32>
    %cst_20 = arith.constant 0.000000e+00 : f32
    %76 = vector.broadcast %cst_20 : f32 to vector<2x32xf32>
    %77 = arith.maximumf %75, %76 : vector<2x32xf32>
    %c0_21 = arith.constant 0 : index
    %c0_22 = arith.constant 0 : index
    %78 = vector.load %arg4[%c0_21, %c0_22] : memref<32x4xf32, #tpu.memory_space<vmem>>, vector<32x4xf32>
    %cst_23 = arith.constant dense<0.000000e+00> : vector<2x4xf32>
    %79 = tpu.matmul %77, %78, %cst_23 {dimension_numbers = #tpu.dot_dimension_numbers<[1], [0], [0], [1], [0, 0, 1, 1], [], []>} : vector<2x32xf32>, vector<32x4xf32>, vector<2x4xf32> -> vector<2x4xf32>
    %c0_24 = arith.constant 0 : index
    %c0_25 = arith.constant 0 : index
    %80 = vector.load %arg5[%c0_24, %c0_25] : memref<1x4xf32, #tpu.memory_space<vmem>>, vector<1x4xf32>
    %81 = vector.broadcast %80 : vector<1x4xf32> to vector<2x4xf32>
    %82 = arith.addf %79, %81 : vector<2x4xf32>
    %c0_26 = arith.constant 0 : index
    %c0_27 = arith.constant 0 : index
    %83 = vector.load %arg6[%c0_26, %c0_27] : memref<2x4xf32, #tpu.memory_space<vmem>>, vector<2x4xf32>
    tpu.vector_store %arg6[%c0_26, %c0_27], %82 {strides = array<i32>} : memref<2x4xf32, #tpu.memory_space<vmem>>, vector<2x4xf32>,
    return
  }
}

</mosaic_0001>

<llo_original>
// kernel: forward.6
$region0: #{forward.6}
  #allocation0 [shape = 'u32[]', space=smem, size = 0x4, offset = 0x4, fixed_abs, tag = 'smem constant byte address 0x4 - core index']
  #allocation1 [shape = 'u32[144,128]{1,0:T(1,128)}', space=vmem, size = 0x12000, scoped, tag = 'internal scratch']
  %s0 = inlined_call_operand.vmem [shape: bf16[512,45], index: 0, kind: input, shape index: {}]
  %s1 = inlined_call_operand.vmem [shape: bf16[45,128], index: 1, kind: input, shape index: {}]
  %s2 = inlined_call_operand.vmem [shape: f32[1,128], index: 2, kind: input, shape index: {}]
  %s3 = inlined_call_operand.vmem [shape: f32[1,128], index: 3, kind: input, shape index: {}]
  %s4 = inlined_call_operand.vmem [shape: bf16[512,128], index: 4, kind: output, shape index: {}]
  %s5 = sld [smem:[#allocation0]]
  $region26: #{forward.6} parent=0
    _
  %s7 = ssub.s32 1, %s5
  %s8 = scalar_select 0, %s7, %s5
  // Predicated region
  $region2: #{forward.6} parent=0 // pred_check
    _
  $region3: #{forward.6} parent=0 // pred_check_branch
    %10 = sbr.rel (0) target = $region5
  $region4: #{forward.6} parent=0 // pred_region
    _
  $region5: #{forward.6} parent=0 // pred_fallthru
    _
  // Predicated region
  $region6: #{forward.6} parent=0 // pred_check
    _
  $region7: #{forward.6} parent=0 // pred_check_branch
    %12 = sbr.rel (0) target = $region9
  $region8: #{forward.6} parent=0 // pred_region
    _
  $region9: #{forward.6} parent=0 // pred_fallthru
    _
  // Predicated region
  $region10: #{forward.6} parent=0 // pred_check
    _
  $region11: #{forward.6} parent=0 // pred_check_branch
    %14 = sbr.rel (0) target = $region13
  $region12: #{forward.6} parent=0 // pred_region
    _
  $region13: #{forward.6} parent=0 // pred_fallthru
    _
  // Predicated region
  $region14: #{forward.6} parent=0 // pred_check
    _
  $region15: #{forward.6} parent=0 // pred_check_branch
    %16 = sbr.rel (0) target = $region17
  $region16: #{forward.6} parent=0 // pred_region
    _
  $region17: #{forward.6} parent=0 // pred_fallthru
    _
  %v18 = vld [vmem:[%s0] sm:$0xf]
  %v19 = vld [vmem:[%s0 + $0x4] sm:$0xf]
  %v20 = vld [vmem:[%s0 + $0x8] sm:$0xf]
  %v21 = vld [vmem:[%s0 + $0xc] sm:$0xf]
  %v22 = vld [vmem:[%s0 + $0x10] sm:$0xf]
  %v23 = vld [vmem:[%s0 + $0x14] sm:$0xf]
  %v24 = vld [vmem:[%s0 + $0x18] sm:$0xf]
  %v25 = vld [vmem:[%s0 + $0x1c] sm:$0xf]
  %v26 = vld [vmem:[%s0 + $0x20] sm:$0xf]
  %v27 = vld [vmem:[%s0 + $0x24] sm:$0xf]
  %v28 = vld [vmem:[%s0 + $0x28] sm:$0xf]
  %v29 = vld [vmem:[%s0 + $0x2c] sm:$0xf]
  %v30 = vld [vmem:[%s0 + $0x30] sm:$0xf]
  %v31 = vld [vmem:[%s0 + $0x34] sm:$0xf]
  %v32 = vld [vmem:[%s0 + $0x38] sm:$0xf]
  %v33 = vld [vmem:[%s0 + $0x3c] sm:$0xf]
  %v34 = vld [vmem:[%s0 + $0x40] sm:$0xf]
  %v35 = vld [vmem:[%s0 + $0x44] sm:$0xf]
  %v36 = vld [vmem:[%s0 + $0x48] sm:$0xf]
  %v37 = vld [vmem:[%s0 + $0x4c] sm:$0xf]
  %v38 = vld [vmem:[%s0 + $0x50] sm:$0xf]
  %v39 = vld [vmem:[%s0 + $0x54] sm:$0xf]
  %v40 = vld [vmem:[%s0 + $0x58] sm:$0xf]
  %v41 = vld [vmem:[%s0 + $0x5c] sm:$0xf]
  %v42 = vld [vmem:[%s0 + $0x60] sm:$0xf]
  %v43 = vld [vmem:[%s0 + $0x64] sm:$0xf]
  %v44 = vld [vmem:[%s0 + $0x68] sm:$0xf]
  %v45 = vld [vmem:[%s0 + $0x6c] sm:$0xf]
  %v46 = vld [vmem:[%s0 + $0x70] sm:$0xf]
  %v47 = vld [vmem:[%s0 + $0x74] sm:$0xf]
  %v48 = vld [vmem:[%s0 + $0x78] sm:$0xf]
  %v49 = vld [vmem:[%s0 + $0x7c] sm:$0xf]
  %v50 = vld [vmem:[%s0 + $0x80] sm:$0xf]
  %v51 = vld [vmem:[%s0 + $0x84] sm:$0xf]
  %v52 = vld [vmem:[%s0 + $0x88] sm:$0xf]
  %v53 = vld [vmem:[%s0 + $0x8c] sm:$0xf]
  %v54 = vld [vmem:[%s0 + $0x90] sm:$0xf]
  %v55 = vld [vmem:[%s0 + $0x94] sm:$0xf]
  %v56 = vld [vmem:[%s0 + $0x98] sm:$0xf]
  %v57 = vld [vmem:[%s0 + $0x9c] sm:$0xf]
  %v58 = vld [vmem:[%s0 + $0xa0] sm:$0xf]
  %v59 = vld [vmem:[%s0 + $0xa4] sm:$0xf]
  %v60 = vld [vmem:[%s0 + $0xa8] sm:$0xf]
  %v61 = vld [vmem:[%s0 + $0xac] sm:$0xf]
  %v62 = vld [vmem:[%s0 + $0xb0] sm:$0xf]
  %v63 = vld [vmem:[%s0 + $0xb4] sm:$0xf]
  %v64 = vld [vmem:[%s0 + $0xb8] sm:$0xf]
  %v65 = vld [vmem:[%s0 + $0xbc] sm:$0xf]
  %v66 = vld [vmem:[%s0 + $0xc0] sm:$0xf]
  %v67 = vld [vmem:[%s0 + $0xc4] sm:$0xf]
  %v68 = vld [vmem:[%s0 + $0xc8] sm:$0xf]
  %v69 = vld [vmem:[%s0 + $0xcc] sm:$0xf]
  %v70 = vld [vmem:[%s0 + $0xd0] sm:$0xf]
  %v71 = vld [vmem:[%s0 + $0xd4] sm:$0xf]
  %v72 = vld [vmem:[%s0 + $0xd8] sm:$0xf]
  %v73 = vld [vmem:[%s0 + $0xdc] sm:$0xf]
  %v74 = vld [vmem:[%s0 + $0xe0] sm:$0xf]
  %v75 = vld [vmem:[%s0 + $0xe4] sm:$0xf]
  %v76 = vld [vmem:[%s0 + $0xe8] sm:$0xf]
  %v77 = vld [vmem:[%s0 + $0xec] sm:$0xf]
  %v78 = vld [vmem:[%s0 + $0xf0] sm:$0xf]
  %v79 = vld [vmem:[%s0 + $0xf4] sm:$0xf]
  %v80 = vld [vmem:[%s0 + $0xf8] sm:$0xf]
  %v81 = vld [vmem:[%s0 + $0xfc] sm:$0xf]
  %v82 = vld [vmem:[%s1] sm:$0xf]
  %v83 = vld [vmem:[%s1 + $0x4] sm:$0xf]
  %v84 = vld [vmem:[%s1 + $0x8] sm:$0xf]
  %v85 = vld [vmem:[%s1 + $0xc] sm:$0xf]
  %v86 = vld [vmem:[%s1 + $0x10] sm:$0xf]
  %v87 = vld [vmem:[%s1 + $0x14] sm:$0x7]
  %v152 = vunpack.c.l.b16 %v18
  %v153 = vunpack.c.l.b16 %v19
  %v154 = vunpack.c.l.b16 %v20
  %v155 = vunpack.c.l.b16 %v21
  %v156 = vunpack.c.l.b16 %v22
  %v157 = vunpack.c.l.b16 %v23
  %v158 = vunpack.c.l.b16 %v24
  %v159 = vunpack.c.l.b16 %v25
  %v160 = vunpack.c.l.b16 %v26
  %v161 = vunpack.c.l.b16 %v27
  %v162 = vunpack.c.l.b16 %v28
  %v163 = vunpack.c.l.b16 %v29
  %v164 = vunpack.c.l.b16 %v30
  %v165 = vunpack.c.l.b16 %v31
  %v166 = vunpack.c.l.b16 %v32
  %v167 = vunpack.c.l.b16 %v33
  %v168 = vunpack.c.l.b16 %v34
  %v169 = vunpack.c.l.b16 %v35
  %v170 = vunpack.c.l.b16 %v36
  %v171 = vunpack.c.l.b16 %v37
  %v172 = vunpack.c.l.b16 %v38
  %v173 = vunpack.c.l.b16 %v39
  %v174 = vunpack.c.l.b16 %v40
  %v175 = vunpack.c.l.b16 %v41
  %v176 = vunpack.c.l.b16 %v42
  %v177 = vunpack.c.l.b16 %v43
  %v178 = vunpack.c.l.b16 %v44
  %v179 = vunpack.c.l.b16 %v45
  %v180 = vunpack.c.l.b16 %v46
  %v181 = vunpack.c.l.b16 %v47
  %v182 = vunpack.c.l.b16 %v48
  %v183 = vunpack.c.l.b16 %v49
  %v184 = vunpack.c.l.b16 %v50
  %v185 = vunpack.c.l.b16 %v51
  %v186 = vunpack.c.l.b16 %v52
  %v187 = vunpack.c.l.b16 %v53
  %v188 = vunpack.c.l.b16 %v54
  %v189 = vunpack.c.l.b16 %v55
  %v190 = vunpack.c.l.b16 %v56
  %v191 = vunpack.c.l.b16 %v57
  %v192 = vunpack.c.l.b16 %v58
  %v193 = vunpack.c.l.b16 %v59
  %v194 = vunpack.c.l.b16 %v60
  %v195 = vunpack.c.l.b16 %v61
  %v196 = vunpack.c.l.b16 %v62
  %v197 = vunpack.c.l.b16 %v63
  %v198 = vunpack.c.l.b16 %v64
  %v199 = vunpack.c.l.b16 %v65
  %v200 = vunpack.c.l.b16 %v66
  %v201 = vunpack.c.l.b16 %v67
  %v202 = vunpack.c.l.b16 %v68
  %v203 = vunpack.c.l.b16 %v69
  %v204 = vunpack.c.l.b16 %v70
  %v205 = vunpack.c.l.b16 %v71
  %v206 = vunpack.c.l.b16 %v72
  %v207 = vunpack.c.l.b16 %v73
  %v208 = vunpack.c.l.b16 %v74
  %v209 = vunpack.c.l.b16 %v75
  %v210 = vunpack.c.l.b16 %v76
  %v211 = vunpack.c.l.b16 %v77
  %v212 = vunpack.c.l.b16 %v78
  %v213 = vunpack.c.l.b16 %v79
  %v214 = vunpack.c.l.b16 %v80
  %v215 = vunpack.c.l.b16 %v81
  %v216 = vpack.c.b16 %v153, %v152
  %v217 = vpack.c.b16 %v155, %v154
  %v218 = vpack.c.b16 %v157, %v156
  %v219 = vpack.c.b16 %v159, %v158
  %v220 = vpack.c.b16 %v161, %v160
  %v221 = vpack.c.b16 %v163, %v162
  %v222 = vpack.c.b16 %v165, %v164
  %v223 = vpack.c.b16 %v167, %v166
  %v224 = vpack.c.b16 %v169, %v168
  %v225 = vpack.c.b16 %v171, %v170
  %v226 = vpack.c.b16 %v173, %v172
  %v227 = vpack.c.b16 %v175, %v174
  %v228 = vpack.c.b16 %v177, %v176
  %v229 = vpack.c.b16 %v179, %v178
  %v230 = vpack.c.b16 %v181, %v180
  %v231 = vpack.c.b16 %v183, %v182
  %v232 = vpack.c.b16 %v185, %v184
  %v233 = vpack.c.b16 %v187, %v186
  %v234 = vpack.c.b16 %v189, %v188
  %v235 = vpack.c.b16 %v191, %v190
  %v236 = vpack.c.b16 %v193, %v192
  %v237 = vpack.c.b16 %v195, %v194
  %v238 = vpack.c.b16 %v197, %v196
  %v239 = vpack.c.b16 %v199, %v198
  %v240 = vpack.c.b16 %v201, %v200
  %v241 = vpack.c.b16 %v203, %v202
  %v242 = vpack.c.b16 %v205, %v204
  %v243 = vpack.c.b16 %v207, %v206
  %v244 = vpack.c.b16 %v209, %v208
  %v245 = vpack.c.b16 %v211, %v210
  %v246 = vpack.c.b16 %v213, %v212
  %v247 = vpack.c.b16 %v215, %v214
  %v254 = vunpack.c.l.b16 %v82
  %v255 = vunpack.c.l.b16 %v83
  %v256 = vunpack.c.l.b16 %v84
  %v257 = vunpack.c.l.b16 %v85
  %v258 = vunpack.c.l.b16 %v86
  %v259 = vunpack.c.l.b16 %v87
  %v260 = vpack.c.b16 %v255, %v254
  %v261 = vpack.c.b16 %v257, %v256
  %v262 = vpack.c.b16 %v259, %v258
  %vm265 = vcmask 367616
  %v267 = vsel %vm265, %v216, 0
  %v270 = vsel %vm265, %v217, 0
  %v273 = vsel %vm265, %v218, 0
  %v276 = vsel %vm265, %v219, 0
  %v279 = vsel %vm265, %v220, 0
  %v282 = vsel %vm265, %v221, 0
  %v285 = vsel %vm265, %v222, 0
  %v288 = vsel %vm265, %v223, 0
  %v291 = vsel %vm265, %v224, 0
  %v294 = vsel %vm265, %v225, 0
  %v297 = vsel %vm265, %v226, 0
  %v300 = vsel %vm265, %v227, 0
  %v303 = vsel %vm265, %v228, 0
  %v306 = vsel %vm265, %v229, 0
  %v309 = vsel %vm265, %v230, 0
  %v312 = vsel %vm265, %v231, 0
  %v315 = vsel %vm265, %v232, 0
  %v318 = vsel %vm265, %v233, 0
  %v321 = vsel %vm265, %v234, 0
  %v324 = vsel %vm265, %v235, 0
  %v327 = vsel %vm265, %v236, 0
  %v330 = vsel %vm265, %v237, 0
  %v333 = vsel %vm265, %v238, 0
  %v336 = vsel %vm265, %v239, 0
  %v339 = vsel %vm265, %v240, 0
  %v342 = vsel %vm265, %v241, 0
  %v345 = vsel %vm265, %v242, 0
  %v348 = vsel %vm265, %v243, 0
  %v351 = vsel %vm265, %v244, 0
  %v354 = vsel %vm265, %v245, 0
  %v357 = vsel %vm265, %v246, 0
  %v360 = vsel %vm265, %v247, 0
  %vm362 = vcmask 1045504
  %vm363 = vcmask 1046528
  %v364 = vsel %vm362, 4294967295, 65535
  %v365 = vsel %vm363, %v364, 0
  %v367 = vand.u32 %v262, %v365
  %369 = vmatprep.subr.bf16.mxu0 0
  %370 = vmatpush1.bf16.msra.mxu0 %v260
  %371 = vmatprep.subr.bf16.mxu0 0
  %372 = vmatpush1.bf16.msra.mxu0 %v261
  %373 = vmatprep.subr.bf16.mxu0 0
  %374 = vmatpush1.bf16.msra.mxu0 %v367
  %375 = vmatprep.subr.bf16.mxu0 0
  %376 = vmatpush1.bf16.msra.mxu0 0
  %377 = vmatprep.subr.bf16.mxu0 0
  %378 = vmatpush1.bf16.msra.mxu0 0
  %379 = vmatprep.subr.bf16.mxu0 0
  %380 = vmatpush1.bf16.msra.mxu0 0
  %381 = vmatprep.subr.bf16.mxu0 0
  %382 = vmatpush1.bf16.msra.mxu0 0
  %383 = vmatprep.subr.bf16.mxu0 0
  %384 = vmatpush1.bf16.msra.mxu0 0
  %385 = vmatprep.subr.bf16.mxu0 0
  %386 = vmatpush1.bf16.msra.mxu0 0
  %387 = vmatprep.subr.bf16.mxu0 0
  %388 = vmatpush1.bf16.msra.mxu0 0
  %389 = vmatprep.subr.bf16.mxu0 0
  %390 = vmatpush1.bf16.msra.mxu0 0
  %391 = vmatprep.subr.bf16.mxu0 0
  %392 = vmatpush1.bf16.msra.mxu0 0
  %393 = vmatprep.subr.bf16.mxu0 0
  %394 = vmatpush1.bf16.msra.mxu0 0
  %395 = vmatprep.subr.bf16.mxu0 0
  %396 = vmatpush1.bf16.msra.mxu0 0
  %397 = vmatprep.subr.bf16.mxu0 0
  %398 = vmatpush1.bf16.msra.mxu0 0
  %399 = vmatprep.subr.bf16.mxu0 0
  %400 = vmatpush1.bf16.msra.mxu0 0
  %401 = vmatprep.mubr.bf16.mxu0 0
  %402 = vmatmul.mubr.bf16.gmra.mrb[0].mxu0 %v267
  %v403 = vpop.f32.mrb[0].mxu0
  %v404 = vadd.f32 0.0, %v403
  %v405 = vpop.f32.mrb[0].mxu0
  %v406 = vpop.f32.mrb[0].mxu0
  %v407 = vadd.f32 0.0, %v406
  %v408 = vpop.f32.mrb[0].mxu0
  %409 = vmatprep.mubr.bf16.mxu0 0
  %410 = vmatmul.mubr.bf16.gmra.mrb[0].mxu0 %v270
  %v411 = vpop.f32.mrb[0].mxu0
  %v412 = vadd.f32 0.0, %v411
  %v413 = vpop.f32.mrb[0].mxu0
  %v414 = vpop.f32.mrb[0].mxu0
  %v415 = vadd.f32 0.0, %v414
  %v416 = vpop.f32.mrb[0].mxu0
  %417 = vmatprep.mubr.bf16.mxu0 0
  %418 = vmatmul.mubr.bf16.gmra.mrb[0].mxu0 %v273
  %v419 = vpop.f32.mrb[0].mxu0
  %v420 = vadd.f32 0.0, %v419
  %v421 = vpop.f32.mrb[0].mxu0
  %v422 = vpop.f32.mrb[0].mxu0
  %v423 = vadd.f32 0.0, %v422
  %v424 = vpop.f32.mrb[0].mxu0
  %425 = vmatprep.mubr.bf16.mxu0 0
  %426 = vmatmul.mubr.bf16.gmra.mrb[0].mxu0 %v276
  %v427 = vpop.f32.mrb[0].mxu0
  %v428 = vadd.f32 0.0, %v427
  %v429 = vpop.f32.mrb[0].mxu0
  %v430 = vpop.f32.mrb[0].mxu0
  %v431 = vadd.f32 0.0, %v430
  %v432 = vpop.f32.mrb[0].mxu0
  %433 = vmatprep.mubr.bf16.mxu0 0
  %434 = vmatmul.mubr.bf16.gmra.mrb[0].mxu0 %v279
  %v435 = vpop.f32.mrb[0].mxu0
  %v436 = vadd.f32 0.0, %v435
  %v437 = vpop.f32.mrb[0].mxu0
  %v438 = vpop.f32.mrb[0].mxu0
  %v439 = vadd.f32 0.0, %v438
  %v440 = vpop.f32.mrb[0].mxu0
  %441 = vmatprep.mubr.bf16.mxu0 0
  %442 = vmatmul.mubr.bf16.gmra.mrb[0].mxu0 %v282
  %v443 = vpop.f32.mrb[0].mxu0
  %v444 = vadd.f32 0.0, %v443
  %v445 = vpop.f32.mrb[0].mxu0
  %v446 = vpop.f32.mrb[0].mxu0
  %v447 = vadd.f32 0.0, %v446
  %v448 = vpop.f32.mrb[0].mxu0
  %449 = vmatprep.mubr.bf16.mxu0 0
  %450 = vmatmul.mubr.bf16.gmra.mrb[0].mxu0 %v285
  %v451 = vpop.f32.mrb[0].mxu0
  %v452 = vadd.f32 0.0, %v451
  %v453 = vpop.f32.mrb[0].mxu0
  %v454 = vpop.f32.mrb[0].mxu0
  %v455 = vadd.f32 0.0, %v454
  %v456 = vpop.f32.mrb[0].mxu0
  %457 = vmatprep.mubr.bf16.mxu0 0
  %458 = vmatmul.mubr.bf16.gmra.mrb[0].mxu0 %v288
  %v459 = vpop.f32.mrb[0].mxu0
  %v460 = vadd.f32 0.0, %v459
  %v461 = vpop.f32.mrb[0].mxu0
  %v462 = vpop.f32.mrb[0].mxu0
  %v463 = vadd.f32 0.0, %v462
  %v464 = vpop.f32.mrb[0].mxu0
  %465 = vmatprep.mubr.bf16.mxu0 0
  %466 = vmatmul.mubr.bf16.gmra.mrb[0].mxu0 %v291
  %v467 = vpop.f32.mrb[0].mxu0
  %v468 = vadd.f32 0.0, %v467
  %v469 = vpop.f32.mrb[0].mxu0
  %v470 = vpop.f32.mrb[0].mxu0
  %v471 = vadd.f32 0.0, %v470
  %v472 = vpop.f32.mrb[0].mxu0
  %473 = vmatprep.mubr.bf16.mxu0 0
  %474 = vmatmul.mubr.bf16.gmra.mrb[0].mxu0 %v294
  %v475 = vpop.f32.mrb[0].mxu0
  %v476 = vadd.f32 0.0, %v475
  %v477 = vpop.f32.mrb[0].mxu0
  %v478 = vpop.f32.mrb[0].mxu0
  %v479 = vadd.f32 0.0, %v478
  %v480 = vpop.f32.mrb[0].mxu0
  %481 = vmatprep.mubr.bf16.mxu0 0
  %482 = vmatmul.mubr.bf16.gmra.mrb[0].mxu0 %v297
  %v483 = vpop.f32.mrb[0].mxu0
  %v484 = vadd.f32 0.0, %v483
  %v485 = vpop.f32.mrb[0].mxu0
  %v486 = vpop.f32.mrb[0].mxu0
  %v487 = vadd.f32 0.0, %v486
  %v488 = vpop.f32.mrb[0].mxu0
  %489 = vmatprep.mubr.bf16.mxu0 0
  %490 = vmatmul.mubr.bf16.gmra.mrb[0].mxu0 %v300
  %v491 = vpop.f32.mrb[0].mxu0
  %v492 = vadd.f32 0.0, %v491
  %v493 = vpop.f32.mrb[0].mxu0
  %v494 = vpop.f32.mrb[0].mxu0
  %v495 = vadd.f32 0.0, %v494
  %v496 = vpop.f32.mrb[0].mxu0
  %497 = vmatprep.mubr.bf16.mxu0 0
  %498 = vmatmul.mubr.bf16.gmra.mrb[0].mxu0 %v303
  %v499 = vpop.f32.mrb[0].mxu0
  %v500 = vadd.f32 0.0, %v499
  %v501 = vpop.f32.mrb[0].mxu0
  %v502 = vpop.f32.mrb[0].mxu0
  %v503 = vadd.f32 0.0, %v502
  %v504 = vpop.f32.mrb[0].mxu0
  %505 = vmatprep.mubr.bf16.mxu0 0
  %506 = vmatmul.mubr.bf16.gmra.mrb[0].mxu0 %v306
  %v507 = vpop.f32.mrb[0].mxu0
  %v508 = vadd.f32 0.0, %v507
  %v509 = vpop.f32.mrb[0].mxu0
  %v510 = vpop.f32.mrb[0].mxu0
  %v511 = vadd.f32 0.0, %v510
  %v512 = vpop.f32.mrb[0].mxu0
  %513 = vmatprep.mubr.bf16.mxu0 0
  %514 = vmatmul.mubr.bf16.gmra.mrb[0].mxu0 %v309
  %v515 = vpop.f32.mrb[0].mxu0
  %v516 = vadd.f32 0.0, %v515
  %v517 = vpop.f32.mrb[0].mxu0
  %v518 = vpop.f32.mrb[0].mxu0
  %v519 = vadd.f32 0.0, %v518
  %v520 = vpop.f32.mrb[0].mxu0
  %521 = vmatprep.mubr.bf16.mxu0 0
  %522 = vmatmul.mubr.bf16.gmra.mrb[0].mxu0 %v312
  %v523 = vpop.f32.mrb[0].mxu0
  %v524 = vadd.f32 0.0, %v523
  %v525 = vpop.f32.mrb[0].mxu0
  %v526 = vpop.f32.mrb[0].mxu0
  %v527 = vadd.f32 0.0, %v526
  %v528 = vpop.f32.mrb[0].mxu0
  %529 = vmatprep.mubr.bf16.mxu0 0
  %530 = vmatmul.mubr.bf16.gmra.mrb[0].mxu0 %v315
  %v531 = vpop.f32.mrb[0].mxu0
  %v532 = vadd.f32 0.0, %v531
  %v533 = vpop.f32.mrb[0].mxu0
  %v534 = vpop.f32.mrb[0].mxu0
  %v535 = vadd.f32 0.0, %v534
  %v536 = vpop.f32.mrb[0].mxu0
  %537 = vmatprep.mubr.bf16.mxu0 0
  %538 = vmatmul.mubr.bf16.gmra.mrb[0].mxu0 %v318
  %v539 = vpop.f32.mrb[0].mxu0
  %v540 = vadd.f32 0.0, %v539
  %v541 = vpop.f32.mrb[0].mxu0
  %v542 = vpop.f32.mrb[0].mxu0
  %v543 = vadd.f32 0.0, %v542
  %v544 = vpop.f32.mrb[0].mxu0
  %545 = vmatprep.mubr.bf16.mxu0 0
  %546 = vmatmul.mubr.bf16.gmra.mrb[0].mxu0 %v321
  %v547 = vpop.f32.mrb[0].mxu0
  %v548 = vadd.f32 0.0, %v547
  %v549 = vpop.f32.mrb[0].mxu0
  %v550 = vpop.f32.mrb[0].mxu0
  %v551 = vadd.f32 0.0, %v550
  %v552 = vpop.f32.mrb[0].mxu0
  %553 = vmatprep.mubr.bf16.mxu0 0
  %554 = vmatmul.mubr.bf16.gmra.mrb[0].mxu0 %v324
  %v555 = vpop.f32.mrb[0].mxu0
  %v556 = vadd.f32 0.0, %v555
  %v557 = vpop.f32.mrb[0].mxu0
  %v558 = vpop.f32.mrb[0].mxu0
  %v559 = vadd.f32 0.0, %v558
  %v560 = vpop.f32.mrb[0].mxu0
  %561 = vmatprep.mubr.bf16.mxu0 0
  %562 = vmatmul.mubr.bf16.gmra.mrb[0].mxu0 %v327
  %v563 = vpop.f32.mrb[0].mxu0
  %v564 = vadd.f32 0.0, %v563
  %v565 = vpop.f32.mrb[0].mxu0
  %v566 = vpop.f32.mrb[0].mxu0
  %v567 = vadd.f32 0.0, %v566
  %v568 = vpop.f32.mrb[0].mxu0
  %569 = vmatprep.mubr.bf16.mxu0 0
  %570 = vmatmul.mubr.bf16.gmra.mrb[0].mxu0 %v330
  %v571 = vpop.f32.mrb[0].mxu0
  %v572 = vadd.f32 0.0, %v571
  %v573 = vpop.f32.mrb[0].mxu0
  %v574 = vpop.f32.mrb[0].mxu0
  %v575 = vadd.f32 0.0, %v574
  %v576 = vpop.f32.mrb[0].mxu0
  %577 = vmatprep.mubr.bf16.mxu0 0
  %578 = vmatmul.mubr.bf16.gmra.mrb[0].mxu0 %v333
  %v579 = vpop.f32.mrb[0].mxu0
  %v580 = vadd.f32 0.0, %v579
  %v581 = vpop.f32.mrb[0].mxu0
  %v582 = vpop.f32.mrb[0].mxu0
  %v583 = vadd.f32 0.0, %v582
  %v584 = vpop.f32.mrb[0].mxu0
  %585 = vmatprep.mubr.bf16.mxu0 0
  %586 = vmatmul.mubr.bf16.gmra.mrb[0].mxu0 %v336
  %v587 = vpop.f32.mrb[0].mxu0
  %v588 = vadd.f32 0.0, %v587
  %v589 = vpop.f32.mrb[0].mxu0
  %v590 = vpop.f32.mrb[0].mxu0
  %v591 = vadd.f32 0.0, %v590
  %v592 = vpop.f32.mrb[0].mxu0
  %593 = vmatprep.mubr.bf16.mxu0 0
  %594 = vmatmul.mubr.bf16.gmra.mrb[0].mxu0 %v339
  %v595 = vpop.f32.mrb[0].mxu0
  %v596 = vadd.f32 0.0, %v595
  %v597 = vpop.f32.mrb[0].mxu0
  %v598 = vpop.f32.mrb[0].mxu0
  %v599 = vadd.f32 0.0, %v598
  %v600 = vpop.f32.mrb[0].mxu0
  %601 = vmatprep.mubr.bf16.mxu0 0
  %602 = vmatmul.mubr.bf16.gmra.mrb[0].mxu0 %v342
  %v603 = vpop.f32.mrb[0].mxu0
  %v604 = vadd.f32 0.0, %v603
  %v605 = vpop.f32.mrb[0].mxu0
  %v606 = vpop.f32.mrb[0].mxu0
  %v607 = vadd.f32 0.0, %v606
  %v608 = vpop.f32.mrb[0].mxu0
  %609 = vmatprep.mubr.bf16.mxu0 0
  %610 = vmatmul.mubr.bf16.gmra.mrb[0].mxu0 %v345
  %v611 = vpop.f32.mrb[0].mxu0
  %v612 = vadd.f32 0.0, %v611
  %v613 = vpop.f32.mrb[0].mxu0
  %v614 = vpop.f32.mrb[0].mxu0
  %v615 = vadd.f32 0.0, %v614
  %v616 = vpop.f32.mrb[0].mxu0
  %617 = vmatprep.mubr.bf16.mxu0 0
  %618 = vmatmul.mubr.bf16.gmra.mrb[0].mxu0 %v348
  %v619 = vpop.f32.mrb[0].mxu0
  %v620 = vadd.f32 0.0, %v619
  %v621 = vpop.f32.mrb[0].mxu0
  %v622 = vpop.f32.mrb[0].mxu0
  %v623 = vadd.f32 0.0, %v622
  %v624 = vpop.f32.mrb[0].mxu0
  %625 = vmatprep.mubr.bf16.mxu0 0
  %626 = vmatmul.mubr.bf16.gmra.mrb[0].mxu0 %v351
  %v627 = vpop.f32.mrb[0].mxu0
  %v628 = vadd.f32 0.0, %v627
  %v629 = vpop.f32.mrb[0].mxu0
  %v630 = vpop.f32.mrb[0].mxu0
  %v631 = vadd.f32 0.0, %v630
  %v632 = vpop.f32.mrb[0].mxu0
  %633 = vmatprep.mubr.bf16.mxu0 0
  %634 = vmatmul.mubr.bf16.gmra.mrb[0].mxu0 %v354
  %v635 = vpop.f32.mrb[0].mxu0
  %v636 = vadd.f32 0.0, %v635
  %v637 = vpop.f32.mrb[0].mxu0
  %v638 = vpop.f32.mrb[0].mxu0
  %v639 = vadd.f32 0.0, %v638
  %v640 = vpop.f32.mrb[0].mxu0
  %641 = vmatprep.mubr.bf16.mxu0 0
  %642 = vmatmul.mubr.bf16.gmra.mrb[0].mxu0 %v357
  %v643 = vpop.f32.mrb[0].mxu0
  %v644 = vadd.f32 0.0, %v643
  %v645 = vpop.f32.mrb[0].mxu0
  %v646 = vpop.f32.mrb[0].mxu0
  %v647 = vadd.f32 0.0, %v646
  %v648 = vpop.f32.mrb[0].mxu0
  %649 = vmatprep.mubr.bf16.mxu0 0
  %650 = vmatmul.mubr.bf16.gmra.mrb[0].mxu0 %v360
  %v651 = vpop.f32.mrb[0].mxu0
  %v652 = vadd.f32 0.0, %v651
  %v653 = vpop.f32.mrb[0].mxu0
  %v654 = vpop.f32.mrb[0].mxu0
  %v655 = vadd.f32 0.0, %v654
  %v656 = vpop.f32.mrb[0].mxu0
  %657 = vdwg.mxu0
  %v658 = vld [vmem:[%s2] sm:$0x1]
  %v660 = vlaneseq
  %v661 = vshrl.u32 %v660, 7
  %v662 = vsub.s32 0, %v661
  %v663 = vrot.slane %v658, %v662
  %v665 = vmul.f32 %v404, %v663
  %v666 = vmul.f32 %v407, %v663
  %v667 = vmul.f32 %v412, %v663
  %v668 = vmul.f32 %v415, %v663
  %v669 = vmul.f32 %v420, %v663
  %v670 = vmul.f32 %v423, %v663
  %v671 = vmul.f32 %v428, %v663
  %v672 = vmul.f32 %v431, %v663
  %v673 = vmul.f32 %v436, %v663
  %v674 = vmul.f32 %v439, %v663
  %v675 = vmul.f32 %v444, %v663
  %v676 = vmul.f32 %v447, %v663
  %v677 = vmul.f32 %v452, %v663
  %v678 = vmul.f32 %v455, %v663
  %v679 = vmul.f32 %v460, %v663
  %v680 = vmul.f32 %v463, %v663
  %v681 = vmul.f32 %v468, %v663
  %v682 = vmul.f32 %v471, %v663
  %v683 = vmul.f32 %v476, %v663
  %v684 = vmul.f32 %v479, %v663
  %v685 = vmul.f32 %v484, %v663
  %v686 = vmul.f32 %v487, %v663
  %v687 = vmul.f32 %v492, %v663
  %v688 = vmul.f32 %v495, %v663
  %v689 = vmul.f32 %v500, %v663
  %v690 = vmul.f32 %v503, %v663
  %v691 = vmul.f32 %v508, %v663
  %v692 = vmul.f32 %v511, %v663
  %v693 = vmul.f32 %v516, %v663
  %v694 = vmul.f32 %v519, %v663
  %v695 = vmul.f32 %v524, %v663
  %v696 = vmul.f32 %v527, %v663
  %v697 = vmul.f32 %v532, %v663
  %v698 = vmul.f32 %v535, %v663
  %v699 = vmul.f32 %v540, %v663
  %v700 = vmul.f32 %v543, %v663
  %v701 = vmul.f32 %v548, %v663
  %v702 = vmul.f32 %v551, %v663
  %v703 = vmul.f32 %v556, %v663
  %v704 = vmul.f32 %v559, %v663
  %v705 = vmul.f32 %v564, %v663
  %v706 = vmul.f32 %v567, %v663
  %v707 = vmul.f32 %v572, %v663
  %v708 = vmul.f32 %v575, %v663
  %v709 = vmul.f32 %v580, %v663
  %v710 = vmul.f32 %v583, %v663
  %v711 = vmul.f32 %v588, %v663
  %v712 = vmul.f32 %v591, %v663
  %v713 = vmul.f32 %v596, %v663
  %v714 = vmul.f32 %v599, %v663
  %v715 = vmul.f32 %v604, %v663
  %v716 = vmul.f32 %v607, %v663
  %v717 = vmul.f32 %v612, %v663
  %v718 = vmul.f32 %v615, %v663
  %v719 = vmul.f32 %v620, %v663
  %v720 = vmul.f32 %v623, %v663
  %v721 = vmul.f32 %v628, %v663
  %v722 = vmul.f32 %v631, %v663
  %v723 = vmul.f32 %v636, %v663
  %v724 = vmul.f32 %v639, %v663
  %v725 = vmul.f32 %v644, %v663
  %v726 = vmul.f32 %v647, %v663
  %v727 = vmul.f32 %v652, %v663
  %v728 = vmul.f32 %v655, %v663
  %v729 = vld [vmem:[%s3] sm:$0x1]
  %v731 = vlaneseq
  %v732 = vshrl.u32 %v731, 7
  %v733 = vsub.s32 0, %v732
  %v734 = vrot.slane %v729, %v733
  %v736 = vadd.f32 %v665, %v734
  %v737 = vadd.f32 %v666, %v734
  %v738 = vadd.f32 %v667, %v734
  %v739 = vadd.f32 %v668, %v734
  %v740 = vadd.f32 %v669, %v734
  %v741 = vadd.f32 %v670, %v734
  %v742 = vadd.f32 %v671, %v734
  %v743 = vadd.f32 %v672, %v734
  %v744 = vadd.f32 %v673, %v734
  %v745 = vadd.f32 %v674, %v734
  %v746 = vadd.f32 %v675, %v734
  %v747 = vadd.f32 %v676, %v734
  %v748 = vadd.f32 %v677, %v734
  %v749 = vadd.f32 %v678, %v734
  %v750 = vadd.f32 %v679, %v734
  %v751 = vadd.f32 %v680, %v734
  %v752 = vadd.f32 %v681, %v734
  %v753 = vadd.f32 %v682, %v734
  %v754 = vadd.f32 %v683, %v734
  %v755 = vadd.f32 %v684, %v734
  %v756 = vadd.f32 %v685, %v734
  %v757 = vadd.f32 %v686, %v734
  %v758 = vadd.f32 %v687, %v734
  %v759 = vadd.f32 %v688, %v734
  %v760 = vadd.f32 %v689, %v734
  %v761 = vadd.f32 %v690, %v734
  %v762 = vadd.f32 %v691, %v734
  %v763 = vadd.f32 %v692, %v734
  %v764 = vadd.f32 %v693, %v734
  %v765 = vadd.f32 %v694, %v734
  %v766 = vadd.f32 %v695, %v734
  %v767 = vadd.f32 %v696, %v734
  %v768 = vadd.f32 %v697, %v734
  %v769 = vadd.f32 %v698, %v734
  %v770 = vadd.f32 %v699, %v734
  %v771 = vadd.f32 %v700, %v734
  %v772 = vadd.f32 %v701, %v734
  %v773 = vadd.f32 %v702, %v734
  %v774 = vadd.f32 %v703, %v734
  %v775 = vadd.f32 %v704, %v734
  %v776 = vadd.f32 %v705, %v734
  %v777 = vadd.f32 %v706, %v734
  %v778 = vadd.f32 %v707, %v734
  %v779 = vadd.f32 %v708, %v734
  %v780 = vadd.f32 %v709, %v734
  %v781 = vadd.f32 %v710, %v734
  %v782 = vadd.f32 %v711, %v734
  %v783 = vadd.f32 %v712, %v734
  %v784 = vadd.f32 %v713, %v734
  %v785 = vadd.f32 %v714, %v734
  %v786 = vadd.f32 %v715, %v734
  %v787 = vadd.f32 %v716, %v734
  %v788 = vadd.f32 %v717, %v734
  %v789 = vadd.f32 %v718, %v734
  %v790 = vadd.f32 %v719, %v734
  %v791 = vadd.f32 %v720, %v734
  %v792 = vadd.f32 %v721, %v734
  %v793 = vadd.f32 %v722, %v734
  %v794 = vadd.f32 %v723, %v734
  %v795 = vadd.f32 %v724, %v734
  %v796 = vadd.f32 %v725, %v734
  %v797 = vadd.f32 %v726, %v734
  %v798 = vadd.f32 %v727, %v734
  %v799 = vadd.f32 %v728, %v734
  %v800 = vmax.f32 %v736, 0.0
  %v801 = vmax.f32 %v737, 0.0
  %v802 = vmax.f32 %v738, 0.0
  %v803 = vmax.f32 %v739, 0.0
  %v804 = vmax.f32 %v740, 0.0
  %v805 = vmax.f32 %v741, 0.0
  %v806 = vmax.f32 %v742, 0.0
  %v807 = vmax.f32 %v743, 0.0
  %v808 = vmax.f32 %v744, 0.0
  %v809 = vmax.f32 %v745, 0.0
  %v810 = vmax.f32 %v746, 0.0
  %v811 = vmax.f32 %v747, 0.0
  %v812 = vmax.f32 %v748, 0.0
  %v813 = vmax.f32 %v749, 0.0
  %v814 = vmax.f32 %v750, 0.0
  %v815 = vmax.f32 %v751, 0.0
  %v816 = vmax.f32 %v752, 0.0
  %v817 = vmax.f32 %v753, 0.0
  %v818 = vmax.f32 %v754, 0.0
  %v819 = vmax.f32 %v755, 0.0
  %v820 = vmax.f32 %v756, 0.0
  %v821 = vmax.f32 %v757, 0.0
  %v822 = vmax.f32 %v758, 0.0
  %v823 = vmax.f32 %v759, 0.0
  %v824 = vmax.f32 %v760, 0.0
  %v825 = vmax.f32 %v761, 0.0
  %v826 = vmax.f32 %v762, 0.0
  %v827 = vmax.f32 %v763, 0.0
  %v828 = vmax.f32 %v764, 0.0
  %v829 = vmax.f32 %v765, 0.0
  %v830 = vmax.f32 %v766, 0.0
  %v831 = vmax.f32 %v767, 0.0
  %v832 = vmax.f32 %v768, 0.0
  %v833 = vmax.f32 %v769, 0.0
  %v834 = vmax.f32 %v770, 0.0
  %v835 = vmax.f32 %v771, 0.0
  %v836 = vmax.f32 %v772, 0.0
  %v837 = vmax.f32 %v773, 0.0
  %v838 = vmax.f32 %v774, 0.0
  %v839 = vmax.f32 %v775, 0.0
  %v840 = vmax.f32 %v776, 0.0
  %v841 = vmax.f32 %v777, 0.0
  %v842 = vmax.f32 %v778, 0.0
  %v843 = vmax.f32 %v779, 0.0
  %v844 = vmax.f32 %v780, 0.0
  %v845 = vmax.f32 %v781, 0.0
  %v846 = vmax.f32 %v782, 0.0
  %v847 = vmax.f32 %v783, 0.0
  %v848 = vmax.f32 %v784, 0.0
  %v849 = vmax.f32 %v785, 0.0
  %v850 = vmax.f32 %v786, 0.0
  %v851 = vmax.f32 %v787, 0.0
  %v852 = vmax.f32 %v788, 0.0
  %v853 = vmax.f32 %v789, 0.0
  %v854 = vmax.f32 %v790, 0.0
  %v855 = vmax.f32 %v791, 0.0
  %v856 = vmax.f32 %v792, 0.0
  %v857 = vmax.f32 %v793, 0.0
  %v858 = vmax.f32 %v794, 0.0
  %v859 = vmax.f32 %v795, 0.0
  %v860 = vmax.f32 %v796, 0.0
  %v861 = vmax.f32 %v797, 0.0
  %v862 = vmax.f32 %v798, 0.0
  %v863 = vmax.f32 %v799, 0.0
  %v864 = vpack.c.bf16 %v801, %v800
  %v865 = vpack.c.bf16 %v803, %v802
  %v866 = vpack.c.bf16 %v805, %v804
  %v867 = vpack.c.bf16 %v807, %v806
  %v868 = vpack.c.bf16 %v809, %v808
  %v869 = vpack.c.bf16 %v811, %v810
  %v870 = vpack.c.bf16 %v813, %v812
  %v871 = vpack.c.bf16 %v815, %v814
  %v872 = vpack.c.bf16 %v817, %v816
  %v873 = vpack.c.bf16 %v819, %v818
  %v874 = vpack.c.bf16 %v821, %v820
  %v875 = vpack.c.bf16 %v823, %v822
  %v876 = vpack.c.bf16 %v825, %v824
  %v877 = vpack.c.bf16 %v827, %v826
  %v878 = vpack.c.bf16 %v829, %v828
  %v879 = vpack.c.bf16 %v831, %v830
  %v880 = vpack.c.bf16 %v833, %v832
  %v881 = vpack.c.bf16 %v835, %v834
  %v882 = vpack.c.bf16 %v837, %v836
  %v883 = vpack.c.bf16 %v839, %v838
  %v884 = vpack.c.bf16 %v841, %v840
  %v885 = vpack.c.bf16 %v843, %v842
  %v886 = vpack.c.bf16 %v845, %v844
  %v887 = vpack.c.bf16 %v847, %v846
  %v888 = vpack.c.bf16 %v849, %v848
  %v889 = vpack.c.bf16 %v851, %v850
  %v890 = vpack.c.bf16 %v853, %v852
  %v891 = vpack.c.bf16 %v855, %v854
  %v892 = vpack.c.bf16 %v857, %v856
  %v893 = vpack.c.bf16 %v859, %v858
  %v894 = vpack.c.bf16 %v861, %v860
  %v895 = vpack.c.bf16 %v863, %v862
  %v928 = vunpack.c.l.b16 %v864
  %v929 = vunpack.c.h.b16 %v864
  %v930 = vunpack.c.l.b16 %v865
  %v931 = vunpack.c.h.b16 %v865
  %v932 = vunpack.c.l.b16 %v866
  %v933 = vunpack.c.h.b16 %v866
  %v934 = vunpack.c.l.b16 %v867
  %v935 = vunpack.c.h.b16 %v867
  %v936 = vunpack.c.l.b16 %v868
  %v937 = vunpack.c.h.b16 %v868
  %v938 = vunpack.c.l.b16 %v869
  %v939 = vunpack.c.h.b16 %v869
  %v940 = vunpack.c.l.b16 %v870
  %v941 = vunpack.c.h.b16 %v870
  %v942 = vunpack.c.l.b16 %v871
  %v943 = vunpack.c.h.b16 %v871
  %v944 = vunpack.c.l.b16 %v872
  %v945 = vunpack.c.h.b16 %v872
  %v946 = vunpack.c.l.b16 %v873
  %v947 = vunpack.c.h.b16 %v873
  %v948 = vunpack.c.l.b16 %v874
  %v949 = vunpack.c.h.b16 %v874
  %v950 = vunpack.c.l.b16 %v875
  %v951 = vunpack.c.h.b16 %v875
  %v952 = vunpack.c.l.b16 %v876
  %v953 = vunpack.c.h.b16 %v876
  %v954 = vunpack.c.l.b16 %v877
  %v955 = vunpack.c.h.b16 %v877
  %v956 = vunpack.c.l.b16 %v878
  %v957 = vunpack.c.h.b16 %v878
  %v958 = vunpack.c.l.b16 %v879
  %v959 = vunpack.c.h.b16 %v879
  %v960 = vunpack.c.l.b16 %v880
  %v961 = vunpack.c.h.b16 %v880
  %v962 = vunpack.c.l.b16 %v881
  %v963 = vunpack.c.h.b16 %v881
  %v964 = vunpack.c.l.b16 %v882
  %v965 = vunpack.c.h.b16 %v882
  %v966 = vunpack.c.l.b16 %v883
  %v967 = vunpack.c.h.b16 %v883
  %v968 = vunpack.c.l.b16 %v884
  %v969 = vunpack.c.h.b16 %v884
  %v970 = vunpack.c.l.b16 %v885
  %v971 = vunpack.c.h.b16 %v885
  %v972 = vunpack.c.l.b16 %v886
  %v973 = vunpack.c.h.b16 %v886
  %v974 = vunpack.c.l.b16 %v887
  %v975 = vunpack.c.h.b16 %v887
  %v976 = vunpack.c.l.b16 %v888
  %v977 = vunpack.c.h.b16 %v888
  %v978 = vunpack.c.l.b16 %v889
  %v979 = vunpack.c.h.b16 %v889
  %v980 = vunpack.c.l.b16 %v890
  %v981 = vunpack.c.h.b16 %v890
  %v982 = vunpack.c.l.b16 %v891
  %v983 = vunpack.c.h.b16 %v891
  %v984 = vunpack.c.l.b16 %v892
  %v985 = vunpack.c.h.b16 %v892
  %v986 = vunpack.c.l.b16 %v893
  %v987 = vunpack.c.h.b16 %v893
  %v988 = vunpack.c.l.b16 %v894
  %v989 = vunpack.c.h.b16 %v894
  %v990 = vunpack.c.l.b16 %v895
  %v991 = vunpack.c.h.b16 %v895
  %v992 = vpack.c.b16 %v928, %v928
  %v993 = vpack.c.b16 %v929, %v929
  %v994 = vpack.c.b16 %v930, %v930
  %v995 = vpack.c.b16 %v931, %v931
  %v996 = vpack.c.b16 %v932, %v932
  %v997 = vpack.c.b16 %v933, %v933
  %v998 = vpack.c.b16 %v934, %v934
  %v999 = vpack.c.b16 %v935, %v935
  %v1000 = vpack.c.b16 %v936, %v936
  %v1001 = vpack.c.b16 %v937, %v937
  %v1002 = vpack.c.b16 %v938, %v938
  %v1003 = vpack.c.b16 %v939, %v939
  %v1004 = vpack.c.b16 %v940, %v940
  %v1005 = vpack.c.b16 %v941, %v941
  %v1006 = vpack.c.b16 %v942, %v942
  %v1007 = vpack.c.b16 %v943, %v943
  %v1008 = vpack.c.b16 %v944, %v944
  %v1009 = vpack.c.b16 %v945, %v945
  %v1010 = vpack.c.b16 %v946, %v946
  %v1011 = vpack.c.b16 %v947, %v947
  %v1012 = vpack.c.b16 %v948, %v948
  %v1013 = vpack.c.b16 %v949, %v949
  %v1014 = vpack.c.b16 %v950, %v950
  %v1015 = vpack.c.b16 %v951, %v951
  %v1016 = vpack.c.b16 %v952, %v952
  %v1017 = vpack.c.b16 %v953, %v953
  %v1018 = vpack.c.b16 %v954, %v954
  %v1019 = vpack.c.b16 %v955, %v955
  %v1020 = vpack.c.b16 %v956, %v956
  %v1021 = vpack.c.b16 %v957, %v957
  %v1022 = vpack.c.b16 %v958, %v958
  %v1023 = vpack.c.b16 %v959, %v959
  %v1024 = vpack.c.b16 %v960, %v960
  %v1025 = vpack.c.b16 %v961, %v961
  %v1026 = vpack.c.b16 %v962, %v962
  %v1027 = vpack.c.b16 %v963, %v963
  %v1028 = vpack.c.b16 %v964, %v964
  %v1029 = vpack.c.b16 %v965, %v965
  %v1030 = vpack.c.b16 %v966, %v966
  %v1031 = vpack.c.b16 %v967, %v967
  %v1032 = vpack.c.b16 %v968, %v968
  %v1033 = vpack.c.b16 %v969, %v969
  %v1034 = vpack.c.b16 %v970, %v970
  %v1035 = vpack.c.b16 %v971, %v971
  %v1036 = vpack.c.b16 %v972, %v972
  %v1037 = vpack.c.b16 %v973, %v973
  %v1038 = vpack.c.b16 %v974, %v974
  %v1039 = vpack.c.b16 %v975, %v975
  %v1040 = vpack.c.b16 %v976, %v976
  %v1041 = vpack.c.b16 %v977, %v977
  %v1042 = vpack.c.b16 %v978, %v978
  %v1043 = vpack.c.b16 %v979, %v979
  %v1044 = vpack.c.b16 %v980, %v980
  %v1045 = vpack.c.b16 %v981, %v981
  %v1046 = vpack.c.b16 %v982, %v982
  %v1047 = vpack.c.b16 %v983, %v983
  %v1048 = vpack.c.b16 %v984, %v984
  %v1049 = vpack.c.b16 %v985, %v985
  %v1050 = vpack.c.b16 %v986, %v986
  %v1051 = vpack.c.b16 %v987, %v987
  %v1052 = vpack.c.b16 %v988, %v988
  %v1053 = vpack.c.b16 %v989, %v989
  %v1054 = vpack.c.b16 %v990, %v990
  %v1055 = vpack.c.b16 %v991, %v991
  %1120 = vst [vmem:[%s4] sm:$0xf] %v992
  %1121 = vst [vmem:[%s4 + $0x4] sm:$0xf] %v993
  %1122 = vst [vmem:[%s4 + $0x8] sm:$0xf] %v994
  %1123 = vst [vmem:[%s4 + $0xc] sm:$0xf] %v995
  %1124 = vst [vmem:[%s4 + $0x10] sm:$0xf] %v996
  %1125 = vst [vmem:[%s4 + $0x14] sm:$0xf] %v997
  %1126 = vst [vmem:[%s4 + $0x18] sm:$0xf] %v998
  %1127 = vst [vmem:[%s4 + $0x1c] sm:$0xf] %v999
  %1128 = vst [vmem:[%s4 + $0x20] sm:$0xf] %v1000
  %1129 = vst [vmem:[%s4 + $0x24] sm:$0xf] %v1001
  %1130 = vst [vmem:[%s4 + $0x28] sm:$0xf] %v1002
  %1131 = vst [vmem:[%s4 + $0x2c] sm:$0xf] %v1003
  %1132 = vst [vmem:[%s4 + $0x30] sm:$0xf] %v1004
  %1133 = vst [vmem:[%s4 + $0x34] sm:$0xf] %v1005
  %1134 = vst [vmem:[%s4 + $0x38] sm:$0xf] %v1006
  %1135 = vst [vmem:[%s4 + $0x3c] sm:$0xf] %v1007
  %1136 = vst [vmem:[%s4 + $0x40] sm:$0xf] %v1008
  %1137 = vst [vmem:[%s4 + $0x44] sm:$0xf] %v1009
  %1138 = vst [vmem:[%s4 + $0x48] sm:$0xf] %v1010
  %1139 = vst [vmem:[%s4 + $0x4c] sm:$0xf] %v1011
  %1140 = vst [vmem:[%s4 + $0x50] sm:$0xf] %v1012
  %1141 = vst [vmem:[%s4 + $0x54] sm:$0xf] %v1013
  %1142 = vst [vmem:[%s4 + $0x58] sm:$0xf] %v1014
  %1143 = vst [vmem:[%s4 + $0x5c] sm:$0xf] %v1015
  %1144 = vst [vmem:[%s4 + $0x60] sm:$0xf] %v1016
  %1145 = vst [vmem:[%s4 + $0x64] sm:$0xf] %v1017
  %1146 = vst [vmem:[%s4 + $0x68] sm:$0xf] %v1018
  %1147 = vst [vmem:[%s4 + $0x6c] sm:$0xf] %v1019
  %1148 = vst [vmem:[%s4 + $0x70] sm:$0xf] %v1020
  %1149 = vst [vmem:[%s4 + $0x74] sm:$0xf] %v1021
  %1150 = vst [vmem:[%s4 + $0x78] sm:$0xf] %v1022
  %1151 = vst [vmem:[%s4 + $0x7c] sm:$0xf] %v1023
  %1152 = vst [vmem:[%s4 + $0x80] sm:$0xf] %v1024
  %1153 = vst [vmem:[%s4 + $0x84] sm:$0xf] %v1025
  %1154 = vst [vmem:[%s4 + $0x88] sm:$0xf] %v1026
  %1155 = vst [vmem:[%s4 + $0x8c] sm:$0xf] %v1027
  %1156 = vst [vmem:[%s4 + $0x90] sm:$0xf] %v1028
  %1157 = vst [vmem:[%s4 + $0x94] sm:$0xf] %v1029
  %1158 = vst [vmem:[%s4 + $0x98] sm:$0xf] %v1030
  %1159 = vst [vmem:[%s4 + $0x9c] sm:$0xf] %v1031
  %1160 = vst [vmem:[%s4 + $0xa0] sm:$0xf] %v1032
  %1161 = vst [vmem:[%s4 + $0xa4] sm:$0xf] %v1033
  %1162 = vst [vmem:[%s4 + $0xa8] sm:$0xf] %v1034
  %1163 = vst [vmem:[%s4 + $0xac] sm:$0xf] %v1035
  %1164 = vst [vmem:[%s4 + $0xb0] sm:$0xf] %v1036
  %1165 = vst [vmem:[%s4 + $0xb4] sm:$0xf] %v1037
  %1166 = vst [vmem:[%s4 + $0xb8] sm:$0xf] %v1038
  %1167 = vst [vmem:[%s4 + $0xbc] sm:$0xf] %v1039
  %1168 = vst [vmem:[%s4 + $0xc0] sm:$0xf] %v1040
  %1169 = vst [vmem:[%s4 + $0xc4] sm:$0xf] %v1041
  %1170 = vst [vmem:[%s4 + $0xc8] sm:$0xf] %v1042
  %1171 = vst [vmem:[%s4 + $0xcc] sm:$0xf] %v1043
  %1172 = vst [vmem:[%s4 + $0xd0] sm:$0xf] %v1044
  %1173 = vst [vmem:[%s4 + $0xd4] sm:$0xf] %v1045
  %1174 = vst [vmem:[%s4 + $0xd8] sm:$0xf] %v1046
  %1175 = vst [vmem:[%s4 + $0xdc] sm:$0xf] %v1047
  %1176 = vst [vmem:[%s4 + $0xe0] sm:$0xf] %v1048
  %1177 = vst [vmem:[%s4 + $0xe4] sm:$0xf] %v1049
  %1178 = vst [vmem:[%s4 + $0xe8] sm:$0xf] %v1050
  %1179 = vst [vmem:[%s4 + $0xec] sm:$0xf] %v1051
  %1180 = vst [vmem:[%s4 + $0xf0] sm:$0xf] %v1052
  %1181 = vst [vmem:[%s4 + $0xf4] sm:$0xf] %v1053
  %1182 = vst [vmem:[%s4 + $0xf8] sm:$0xf] %v1054
  %1183 = vst [vmem:[%s4 + $0xfc] sm:$0xf] %v1055
  // Predicated region
  $region18: #{forward.6} parent=0 // pred_check
    _
  $region19: #{forward.6} parent=0 // pred_check_branch
    %1185 = sbr.rel (0) target = $region21
  $region20: #{forward.6} parent=0 // pred_region
    _
  $region21: #{forward.6} parent=0 // pred_fallthru
    _
  // Predicated region
  $region22: #{forward.6} parent=0 // pred_check
    _
  $region23: #{forward.6} parent=0 // pred_check_branch
    %1187 = sbr.rel (0) target = $region25
  $region24: #{forward.6} parent=0 // pred_region
    _
  $region25: #{forward.6} parent=0 // pred_fallthru
    _

// kernel: forward.9
$region0: #{forward.9}
  #allocation0 [shape = 'u32[]', space=smem, size = 0x4, offset = 0x4, fixed_abs, tag = 'smem constant byte address 0x4 - core index']
  #allocation1 [shape = 'u32[144,128]{1,0:T(1,128)}', space=vmem, size = 0x12000, scoped, tag = 'internal scratch']
  %s0 = inlined_call_operand.vmem [shape: f32[14,2,256], index: 0, kind: input, shape index: {}]
  %s1 = inlined_call_operand.vmem [shape: f32[64,256], index: 1, kind: input, shape index: {}]
  %s2 = inlined_call_operand.vmem [shape: f32[14,2,64], index: 2, kind: output, shape index: {}]
  %s3 = sld [smem:[#allocation0]]
  $region25: #{forward.9} parent=0
    _
  %s5 = ssub.s32 1, %s3
  %s6 = scalar_select 0, %s5, %s3
  // Predicated region
  $region2: #{forward.9} parent=0 // pred_check
    _
  $region3: #{forward.9} parent=0 // pred_check_branch
    %8 = sbr.rel (0) target = $region5
  $region4: #{forward.9} parent=0 // pred_region
    _
  $region5: #{forward.9} parent=0 // pred_fallthru
    _
  // Predicated region
  $region6: #{forward.9} parent=0 // pred_check
    _
  $region7: #{forward.9} parent=0 // pred_check_branch
    %10 = sbr.rel (0) target = $region9
  $region8: #{forward.9} parent=0 // pred_region
    _
  $region9: #{forward.9} parent=0 // pred_fallthru
    _
  loop: start=0, step=1, limit=14
  $region10: #{forward.9} parent=0 // loop_pre_header
    _
  $region11: #{forward.9} parent=0 // loop_header
    %s12 = sphi 0, %s16
    %p13 = scmp.ge.s32.totalorder %s12, 14
    %v17 = vphi 0.0, %v203
    %v18 = vphi 0.0, %v215
  $region12: #{forward.9} parent=0 // loop_header_branch
    %15 = sbr.rel (%p13) target = $region16
  $region13: #{forward.9} parent=0 // loop_body
    %s19 = smul.u32 %s12, 2
    %s20 = smul.addr %s19, 2
    %s21 = scalar_lea.vmem %s0, %s20
    %v22 = vld [vmem:[%s21] sm:$0x3]
    %s23 = ssub.s32 13, %s12
    %s24 = smul.u32 %s23, 2
    %s25 = smul.addr %s24, 2
    %s26 = scalar_lea.vmem %s0, %s25
    %v27 = vld [vmem:[%s26 + $0x2] sm:$0x3]
    %v28 = vld [vmem:[%s1] sm:$0xff]
    %v29 = vld [vmem:[%s1 + $0x8] sm:$0xff]
    %v30 = vld [vmem:[%s1 + $0x10] sm:$0xff]
    %v31 = vld [vmem:[%s1 + $0x18] sm:$0xff]
    %v32 = vld [vmem:[%s1 + $0x20] sm:$0xff]
    %v33 = vld [vmem:[%s1 + $0x28] sm:$0xff]
    %v34 = vld [vmem:[%s1 + $0x30] sm:$0xff]
    %v35 = vld [vmem:[%s1 + $0x38] sm:$0xff]
    %v36 = vld [vmem:[%s1 + $0x40] sm:$0xff]
    %v37 = vld [vmem:[%s1 + $0x48] sm:$0xff]
    %v38 = vld [vmem:[%s1 + $0x50] sm:$0xff]
    %v39 = vld [vmem:[%s1 + $0x58] sm:$0xff]
    %v40 = vld [vmem:[%s1 + $0x60] sm:$0xff]
    %v41 = vld [vmem:[%s1 + $0x68] sm:$0xff]
    %v42 = vld [vmem:[%s1 + $0x70] sm:$0xff]
    %v43 = vld [vmem:[%s1 + $0x78] sm:$0xff]
    %vm44 = vcmask 523264
    %v46 = vsel %vm44, %v17, 0
    %48 = vmatprep.subr.mxu0 %v29
    %49 = vmatpush1.msra.mxu0 %v28
    %50 = vmatprep.subr.mxu0 %v31
    %51 = vmatpush1.msra.mxu0 %v30
    %52 = vmatprep.subr.mxu0 %v33
    %53 = vmatpush1.msra.mxu0 %v32
    %54 = vmatprep.subr.mxu0 %v35
    %55 = vmatpush1.msra.mxu0 %v34
    %56 = vmatprep.subr.mxu0 %v37
    %57 = vmatpush1.msra.mxu0 %v36
    %58 = vmatprep.subr.mxu0 %v39
    %59 = vmatpush1.msra.mxu0 %v38
    %60 = vmatprep.subr.mxu0 %v41
    %61 = vmatpush1.msra.mxu0 %v40
    %62 = vmatprep.subr.mxu0 %v43
    %63 = vmatpush1.msra.mxu0 %v42
    %64 = vmatprep.subr.mxu0 0.0
    %65 = vmatpush1.msra.mxu0 0.0
    %66 = vmatprep.subr.mxu0 0.0
    %67 = vmatpush1.msra.mxu0 0.0
    %68 = vmatprep.subr.mxu0 0.0
    %69 = vmatpush1.msra.mxu0 0.0
    %70 = vmatprep.subr.mxu0 0.0
    %71 = vmatpush1.msra.mxu0 0.0
    %72 = vmatprep.subr.mxu0 0.0
    %73 = vmatpush1.msra.mxu0 0.0
    %74 = vmatprep.subr.mxu0 0.0
    %75 = vmatpush1.msra.mxu0 0.0
    %76 = vmatprep.subr.mxu0 0.0
    %77 = vmatpush1.msra.mxu0 0.0
    %78 = vmatprep.subr.mxu0 0.0
    %79 = vmatpush1.msra.mxu0 0.0
    %80 = vmatprep.subr.mxu0 0.0
    %81 = vmatpush1.msra.mxu0 0.0
    %82 = vmatprep.subr.mxu0 0.0
    %83 = vmatpush1.msra.mxu0 0.0
    %84 = vmatprep.subr.mxu0 0.0
    %85 = vmatpush1.msra.mxu0 0.0
    %86 = vmatprep.subr.mxu0 0.0
    %87 = vmatpush1.msra.mxu0 0.0
    %88 = vmatprep.subr.mxu0 0.0
    %89 = vmatpush1.msra.mxu0 0.0
    %90 = vmatprep.subr.mxu0 0.0
    %91 = vmatpush1.msra.mxu0 0.0
    %92 = vmatprep.subr.mxu0 0.0
    %93 = vmatpush1.msra.mxu0 0.0
    %94 = vmatprep.subr.mxu0 0.0
    %95 = vmatpush1.msra.mxu0 0.0
    %96 = vmatprep.subr.mxu0 0.0
    %97 = vmatpush1.msra.mxu0 0.0
    %98 = vmatprep.subr.mxu0 0.0
    %99 = vmatpush1.msra.mxu0 0.0
    %100 = vmatprep.subr.mxu0 0.0
    %101 = vmatpush1.msra.mxu0 0.0
    %102 = vmatprep.subr.mxu0 0.0
    %103 = vmatpush1.msra.mxu0 0.0
    %104 = vmatprep.subr.mxu0 0.0
    %105 = vmatpush1.msra.mxu0 0.0
    %106 = vmatprep.subr.mxu0 0.0
    %107 = vmatpush1.msra.mxu0 0.0
    %108 = vmatprep.subr.mxu0 0.0
    %109 = vmatpush1.msra.mxu0 0.0
    %110 = vmatprep.subr.mxu0 0.0
    %111 = vmatpush1.msra.mxu0 0.0
    %112 = vmatprep.mubr.f32.mxu0 0.0
    %113 = vmatmul.mubr.f32.gmra.mrb[0].mxu0 %v46
    %v114 = vpop.f32.mrb[0].mxu0
    %v115 = vadd.f32 0.0, %v114
    %v116 = vpop.f32.mrb[0].mxu0
    %v117 = vadd.f32 0.0, %v116
    %118 = vdwg.mxu0
    %v119 = vadd.f32 %v22, %v115
    %v120 = vxor.u32 %v119, 2147483648
    %v121 = vmul.f32 %v120, 1.442695
    %v122 = vpow.pop %v121
    %v123 = vadd.f32 %v122, 1.0
    %v124 = vrcp.pop %v123
    %v125 = vmul.f32 1.0, %v124
    %v126 = vtanh.pop %v119
    %v129 = vunpack.c.l.s4 1983009808
    %v130 = vunpack.c.0.s8 %v129
    %v131 = vlaneseq
    %v132 = vshrl.u32 %v131, 7
    %v133 = vsub.s32 %v130, %v132
    %v134 = vrot.slane %v18, %v133
    %135 = vrot.lane.b32.xlu0 %v134, 32
    %v136 = vpop.permute.xlu0 %135
    %v138 = vmul.f32 %v125, %v136
    %140 = vrot.lane.b32.xlu0 %v126, 64
    %v141 = vpop.permute.xlu0 %140
    %v143 = vmul.f32 %v125, %v141
    %145 = vrot.lane.b32.xlu0 %v143, 32
    %v146 = vpop.permute.xlu0 %145
    %v148 = vadd.f32 %v138, %v146
    %v149 = vtanh.pop %v148
    %151 = vrot.lane.b32.xlu0 %v149, 64
    %v152 = vpop.permute.xlu0 %151
    %v154 = vmul.f32 %v125, %v152
    %v155 = vadd.f32 %v27, %v117
    %v156 = vxor.u32 %v155, 2147483648
    %v157 = vmul.f32 %v156, 1.442695
    %v158 = vpow.pop %v157
    %v159 = vadd.f32 %v158, 1.0
    %v160 = vrcp.pop %v159
    %v161 = vmul.f32 1.0, %v160
    %v162 = vtanh.pop %v155
    %v163 = vmul.f32 %v161, %v18
    %165 = vrot.lane.b32.xlu0 %v162, 64
    %v166 = vpop.permute.xlu0 %165
    %v168 = vmul.f32 %v161, %v166
    %170 = vrot.lane.b32.xlu0 %v168, 32
    %v171 = vpop.permute.xlu0 %170
    %v173 = vadd.f32 %v163, %v171
    %v174 = vtanh.pop %v173
    %176 = vrot.lane.b32.xlu0 %v174, 64
    %v177 = vpop.permute.xlu0 %176
    %v179 = vmul.f32 %v161, %v177
    %v182 = vunpack.c.l.s4 1983009808
    %v183 = vunpack.c.0.s8 %v182
    %v184 = vlaneseq
    %v185 = vshrl.u32 %v184, 7
    %v186 = vsub.s32 %v183, %v185
    %v187 = vrot.slane %v154, %v186
    %188 = vrot.lane.b32.xlu0 %v187, 32
    %v189 = vpop.permute.xlu0 %188
    %v193 = vunpack.c.l.s4 1983009808
    %v194 = vunpack.c.0.s8 %v193
    %v195 = vlaneseq
    %v196 = vshrl.u32 %v195, 7
    %v197 = vsub.s32 %v194, %v196
    %v198 = vrot.slane %v179, %v197
    %199 = vrot.lane.b32.xlu0 %v198, 64
    %v200 = vpop.permute.xlu0 %199
    %vm202 = vcmask 261120
    %v203 = vsel %vm202, %v189, %v200
    %v206 = vunpack.c.l.s4 1983009808
    %v207 = vunpack.c.0.s8 %v206
    %v208 = vlaneseq
    %v209 = vshrl.u32 %v208, 7
    %v210 = vsub.s32 %v207, %v209
    %v211 = vrot.slane %v148, %v210
    %212 = vrot.lane.b32.xlu0 %v211, 96
    %v213 = vpop.permute.xlu0 %212
    %v215 = vsel %vm202, %v213, %v173
    %s216 = scalar_lea.vmem %s2, %s19
    %vm217 = vcmask 254976
    %218 = vst.msk [vmem:[%s216] sm:$0x3] %vm217, %v203
    %s219 = scalar_lea.vmem %s2, %s24
    %vm220 = vcmask 517376
    %221 = vst.msk [vmem:[%s219] sm:$0x3] %vm220, %v203
  $region14: #{forward.9} parent=0 // loop_footer
    %s16 = sadd.s32 1, %s12
  $region15: #{forward.9} parent=0 // loop_footer_branch
    %11 = sbr.rel target = $region11
  $region16: #{forward.9} parent=0 // loop_exit
    _
  // Predicated region
  $region17: #{forward.9} parent=0 // pred_check
    _
  $region18: #{forward.9} parent=0 // pred_check_branch
    %223 = sbr.rel (0) target = $region20
  $region19: #{forward.9} parent=0 // pred_region
    _
  $region20: #{forward.9} parent=0 // pred_fallthru
    _
  // Predicated region
  $region21: #{forward.9} parent=0 // pred_check
    _
  $region22: #{forward.9} parent=0 // pred_check_branch
    %225 = sbr.rel (0) target = $region24
  $region23: #{forward.9} parent=0 // pred_region
    _
  $region24: #{forward.9} parent=0 // pred_fallthru
    _

// kernel: forward.8
$region0: #{forward.8}
  #allocation0 [shape = 'u32[]', space=smem, size = 0x4, offset = 0x4, fixed_abs, tag = 'smem constant byte address 0x4 - core index']
  #allocation1 [shape = 'u32[144,128]{1,0:T(1,128)}', space=vmem, size = 0x12000, scoped, tag = 'internal scratch']
  %s0 = inlined_call_operand.vmem [shape: bf16[256,224], index: 0, kind: input, shape index: {}]
  %s1 = inlined_call_operand.vmem [shape: bf16[224,256], index: 1, kind: input, shape index: {}]
  %s2 = inlined_call_operand.vmem [shape: f32[1,256], index: 2, kind: input, shape index: {}]
  %s3 = inlined_call_operand.vmem [shape: f32[256,256], index: 3, kind: output, shape index: {}]
  %s4 = sld [smem:[#allocation0]]
  $region22: #{forward.8} parent=0
    _
  %s6 = ssub.s32 1, %s4
  %s7 = scalar_select 0, %s6, %s4
  // Predicated region
  $region2: #{forward.8} parent=0 // pred_check
    _
  $region3: #{forward.8} parent=0 // pred_check_branch
    %9 = sbr.rel (0) target = $region5
  $region4: #{forward.8} parent=0 // pred_region
    _
  $region5: #{forward.8} parent=0 // pred_fallthru
    _
  // Predicated region
  $region6: #{forward.8} parent=0 // pred_check
    _
  $region7: #{forward.8} parent=0 // pred_check_branch
    %11 = sbr.rel (0) target = $region9
  $region8: #{forward.8} parent=0 // pred_region
    _
  $region9: #{forward.8} parent=0 // pred_fallthru
    _
  // Predicated region
  $region10: #{forward.8} parent=0 // pred_check
    _
  $region11: #{forward.8} parent=0 // pred_check_branch
    %13 = sbr.rel (0) target = $region13
  $region12: #{forward.8} parent=0 // pred_region
    _
  $region13: #{forward.8} parent=0 // pred_fallthru
    _
  %v15 = vld [vmem:[%s0] sm:$0xff]
  %v16 = vld [vmem:[%s0 + $0x8] sm:$0xff]
  %v17 = vld [vmem:[%s0 + $0x10] sm:$0xff]
  %v18 = vld [vmem:[%s0 + $0x18] sm:$0xff]
  %v19 = vld [vmem:[%s0 + $0x20] sm:$0xff]
  %v20 = vld [vmem:[%s0 + $0x28] sm:$0xff]
  %v21 = vld [vmem:[%s0 + $0x30] sm:$0xff]
  %v22 = vld [vmem:[%s0 + $0x38] sm:$0xff]
  %v23 = vld [vmem:[%s0 + $0x40] sm:$0xff]
  %v24 = vld [vmem:[%s0 + $0x48] sm:$0xff]
  %v25 = vld [vmem:[%s0 + $0x50] sm:$0xff]
  %v26 = vld [vmem:[%s0 + $0x58] sm:$0xff]
  %v27 = vld [vmem:[%s0 + $0x60] sm:$0xff]
  %v28 = vld [vmem:[%s0 + $0x68] sm:$0xff]
  %v29 = vld [vmem:[%s0 + $0x70] sm:$0xff]
  %v30 = vld [vmem:[%s0 + $0x78] sm:$0xff]
  %v31 = vld [vmem:[%s0 + $0x80] sm:$0xff]
  %v32 = vld [vmem:[%s0 + $0x88] sm:$0xff]
  %v33 = vld [vmem:[%s0 + $0x90] sm:$0xff]
  %v34 = vld [vmem:[%s0 + $0x98] sm:$0xff]
  %v35 = vld [vmem:[%s0 + $0xa0] sm:$0xff]
  %v36 = vld [vmem:[%s0 + $0xa8] sm:$0xff]
  %v37 = vld [vmem:[%s0 + $0xb0] sm:$0xff]
  %v38 = vld [vmem:[%s0 + $0xb8] sm:$0xff]
  %v39 = vld [vmem:[%s0 + $0xc0] sm:$0xff]
  %v40 = vld [vmem:[%s0 + $0xc8] sm:$0xff]
  %v41 = vld [vmem:[%s0 + $0xd0] sm:$0xff]
  %v42 = vld [vmem:[%s0 + $0xd8] sm:$0xff]
  %v43 = vld [vmem:[%s0 + $0xe0] sm:$0xff]
  %v44 = vld [vmem:[%s0 + $0xe8] sm:$0xff]
  %v45 = vld [vmem:[%s0 + $0xf0] sm:$0xff]
  %v46 = vld [vmem:[%s0 + $0xf8] sm:$0xff]
  %v47 = vld [vmem:[%s1] sm:$0xff]
  %v48 = vld [vmem:[%s1 + $0x8] sm:$0xff]
  %v49 = vld [vmem:[%s1 + $0x10] sm:$0xff]
  %v50 = vld [vmem:[%s1 + $0x18] sm:$0xff]
  %v51 = vld [vmem:[%s1 + $0x20] sm:$0xff]
  %v52 = vld [vmem:[%s1 + $0x28] sm:$0xff]
  %v53 = vld [vmem:[%s1 + $0x30] sm:$0xff]
  %v54 = vld [vmem:[%s1 + $0x38] sm:$0xff]
  %v55 = vld [vmem:[%s1 + $0x40] sm:$0xff]
  %v56 = vld [vmem:[%s1 + $0x48] sm:$0xff]
  %v57 = vld [vmem:[%s1 + $0x50] sm:$0xff]
  %v58 = vld [vmem:[%s1 + $0x58] sm:$0xff]
  %v59 = vld [vmem:[%s1 + $0x60] sm:$0xff]
  %v60 = vld [vmem:[%s1 + $0x68] sm:$0xff]
  %v61 = vld [vmem:[%s1 + $0x70] sm:$0xff]
  %v62 = vld [vmem:[%s1 + $0x78] sm:$0xff]
  %v63 = vld [vmem:[%s1 + $0x80] sm:$0xff]
  %v64 = vld [vmem:[%s1 + $0x88] sm:$0xff]
  %v65 = vld [vmem:[%s1 + $0x90] sm:$0xff]
  %v66 = vld [vmem:[%s1 + $0x98] sm:$0xff]
  %v67 = vld [vmem:[%s1 + $0xa0] sm:$0xff]
  %v68 = vld [vmem:[%s1 + $0xa8] sm:$0xff]
  %v69 = vld [vmem:[%s1 + $0xb0] sm:$0xff]
  %v70 = vld [vmem:[%s1 + $0xb8] sm:$0xff]
  %v71 = vld [vmem:[%s1 + $0xc0] sm:$0xff]
  %v72 = vld [vmem:[%s1 + $0xc8] sm:$0xff]
  %v73 = vld [vmem:[%s1 + $0xd0] sm:$0xff]
  %v74 = vld [vmem:[%s1 + $0xd8] sm:$0xff]
  %v75 = vld [vmem:[%s2] sm:$0x3]
  %v77 = vlaneseq
  %v78 = vshrl.u32 %v77, 7
  %v79 = vsub.s32 0, %v78
  %v80 = vrot.slane %v75, %v79
  %v81 = vlaneseq
  %v82 = vshrl.u32 %v81, 7
  %v83 = vsub.s32 1, %v82
  %v84 = vrot.slane %v75, %v83
  %v119 = vunpack.c.l.b16 %v15
  %v120 = vunpack.c.h.b16 %v15
  %v121 = vunpack.c.l.b16 %v16
  %v122 = vunpack.c.h.b16 %v16
  %v123 = vunpack.c.l.b16 %v17
  %v124 = vunpack.c.h.b16 %v17
  %v125 = vunpack.c.l.b16 %v18
  %v126 = vunpack.c.h.b16 %v18
  %v127 = vunpack.c.l.b16 %v19
  %v128 = vunpack.c.h.b16 %v19
  %v129 = vunpack.c.l.b16 %v20
  %v130 = vunpack.c.h.b16 %v20
  %v131 = vunpack.c.l.b16 %v21
  %v132 = vunpack.c.h.b16 %v21
  %v133 = vunpack.c.l.b16 %v22
  %v134 = vunpack.c.h.b16 %v22
  %v135 = vunpack.c.l.b16 %v23
  %v136 = vunpack.c.h.b16 %v23
  %v137 = vunpack.c.l.b16 %v24
  %v138 = vunpack.c.h.b16 %v24
  %v139 = vunpack.c.l.b16 %v25
  %v140 = vunpack.c.h.b16 %v25
  %v141 = vunpack.c.l.b16 %v26
  %v142 = vunpack.c.h.b16 %v26
  %v143 = vunpack.c.l.b16 %v27
  %v144 = vunpack.c.h.b16 %v27
  %v145 = vunpack.c.l.b16 %v28
  %v146 = vunpack.c.h.b16 %v28
  %v147 = vunpack.c.l.b16 %v29
  %v148 = vunpack.c.h.b16 %v29
  %v149 = vunpack.c.l.b16 %v30
  %v150 = vunpack.c.h.b16 %v30
  %v151 = vunpack.c.l.b16 %v31
  %v152 = vunpack.c.h.b16 %v31
  %v153 = vunpack.c.l.b16 %v32
  %v154 = vunpack.c.h.b16 %v32
  %v155 = vunpack.c.l.b16 %v33
  %v156 = vunpack.c.h.b16 %v33
  %v157 = vunpack.c.l.b16 %v34
  %v158 = vunpack.c.h.b16 %v34
  %v159 = vunpack.c.l.b16 %v35
  %v160 = vunpack.c.h.b16 %v35
  %v161 = vunpack.c.l.b16 %v36
  %v162 = vunpack.c.h.b16 %v36
  %v163 = vunpack.c.l.b16 %v37
  %v164 = vunpack.c.h.b16 %v37
  %v165 = vunpack.c.l.b16 %v38
  %v166 = vunpack.c.h.b16 %v38
  %v167 = vunpack.c.l.b16 %v39
  %v168 = vunpack.c.h.b16 %v39
  %v169 = vunpack.c.l.b16 %v40
  %v170 = vunpack.c.h.b16 %v40
  %v171 = vunpack.c.l.b16 %v41
  %v172 = vunpack.c.h.b16 %v41
  %v173 = vunpack.c.l.b16 %v42
  %v174 = vunpack.c.h.b16 %v42
  %v175 = vunpack.c.l.b16 %v43
  %v176 = vunpack.c.h.b16 %v43
  %v177 = vunpack.c.l.b16 %v44
  %v178 = vunpack.c.h.b16 %v44
  %v179 = vunpack.c.l.b16 %v45
  %v180 = vunpack.c.h.b16 %v45
  %v181 = vunpack.c.l.b16 %v46
  %v182 = vunpack.c.h.b16 %v46
  %v183 = vpack.c.b16 %v121, %v119
  %v184 = vpack.c.b16 %v122, %v120
  %v185 = vpack.c.b16 %v125, %v123
  %v186 = vpack.c.b16 %v126, %v124
  %v187 = vpack.c.b16 %v129, %v127
  %v188 = vpack.c.b16 %v130, %v128
  %v189 = vpack.c.b16 %v133, %v131
  %v190 = vpack.c.b16 %v134, %v132
  %v191 = vpack.c.b16 %v137, %v135
  %v192 = vpack.c.b16 %v138, %v136
  %v193 = vpack.c.b16 %v141, %v139
  %v194 = vpack.c.b16 %v142, %v140
  %v195 = vpack.c.b16 %v145, %v143
  %v196 = vpack.c.b16 %v146, %v144
  %v197 = vpack.c.b16 %v149, %v147
  %v198 = vpack.c.b16 %v150, %v148
  %v199 = vpack.c.b16 %v153, %v151
  %v200 = vpack.c.b16 %v154, %v152
  %v201 = vpack.c.b16 %v157, %v155
  %v202 = vpack.c.b16 %v158, %v156
  %v203 = vpack.c.b16 %v161, %v159
  %v204 = vpack.c.b16 %v162, %v160
  %v205 = vpack.c.b16 %v165, %v163
  %v206 = vpack.c.b16 %v166, %v164
  %v207 = vpack.c.b16 %v169, %v167
  %v208 = vpack.c.b16 %v170, %v168
  %v209 = vpack.c.b16 %v173, %v171
  %v210 = vpack.c.b16 %v174, %v172
  %v211 = vpack.c.b16 %v177, %v175
  %v212 = vpack.c.b16 %v178, %v176
  %v213 = vpack.c.b16 %v181, %v179
  %v214 = vpack.c.b16 %v182, %v180
  %v259 = vunpack.c.l.b16 %v47
  %v260 = vunpack.c.h.b16 %v47
  %v261 = vunpack.c.l.b16 %v48
  %v262 = vunpack.c.h.b16 %v48
  %v263 = vunpack.c.l.b16 %v49
  %v264 = vunpack.c.h.b16 %v49
  %v265 = vunpack.c.l.b16 %v50
  %v266 = vunpack.c.h.b16 %v50
  %v267 = vunpack.c.l.b16 %v51
  %v268 = vunpack.c.h.b16 %v51
  %v269 = vunpack.c.l.b16 %v52
  %v270 = vunpack.c.h.b16 %v52
  %v271 = vunpack.c.l.b16 %v53
  %v272 = vunpack.c.h.b16 %v53
  %v273 = vunpack.c.l.b16 %v54
  %v274 = vunpack.c.h.b16 %v54
  %v275 = vunpack.c.l.b16 %v55
  %v276 = vunpack.c.h.b16 %v55
  %v277 = vunpack.c.l.b16 %v56
  %v278 = vunpack.c.h.b16 %v56
  %v279 = vunpack.c.l.b16 %v57
  %v280 = vunpack.c.h.b16 %v57
  %v281 = vunpack.c.l.b16 %v58
  %v282 = vunpack.c.h.b16 %v58
  %v283 = vunpack.c.l.b16 %v59
  %v284 = vunpack.c.h.b16 %v59
  %v285 = vunpack.c.l.b16 %v60
  %v286 = vunpack.c.h.b16 %v60
  %v287 = vunpack.c.l.b16 %v61
  %v288 = vunpack.c.h.b16 %v61
  %v289 = vunpack.c.l.b16 %v62
  %v290 = vunpack.c.h.b16 %v62
  %v291 = vunpack.c.l.b16 %v63
  %v292 = vunpack.c.h.b16 %v63
  %v293 = vunpack.c.l.b16 %v64
  %v294 = vunpack.c.h.b16 %v64
  %v295 = vunpack.c.l.b16 %v65
  %v296 = vunpack.c.h.b16 %v65
  %v297 = vunpack.c.l.b16 %v66
  %v298 = vunpack.c.h.b16 %v66
  %v299 = vunpack.c.l.b16 %v67
  %v300 = vunpack.c.h.b16 %v67
  %v301 = vunpack.c.l.b16 %v68
  %v302 = vunpack.c.h.b16 %v68
  %v303 = vunpack.c.l.b16 %v69
  %v304 = vunpack.c.h.b16 %v69
  %v305 = vunpack.c.l.b16 %v70
  %v306 = vunpack.c.h.b16 %v70
  %v307 = vunpack.c.l.b16 %v71
  %v308 = vunpack.c.h.b16 %v71
  %v309 = vunpack.c.l.b16 %v72
  %v310 = vunpack.c.h.b16 %v72
  %v311 = vunpack.c.l.b16 %v73
  %v312 = vunpack.c.h.b16 %v73
  %v313 = vunpack.c.l.b16 %v74
  %v314 = vunpack.c.h.b16 %v74
  %v315 = vpack.c.b16 %v261, %v259
  %v316 = vpack.c.b16 %v262, %v260
  %v317 = vpack.c.b16 %v265, %v263
  %v318 = vpack.c.b16 %v266, %v264
  %v319 = vpack.c.b16 %v269, %v267
  %v320 = vpack.c.b16 %v270, %v268
  %v321 = vpack.c.b16 %v273, %v271
  %v322 = vpack.c.b16 %v274, %v272
  %v323 = vpack.c.b16 %v277, %v275
  %v324 = vpack.c.b16 %v278, %v276
  %v325 = vpack.c.b16 %v281, %v279
  %v326 = vpack.c.b16 %v282, %v280
  %v327 = vpack.c.b16 %v285, %v283
  %v328 = vpack.c.b16 %v286, %v284
  %v329 = vpack.c.b16 %v289, %v287
  %v330 = vpack.c.b16 %v290, %v288
  %v331 = vpack.c.b16 %v293, %v291
  %v332 = vpack.c.b16 %v294, %v292
  %v333 = vpack.c.b16 %v297, %v295
  %v334 = vpack.c.b16 %v298, %v296
  %v335 = vpack.c.b16 %v301, %v299
  %v336 = vpack.c.b16 %v302, %v300
  %v337 = vpack.c.b16 %v305, %v303
  %v338 = vpack.c.b16 %v306, %v304
  %v339 = vpack.c.b16 %v309, %v307
  %v340 = vpack.c.b16 %v310, %v308
  %v341 = vpack.c.b16 %v313, %v311
  %v342 = vpack.c.b16 %v314, %v312
  %vm371 = vcmask 785408
  %v373 = vsel %vm371, %v184, 0
  %v376 = vsel %vm371, %v186, 0
  %v379 = vsel %vm371, %v188, 0
  %v382 = vsel %vm371, %v190, 0
  %v385 = vsel %vm371, %v192, 0
  %v388 = vsel %vm371, %v194, 0
  %v391 = vsel %vm371, %v196, 0
  %v394 = vsel %vm371, %v198, 0
  %v397 = vsel %vm371, %v200, 0
  %v400 = vsel %vm371, %v202, 0
  %v403 = vsel %vm371, %v204, 0
  %v406 = vsel %vm371, %v206, 0
  %v409 = vsel %vm371, %v208, 0
  %v412 = vsel %vm371, %v210, 0
  %v415 = vsel %vm371, %v212, 0
  %v418 = vsel %vm371, %v214, 0
  %420 = vmatprep.subr.bf16.mxu0 %v316
  %421 = vmatpush1.bf16.msra.mxu0 %v315
  %422 = vmatprep.subr.bf16.mxu0 %v318
  %423 = vmatpush1.bf16.msra.mxu0 %v317
  %424 = vmatprep.subr.bf16.mxu0 %v320
  %425 = vmatpush1.bf16.msra.mxu0 %v319
  %426 = vmatprep.subr.bf16.mxu0 %v322
  %427 = vmatpush1.bf16.msra.mxu0 %v321
  %428 = vmatprep.subr.bf16.mxu0 %v324
  %429 = vmatpush1.bf16.msra.mxu0 %v323
  %430 = vmatprep.subr.bf16.mxu0 %v326
  %431 = vmatpush1.bf16.msra.mxu0 %v325
  %432 = vmatprep.subr.bf16.mxu0 %v328
  %433 = vmatpush1.bf16.msra.mxu0 %v327
  %434 = vmatprep.subr.bf16.mxu0 %v330
  %435 = vmatpush1.bf16.msra.mxu0 %v329
  %436 = vmatprep.subr.bf16.mxu0 %v332
  %437 = vmatpush1.bf16.msra.mxu0 %v331
  %438 = vmatprep.subr.bf16.mxu0 %v334
  %439 = vmatpush1.bf16.msra.mxu0 %v333
  %440 = vmatprep.subr.bf16.mxu0 %v336
  %441 = vmatpush1.bf16.msra.mxu0 %v335
  %442 = vmatprep.subr.bf16.mxu0 %v338
  %443 = vmatpush1.bf16.msra.mxu0 %v337
  %444 = vmatprep.subr.bf16.mxu0 %v340
  %445 = vmatpush1.bf16.msra.mxu0 %v339
  %446 = vmatprep.subr.bf16.mxu0 %v342
  %447 = vmatpush1.bf16.msra.mxu0 %v341
  %448 = vmatprep.subr.bf16.mxu0 0
  %449 = vmatpush1.bf16.msra.mxu0 0
  %450 = vmatprep.subr.bf16.mxu0 0
  %451 = vmatpush1.bf16.msra.mxu0 0
  %452 = vmatprep.mubr.bf16.mxu0 %v373
  %453 = vmatmul.mubr.bf16.gmra.mrb[0].mxu0 %v183
  %v454 = vpop.f32.mrb[0].mxu0
  %v455 = vadd.f32 %v80, %v454
  %v456 = vpop.f32.mrb[0].mxu0
  %v457 = vadd.f32 %v84, %v456
  %v458 = vpop.f32.mrb[0].mxu0
  %v459 = vadd.f32 %v80, %v458
  %v460 = vpop.f32.mrb[0].mxu0
  %v461 = vadd.f32 %v84, %v460
  %462 = vmatprep.mubr.bf16.mxu0 %v376
  %463 = vmatmul.mubr.bf16.gmra.mrb[0].mxu0 %v185
  %v464 = vpop.f32.mrb[0].mxu0
  %v465 = vadd.f32 %v80, %v464
  %v466 = vpop.f32.mrb[0].mxu0
  %v467 = vadd.f32 %v84, %v466
  %v468 = vpop.f32.mrb[0].mxu0
  %v469 = vadd.f32 %v80, %v468
  %v470 = vpop.f32.mrb[0].mxu0
  %v471 = vadd.f32 %v84, %v470
  %472 = vmatprep.mubr.bf16.mxu0 %v379
  %473 = vmatmul.mubr.bf16.gmra.mrb[0].mxu0 %v187
  %v474 = vpop.f32.mrb[0].mxu0
  %v475 = vadd.f32 %v80, %v474
  %v476 = vpop.f32.mrb[0].mxu0
  %v477 = vadd.f32 %v84, %v476
  %v478 = vpop.f32.mrb[0].mxu0
  %v479 = vadd.f32 %v80, %v478
  %v480 = vpop.f32.mrb[0].mxu0
  %v481 = vadd.f32 %v84, %v480
  %482 = vmatprep.mubr.bf16.mxu0 %v382
  %483 = vmatmul.mubr.bf16.gmra.mrb[0].mxu0 %v189
  %v484 = vpop.f32.mrb[0].mxu0
  %v485 = vadd.f32 %v80, %v484
  %v486 = vpop.f32.mrb[0].mxu0
  %v487 = vadd.f32 %v84, %v486
  %v488 = vpop.f32.mrb[0].mxu0
  %v489 = vadd.f32 %v80, %v488
  %v490 = vpop.f32.mrb[0].mxu0
  %v491 = vadd.f32 %v84, %v490
  %492 = vmatprep.mubr.bf16.mxu0 %v385
  %493 = vmatmul.mubr.bf16.gmra.mrb[0].mxu0 %v191
  %v494 = vpop.f32.mrb[0].mxu0
  %v495 = vadd.f32 %v80, %v494
  %v496 = vpop.f32.mrb[0].mxu0
  %v497 = vadd.f32 %v84, %v496
  %v498 = vpop.f32.mrb[0].mxu0
  %v499 = vadd.f32 %v80, %v498
  %v500 = vpop.f32.mrb[0].mxu0
  %v501 = vadd.f32 %v84, %v500
  %502 = vmatprep.mubr.bf16.mxu0 %v388
  %503 = vmatmul.mubr.bf16.gmra.mrb[0].mxu0 %v193
  %v504 = vpop.f32.mrb[0].mxu0
  %v505 = vadd.f32 %v80, %v504
  %v506 = vpop.f32.mrb[0].mxu0
  %v507 = vadd.f32 %v84, %v506
  %v508 = vpop.f32.mrb[0].mxu0
  %v509 = vadd.f32 %v80, %v508
  %v510 = vpop.f32.mrb[0].mxu0
  %v511 = vadd.f32 %v84, %v510
  %512 = vmatprep.mubr.bf16.mxu0 %v391
  %513 = vmatmul.mubr.bf16.gmra.mrb[0].mxu0 %v195
  %v514 = vpop.f32.mrb[0].mxu0
  %v515 = vadd.f32 %v80, %v514
  %v516 = vpop.f32.mrb[0].mxu0
  %v517 = vadd.f32 %v84, %v516
  %v518 = vpop.f32.mrb[0].mxu0
  %v519 = vadd.f32 %v80, %v518
  %v520 = vpop.f32.mrb[0].mxu0
  %v521 = vadd.f32 %v84, %v520
  %522 = vmatprep.mubr.bf16.mxu0 %v394
  %523 = vmatmul.mubr.bf16.gmra.mrb[0].mxu0 %v197
  %v524 = vpop.f32.mrb[0].mxu0
  %v525 = vadd.f32 %v80, %v524
  %v526 = vpop.f32.mrb[0].mxu0
  %v527 = vadd.f32 %v84, %v526
  %v528 = vpop.f32.mrb[0].mxu0
  %v529 = vadd.f32 %v80, %v528
  %v530 = vpop.f32.mrb[0].mxu0
  %v531 = vadd.f32 %v84, %v530
  %532 = vmatprep.mubr.bf16.mxu0 %v397
  %533 = vmatmul.mubr.bf16.gmra.mrb[0].mxu0 %v199
  %v534 = vpop.f32.mrb[0].mxu0
  %v535 = vadd.f32 %v80, %v534
  %v536 = vpop.f32.mrb[0].mxu0
  %v537 = vadd.f32 %v84, %v536
  %v538 = vpop.f32.mrb[0].mxu0
  %v539 = vadd.f32 %v80, %v538
  %v540 = vpop.f32.mrb[0].mxu0
  %v541 = vadd.f32 %v84, %v540
  %542 = vmatprep.mubr.bf16.mxu0 %v400
  %543 = vmatmul.mubr.bf16.gmra.mrb[0].mxu0 %v201
  %v544 = vpop.f32.mrb[0].mxu0
  %v545 = vadd.f32 %v80, %v544
  %v546 = vpop.f32.mrb[0].mxu0
  %v547 = vadd.f32 %v84, %v546
  %v548 = vpop.f32.mrb[0].mxu0
  %v549 = vadd.f32 %v80, %v548
  %v550 = vpop.f32.mrb[0].mxu0
  %v551 = vadd.f32 %v84, %v550
  %552 = vmatprep.mubr.bf16.mxu0 %v403
  %553 = vmatmul.mubr.bf16.gmra.mrb[0].mxu0 %v203
  %v554 = vpop.f32.mrb[0].mxu0
  %v555 = vadd.f32 %v80, %v554
  %v556 = vpop.f32.mrb[0].mxu0
  %v557 = vadd.f32 %v84, %v556
  %v558 = vpop.f32.mrb[0].mxu0
  %v559 = vadd.f32 %v80, %v558
  %v560 = vpop.f32.mrb[0].mxu0
  %v561 = vadd.f32 %v84, %v560
  %562 = vmatprep.mubr.bf16.mxu0 %v406
  %563 = vmatmul.mubr.bf16.gmra.mrb[0].mxu0 %v205
  %v564 = vpop.f32.mrb[0].mxu0
  %v565 = vadd.f32 %v80, %v564
  %v566 = vpop.f32.mrb[0].mxu0
  %v567 = vadd.f32 %v84, %v566
  %v568 = vpop.f32.mrb[0].mxu0
  %v569 = vadd.f32 %v80, %v568
  %v570 = vpop.f32.mrb[0].mxu0
  %v571 = vadd.f32 %v84, %v570
  %572 = vmatprep.mubr.bf16.mxu0 %v409
  %573 = vmatmul.mubr.bf16.gmra.mrb[0].mxu0 %v207
  %v574 = vpop.f32.mrb[0].mxu0
  %v575 = vadd.f32 %v80, %v574
  %v576 = vpop.f32.mrb[0].mxu0
  %v577 = vadd.f32 %v84, %v576
  %v578 = vpop.f32.mrb[0].mxu0
  %v579 = vadd.f32 %v80, %v578
  %v580 = vpop.f32.mrb[0].mxu0
  %v581 = vadd.f32 %v84, %v580
  %582 = vmatprep.mubr.bf16.mxu0 %v412
  %583 = vmatmul.mubr.bf16.gmra.mrb[0].mxu0 %v209
  %v584 = vpop.f32.mrb[0].mxu0
  %v585 = vadd.f32 %v80, %v584
  %v586 = vpop.f32.mrb[0].mxu0
  %v587 = vadd.f32 %v84, %v586
  %v588 = vpop.f32.mrb[0].mxu0
  %v589 = vadd.f32 %v80, %v588
  %v590 = vpop.f32.mrb[0].mxu0
  %v591 = vadd.f32 %v84, %v590
  %592 = vmatprep.mubr.bf16.mxu0 %v415
  %593 = vmatmul.mubr.bf16.gmra.mrb[0].mxu0 %v211
  %v594 = vpop.f32.mrb[0].mxu0
  %v595 = vadd.f32 %v80, %v594
  %v596 = vpop.f32.mrb[0].mxu0
  %v597 = vadd.f32 %v84, %v596
  %v598 = vpop.f32.mrb[0].mxu0
  %v599 = vadd.f32 %v80, %v598
  %v600 = vpop.f32.mrb[0].mxu0
  %v601 = vadd.f32 %v84, %v600
  %602 = vmatprep.mubr.bf16.mxu0 %v418
  %603 = vmatmul.mubr.bf16.gmra.mrb[0].mxu0 %v213
  %v604 = vpop.f32.mrb[0].mxu0
  %v605 = vadd.f32 %v80, %v604
  %v606 = vpop.f32.mrb[0].mxu0
  %v607 = vadd.f32 %v84, %v606
  %v608 = vpop.f32.mrb[0].mxu0
  %v609 = vadd.f32 %v80, %v608
  %v610 = vpop.f32.mrb[0].mxu0
  %v611 = vadd.f32 %v84, %v610
  %612 = vdwg.mxu0
  %613 = vst [vmem:[%s3] sm:$0xff] %v455
  %614 = vst [vmem:[%s3 + $0x8] sm:$0xff] %v457
  %615 = vst [vmem:[%s3 + $0x10] sm:$0xff] %v459
  %616 = vst [vmem:[%s3 + $0x18] sm:$0xff] %v461
  %617 = vst [vmem:[%s3 + $0x20] sm:$0xff] %v465
  %618 = vst [vmem:[%s3 + $0x28] sm:$0xff] %v467
  %619 = vst [vmem:[%s3 + $0x30] sm:$0xff] %v469
  %620 = vst [vmem:[%s3 + $0x38] sm:$0xff] %v471
  %621 = vst [vmem:[%s3 + $0x40] sm:$0xff] %v475
  %622 = vst [vmem:[%s3 + $0x48] sm:$0xff] %v477
  %623 = vst [vmem:[%s3 + $0x50] sm:$0xff] %v479
  %624 = vst [vmem:[%s3 + $0x58] sm:$0xff] %v481
  %625 = vst [vmem:[%s3 + $0x60] sm:$0xff] %v485
  %626 = vst [vmem:[%s3 + $0x68] sm:$0xff] %v487
  %627 = vst [vmem:[%s3 + $0x70] sm:$0xff] %v489
  %628 = vst [vmem:[%s3 + $0x78] sm:$0xff] %v491
  %629 = vst [vmem:[%s3 + $0x80] sm:$0xff] %v495
  %630 = vst [vmem:[%s3 + $0x88] sm:$0xff] %v497
  %631 = vst [vmem:[%s3 + $0x90] sm:$0xff] %v499
  %632 = vst [vmem:[%s3 + $0x98] sm:$0xff] %v501
  %633 = vst [vmem:[%s3 + $0xa0] sm:$0xff] %v505
  %634 = vst [vmem:[%s3 + $0xa8] sm:$0xff] %v507
  %635 = vst [vmem:[%s3 + $0xb0] sm:$0xff] %v509
  %636 = vst [vmem:[%s3 + $0xb8] sm:$0xff] %v511
  %637 = vst [vmem:[%s3 + $0xc0] sm:$0xff] %v515
  %638 = vst [vmem:[%s3 + $0xc8] sm:$0xff] %v517
  %639 = vst [vmem:[%s3 + $0xd0] sm:$0xff] %v519
  %640 = vst [vmem:[%s3 + $0xd8] sm:$0xff] %v521
  %641 = vst [vmem:[%s3 + $0xe0] sm:$0xff] %v525
  %642 = vst [vmem:[%s3 + $0xe8] sm:$0xff] %v527
  %643 = vst [vmem:[%s3 + $0xf0] sm:$0xff] %v529
  %644 = vst [vmem:[%s3 + $0xf8] sm:$0xff] %v531
  %645 = vst [vmem:[%s3 + $0x100] sm:$0xff] %v535
  %646 = vst [vmem:[%s3 + $0x108] sm:$0xff] %v537
  %647 = vst [vmem:[%s3 + $0x110] sm:$0xff] %v539
  %648 = vst [vmem:[%s3 + $0x118] sm:$0xff] %v541
  %649 = vst [vmem:[%s3 + $0x120] sm:$0xff] %v545
  %650 = vst [vmem:[%s3 + $0x128] sm:$0xff] %v547
  %651 = vst [vmem:[%s3 + $0x130] sm:$0xff] %v549
  %652 = vst [vmem:[%s3 + $0x138] sm:$0xff] %v551
  %653 = vst [vmem:[%s3 + $0x140] sm:$0xff] %v555
  %654 = vst [vmem:[%s3 + $0x148] sm:$0xff] %v557
  %655 = vst [vmem:[%s3 + $0x150] sm:$0xff] %v559
  %656 = vst [vmem:[%s3 + $0x158] sm:$0xff] %v561
  %657 = vst [vmem:[%s3 + $0x160] sm:$0xff] %v565
  %658 = vst [vmem:[%s3 + $0x168] sm:$0xff] %v567
  %659 = vst [vmem:[%s3 + $0x170] sm:$0xff] %v569
  %660 = vst [vmem:[%s3 + $0x178] sm:$0xff] %v571
  %661 = vst [vmem:[%s3 + $0x180] sm:$0xff] %v575
  %662 = vst [vmem:[%s3 + $0x188] sm:$0xff] %v577
  %663 = vst [vmem:[%s3 + $0x190] sm:$0xff] %v579
  %664 = vst [vmem:[%s3 + $0x198] sm:$0xff] %v581
  %665 = vst [vmem:[%s3 + $0x1a0] sm:$0xff] %v585
  %666 = vst [vmem:[%s3 + $0x1a8] sm:$0xff] %v587
  %667 = vst [vmem:[%s3 + $0x1b0] sm:$0xff] %v589
  %668 = vst [vmem:[%s3 + $0x1b8] sm:$0xff] %v591
  %669 = vst [vmem:[%s3 + $0x1c0] sm:$0xff] %v595
  %670 = vst [vmem:[%s3 + $0x1c8] sm:$0xff] %v597
  %671 = vst [vmem:[%s3 + $0x1d0] sm:$0xff] %v599
  %672 = vst [vmem:[%s3 + $0x1d8] sm:$0xff] %v601
  %673 = vst [vmem:[%s3 + $0x1e0] sm:$0xff] %v605
  %674 = vst [vmem:[%s3 + $0x1e8] sm:$0xff] %v607
  %675 = vst [vmem:[%s3 + $0x1f0] sm:$0xff] %v609
  %676 = vst [vmem:[%s3 + $0x1f8] sm:$0xff] %v611
  // Predicated region
  $region14: #{forward.8} parent=0 // pred_check
    _
  $region15: #{forward.8} parent=0 // pred_check_branch
    %678 = sbr.rel (0) target = $region17
  $region16: #{forward.8} parent=0 // pred_region
    _
  $region17: #{forward.8} parent=0 // pred_fallthru
    _
  // Predicated region
  $region18: #{forward.8} parent=0 // pred_check
    _
  $region19: #{forward.8} parent=0 // pred_check_branch
    %680 = sbr.rel (0) target = $region21
  $region20: #{forward.8} parent=0 // pred_region
    _
  $region21: #{forward.8} parent=0 // pred_fallthru
    _

// kernel: forward.7
$region0: #{forward.7}
  #allocation0 [shape = 'u32[]', space=smem, size = 0x4, offset = 0x4, fixed_abs, tag = 'smem constant byte address 0x4 - core index']
  #allocation1 [shape = 'u32[144,128]{1,0:T(1,128)}', space=vmem, size = 0x12000, scoped, tag = 'internal scratch']
  %s0 = inlined_call_operand.vmem [shape: bf16[256,2240], index: 0, kind: input, shape index: {}]
  %s1 = inlined_call_operand.vmem [shape: bf16[2240,128], index: 1, kind: input, shape index: {}]
  %s2 = inlined_call_operand.vmem [shape: f32[1,128], index: 2, kind: input, shape index: {}]
  %s3 = inlined_call_operand.vmem [shape: f32[1,128], index: 3, kind: input, shape index: {}]
  %s4 = inlined_call_operand.vmem [shape: bf16[256,128], index: 4, kind: output, shape index: {}]
  %s5 = sld [smem:[#allocation0]]
  $region26: #{forward.7} parent=0
    _
  %s7 = ssub.s32 1, %s5
  %s8 = scalar_select 0, %s7, %s5
  // Predicated region
  $region2: #{forward.7} parent=0 // pred_check
    _
  $region3: #{forward.7} parent=0 // pred_check_branch
    %10 = sbr.rel (0) target = $region5
  $region4: #{forward.7} parent=0 // pred_region
    _
  $region5: #{forward.7} parent=0 // pred_fallthru
    _
  // Predicated region
  $region6: #{forward.7} parent=0 // pred_check
    _
  $region7: #{forward.7} parent=0 // pred_check_branch
    %12 = sbr.rel (0) target = $region9
  $region8: #{forward.7} parent=0 // pred_region
    _
  $region9: #{forward.7} parent=0 // pred_fallthru
    _
  // Predicated region
  $region10: #{forward.7} parent=0 // pred_check
    _
  $region11: #{forward.7} parent=0 // pred_check_branch
    %14 = sbr.rel (0) target = $region13
  $region12: #{forward.7} parent=0 // pred_region
    _
  $region13: #{forward.7} parent=0 // pred_fallthru
    _
  // Predicated region
  $region14: #{forward.7} parent=0 // pred_check
    _
  $region15: #{forward.7} parent=0 // pred_check_branch
    %16 = sbr.rel (0) target = $region17
  $region16: #{forward.7} parent=0 // pred_region
    _
  $region17: #{forward.7} parent=0 // pred_fallthru
    _
  %v18 = vld [vmem:[%s0] sm:$0xff]
  %v19 = vld [vmem:[%s0 + $0x8] sm:$0xff]
  %v20 = vld [vmem:[%s0 + $0x10] sm:$0xff]
  %v21 = vld [vmem:[%s0 + $0x18] sm:$0xff]
  %v22 = vld [vmem:[%s0 + $0x20] sm:$0xff]
  %v23 = vld [vmem:[%s0 + $0x28] sm:$0xff]
  %v24 = vld [vmem:[%s0 + $0x30] sm:$0xff]
  %v25 = vld [vmem:[%s0 + $0x38] sm:$0xff]
  %v26 = vld [vmem:[%s0 + $0x40] sm:$0xff]
  %v27 = vld [vmem:[%s0 + $0x48] sm:$0xff]
  %v28 = vld [vmem:[%s0 + $0x50] sm:$0xff]
  %v29 = vld [vmem:[%s0 + $0x58] sm:$0xff]
  %v30 = vld [vmem:[%s0 + $0x60] sm:$0xff]
  %v31 = vld [vmem:[%s0 + $0x68] sm:$0xff]
  %v32 = vld [vmem:[%s0 + $0x70] sm:$0xff]
  %v33 = vld [vmem:[%s0 + $0x78] sm:$0xff]
  %v34 = vld [vmem:[%s0 + $0x80] sm:$0xff]
  %v35 = vld [vmem:[%s0 + $0x88] sm:$0xff]
  %v36 = vld [vmem:[%s0 + $0x90] sm:$0xff]
  %v37 = vld [vmem:[%s0 + $0x98] sm:$0xff]
  %v38 = vld [vmem:[%s0 + $0xa0] sm:$0xff]
  %v39 = vld [vmem:[%s0 + $0xa8] sm:$0xff]
  %v40 = vld [vmem:[%s0 + $0xb0] sm:$0xff]
  %v41 = vld [vmem:[%s0 + $0xb8] sm:$0xff]
  %v42 = vld [vmem:[%s0 + $0xc0] sm:$0xff]
  %v43 = vld [vmem:[%s0 + $0xc8] sm:$0xff]
  %v44 = vld [vmem:[%s0 + $0xd0] sm:$0xff]
  %v45 = vld [vmem:[%s0 + $0xd8] sm:$0xff]
  %v46 = vld [vmem:[%s0 + $0xe0] sm:$0xff]
  %v47 = vld [vmem:[%s0 + $0xe8] sm:$0xff]
  %v48 = vld [vmem:[%s0 + $0xf0] sm:$0xff]
  %v49 = vld [vmem:[%s0 + $0xf8] sm:$0xff]
  %v50 = vld [vmem:[%s0 + $0x100] sm:$0xff]
  %v51 = vld [vmem:[%s0 + $0x108] sm:$0xff]
  %v52 = vld [vmem:[%s0 + $0x110] sm:$0xff]
  %v53 = vld [vmem:[%s0 + $0x118] sm:$0xff]
  %v54 = vld [vmem:[%s0 + $0x120] sm:$0xff]
  %v55 = vld [vmem:[%s0 + $0x128] sm:$0xff]
  %v56 = vld [vmem:[%s0 + $0x130] sm:$0xff]
  %v57 = vld [vmem:[%s0 + $0x138] sm:$0xff]
  %v58 = vld [vmem:[%s0 + $0x140] sm:$0xff]
  %v59 = vld [vmem:[%s0 + $0x148] sm:$0xff]
  %v60 = vld [vmem:[%s0 + $0x150] sm:$0xff]
  %v61 = vld [vmem:[%s0 + $0x158] sm:$0xff]
  %v62 = vld [vmem:[%s0 + $0x160] sm:$0xff]
  %v63 = vld [vmem:[%s0 + $0x168] sm:$0xff]
  %v64 = vld [vmem:[%s0 + $0x170] sm:$0xff]
  %v65 = vld [vmem:[%s0 + $0x178] sm:$0xff]
  %v66 = vld [vmem:[%s0 + $0x180] sm:$0xff]
  %v67 = vld [vmem:[%s0 + $0x188] sm:$0xff]
  %v68 = vld [vmem:[%s0 + $0x190] sm:$0xff]
  %v69 = vld [vmem:[%s0 + $0x198] sm:$0xff]
  %v70 = vld [vmem:[%s0 + $0x1a0] sm:$0xff]
  %v71 = vld [vmem:[%s0 + $0x1a8] sm:$0xff]
  %v72 = vld [vmem:[%s0 + $0x1b0] sm:$0xff]
  %v73 = vld [vmem:[%s0 + $0x1b8] sm:$0xff]
  %v74 = vld [vmem:[%s0 + $0x1c0] sm:$0xff]
  %v75 = vld [vmem:[%s0 + $0x1c8] sm:$0xff]
  %v76 = vld [vmem:[%s0 + $0x1d0] sm:$0xff]
  %v77 = vld [vmem:[%s0 + $0x1d8] sm:$0xff]
  %v78 = vld [vmem:[%s0 + $0x1e0] sm:$0xff]
  %v79 = vld [vmem:[%s0 + $0x1e8] sm:$0xff]
  %v80 = vld [vmem:[%s0 + $0x1f0] sm:$0xff]
  %v81 = vld [vmem:[%s0 + $0x1f8] sm:$0xff]
  %v82 = vld [vmem:[%s0 + $0x200] sm:$0xff]
  %v83 = vld [vmem:[%s0 + $0x208] sm:$0xff]
  %v84 = vld [vmem:[%s0 + $0x210] sm:$0xff]
  %v85 = vld [vmem:[%s0 + $0x218] sm:$0xff]
  %v86 = vld [vmem:[%s0 + $0x220] sm:$0xff]
  %v87 = vld [vmem:[%s0 + $0x228] sm:$0xff]
  %v88 = vld [vmem:[%s0 + $0x230] sm:$0xff]
  %v89 = vld [vmem:[%s0 + $0x238] sm:$0xff]
  %v90 = vld [vmem:[%s0 + $0x240] sm:$0xff]
  %v91 = vld [vmem:[%s0 + $0x248] sm:$0xff]
  %v92 = vld [vmem:[%s0 + $0x250] sm:$0xff]
  %v93 = vld [vmem:[%s0 + $0x258] sm:$0xff]
  %v94 = vld [vmem:[%s0 + $0x260] sm:$0xff]
  %v95 = vld [vmem:[%s0 + $0x268] sm:$0xff]
  %v96 = vld [vmem:[%s0 + $0x270] sm:$0xff]
  %v97 = vld [vmem:[%s0 + $0x278] sm:$0xff]
  %v98 = vld [vmem:[%s0 + $0x280] sm:$0xff]
  %v99 = vld [vmem:[%s0 + $0x288] sm:$0xff]
  %v100 = vld [vmem:[%s0 + $0x290] sm:$0xff]
  %v101 = vld [vmem:[%s0 + $0x298] sm:$0xff]
  %v102 = vld [vmem:[%s0 + $0x2a0] sm:$0xff]
  %v103 = vld [vmem:[%s0 + $0x2a8] sm:$0xff]
  %v104 = vld [vmem:[%s0 + $0x2b0] sm:$0xff]
  %v105 = vld [vmem:[%s0 + $0x2b8] sm:$0xff]
  %v106 = vld [vmem:[%s0 + $0x2c0] sm:$0xff]
  %v107 = vld [vmem:[%s0 + $0x2c8] sm:$0xff]
  %v108 = vld [vmem:[%s0 + $0x2d0] sm:$0xff]
  %v109 = vld [vmem:[%s0 + $0x2d8] sm:$0xff]
  %v110 = vld [vmem:[%s0 + $0x2e0] sm:$0xff]
  %v111 = vld [vmem:[%s0 + $0x2e8] sm:$0xff]
  %v112 = vld [vmem:[%s0 + $0x2f0] sm:$0xff]
  %v113 = vld [vmem:[%s0 + $0x2f8] sm:$0xff]
  %v114 = vld [vmem:[%s0 + $0x300] sm:$0xff]
  %v115 = vld [vmem:[%s0 + $0x308] sm:$0xff]
  %v116 = vld [vmem:[%s0 + $0x310] sm:$0xff]
  %v117 = vld [vmem:[%s0 + $0x318] sm:$0xff]
  %v118 = vld [vmem:[%s0 + $0x320] sm:$0xff]
  %v119 = vld [vmem:[%s0 + $0x328] sm:$0xff]
  %v120 = vld [vmem:[%s0 + $0x330] sm:$0xff]
  %v121 = vld [vmem:[%s0 + $0x338] sm:$0xff]
  %v122 = vld [vmem:[%s0 + $0x340] sm:$0xff]
  %v123 = vld [vmem:[%s0 + $0x348] sm:$0xff]
  %v124 = vld [vmem:[%s0 + $0x350] sm:$0xff]
  %v125 = vld [vmem:[%s0 + $0x358] sm:$0xff]
  %v126 = vld [vmem:[%s0 + $0x360] sm:$0xff]
  %v127 = vld [vmem:[%s0 + $0x368] sm:$0xff]
  %v128 = vld [vmem:[%s0 + $0x370] sm:$0xff]
  %v129 = vld [vmem:[%s0 + $0x378] sm:$0xff]
  %v130 = vld [vmem:[%s0 + $0x380] sm:$0xff]
  %v131 = vld [vmem:[%s0 + $0x388] sm:$0xff]
  %v132 = vld [vmem:[%s0 + $0x390] sm:$0xff]
  %v133 = vld [vmem:[%s0 + $0x398] sm:$0xff]
  %v134 = vld [vmem:[%s0 + $0x3a0] sm:$0xff]
  %v135 = vld [vmem:[%s0 + $0x3a8] sm:$0xff]
  %v136 = vld [vmem:[%s0 + $0x3b0] sm:$0xff]
  %v137 = vld [vmem:[%s0 + $0x3b8] sm:$0xff]
  %v138 = vld [vmem:[%s0 + $0x3c0] sm:$0xff]
  %v139 = vld [vmem:[%s0 + $0x3c8] sm:$0xff]
  %v140 = vld [vmem:[%s0 + $0x3d0] sm:$0xff]
  %v141 = vld [vmem:[%s0 + $0x3d8] sm:$0xff]
  %v142 = vld [vmem:[%s0 + $0x3e0] sm:$0xff]
  %v143 = vld [vmem:[%s0 + $0x3e8] sm:$0xff]
  %v144 = vld [vmem:[%s0 + $0x3f0] sm:$0xff]
  %v145 = vld [vmem:[%s0 + $0x3f8] sm:$0xff]
  %v146 = vld [vmem:[%s0 + $0x400] sm:$0xff]
  %v147 = vld [vmem:[%s0 + $0x408] sm:$0xff]
  %v148 = vld [vmem:[%s0 + $0x410] sm:$0xff]
  %v149 = vld [vmem:[%s0 + $0x418] sm:$0xff]
  %v150 = vld [vmem:[%s0 + $0x420] sm:$0xff]
  %v151 = vld [vmem:[%s0 + $0x428] sm:$0xff]
  %v152 = vld [vmem:[%s0 + $0x430] sm:$0xff]
  %v153 = vld [vmem:[%s0 + $0x438] sm:$0xff]
  %v154 = vld [vmem:[%s0 + $0x440] sm:$0xff]
  %v155 = vld [vmem:[%s0 + $0x448] sm:$0xff]
  %v156 = vld [vmem:[%s0 + $0x450] sm:$0xff]
  %v157 = vld [vmem:[%s0 + $0x458] sm:$0xff]
  %v158 = vld [vmem:[%s0 + $0x460] sm:$0xff]
  %v159 = vld [vmem:[%s0 + $0x468] sm:$0xff]
  %v160 = vld [vmem:[%s0 + $0x470] sm:$0xff]
  %v161 = vld [vmem:[%s0 + $0x478] sm:$0xff]
  %v162 = vld [vmem:[%s0 + $0x480] sm:$0xff]
  %v163 = vld [vmem:[%s0 + $0x488] sm:$0xff]
  %v164 = vld [vmem:[%s0 + $0x490] sm:$0xff]
  %v165 = vld [vmem:[%s0 + $0x498] sm:$0xff]
  %v166 = vld [vmem:[%s0 + $0x4a0] sm:$0xff]
  %v167 = vld [vmem:[%s0 + $0x4a8] sm:$0xff]
  %v168 = vld [vmem:[%s0 + $0x4b0] sm:$0xff]
  %v169 = vld [vmem:[%s0 + $0x4b8] sm:$0xff]
  %v170 = vld [vmem:[%s0 + $0x4c0] sm:$0xff]
  %v171 = vld [vmem:[%s0 + $0x4c8] sm:$0xff]
  %v172 = vld [vmem:[%s0 + $0x4d0] sm:$0xff]
  %v173 = vld [vmem:[%s0 + $0x4d8] sm:$0xff]
  %v174 = vld [vmem:[%s0 + $0x4e0] sm:$0xff]
  %v175 = vld [vmem:[%s0 + $0x4e8] sm:$0xff]
  %v176 = vld [vmem:[%s0 + $0x4f0] sm:$0xff]
  %v177 = vld [vmem:[%s0 + $0x4f8] sm:$0xff]
  %v178 = vld [vmem:[%s0 + $0x500] sm:$0xff]
  %v179 = vld [vmem:[%s0 + $0x508] sm:$0xff]
  %v180 = vld [vmem:[%s0 + $0x510] sm:$0xff]
  %v181 = vld [vmem:[%s0 + $0x518] sm:$0xff]
  %v182 = vld [vmem:[%s0 + $0x520] sm:$0xff]
  %v183 = vld [vmem:[%s0 + $0x528] sm:$0xff]
  %v184 = vld [vmem:[%s0 + $0x530] sm:$0xff]
  %v185 = vld [vmem:[%s0 + $0x538] sm:$0xff]
  %v186 = vld [vmem:[%s0 + $0x540] sm:$0xff]
  %v187 = vld [vmem:[%s0 + $0x548] sm:$0xff]
  %v188 = vld [vmem:[%s0 + $0x550] sm:$0xff]
  %v189 = vld [vmem:[%s0 + $0x558] sm:$0xff]
  %v190 = vld [vmem:[%s0 + $0x560] sm:$0xff]
  %v191 = vld [vmem:[%s0 + $0x568] sm:$0xff]
  %v192 = vld [vmem:[%s0 + $0x570] sm:$0xff]
  %v193 = vld [vmem:[%s0 + $0x578] sm:$0xff]
  %v194 = vld [vmem:[%s0 + $0x580] sm:$0xff]
  %v195 = vld [vmem:[%s0 + $0x588] sm:$0xff]
  %v196 = vld [vmem:[%s0 + $0x590] sm:$0xff]
  %v197 = vld [vmem:[%s0 + $0x598] sm:$0xff]
  %v198 = vld [vmem:[%s0 + $0x5a0] sm:$0xff]
  %v199 = vld [vmem:[%s0 + $0x5a8] sm:$0xff]
  %v200 = vld [vmem:[%s0 + $0x5b0] sm:$0xff]
  %v201 = vld [vmem:[%s0 + $0x5b8] sm:$0xff]
  %v202 = vld [vmem:[%s0 + $0x5c0] sm:$0xff]
  %v203 = vld [vmem:[%s0 + $0x5c8] sm:$0xff]
  %v204 = vld [vmem:[%s0 + $0x5d0] sm:$0xff]
  %v205 = vld [vmem:[%s0 + $0x5d8] sm:$0xff]
  %v206 = vld [vmem:[%s0 + $0x5e0] sm:$0xff]
  %v207 = vld [vmem:[%s0 + $0x5e8] sm:$0xff]
  %v208 = vld [vmem:[%s0 + $0x5f0] sm:$0xff]
  %v209 = vld [vmem:[%s0 + $0x5f8] sm:$0xff]
  %v210 = vld [vmem:[%s0 + $0x600] sm:$0xff]
  %v211 = vld [vmem:[%s0 + $0x608] sm:$0xff]
  %v212 = vld [vmem:[%s0 + $0x610] sm:$0xff]
  %v213 = vld [vmem:[%s0 + $0x618] sm:$0xff]
  %v214 = vld [vmem:[%s0 + $0x620] sm:$0xff]
  %v215 = vld [vmem:[%s0 + $0x628] sm:$0xff]
  %v216 = vld [vmem:[%s0 + $0x630] sm:$0xff]
  %v217 = vld [vmem:[%s0 + $0x638] sm:$0xff]
  %v218 = vld [vmem:[%s0 + $0x640] sm:$0xff]
  %v219 = vld [vmem:[%s0 + $0x648] sm:$0xff]
  %v220 = vld [vmem:[%s0 + $0x650] sm:$0xff]
  %v221 = vld [vmem:[%s0 + $0x658] sm:$0xff]
  %v222 = vld [vmem:[%s0 + $0x660] sm:$0xff]
  %v223 = vld [vmem:[%s0 + $0x668] sm:$0xff]
  %v224 = vld [vmem:[%s0 + $0x670] sm:$0xff]
  %v225 = vld [vmem:[%s0 + $0x678] sm:$0xff]
  %v226 = vld [vmem:[%s0 + $0x680] sm:$0xff]
  %v227 = vld [vmem:[%s0 + $0x688] sm:$0xff]
  %v228 = vld [vmem:[%s0 + $0x690] sm:$0xff]
  %v229 = vld [vmem:[%s0 + $0x698] sm:$0xff]
  %v230 = vld [vmem:[%s0 + $0x6a0] sm:$0xff]
  %v231 = vld [vmem:[%s0 + $0x6a8] sm:$0xff]
  %v232 = vld [vmem:[%s0 + $0x6b0] sm:$0xff]
  %v233 = vld [vmem:[%s0 + $0x6b8] sm:$0xff]
  %v234 = vld [vmem:[%s0 + $0x6c0] sm:$0xff]
  %v235 = vld [vmem:[%s0 + $0x6c8] sm:$0xff]
  %v236 = vld [vmem:[%s0 + $0x6d0] sm:$0xff]
  %v237 = vld [vmem:[%s0 + $0x6d8] sm:$0xff]
  %v238 = vld [vmem:[%s0 + $0x6e0] sm:$0xff]
  %v239 = vld [vmem:[%s0 + $0x6e8] sm:$0xff]
  %v240 = vld [vmem:[%s0 + $0x6f0] sm:$0xff]
  %v241 = vld [vmem:[%s0 + $0x6f8] sm:$0xff]
  %v242 = vld [vmem:[%s0 + $0x700] sm:$0xff]
  %v243 = vld [vmem:[%s0 + $0x708] sm:$0xff]
  %v244 = vld [vmem:[%s0 + $0x710] sm:$0xff]
  %v245 = vld [vmem:[%s0 + $0x718] sm:$0xff]
  %v246 = vld [vmem:[%s0 + $0x720] sm:$0xff]
  %v247 = vld [vmem:[%s0 + $0x728] sm:$0xff]
  %v248 = vld [vmem:[%s0 + $0x730] sm:$0xff]
  %v249 = vld [vmem:[%s0 + $0x738] sm:$0xff]
  %v250 = vld [vmem:[%s0 + $0x740] sm:$0xff]
  %v251 = vld [vmem:[%s0 + $0x748] sm:$0xff]
  %v252 = vld [vmem:[%s0 + $0x750] sm:$0xff]
  %v253 = vld [vmem:[%s0 + $0x758] sm:$0xff]
  %v254 = vld [vmem:[%s0 + $0x760] sm:$0xff]
  %v255 = vld [vmem:[%s0 + $0x768] sm:$0xff]
  %v256 = vld [vmem:[%s0 + $0x770] sm:$0xff]
  %v257 = vld [vmem:[%s0 + $0x778] sm:$0xff]
  %v258 = vld [vmem:[%s0 + $0x780] sm:$0xff]
  %v259 = vld [vmem:[%s0 + $0x788] sm:$0xff]
  %v260 = vld [vmem:[%s0 + $0x790] sm:$0xff]
  %v261 = vld [vmem:[%s0 + $0x798] sm:$0xff]
  %v262 = vld [vmem:[%s0 + $0x7a0] sm:$0xff]
  %v263 = vld [vmem:[%s0 + $0x7a8] sm:$0xff]
  %v264 = vld [vmem:[%s0 + $0x7b0] sm:$0xff]
  %v265 = vld [vmem:[%s0 + $0x7b8] sm:$0xff]
  %v266 = vld [vmem:[%s0 + $0x7c0] sm:$0xff]
  %v267 = vld [vmem:[%s0 + $0x7c8] sm:$0xff]
  %v268 = vld [vmem:[%s0 + $0x7d0] sm:$0xff]
  %v269 = vld [vmem:[%s0 + $0x7d8] sm:$0xff]
  %v270 = vld [vmem:[%s0 + $0x7e0] sm:$0xff]
  %v271 = vld [vmem:[%s0 + $0x7e8] sm:$0xff]
  %v272 = vld [vmem:[%s0 + $0x7f0] sm:$0xff]
  %v273 = vld [vmem:[%s0 + $0x7f8] sm:$0xff]
  %v274 = vld [vmem:[%s0 + $0x800] sm:$0xff]
  %v275 = vld [vmem:[%s0 + $0x808] sm:$0xff]
  %v276 = vld [vmem:[%s0 + $0x810] sm:$0xff]
  %v277 = vld [vmem:[%s0 + $0x818] sm:$0xff]
  %v278 = vld [vmem:[%s0 + $0x820] sm:$0xff]
  %v279 = vld [vmem:[%s0 + $0x828] sm:$0xff]
  %v280 = vld [vmem:[%s0 + $0x830] sm:$0xff]
  %v281 = vld [vmem:[%s0 + $0x838] sm:$0xff]
  %v282 = vld [vmem:[%s0 + $0x840] sm:$0xff]
  %v283 = vld [vmem:[%s0 + $0x848] sm:$0xff]
  %v284 = vld [vmem:[%s0 + $0x850] sm:$0xff]
  %v285 = vld [vmem:[%s0 + $0x858] sm:$0xff]
  %v286 = vld [vmem:[%s0 + $0x860] sm:$0xff]
  %v287 = vld [vmem:[%s0 + $0x868] sm:$0xff]
  %v288 = vld [vmem:[%s0 + $0x870] sm:$0xff]
  %v289 = vld [vmem:[%s0 + $0x878] sm:$0xff]
  %v290 = vld [vmem:[%s0 + $0x880] sm:$0xff]
  %v291 = vld [vmem:[%s0 + $0x888] sm:$0xff]
  %v292 = vld [vmem:[%s0 + $0x890] sm:$0xff]
  %v293 = vld [vmem:[%s0 + $0x898] sm:$0xff]
  %v294 = vld [vmem:[%s0 + $0x8a0] sm:$0xff]
  %v295 = vld [vmem:[%s0 + $0x8a8] sm:$0xff]
  %v296 = vld [vmem:[%s0 + $0x8b0] sm:$0xff]
  %v297 = vld [vmem:[%s0 + $0x8b8] sm:$0xff]
  %v298 = vld [vmem:[%s0 + $0x8c0] sm:$0xff]
  %v299 = vld [vmem:[%s0 + $0x8c8] sm:$0xff]
  %v300 = vld [vmem:[%s0 + $0x8d0] sm:$0xff]
  %v301 = vld [vmem:[%s0 + $0x8d8] sm:$0xff]
  %v302 = vld [vmem:[%s0 + $0x8e0] sm:$0xff]
  %v303 = vld [vmem:[%s0 + $0x8e8] sm:$0xff]
  %v304 = vld [vmem:[%s0 + $0x8f0] sm:$0xff]
  %v305 = vld [vmem:[%s0 + $0x8f8] sm:$0xff]
  %v306 = vld [vmem:[%s1] sm:$0xf]
  %v307 = vld [vmem:[%s1 + $0x4] sm:$0xf]
  %v308 = vld [vmem:[%s1 + $0x8] sm:$0xf]
  %v309 = vld [vmem:[%s1 + $0xc] sm:$0xf]
  %v310 = vld [vmem:[%s1 + $0x10] sm:$0xf]
  %v311 = vld [vmem:[%s1 + $0x14] sm:$0xf]
  %v312 = vld [vmem:[%s1 + $0x18] sm:$0xf]
  %v313 = vld [vmem:[%s1 + $0x1c] sm:$0xf]
  %v314 = vld [vmem:[%s1 + $0x20] sm:$0xf]
  %v315 = vld [vmem:[%s1 + $0x24] sm:$0xf]
  %v316 = vld [vmem:[%s1 + $0x28] sm:$0xf]
  %v317 = vld [vmem:[%s1 + $0x2c] sm:$0xf]
  %v318 = vld [vmem:[%s1 + $0x30] sm:$0xf]
  %v319 = vld [vmem:[%s1 + $0x34] sm:$0xf]
  %v320 = vld [vmem:[%s1 + $0x38] sm:$0xf]
  %v321 = vld [vmem:[%s1 + $0x3c] sm:$0xf]
  %v322 = vld [vmem:[%s1 + $0x40] sm:$0xf]
  %v323 = vld [vmem:[%s1 + $0x44] sm:$0xf]
  %v324 = vld [vmem:[%s1 + $0x48] sm:$0xf]
  %v325 = vld [vmem:[%s1 + $0x4c] sm:$0xf]
  %v326 = vld [vmem:[%s1 + $0x50] sm:$0xf]
  %v327 = vld [vmem:[%s1 + $0x54] sm:$0xf]
  %v328 = vld [vmem:[%s1 + $0x58] sm:$0xf]
  %v329 = vld [vmem:[%s1 + $0x5c] sm:$0xf]
  %v330 = vld [vmem:[%s1 + $0x60] sm:$0xf]
  %v331 = vld [vmem:[%s1 + $0x64] sm:$0xf]
  %v332 = vld [vmem:[%s1 + $0x68] sm:$0xf]
  %v333 = vld [vmem:[%s1 + $0x6c] sm:$0xf]
  %v334 = vld [vmem:[%s1 + $0x70] sm:$0xf]
  %v335 = vld [vmem:[%s1 + $0x74] sm:$0xf]
  %v336 = vld [vmem:[%s1 + $0x78] sm:$0xf]
  %v337 = vld [vmem:[%s1 + $0x7c] sm:$0xf]
  %v338 = vld [vmem:[%s1 + $0x80] sm:$0xf]
  %v339 = vld [vmem:[%s1 + $0x84] sm:$0xf]
  %v340 = vld [vmem:[%s1 + $0x88] sm:$0xf]
  %v341 = vld [vmem:[%s1 + $0x8c] sm:$0xf]
  %v342 = vld [vmem:[%s1 + $0x90] sm:$0xf]
  %v343 = vld [vmem:[%s1 + $0x94] sm:$0xf]
  %v344 = vld [vmem:[%s1 + $0x98] sm:$0xf]
  %v345 = vld [vmem:[%s1 + $0x9c] sm:$0xf]
  %v346 = vld [vmem:[%s1 + $0xa0] sm:$0xf]
  %v347 = vld [vmem:[%s1 + $0xa4] sm:$0xf]
  %v348 = vld [vmem:[%s1 + $0xa8] sm:$0xf]
  %v349 = vld [vmem:[%s1 + $0xac] sm:$0xf]
  %v350 = vld [vmem:[%s1 + $0xb0] sm:$0xf]
  %v351 = vld [vmem:[%s1 + $0xb4] sm:$0xf]
  %v352 = vld [vmem:[%s1 + $0xb8] sm:$0xf]
  %v353 = vld [vmem:[%s1 + $0xbc] sm:$0xf]
  %v354 = vld [vmem:[%s1 + $0xc0] sm:$0xf]
  %v355 = vld [vmem:[%s1 + $0xc4] sm:$0xf]
  %v356 = vld [vmem:[%s1 + $0xc8] sm:$0xf]
  %v357 = vld [vmem:[%s1 + $0xcc] sm:$0xf]
  %v358 = vld [vmem:[%s1 + $0xd0] sm:$0xf]
  %v359 = vld [vmem:[%s1 + $0xd4] sm:$0xf]
  %v360 = vld [vmem:[%s1 + $0xd8] sm:$0xf]
  %v361 = vld [vmem:[%s1 + $0xdc] sm:$0xf]
  %v362 = vld [vmem:[%s1 + $0xe0] sm:$0xf]
  %v363 = vld [vmem:[%s1 + $0xe4] sm:$0xf]
  %v364 = vld [vmem:[%s1 + $0xe8] sm:$0xf]
  %v365 = vld [vmem:[%s1 + $0xec] sm:$0xf]
  %v366 = vld [vmem:[%s1 + $0xf0] sm:$0xf]
  %v367 = vld [vmem:[%s1 + $0xf4] sm:$0xf]
  %v368 = vld [vmem:[%s1 + $0xf8] sm:$0xf]
  %v369 = vld [vmem:[%s1 + $0xfc] sm:$0xf]
  %v370 = vld [vmem:[%s1 + $0x100] sm:$0xf]
  %v371 = vld [vmem:[%s1 + $0x104] sm:$0xf]
  %v372 = vld [vmem:[%s1 + $0x108] sm:$0xf]
  %v373 = vld [vmem:[%s1 + $0x10c] sm:$0xf]
  %v374 = vld [vmem:[%s1 + $0x110] sm:$0xf]
  %v375 = vld [vmem:[%s1 + $0x114] sm:$0xf]
  %v376 = vld [vmem:[%s1 + $0x118] sm:$0xf]
  %v377 = vld [vmem:[%s1 + $0x11c] sm:$0xf]
  %v378 = vld [vmem:[%s1 + $0x120] sm:$0xf]
  %v379 = vld [vmem:[%s1 + $0x124] sm:$0xf]
  %v380 = vld [vmem:[%s1 + $0x128] sm:$0xf]
  %v381 = vld [vmem:[%s1 + $0x12c] sm:$0xf]
  %v382 = vld [vmem:[%s1 + $0x130] sm:$0xf]
  %v383 = vld [vmem:[%s1 + $0x134] sm:$0xf]
  %v384 = vld [vmem:[%s1 + $0x138] sm:$0xf]
  %v385 = vld [vmem:[%s1 + $0x13c] sm:$0xf]
  %v386 = vld [vmem:[%s1 + $0x140] sm:$0xf]
  %v387 = vld [vmem:[%s1 + $0x144] sm:$0xf]
  %v388 = vld [vmem:[%s1 + $0x148] sm:$0xf]
  %v389 = vld [vmem:[%s1 + $0x14c] sm:$0xf]
  %v390 = vld [vmem:[%s1 + $0x150] sm:$0xf]
  %v391 = vld [vmem:[%s1 + $0x154] sm:$0xf]
  %v392 = vld [vmem:[%s1 + $0x158] sm:$0xf]
  %v393 = vld [vmem:[%s1 + $0x15c] sm:$0xf]
  %v394 = vld [vmem:[%s1 + $0x160] sm:$0xf]
  %v395 = vld [vmem:[%s1 + $0x164] sm:$0xf]
  %v396 = vld [vmem:[%s1 + $0x168] sm:$0xf]
  %v397 = vld [vmem:[%s1 + $0x16c] sm:$0xf]
  %v398 = vld [vmem:[%s1 + $0x170] sm:$0xf]
  %v399 = vld [vmem:[%s1 + $0x174] sm:$0xf]
  %v400 = vld [vmem:[%s1 + $0x178] sm:$0xf]
  %v401 = vld [vmem:[%s1 + $0x17c] sm:$0xf]
  %v402 = vld [vmem:[%s1 + $0x180] sm:$0xf]
  %v403 = vld [vmem:[%s1 + $0x184] sm:$0xf]
  %v404 = vld [vmem:[%s1 + $0x188] sm:$0xf]
  %v405 = vld [vmem:[%s1 + $0x18c] sm:$0xf]
  %v406 = vld [vmem:[%s1 + $0x190] sm:$0xf]
  %v407 = vld [vmem:[%s1 + $0x194] sm:$0xf]
  %v408 = vld [vmem:[%s1 + $0x198] sm:$0xf]
  %v409 = vld [vmem:[%s1 + $0x19c] sm:$0xf]
  %v410 = vld [vmem:[%s1 + $0x1a0] sm:$0xf]
  %v411 = vld [vmem:[%s1 + $0x1a4] sm:$0xf]
  %v412 = vld [vmem:[%s1 + $0x1a8] sm:$0xf]
  %v413 = vld [vmem:[%s1 + $0x1ac] sm:$0xf]
  %v414 = vld [vmem:[%s1 + $0x1b0] sm:$0xf]
  %v415 = vld [vmem:[%s1 + $0x1b4] sm:$0xf]
  %v416 = vld [vmem:[%s1 + $0x1b8] sm:$0xf]
  %v417 = vld [vmem:[%s1 + $0x1bc] sm:$0xf]
  %v418 = vld [vmem:[%s1 + $0x1c0] sm:$0xf]
  %v419 = vld [vmem:[%s1 + $0x1c4] sm:$0xf]
  %v420 = vld [vmem:[%s1 + $0x1c8] sm:$0xf]
  %v421 = vld [vmem:[%s1 + $0x1cc] sm:$0xf]
  %v422 = vld [vmem:[%s1 + $0x1d0] sm:$0xf]
  %v423 = vld [vmem:[%s1 + $0x1d4] sm:$0xf]
  %v424 = vld [vmem:[%s1 + $0x1d8] sm:$0xf]
  %v425 = vld [vmem:[%s1 + $0x1dc] sm:$0xf]
  %v426 = vld [vmem:[%s1 + $0x1e0] sm:$0xf]
  %v427 = vld [vmem:[%s1 + $0x1e4] sm:$0xf]
  %v428 = vld [vmem:[%s1 + $0x1e8] sm:$0xf]
  %v429 = vld [vmem:[%s1 + $0x1ec] sm:$0xf]
  %v430 = vld [vmem:[%s1 + $0x1f0] sm:$0xf]
  %v431 = vld [vmem:[%s1 + $0x1f4] sm:$0xf]
  %v432 = vld [vmem:[%s1 + $0x1f8] sm:$0xf]
  %v433 = vld [vmem:[%s1 + $0x1fc] sm:$0xf]
  %v434 = vld [vmem:[%s1 + $0x200] sm:$0xf]
  %v435 = vld [vmem:[%s1 + $0x204] sm:$0xf]
  %v436 = vld [vmem:[%s1 + $0x208] sm:$0xf]
  %v437 = vld [vmem:[%s1 + $0x20c] sm:$0xf]
  %v438 = vld [vmem:[%s1 + $0x210] sm:$0xf]
  %v439 = vld [vmem:[%s1 + $0x214] sm:$0xf]
  %v440 = vld [vmem:[%s1 + $0x218] sm:$0xf]
  %v441 = vld [vmem:[%s1 + $0x21c] sm:$0xf]
  %v442 = vld [vmem:[%s1 + $0x220] sm:$0xf]
  %v443 = vld [vmem:[%s1 + $0x224] sm:$0xf]
  %v444 = vld [vmem:[%s1 + $0x228] sm:$0xf]
  %v445 = vld [vmem:[%s1 + $0x22c] sm:$0xf]
  %v446 = vld [vmem:[%s1 + $0x230] sm:$0xf]
  %v447 = vld [vmem:[%s1 + $0x234] sm:$0xf]
  %v448 = vld [vmem:[%s1 + $0x238] sm:$0xf]
  %v449 = vld [vmem:[%s1 + $0x23c] sm:$0xf]
  %v450 = vld [vmem:[%s1 + $0x240] sm:$0xf]
  %v451 = vld [vmem:[%s1 + $0x244] sm:$0xf]
  %v452 = vld [vmem:[%s1 + $0x248] sm:$0xf]
  %v453 = vld [vmem:[%s1 + $0x24c] sm:$0xf]
  %v454 = vld [vmem:[%s1 + $0x250] sm:$0xf]
  %v455 = vld [vmem:[%s1 + $0x254] sm:$0xf]
  %v456 = vld [vmem:[%s1 + $0x258] sm:$0xf]
  %v457 = vld [vmem:[%s1 + $0x25c] sm:$0xf]
  %v458 = vld [vmem:[%s1 + $0x260] sm:$0xf]
  %v459 = vld [vmem:[%s1 + $0x264] sm:$0xf]
  %v460 = vld [vmem:[%s1 + $0x268] sm:$0xf]
  %v461 = vld [vmem:[%s1 + $0x26c] sm:$0xf]
  %v462 = vld [vmem:[%s1 + $0x270] sm:$0xf]
  %v463 = vld [vmem:[%s1 + $0x274] sm:$0xf]
  %v464 = vld [vmem:[%s1 + $0x278] sm:$0xf]
  %v465 = vld [vmem:[%s1 + $0x27c] sm:$0xf]
  %v466 = vld [vmem:[%s1 + $0x280] sm:$0xf]
  %v467 = vld [vmem:[%s1 + $0x284] sm:$0xf]
  %v468 = vld [vmem:[%s1 + $0x288] sm:$0xf]
  %v469 = vld [vmem:[%s1 + $0x28c] sm:$0xf]
  %v470 = vld [vmem:[%s1 + $0x290] sm:$0xf]
  %v471 = vld [vmem:[%s1 + $0x294] sm:$0xf]
  %v472 = vld [vmem:[%s1 + $0x298] sm:$0xf]
  %v473 = vld [vmem:[%s1 + $0x29c] sm:$0xf]
  %v474 = vld [vmem:[%s1 + $0x2a0] sm:$0xf]
  %v475 = vld [vmem:[%s1 + $0x2a4] sm:$0xf]
  %v476 = vld [vmem:[%s1 + $0x2a8] sm:$0xf]
  %v477 = vld [vmem:[%s1 + $0x2ac] sm:$0xf]
  %v478 = vld [vmem:[%s1 + $0x2b0] sm:$0xf]
  %v479 = vld [vmem:[%s1 + $0x2b4] sm:$0xf]
  %v480 = vld [vmem:[%s1 + $0x2b8] sm:$0xf]
  %v481 = vld [vmem:[%s1 + $0x2bc] sm:$0xf]
  %v482 = vld [vmem:[%s1 + $0x2c0] sm:$0xf]
  %v483 = vld [vmem:[%s1 + $0x2c4] sm:$0xf]
  %v484 = vld [vmem:[%s1 + $0x2c8] sm:$0xf]
  %v485 = vld [vmem:[%s1 + $0x2cc] sm:$0xf]
  %v486 = vld [vmem:[%s1 + $0x2d0] sm:$0xf]
  %v487 = vld [vmem:[%s1 + $0x2d4] sm:$0xf]
  %v488 = vld [vmem:[%s1 + $0x2d8] sm:$0xf]
  %v489 = vld [vmem:[%s1 + $0x2dc] sm:$0xf]
  %v490 = vld [vmem:[%s1 + $0x2e0] sm:$0xf]
  %v491 = vld [vmem:[%s1 + $0x2e4] sm:$0xf]
  %v492 = vld [vmem:[%s1 + $0x2e8] sm:$0xf]
  %v493 = vld [vmem:[%s1 + $0x2ec] sm:$0xf]
  %v494 = vld [vmem:[%s1 + $0x2f0] sm:$0xf]
  %v495 = vld [vmem:[%s1 + $0x2f4] sm:$0xf]
  %v496 = vld [vmem:[%s1 + $0x2f8] sm:$0xf]
  %v497 = vld [vmem:[%s1 + $0x2fc] sm:$0xf]
  %v498 = vld [vmem:[%s1 + $0x300] sm:$0xf]
  %v499 = vld [vmem:[%s1 + $0x304] sm:$0xf]
  %v500 = vld [vmem:[%s1 + $0x308] sm:$0xf]
  %v501 = vld [vmem:[%s1 + $0x30c] sm:$0xf]
  %v502 = vld [vmem:[%s1 + $0x310] sm:$0xf]
  %v503 = vld [vmem:[%s1 + $0x314] sm:$0xf]
  %v504 = vld [vmem:[%s1 + $0x318] sm:$0xf]
  %v505 = vld [vmem:[%s1 + $0x31c] sm:$0xf]
  %v506 = vld [vmem:[%s1 + $0x320] sm:$0xf]
  %v507 = vld [vmem:[%s1 + $0x324] sm:$0xf]
  %v508 = vld [vmem:[%s1 + $0x328] sm:$0xf]
  %v509 = vld [vmem:[%s1 + $0x32c] sm:$0xf]
  %v510 = vld [vmem:[%s1 + $0x330] sm:$0xf]
  %v511 = vld [vmem:[%s1 + $0x334] sm:$0xf]
  %v512 = vld [vmem:[%s1 + $0x338] sm:$0xf]
  %v513 = vld [vmem:[%s1 + $0x33c] sm:$0xf]
  %v514 = vld [vmem:[%s1 + $0x340] sm:$0xf]
  %v515 = vld [vmem:[%s1 + $0x344] sm:$0xf]
  %v516 = vld [vmem:[%s1 + $0x348] sm:$0xf]
  %v517 = vld [vmem:[%s1 + $0x34c] sm:$0xf]
  %v518 = vld [vmem:[%s1 + $0x350] sm:$0xf]
  %v519 = vld [vmem:[%s1 + $0x354] sm:$0xf]
  %v520 = vld [vmem:[%s1 + $0x358] sm:$0xf]
  %v521 = vld [vmem:[%s1 + $0x35c] sm:$0xf]
  %v522 = vld [vmem:[%s1 + $0x360] sm:$0xf]
  %v523 = vld [vmem:[%s1 + $0x364] sm:$0xf]
  %v524 = vld [vmem:[%s1 + $0x368] sm:$0xf]
  %v525 = vld [vmem:[%s1 + $0x36c] sm:$0xf]
  %v526 = vld [vmem:[%s1 + $0x370] sm:$0xf]
  %v527 = vld [vmem:[%s1 + $0x374] sm:$0xf]
  %v528 = vld [vmem:[%s1 + $0x378] sm:$0xf]
  %v529 = vld [vmem:[%s1 + $0x37c] sm:$0xf]
  %v530 = vld [vmem:[%s1 + $0x380] sm:$0xf]
  %v531 = vld [vmem:[%s1 + $0x384] sm:$0xf]
  %v532 = vld [vmem:[%s1 + $0x388] sm:$0xf]
  %v533 = vld [vmem:[%s1 + $0x38c] sm:$0xf]
  %v534 = vld [vmem:[%s1 + $0x390] sm:$0xf]
  %v535 = vld [vmem:[%s1 + $0x394] sm:$0xf]
  %v536 = vld [vmem:[%s1 + $0x398] sm:$0xf]
  %v537 = vld [vmem:[%s1 + $0x39c] sm:$0xf]
  %v538 = vld [vmem:[%s1 + $0x3a0] sm:$0xf]
  %v539 = vld [vmem:[%s1 + $0x3a4] sm:$0xf]
  %v540 = vld [vmem:[%s1 + $0x3a8] sm:$0xf]
  %v541 = vld [vmem:[%s1 + $0x3ac] sm:$0xf]
  %v542 = vld [vmem:[%s1 + $0x3b0] sm:$0xf]
  %v543 = vld [vmem:[%s1 + $0x3b4] sm:$0xf]
  %v544 = vld [vmem:[%s1 + $0x3b8] sm:$0xf]
  %v545 = vld [vmem:[%s1 + $0x3bc] sm:$0xf]
  %v546 = vld [vmem:[%s1 + $0x3c0] sm:$0xf]
  %v547 = vld [vmem:[%s1 + $0x3c4] sm:$0xf]
  %v548 = vld [vmem:[%s1 + $0x3c8] sm:$0xf]
  %v549 = vld [vmem:[%s1 + $0x3cc] sm:$0xf]
  %v550 = vld [vmem:[%s1 + $0x3d0] sm:$0xf]
  %v551 = vld [vmem:[%s1 + $0x3d4] sm:$0xf]
  %v552 = vld [vmem:[%s1 + $0x3d8] sm:$0xf]
  %v553 = vld [vmem:[%s1 + $0x3dc] sm:$0xf]
  %v554 = vld [vmem:[%s1 + $0x3e0] sm:$0xf]
  %v555 = vld [vmem:[%s1 + $0x3e4] sm:$0xf]
  %v556 = vld [vmem:[%s1 + $0x3e8] sm:$0xf]
  %v557 = vld [vmem:[%s1 + $0x3ec] sm:$0xf]
  %v558 = vld [vmem:[%s1 + $0x3f0] sm:$0xf]
  %v559 = vld [vmem:[%s1 + $0x3f4] sm:$0xf]
  %v560 = vld [vmem:[%s1 + $0x3f8] sm:$0xf]
  %v561 = vld [vmem:[%s1 + $0x3fc] sm:$0xf]
  %v562 = vld [vmem:[%s1 + $0x400] sm:$0xf]
  %v563 = vld [vmem:[%s1 + $0x404] sm:$0xf]
  %v564 = vld [vmem:[%s1 + $0x408] sm:$0xf]
  %v565 = vld [vmem:[%s1 + $0x40c] sm:$0xf]
  %v566 = vld [vmem:[%s1 + $0x410] sm:$0xf]
  %v567 = vld [vmem:[%s1 + $0x414] sm:$0xf]
  %v568 = vld [vmem:[%s1 + $0x418] sm:$0xf]
  %v569 = vld [vmem:[%s1 + $0x41c] sm:$0xf]
  %v570 = vld [vmem:[%s1 + $0x420] sm:$0xf]
  %v571 = vld [vmem:[%s1 + $0x424] sm:$0xf]
  %v572 = vld [vmem:[%s1 + $0x428] sm:$0xf]
  %v573 = vld [vmem:[%s1 + $0x42c] sm:$0xf]
  %v574 = vld [vmem:[%s1 + $0x430] sm:$0xf]
  %v575 = vld [vmem:[%s1 + $0x434] sm:$0xf]
  %v576 = vld [vmem:[%s1 + $0x438] sm:$0xf]
  %v577 = vld [vmem:[%s1 + $0x43c] sm:$0xf]
  %v578 = vld [vmem:[%s1 + $0x440] sm:$0xf]
  %v579 = vld [vmem:[%s1 + $0x444] sm:$0xf]
  %v580 = vld [vmem:[%s1 + $0x448] sm:$0xf]
  %v581 = vld [vmem:[%s1 + $0x44c] sm:$0xf]
  %v582 = vld [vmem:[%s1 + $0x450] sm:$0xf]
  %v583 = vld [vmem:[%s1 + $0x454] sm:$0xf]
  %v584 = vld [vmem:[%s1 + $0x458] sm:$0xf]
  %v585 = vld [vmem:[%s1 + $0x45c] sm:$0xf]
  %v874 = vunpack.c.l.b16 %v18
  %v875 = vunpack.c.h.b16 %v18
  %v876 = vunpack.c.l.b16 %v19
  %v877 = vunpack.c.h.b16 %v19
  %v878 = vunpack.c.l.b16 %v20
  %v879 = vunpack.c.h.b16 %v20
  %v880 = vunpack.c.l.b16 %v21
  %v881 = vunpack.c.h.b16 %v21
  %v882 = vunpack.c.l.b16 %v22
  %v883 = vunpack.c.h.b16 %v22
  %v884 = vunpack.c.l.b16 %v23
  %v885 = vunpack.c.h.b16 %v23
  %v886 = vunpack.c.l.b16 %v24
  %v887 = vunpack.c.h.b16 %v24
  %v888 = vunpack.c.l.b16 %v25
  %v889 = vunpack.c.h.b16 %v25
  %v890 = vunpack.c.l.b16 %v26
  %v891 = vunpack.c.h.b16 %v26
  %v892 = vunpack.c.l.b16 %v27
  %v893 = vunpack.c.h.b16 %v27
  %v894 = vunpack.c.l.b16 %v28
  %v895 = vunpack.c.h.b16 %v28
  %v896 = vunpack.c.l.b16 %v29
  %v897 = vunpack.c.h.b16 %v29
  %v898 = vunpack.c.l.b16 %v30
  %v899 = vunpack.c.h.b16 %v30
  %v900 = vunpack.c.l.b16 %v31
  %v901 = vunpack.c.h.b16 %v31
  %v902 = vunpack.c.l.b16 %v32
  %v903 = vunpack.c.h.b16 %v32
  %v904 = vunpack.c.l.b16 %v33
  %v905 = vunpack.c.h.b16 %v33
  %v906 = vunpack.c.l.b16 %v34
  %v907 = vunpack.c.h.b16 %v34
  %v908 = vunpack.c.l.b16 %v35
  %v909 = vunpack.c.h.b16 %v35
  %v910 = vunpack.c.l.b16 %v36
  %v911 = vunpack.c.h.b16 %v36
  %v912 = vunpack.c.l.b16 %v37
  %v913 = vunpack.c.h.b16 %v37
  %v914 = vunpack.c.l.b16 %v38
  %v915 = vunpack.c.h.b16 %v38
  %v916 = vunpack.c.l.b16 %v39
  %v917 = vunpack.c.h.b16 %v39
  %v918 = vunpack.c.l.b16 %v40
  %v919 = vunpack.c.h.b16 %v40
  %v920 = vunpack.c.l.b16 %v41
  %v921 = vunpack.c.h.b16 %v41
  %v922 = vunpack.c.l.b16 %v42
  %v923 = vunpack.c.h.b16 %v42
  %v924 = vunpack.c.l.b16 %v43
  %v925 = vunpack.c.h.b16 %v43
  %v926 = vunpack.c.l.b16 %v44
  %v927 = vunpack.c.h.b16 %v44
  %v928 = vunpack.c.l.b16 %v45
  %v929 = vunpack.c.h.b16 %v45
  %v930 = vunpack.c.l.b16 %v46
  %v931 = vunpack.c.h.b16 %v46
  %v932 = vunpack.c.l.b16 %v47
  %v933 = vunpack.c.h.b16 %v47
  %v934 = vunpack.c.l.b16 %v48
  %v935 = vunpack.c.h.b16 %v48
  %v936 = vunpack.c.l.b16 %v49
  %v937 = vunpack.c.h.b16 %v49
  %v938 = vunpack.c.l.b16 %v50
  %v939 = vunpack.c.h.b16 %v50
  %v940 = vunpack.c.l.b16 %v51
  %v941 = vunpack.c.h.b16 %v51
  %v942 = vunpack.c.l.b16 %v52
  %v943 = vunpack.c.h.b16 %v52
  %v944 = vunpack.c.l.b16 %v53
  %v945 = vunpack.c.h.b16 %v53
  %v946 = vunpack.c.l.b16 %v54
  %v947 = vunpack.c.h.b16 %v54
  %v948 = vunpack.c.l.b16 %v55
  %v949 = vunpack.c.h.b16 %v55
  %v950 = vunpack.c.l.b16 %v56
  %v951 = vunpack.c.h.b16 %v56
  %v952 = vunpack.c.l.b16 %v57
  %v953 = vunpack.c.h.b16 %v57
  %v954 = vunpack.c.l.b16 %v58
  %v955 = vunpack.c.h.b16 %v58
  %v956 = vunpack.c.l.b16 %v59
  %v957 = vunpack.c.h.b16 %v59
  %v958 = vunpack.c.l.b16 %v60
  %v959 = vunpack.c.h.b16 %v60
  %v960 = vunpack.c.l.b16 %v61
  %v961 = vunpack.c.h.b16 %v61
  %v962 = vunpack.c.l.b16 %v62
  %v963 = vunpack.c.h.b16 %v62
  %v964 = vunpack.c.l.b16 %v63
  %v965 = vunpack.c.h.b16 %v63
  %v966 = vunpack.c.l.b16 %v64
  %v967 = vunpack.c.h.b16 %v64
  %v968 = vunpack.c.l.b16 %v65
  %v969 = vunpack.c.h.b16 %v65
  %v970 = vunpack.c.l.b16 %v66
  %v971 = vunpack.c.h.b16 %v66
  %v972 = vunpack.c.l.b16 %v67
  %v973 = vunpack.c.h.b16 %v67
  %v974 = vunpack.c.l.b16 %v68
  %v975 = vunpack.c.h.b16 %v68
  %v976 = vunpack.c.l.b16 %v69
  %v977 = vunpack.c.h.b16 %v69
  %v978 = vunpack.c.l.b16 %v70
  %v979 = vunpack.c.h.b16 %v70
  %v980 = vunpack.c.l.b16 %v71
  %v981 = vunpack.c.h.b16 %v71
  %v982 = vunpack.c.l.b16 %v72
  %v983 = vunpack.c.h.b16 %v72
  %v984 = vunpack.c.l.b16 %v73
  %v985 = vunpack.c.h.b16 %v73
  %v986 = vunpack.c.l.b16 %v74
  %v987 = vunpack.c.h.b16 %v74
  %v988 = vunpack.c.l.b16 %v75
  %v989 = vunpack.c.h.b16 %v75
  %v990 = vunpack.c.l.b16 %v76
  %v991 = vunpack.c.h.b16 %v76
  %v992 = vunpack.c.l.b16 %v77
  %v993 = vunpack.c.h.b16 %v77
  %v994 = vunpack.c.l.b16 %v78
  %v995 = vunpack.c.h.b16 %v78
  %v996 = vunpack.c.l.b16 %v79
  %v997 = vunpack.c.h.b16 %v79
  %v998 = vunpack.c.l.b16 %v80
  %v999 = vunpack.c.h.b16 %v80
  %v1000 = vunpack.c.l.b16 %v81
  %v1001 = vunpack.c.h.b16 %v81
  %v1002 = vunpack.c.l.b16 %v82
  %v1003 = vunpack.c.h.b16 %v82
  %v1004 = vunpack.c.l.b16 %v83
  %v1005 = vunpack.c.h.b16 %v83
  %v1006 = vunpack.c.l.b16 %v84
  %v1007 = vunpack.c.h.b16 %v84
  %v1008 = vunpack.c.l.b16 %v85
  %v1009 = vunpack.c.h.b16 %v85
  %v1010 = vunpack.c.l.b16 %v86
  %v1011 = vunpack.c.h.b16 %v86
  %v1012 = vunpack.c.l.b16 %v87
  %v1013 = vunpack.c.h.b16 %v87
  %v1014 = vunpack.c.l.b16 %v88
  %v1015 = vunpack.c.h.b16 %v88
  %v1016 = vunpack.c.l.b16 %v89
  %v1017 = vunpack.c.h.b16 %v89
  %v1018 = vunpack.c.l.b16 %v90
  %v1019 = vunpack.c.h.b16 %v90
  %v1020 = vunpack.c.l.b16 %v91
  %v1021 = vunpack.c.h.b16 %v91
  %v1022 = vunpack.c.l.b16 %v92
  %v1023 = vunpack.c.h.b16 %v92
  %v1024 = vunpack.c.l.b16 %v93
  %v1025 = vunpack.c.h.b16 %v93
  %v1026 = vunpack.c.l.b16 %v94
  %v1027 = vunpack.c.h.b16 %v94
  %v1028 = vunpack.c.l.b16 %v95
  %v1029 = vunpack.c.h.b16 %v95
  %v1030 = vunpack.c.l.b16 %v96
  %v1031 = vunpack.c.h.b16 %v96
  %v1032 = vunpack.c.l.b16 %v97
  %v1033 = vunpack.c.h.b16 %v97
  %v1034 = vunpack.c.l.b16 %v98
  %v1035 = vunpack.c.h.b16 %v98
  %v1036 = vunpack.c.l.b16 %v99
  %v1037 = vunpack.c.h.b16 %v99
  %v1038 = vunpack.c.l.b16 %v100
  %v1039 = vunpack.c.h.b16 %v100
  %v1040 = vunpack.c.l.b16 %v101
  %v1041 = vunpack.c.h.b16 %v101
  %v1042 = vunpack.c.l.b16 %v102
  %v1043 = vunpack.c.h.b16 %v102
  %v1044 = vunpack.c.l.b16 %v103
  %v1045 = vunpack.c.h.b16 %v103
  %v1046 = vunpack.c.l.b16 %v104
  %v1047 = vunpack.c.h.b16 %v104
  %v1048 = vunpack.c.l.b16 %v105
  %v1049 = vunpack.c.h.b16 %v105
  %v1050 = vunpack.c.l.b16 %v106
  %v1051 = vunpack.c.h.b16 %v106
  %v1052 = vunpack.c.l.b16 %v107
  %v1053 = vunpack.c.h.b16 %v107
  %v1054 = vunpack.c.l.b16 %v108
  %v1055 = vunpack.c.h.b16 %v108
  %v1056 = vunpack.c.l.b16 %v109
  %v1057 = vunpack.c.h.b16 %v109
  %v1058 = vunpack.c.l.b16 %v110
  %v1059 = vunpack.c.h.b16 %v110
  %v1060 = vunpack.c.l.b16 %v111
  %v1061 = vunpack.c.h.b16 %v111
  %v1062 = vunpack.c.l.b16 %v112
  %v1063 = vunpack.c.h.b16 %v112
  %v1064 = vunpack.c.l.b16 %v113
  %v1065 = vunpack.c.h.b16 %v113
  %v1066 = vunpack.c.l.b16 %v114
  %v1067 = vunpack.c.h.b16 %v114
  %v1068 = vunpack.c.l.b16 %v115
  %v1069 = vunpack.c.h.b16 %v115
  %v1070 = vunpack.c.l.b16 %v116
  %v1071 = vunpack.c.h.b16 %v116
  %v1072 = vunpack.c.l.b16 %v117
  %v1073 = vunpack.c.h.b16 %v117
  %v1074 = vunpack.c.l.b16 %v118
  %v1075 = vunpack.c.h.b16 %v118
  %v1076 = vunpack.c.l.b16 %v119
  %v1077 = vunpack.c.h.b16 %v119
  %v1078 = vunpack.c.l.b16 %v120
  %v1079 = vunpack.c.h.b16 %v120
  %v1080 = vunpack.c.l.b16 %v121
  %v1081 = vunpack.c.h.b16 %v121
  %v1082 = vunpack.c.l.b16 %v122
  %v1083 = vunpack.c.h.b16 %v122
  %v1084 = vunpack.c.l.b16 %v123
  %v1085 = vunpack.c.h.b16 %v123
  %v1086 = vunpack.c.l.b16 %v124
  %v1087 = vunpack.c.h.b16 %v124
  %v1088 = vunpack.c.l.b16 %v125
  %v1089 = vunpack.c.h.b16 %v125
  %v1090 = vunpack.c.l.b16 %v126
  %v1091 = vunpack.c.h.b16 %v126
  %v1092 = vunpack.c.l.b16 %v127
  %v1093 = vunpack.c.h.b16 %v127
  %v1094 = vunpack.c.l.b16 %v128
  %v1095 = vunpack.c.h.b16 %v128
  %v1096 = vunpack.c.l.b16 %v129
  %v1097 = vunpack.c.h.b16 %v129
  %v1098 = vunpack.c.l.b16 %v130
  %v1099 = vunpack.c.h.b16 %v130
  %v1100 = vunpack.c.l.b16 %v131
  %v1101 = vunpack.c.h.b16 %v131
  %v1102 = vunpack.c.l.b16 %v132
  %v1103 = vunpack.c.h.b16 %v132
  %v1104 = vunpack.c.l.b16 %v133
  %v1105 = vunpack.c.h.b16 %v133
  %v1106 = vunpack.c.l.b16 %v134
  %v1107 = vunpack.c.h.b16 %v134
  %v1108 = vunpack.c.l.b16 %v135
  %v1109 = vunpack.c.h.b16 %v135
  %v1110 = vunpack.c.l.b16 %v136
  %v1111 = vunpack.c.h.b16 %v136
  %v1112 = vunpack.c.l.b16 %v137
  %v1113 = vunpack.c.h.b16 %v137
  %v1114 = vunpack.c.l.b16 %v138
  %v1115 = vunpack.c.h.b16 %v138
  %v1116 = vunpack.c.l.b16 %v139
  %v1117 = vunpack.c.h.b16 %v139
  %v1118 = vunpack.c.l.b16 %v140
  %v1119 = vunpack.c.h.b16 %v140
  %v1120 = vunpack.c.l.b16 %v141
  %v1121 = vunpack.c.h.b16 %v141
  %v1122 = vunpack.c.l.b16 %v142
  %v1123 = vunpack.c.h.b16 %v142
  %v1124 = vunpack.c.l.b16 %v143
  %v1125 = vunpack.c.h.b16 %v143
  %v1126 = vunpack.c.l.b16 %v144
  %v1127 = vunpack.c.h.b16 %v144
  %v1128 = vunpack.c.l.b16 %v145
  %v1129 = vunpack.c.h.b16 %v145
  %v1130 = vunpack.c.l.b16 %v146
  %v1131 = vunpack.c.h.b16 %v146
  %v1132 = vunpack.c.l.b16 %v147
  %v1133 = vunpack.c.h.b16 %v147
  %v1134 = vunpack.c.l.b16 %v148
  %v1135 = vunpack.c.h.b16 %v148
  %v1136 = vunpack.c.l.b16 %v149
  %v1137 = vunpack.c.h.b16 %v149
  %v1138 = vunpack.c.l.b16 %v150
  %v1139 = vunpack.c.h.b16 %v150
  %v1140 = vunpack.c.l.b16 %v151
  %v1141 = vunpack.c.h.b16 %v151
  %v1142 = vunpack.c.l.b16 %v152
  %v1143 = vunpack.c.h.b16 %v152
  %v1144 = vunpack.c.l.b16 %v153
  %v1145 = vunpack.c.h.b16 %v153
  %v1146 = vunpack.c.l.b16 %v154
  %v1147 = vunpack.c.h.b16 %v154
  %v1148 = vunpack.c.l.b16 %v155
  %v1149 = vunpack.c.h.b16 %v155
  %v1150 = vunpack.c.l.b16 %v156
  %v1151 = vunpack.c.h.b16 %v156
  %v1152 = vunpack.c.l.b16 %v157
  %v1153 = vunpack.c.h.b16 %v157
  %v1154 = vunpack.c.l.b16 %v158
  %v1155 = vunpack.c.h.b16 %v158
  %v1156 = vunpack.c.l.b16 %v159
  %v1157 = vunpack.c.h.b16 %v159
  %v1158 = vunpack.c.l.b16 %v160
  %v1159 = vunpack.c.h.b16 %v160
  %v1160 = vunpack.c.l.b16 %v161
  %v1161 = vunpack.c.h.b16 %v161
  %v1162 = vunpack.c.l.b16 %v162
  %v1163 = vunpack.c.h.b16 %v162
  %v1164 = vunpack.c.l.b16 %v163
  %v1165 = vunpack.c.h.b16 %v163
  %v1166 = vunpack.c.l.b16 %v164
  %v1167 = vunpack.c.h.b16 %v164
  %v1168 = vunpack.c.l.b16 %v165
  %v1169 = vunpack.c.h.b16 %v165
  %v1170 = vunpack.c.l.b16 %v166
  %v1171 = vunpack.c.h.b16 %v166
  %v1172 = vunpack.c.l.b16 %v167
  %v1173 = vunpack.c.h.b16 %v167
  %v1174 = vunpack.c.l.b16 %v168
  %v1175 = vunpack.c.h.b16 %v168
  %v1176 = vunpack.c.l.b16 %v169
  %v1177 = vunpack.c.h.b16 %v169
  %v1178 = vunpack.c.l.b16 %v170
  %v1179 = vunpack.c.h.b16 %v170
  %v1180 = vunpack.c.l.b16 %v171
  %v1181 = vunpack.c.h.b16 %v171
  %v1182 = vunpack.c.l.b16 %v172
  %v1183 = vunpack.c.h.b16 %v172
  %v1184 = vunpack.c.l.b16 %v173
  %v1185 = vunpack.c.h.b16 %v173
  %v1186 = vunpack.c.l.b16 %v174
  %v1187 = vunpack.c.h.b16 %v174
  %v1188 = vunpack.c.l.b16 %v175
  %v1189 = vunpack.c.h.b16 %v175
  %v1190 = vunpack.c.l.b16 %v176
  %v1191 = vunpack.c.h.b16 %v176
  %v1192 = vunpack.c.l.b16 %v177
  %v1193 = vunpack.c.h.b16 %v177
  %v1194 = vunpack.c.l.b16 %v178
  %v1195 = vunpack.c.h.b16 %v178
  %v1196 = vunpack.c.l.b16 %v179
  %v1197 = vunpack.c.h.b16 %v179
  %v1198 = vunpack.c.l.b16 %v180
  %v1199 = vunpack.c.h.b16 %v180
  %v1200 = vunpack.c.l.b16 %v181
  %v1201 = vunpack.c.h.b16 %v181
  %v1202 = vunpack.c.l.b16 %v182
  %v1203 = vunpack.c.h.b16 %v182
  %v1204 = vunpack.c.l.b16 %v183
  %v1205 = vunpack.c.h.b16 %v183
  %v1206 = vunpack.c.l.b16 %v184
  %v1207 = vunpack.c.h.b16 %v184
  %v1208 = vunpack.c.l.b16 %v185
  %v1209 = vunpack.c.h.b16 %v185
  %v1210 = vunpack.c.l.b16 %v186
  %v1211 = vunpack.c.h.b16 %v186
  %v1212 = vunpack.c.l.b16 %v187
  %v1213 = vunpack.c.h.b16 %v187
  %v1214 = vunpack.c.l.b16 %v188
  %v1215 = vunpack.c.h.b16 %v188
  %v1216 = vunpack.c.l.b16 %v189
  %v1217 = vunpack.c.h.b16 %v189
  %v1218 = vunpack.c.l.b16 %v190
  %v1219 = vunpack.c.h.b16 %v190
  %v1220 = vunpack.c.l.b16 %v191
  %v1221 = vunpack.c.h.b16 %v191
  %v1222 = vunpack.c.l.b16 %v192
  %v1223 = vunpack.c.h.b16 %v192
  %v1224 = vunpack.c.l.b16 %v193
  %v1225 = vunpack.c.h.b16 %v193
  %v1226 = vunpack.c.l.b16 %v194
  %v1227 = vunpack.c.h.b16 %v194
  %v1228 = vunpack.c.l.b16 %v195
  %v1229 = vunpack.c.h.b16 %v195
  %v1230 = vunpack.c.l.b16 %v196
  %v1231 = vunpack.c.h.b16 %v196
  %v1232 = vunpack.c.l.b16 %v197
  %v1233 = vunpack.c.h.b16 %v197
  %v1234 = vunpack.c.l.b16 %v198
  %v1235 = vunpack.c.h.b16 %v198
  %v1236 = vunpack.c.l.b16 %v199
  %v1237 = vunpack.c.h.b16 %v199
  %v1238 = vunpack.c.l.b16 %v200
  %v1239 = vunpack.c.h.b16 %v200
  %v1240 = vunpack.c.l.b16 %v201
  %v1241 = vunpack.c.h.b16 %v201
  %v1242 = vunpack.c.l.b16 %v202
  %v1243 = vunpack.c.h.b16 %v202
  %v1244 = vunpack.c.l.b16 %v203
  %v1245 = vunpack.c.h.b16 %v203
  %v1246 = vunpack.c.l.b16 %v204
  %v1247 = vunpack.c.h.b16 %v204
  %v1248 = vunpack.c.l.b16 %v205
  %v1249 = vunpack.c.h.b16 %v205
  %v1250 = vunpack.c.l.b16 %v206
  %v1251 = vunpack.c.h.b16 %v206
  %v1252 = vunpack.c.l.b16 %v207
  %v1253 = vunpack.c.h.b16 %v207
  %v1254 = vunpack.c.l.b16 %v208
  %v1255 = vunpack.c.h.b16 %v208
  %v1256 = vunpack.c.l.b16 %v209
  %v1257 = vunpack.c.h.b16 %v209
  %v1258 = vunpack.c.l.b16 %v210
  %v1259 = vunpack.c.h.b16 %v210
  %v1260 = vunpack.c.l.b16 %v211
  %v1261 = vunpack.c.h.b16 %v211
  %v1262 = vunpack.c.l.b16 %v212
  %v1263 = vunpack.c.h.b16 %v212
  %v1264 = vunpack.c.l.b16 %v213
  %v1265 = vunpack.c.h.b16 %v213
  %v1266 = vunpack.c.l.b16 %v214
  %v1267 = vunpack.c.h.b16 %v214
  %v1268 = vunpack.c.l.b16 %v215
  %v1269 = vunpack.c.h.b16 %v215
  %v1270 = vunpack.c.l.b16 %v216
  %v1271 = vunpack.c.h.b16 %v216
  %v1272 = vunpack.c.l.b16 %v217
  %v1273 = vunpack.c.h.b16 %v217
  %v1274 = vunpack.c.l.b16 %v218
  %v1275 = vunpack.c.h.b16 %v218
  %v1276 = vunpack.c.l.b16 %v219
  %v1277 = vunpack.c.h.b16 %v219
  %v1278 = vunpack.c.l.b16 %v220
  %v1279 = vunpack.c.h.b16 %v220
  %v1280 = vunpack.c.l.b16 %v221
  %v1281 = vunpack.c.h.b16 %v221
  %v1282 = vunpack.c.l.b16 %v222
  %v1283 = vunpack.c.h.b16 %v222
  %v1284 = vunpack.c.l.b16 %v223
  %v1285 = vunpack.c.h.b16 %v223
  %v1286 = vunpack.c.l.b16 %v224
  %v1287 = vunpack.c.h.b16 %v224
  %v1288 = vunpack.c.l.b16 %v225
  %v1289 = vunpack.c.h.b16 %v225
  %v1290 = vunpack.c.l.b16 %v226
  %v1291 = vunpack.c.h.b16 %v226
  %v1292 = vunpack.c.l.b16 %v227
  %v1293 = vunpack.c.h.b16 %v227
  %v1294 = vunpack.c.l.b16 %v228
  %v1295 = vunpack.c.h.b16 %v228
  %v1296 = vunpack.c.l.b16 %v229
  %v1297 = vunpack.c.h.b16 %v229
  %v1298 = vunpack.c.l.b16 %v230
  %v1299 = vunpack.c.h.b16 %v230
  %v1300 = vunpack.c.l.b16 %v231
  %v1301 = vunpack.c.h.b16 %v231
  %v1302 = vunpack.c.l.b16 %v232
  %v1303 = vunpack.c.h.b16 %v232
  %v1304 = vunpack.c.l.b16 %v233
  %v1305 = vunpack.c.h.b16 %v233
  %v1306 = vunpack.c.l.b16 %v234
  %v1307 = vunpack.c.h.b16 %v234
  %v1308 = vunpack.c.l.b16 %v235
  %v1309 = vunpack.c.h.b16 %v235
  %v1310 = vunpack.c.l.b16 %v236
  %v1311 = vunpack.c.h.b16 %v236
  %v1312 = vunpack.c.l.b16 %v237
  %v1313 = vunpack.c.h.b16 %v237
  %v1314 = vunpack.c.l.b16 %v238
  %v1315 = vunpack.c.h.b16 %v238
  %v1316 = vunpack.c.l.b16 %v239
  %v1317 = vunpack.c.h.b16 %v239
  %v1318 = vunpack.c.l.b16 %v240
  %v1319 = vunpack.c.h.b16 %v240
  %v1320 = vunpack.c.l.b16 %v241
  %v1321 = vunpack.c.h.b16 %v241
  %v1322 = vunpack.c.l.b16 %v242
  %v1323 = vunpack.c.h.b16 %v242
  %v1324 = vunpack.c.l.b16 %v243
  %v1325 = vunpack.c.h.b16 %v243
  %v1326 = vunpack.c.l.b16 %v244
  %v1327 = vunpack.c.h.b16 %v244
  %v1328 = vunpack.c.l.b16 %v245
  %v1329 = vunpack.c.h.b16 %v245
  %v1330 = vunpack.c.l.b16 %v246
  %v1331 = vunpack.c.h.b16 %v246
  %v1332 = vunpack.c.l.b16 %v247
  %v1333 = vunpack.c.h.b16 %v247
  %v1334 = vunpack.c.l.b16 %v248
  %v1335 = vunpack.c.h.b16 %v248
  %v1336 = vunpack.c.l.b16 %v249
  %v1337 = vunpack.c.h.b16 %v249
  %v1338 = vunpack.c.l.b16 %v250
  %v1339 = vunpack.c.h.b16 %v250
  %v1340 = vunpack.c.l.b16 %v251
  %v1341 = vunpack.c.h.b16 %v251
  %v1342 = vunpack.c.l.b16 %v252
  %v1343 = vunpack.c.h.b16 %v252
  %v1344 = vunpack.c.l.b16 %v253
  %v1345 = vunpack.c.h.b16 %v253
  %v1346 = vunpack.c.l.b16 %v254
  %v1347 = vunpack.c.h.b16 %v254
  %v1348 = vunpack.c.l.b16 %v255
  %v1349 = vunpack.c.h.b16 %v255
  %v1350 = vunpack.c.l.b16 %v256
  %v1351 = vunpack.c.h.b16 %v256
  %v1352 = vunpack.c.l.b16 %v257
  %v1353 = vunpack.c.h.b16 %v257
  %v1354 = vunpack.c.l.b16 %v258
  %v1355 = vunpack.c.h.b16 %v258
  %v1356 = vunpack.c.l.b16 %v259
  %v1357 = vunpack.c.h.b16 %v259
  %v1358 = vunpack.c.l.b16 %v260
  %v1359 = vunpack.c.h.b16 %v260
  %v1360 = vunpack.c.l.b16 %v261
  %v1361 = vunpack.c.h.b16 %v261
  %v1362 = vunpack.c.l.b16 %v262
  %v1363 = vunpack.c.h.b16 %v262
  %v1364 = vunpack.c.l.b16 %v263
  %v1365 = vunpack.c.h.b16 %v263
  %v1366 = vunpack.c.l.b16 %v264
  %v1367 = vunpack.c.h.b16 %v264
  %v1368 = vunpack.c.l.b16 %v265
  %v1369 = vunpack.c.h.b16 %v265
  %v1370 = vunpack.c.l.b16 %v266
  %v1371 = vunpack.c.h.b16 %v266
  %v1372 = vunpack.c.l.b16 %v267
  %v1373 = vunpack.c.h.b16 %v267
  %v1374 = vunpack.c.l.b16 %v268
  %v1375 = vunpack.c.h.b16 %v268
  %v1376 = vunpack.c.l.b16 %v269
  %v1377 = vunpack.c.h.b16 %v269
  %v1378 = vunpack.c.l.b16 %v270
  %v1379 = vunpack.c.h.b16 %v270
  %v1380 = vunpack.c.l.b16 %v271
  %v1381 = vunpack.c.h.b16 %v271
  %v1382 = vunpack.c.l.b16 %v272
  %v1383 = vunpack.c.h.b16 %v272
  %v1384 = vunpack.c.l.b16 %v273
  %v1385 = vunpack.c.h.b16 %v273
  %v1386 = vunpack.c.l.b16 %v274
  %v1387 = vunpack.c.h.b16 %v274
  %v1388 = vunpack.c.l.b16 %v275
  %v1389 = vunpack.c.h.b16 %v275
  %v1390 = vunpack.c.l.b16 %v276
  %v1391 = vunpack.c.h.b16 %v276
  %v1392 = vunpack.c.l.b16 %v277
  %v1393 = vunpack.c.h.b16 %v277
  %v1394 = vunpack.c.l.b16 %v278
  %v1395 = vunpack.c.h.b16 %v278
  %v1396 = vunpack.c.l.b16 %v279
  %v1397 = vunpack.c.h.b16 %v279
  %v1398 = vunpack.c.l.b16 %v280
  %v1399 = vunpack.c.h.b16 %v280
  %v1400 = vunpack.c.l.b16 %v281
  %v1401 = vunpack.c.h.b16 %v281
  %v1402 = vunpack.c.l.b16 %v282
  %v1403 = vunpack.c.h.b16 %v282
  %v1404 = vunpack.c.l.b16 %v283
  %v1405 = vunpack.c.h.b16 %v283
  %v1406 = vunpack.c.l.b16 %v284
  %v1407 = vunpack.c.h.b16 %v284
  %v1408 = vunpack.c.l.b16 %v285
  %v1409 = vunpack.c.h.b16 %v285
  %v1410 = vunpack.c.l.b16 %v286
  %v1411 = vunpack.c.h.b16 %v286
  %v1412 = vunpack.c.l.b16 %v287
  %v1413 = vunpack.c.h.b16 %v287
  %v1414 = vunpack.c.l.b16 %v288
  %v1415 = vunpack.c.h.b16 %v288
  %v1416 = vunpack.c.l.b16 %v289
  %v1417 = vunpack.c.h.b16 %v289
  %v1418 = vunpack.c.l.b16 %v290
  %v1419 = vunpack.c.h.b16 %v290
  %v1420 = vunpack.c.l.b16 %v291
  %v1421 = vunpack.c.h.b16 %v291
  %v1422 = vunpack.c.l.b16 %v292
  %v1423 = vunpack.c.h.b16 %v292
  %v1424 = vunpack.c.l.b16 %v293
  %v1425 = vunpack.c.h.b16 %v293
  %v1426 = vunpack.c.l.b16 %v294
  %v1427 = vunpack.c.h.b16 %v294
  %v1428 = vunpack.c.l.b16 %v295
  %v1429 = vunpack.c.h.b16 %v295
  %v1430 = vunpack.c.l.b16 %v296
  %v1431 = vunpack.c.h.b16 %v296
  %v1432 = vunpack.c.l.b16 %v297
  %v1433 = vunpack.c.h.b16 %v297
  %v1434 = vunpack.c.l.b16 %v298
  %v1435 = vunpack.c.h.b16 %v298
  %v1436 = vunpack.c.l.b16 %v299
  %v1437 = vunpack.c.h.b16 %v299
  %v1438 = vunpack.c.l.b16 %v300
  %v1439 = vunpack.c.h.b16 %v300
  %v1440 = vunpack.c.l.b16 %v301
  %v1441 = vunpack.c.h.b16 %v301
  %v1442 = vunpack.c.l.b16 %v302
  %v1443 = vunpack.c.h.b16 %v302
  %v1444 = vunpack.c.l.b16 %v303
  %v1445 = vunpack.c.h.b16 %v303
  %v1446 = vunpack.c.l.b16 %v304
  %v1447 = vunpack.c.h.b16 %v304
  %v1448 = vunpack.c.l.b16 %v305
  %v1449 = vunpack.c.h.b16 %v305
  %v1450 = vpack.c.b16 %v892, %v874
  %v1451 = vpack.c.b16 %v893, %v875
  %v1452 = vpack.c.b16 %v894, %v876
  %v1453 = vpack.c.b16 %v895, %v877
  %v1454 = vpack.c.b16 %v896, %v878
  %v1455 = vpack.c.b16 %v897, %v879
  %v1456 = vpack.c.b16 %v898, %v880
  %v1457 = vpack.c.b16 %v899, %v881
  %v1458 = vpack.c.b16 %v900, %v882
  %v1459 = vpack.c.b16 %v901, %v883
  %v1460 = vpack.c.b16 %v902, %v884
  %v1461 = vpack.c.b16 %v903, %v885
  %v1462 = vpack.c.b16 %v904, %v886
  %v1463 = vpack.c.b16 %v905, %v887
  %v1464 = vpack.c.b16 %v906, %v888
  %v1465 = vpack.c.b16 %v907, %v889
  %v1466 = vpack.c.b16 %v908, %v890
  %v1467 = vpack.c.b16 %v909, %v891
  %v1468 = vpack.c.b16 %v928, %v910
  %v1469 = vpack.c.b16 %v929, %v911
  %v1470 = vpack.c.b16 %v930, %v912
  %v1471 = vpack.c.b16 %v931, %v913
  %v1472 = vpack.c.b16 %v932, %v914
  %v1473 = vpack.c.b16 %v933, %v915
  %v1474 = vpack.c.b16 %v934, %v916
  %v1475 = vpack.c.b16 %v935, %v917
  %v1476 = vpack.c.b16 %v936, %v918
  %v1477 = vpack.c.b16 %v937, %v919
  %v1478 = vpack.c.b16 %v938, %v920
  %v1479 = vpack.c.b16 %v939, %v921
  %v1480 = vpack.c.b16 %v940, %v922
  %v1481 = vpack.c.b16 %v941, %v923
  %v1482 = vpack.c.b16 %v942, %v924
  %v1483 = vpack.c.b16 %v943, %v925
  %v1484 = vpack.c.b16 %v944, %v926
  %v1485 = vpack.c.b16 %v945, %v927
  %v1486 = vpack.c.b16 %v964, %v946
  %v1487 = vpack.c.b16 %v965, %v947
  %v1488 = vpack.c.b16 %v966, %v948
  %v1489 = vpack.c.b16 %v967, %v949
  %v1490 = vpack.c.b16 %v968, %v950
  %v1491 = vpack.c.b16 %v969, %v951
  %v1492 = vpack.c.b16 %v970, %v952
  %v1493 = vpack.c.b16 %v971, %v953
  %v1494 = vpack.c.b16 %v972, %v954
  %v1495 = vpack.c.b16 %v973, %v955
  %v1496 = vpack.c.b16 %v974, %v956
  %v1497 = vpack.c.b16 %v975, %v957
  %v1498 = vpack.c.b16 %v976, %v958
  %v1499 = vpack.c.b16 %v977, %v959
  %v1500 = vpack.c.b16 %v978, %v960
  %v1501 = vpack.c.b16 %v979, %v961
  %v1502 = vpack.c.b16 %v980, %v962
  %v1503 = vpack.c.b16 %v981, %v963
  %v1504 = vpack.c.b16 %v1000, %v982
  %v1505 = vpack.c.b16 %v1001, %v983
  %v1506 = vpack.c.b16 %v1002, %v984
  %v1507 = vpack.c.b16 %v1003, %v985
  %v1508 = vpack.c.b16 %v1004, %v986
  %v1509 = vpack.c.b16 %v1005, %v987
  %v1510 = vpack.c.b16 %v1006, %v988
  %v1511 = vpack.c.b16 %v1007, %v989
  %v1512 = vpack.c.b16 %v1008, %v990
  %v1513 = vpack.c.b16 %v1009, %v991
  %v1514 = vpack.c.b16 %v1010, %v992
  %v1515 = vpack.c.b16 %v1011, %v993
  %v1516 = vpack.c.b16 %v1012, %v994
  %v1517 = vpack.c.b16 %v1013, %v995
  %v1518 = vpack.c.b16 %v1014, %v996
  %v1519 = vpack.c.b16 %v1015, %v997
  %v1520 = vpack.c.b16 %v1016, %v998
  %v1521 = vpack.c.b16 %v1017, %v999
  %v1522 = vpack.c.b16 %v1036, %v1018
  %v1523 = vpack.c.b16 %v1037, %v1019
  %v1524 = vpack.c.b16 %v1038, %v1020
  %v1525 = vpack.c.b16 %v1039, %v1021
  %v1526 = vpack.c.b16 %v1040, %v1022
  %v1527 = vpack.c.b16 %v1041, %v1023
  %v1528 = vpack.c.b16 %v1042, %v1024
  %v1529 = vpack.c.b16 %v1043, %v1025
  %v1530 = vpack.c.b16 %v1044, %v1026
  %v1531 = vpack.c.b16 %v1045, %v1027
  %v1532 = vpack.c.b16 %v1046, %v1028
  %v1533 = vpack.c.b16 %v1047, %v1029
  %v1534 = vpack.c.b16 %v1048, %v1030
  %v1535 = vpack.c.b16 %v1049, %v1031
  %v1536 = vpack.c.b16 %v1050, %v1032
  %v1537 = vpack.c.b16 %v1051, %v1033
  %v1538 = vpack.c.b16 %v1052, %v1034
  %v1539 = vpack.c.b16 %v1053, %v1035
  %v1540 = vpack.c.b16 %v1072, %v1054
  %v1541 = vpack.c.b16 %v1073, %v1055
  %v1542 = vpack.c.b16 %v1074, %v1056
  %v1543 = vpack.c.b16 %v1075, %v1057
  %v1544 = vpack.c.b16 %v1076, %v1058
  %v1545 = vpack.c.b16 %v1077, %v1059
  %v1546 = vpack.c.b16 %v1078, %v1060
  %v1547 = vpack.c.b16 %v1079, %v1061
  %v1548 = vpack.c.b16 %v1080, %v1062
  %v1549 = vpack.c.b16 %v1081, %v1063
  %v1550 = vpack.c.b16 %v1082, %v1064
  %v1551 = vpack.c.b16 %v1083, %v1065
  %v1552 = vpack.c.b16 %v1084, %v1066
  %v1553 = vpack.c.b16 %v1085, %v1067
  %v1554 = vpack.c.b16 %v1086, %v1068
  %v1555 = vpack.c.b16 %v1087, %v1069
  %v1556 = vpack.c.b16 %v1088, %v1070
  %v1557 = vpack.c.b16 %v1089, %v1071
  %v1558 = vpack.c.b16 %v1108, %v1090
  %v1559 = vpack.c.b16 %v1109, %v1091
  %v1560 = vpack.c.b16 %v1110, %v1092
  %v1561 = vpack.c.b16 %v1111, %v1093
  %v1562 = vpack.c.b16 %v1112, %v1094
  %v1563 = vpack.c.b16 %v1113, %v1095
  %v1564 = vpack.c.b16 %v1114, %v1096
  %v1565 = vpack.c.b16 %v1115, %v1097
  %v1566 = vpack.c.b16 %v1116, %v1098
  %v1567 = vpack.c.b16 %v1117, %v1099
  %v1568 = vpack.c.b16 %v1118, %v1100
  %v1569 = vpack.c.b16 %v1119, %v1101
  %v1570 = vpack.c.b16 %v1120, %v1102
  %v1571 = vpack.c.b16 %v1121, %v1103
  %v1572 = vpack.c.b16 %v1122, %v1104
  %v1573 = vpack.c.b16 %v1123, %v1105
  %v1574 = vpack.c.b16 %v1124, %v1106
  %v1575 = vpack.c.b16 %v1125, %v1107
  %v1576 = vpack.c.b16 %v1144, %v1126
  %v1577 = vpack.c.b16 %v1145, %v1127
  %v1578 = vpack.c.b16 %v1146, %v1128
  %v1579 = vpack.c.b16 %v1147, %v1129
  %v1580 = vpack.c.b16 %v1148, %v1130
  %v1581 = vpack.c.b16 %v1149, %v1131
  %v1582 = vpack.c.b16 %v1150, %v1132
  %v1583 = vpack.c.b16 %v1151, %v1133
  %v1584 = vpack.c.b16 %v1152, %v1134
  %v1585 = vpack.c.b16 %v1153, %v1135
  %v1586 = vpack.c.b16 %v1154, %v1136
  %v1587 = vpack.c.b16 %v1155, %v1137
  %v1588 = vpack.c.b16 %v1156, %v1138
  %v1589 = vpack.c.b16 %v1157, %v1139
  %v1590 = vpack.c.b16 %v1158, %v1140
  %v1591 = vpack.c.b16 %v1159, %v1141
  %v1592 = vpack.c.b16 %v1160, %v1142
  %v1593 = vpack.c.b16 %v1161, %v1143
  %v1594 = vpack.c.b16 %v1180, %v1162
  %v1595 = vpack.c.b16 %v1181, %v1163
  %v1596 = vpack.c.b16 %v1182, %v1164
  %v1597 = vpack.c.b16 %v1183, %v1165
  %v1598 = vpack.c.b16 %v1184, %v1166
  %v1599 = vpack.c.b16 %v1185, %v1167
  %v1600 = vpack.c.b16 %v1186, %v1168
  %v1601 = vpack.c.b16 %v1187, %v1169
  %v1602 = vpack.c.b16 %v1188, %v1170
  %v1603 = vpack.c.b16 %v1189, %v1171
  %v1604 = vpack.c.b16 %v1190, %v1172
  %v1605 = vpack.c.b16 %v1191, %v1173
  %v1606 = vpack.c.b16 %v1192, %v1174
  %v1607 = vpack.c.b16 %v1193, %v1175
  %v1608 = vpack.c.b16 %v1194, %v1176
  %v1609 = vpack.c.b16 %v1195, %v1177
  %v1610 = vpack.c.b16 %v1196, %v1178
  %v1611 = vpack.c.b16 %v1197, %v1179
  %v1612 = vpack.c.b16 %v1216, %v1198
  %v1613 = vpack.c.b16 %v1217, %v1199
  %v1614 = vpack.c.b16 %v1218, %v1200
  %v1615 = vpack.c.b16 %v1219, %v1201
  %v1616 = vpack.c.b16 %v1220, %v1202
  %v1617 = vpack.c.b16 %v1221, %v1203
  %v1618 = vpack.c.b16 %v1222, %v1204
  %v1619 = vpack.c.b16 %v1223, %v1205
  %v1620 = vpack.c.b16 %v1224, %v1206
  %v1621 = vpack.c.b16 %v1225, %v1207
  %v1622 = vpack.c.b16 %v1226, %v1208
  %v1623 = vpack.c.b16 %v1227, %v1209
  %v1624 = vpack.c.b16 %v1228, %v1210
  %v1625 = vpack.c.b16 %v1229, %v1211
  %v1626 = vpack.c.b16 %v1230, %v1212
  %v1627 = vpack.c.b16 %v1231, %v1213
  %v1628 = vpack.c.b16 %v1232, %v1214
  %v1629 = vpack.c.b16 %v1233, %v1215
  %v1630 = vpack.c.b16 %v1252, %v1234
  %v1631 = vpack.c.b16 %v1253, %v1235
  %v1632 = vpack.c.b16 %v1254, %v1236
  %v1633 = vpack.c.b16 %v1255, %v1237
  %v1634 = vpack.c.b16 %v1256, %v1238
  %v1635 = vpack.c.b16 %v1257, %v1239
  %v1636 = vpack.c.b16 %v1258, %v1240
  %v1637 = vpack.c.b16 %v1259, %v1241
  %v1638 = vpack.c.b16 %v1260, %v1242
  %v1639 = vpack.c.b16 %v1261, %v1243
  %v1640 = vpack.c.b16 %v1262, %v1244
  %v1641 = vpack.c.b16 %v1263, %v1245
  %v1642 = vpack.c.b16 %v1264, %v1246
  %v1643 = vpack.c.b16 %v1265, %v1247
  %v1644 = vpack.c.b16 %v1266, %v1248
  %v1645 = vpack.c.b16 %v1267, %v1249
  %v1646 = vpack.c.b16 %v1268, %v1250
  %v1647 = vpack.c.b16 %v1269, %v1251
  %v1648 = vpack.c.b16 %v1288, %v1270
  %v1649 = vpack.c.b16 %v1289, %v1271
  %v1650 = vpack.c.b16 %v1290, %v1272
  %v1651 = vpack.c.b16 %v1291, %v1273
  %v1652 = vpack.c.b16 %v1292, %v1274
  %v1653 = vpack.c.b16 %v1293, %v1275
  %v1654 = vpack.c.b16 %v1294, %v1276
  %v1655 = vpack.c.b16 %v1295, %v1277
  %v1656 = vpack.c.b16 %v1296, %v1278
  %v1657 = vpack.c.b16 %v1297, %v1279
  %v1658 = vpack.c.b16 %v1298, %v1280
  %v1659 = vpack.c.b16 %v1299, %v1281
  %v1660 = vpack.c.b16 %v1300, %v1282
  %v1661 = vpack.c.b16 %v1301, %v1283
  %v1662 = vpack.c.b16 %v1302, %v1284
  %v1663 = vpack.c.b16 %v1303, %v1285
  %v1664 = vpack.c.b16 %v1304, %v1286
  %v1665 = vpack.c.b16 %v1305, %v1287
  %v1666 = vpack.c.b16 %v1324, %v1306
  %v1667 = vpack.c.b16 %v1325, %v1307
  %v1668 = vpack.c.b16 %v1326, %v1308
  %v1669 = vpack.c.b16 %v1327, %v1309
  %v1670 = vpack.c.b16 %v1328, %v1310
  %v1671 = vpack.c.b16 %v1329, %v1311
  %v1672 = vpack.c.b16 %v1330, %v1312
  %v1673 = vpack.c.b16 %v1331, %v1313
  %v1674 = vpack.c.b16 %v1332, %v1314
  %v1675 = vpack.c.b16 %v1333, %v1315
  %v1676 = vpack.c.b16 %v1334, %v1316
  %v1677 = vpack.c.b16 %v1335, %v1317
  %v1678 = vpack.c.b16 %v1336, %v1318
  %v1679 = vpack.c.b16 %v1337, %v1319
  %v1680 = vpack.c.b16 %v1338, %v1320
  %v1681 = vpack.c.b16 %v1339, %v1321
  %v1682 = vpack.c.b16 %v1340, %v1322
  %v1683 = vpack.c.b16 %v1341, %v1323
  %v1684 = vpack.c.b16 %v1360, %v1342
  %v1685 = vpack.c.b16 %v1361, %v1343
  %v1686 = vpack.c.b16 %v1362, %v1344
  %v1687 = vpack.c.b16 %v1363, %v1345
  %v1688 = vpack.c.b16 %v1364, %v1346
  %v1689 = vpack.c.b16 %v1365, %v1347
  %v1690 = vpack.c.b16 %v1366, %v1348
  %v1691 = vpack.c.b16 %v1367, %v1349
  %v1692 = vpack.c.b16 %v1368, %v1350
  %v1693 = vpack.c.b16 %v1369, %v1351
  %v1694 = vpack.c.b16 %v1370, %v1352
  %v1695 = vpack.c.b16 %v1371, %v1353
  %v1696 = vpack.c.b16 %v1372, %v1354
  %v1697 = vpack.c.b16 %v1373, %v1355
  %v1698 = vpack.c.b16 %v1374, %v1356
  %v1699 = vpack.c.b16 %v1375, %v1357
  %v1700 = vpack.c.b16 %v1376, %v1358
  %v1701 = vpack.c.b16 %v1377, %v1359
  %v1702 = vpack.c.b16 %v1396, %v1378
  %v1703 = vpack.c.b16 %v1397, %v1379
  %v1704 = vpack.c.b16 %v1398, %v1380
  %v1705 = vpack.c.b16 %v1399, %v1381
  %v1706 = vpack.c.b16 %v1400, %v1382
  %v1707 = vpack.c.b16 %v1401, %v1383
  %v1708 = vpack.c.b16 %v1402, %v1384
  %v1709 = vpack.c.b16 %v1403, %v1385
  %v1710 = vpack.c.b16 %v1404, %v1386
  %v1711 = vpack.c.b16 %v1405, %v1387
  %v1712 = vpack.c.b16 %v1406, %v1388
  %v1713 = vpack.c.b16 %v1407, %v1389
  %v1714 = vpack.c.b16 %v1408, %v1390
  %v1715 = vpack.c.b16 %v1409, %v1391
  %v1716 = vpack.c.b16 %v1410, %v1392
  %v1717 = vpack.c.b16 %v1411, %v1393
  %v1718 = vpack.c.b16 %v1412, %v1394
  %v1719 = vpack.c.b16 %v1413, %v1395
  %v1720 = vpack.c.b16 %v1432, %v1414
  %v1721 = vpack.c.b16 %v1433, %v1415
  %v1722 = vpack.c.b16 %v1434, %v1416
  %v1723 = vpack.c.b16 %v1435, %v1417
  %v1724 = vpack.c.b16 %v1436, %v1418
  %v1725 = vpack.c.b16 %v1437, %v1419
  %v1726 = vpack.c.b16 %v1438, %v1420
  %v1727 = vpack.c.b16 %v1439, %v1421
  %v1728 = vpack.c.b16 %v1440, %v1422
  %v1729 = vpack.c.b16 %v1441, %v1423
  %v1730 = vpack.c.b16 %v1442, %v1424
  %v1731 = vpack.c.b16 %v1443, %v1425
  %v1732 = vpack.c.b16 %v1444, %v1426
  %v1733 = vpack.c.b16 %v1445, %v1427
  %v1734 = vpack.c.b16 %v1446, %v1428
  %v1735 = vpack.c.b16 %v1447, %v1429
  %v1736 = vpack.c.b16 %v1448, %v1430
  %v1737 = vpack.c.b16 %v1449, %v1431
  %v2290 = vunpack.c.l.b16 %v306
  %v2291 = vunpack.c.l.b16 %v307
  %v2292 = vunpack.c.l.b16 %v308
  %v2293 = vunpack.c.l.b16 %v309
  %v2294 = vunpack.c.l.b16 %v310
  %v2295 = vunpack.c.l.b16 %v311
  %v2296 = vunpack.c.l.b16 %v312
  %v2297 = vunpack.c.l.b16 %v313
  %v2298 = vunpack.c.l.b16 %v314
  %v2299 = vunpack.c.l.b16 %v315
  %v2300 = vunpack.c.l.b16 %v316
  %v2301 = vunpack.c.l.b16 %v317
  %v2302 = vunpack.c.l.b16 %v318
  %v2303 = vunpack.c.l.b16 %v319
  %v2304 = vunpack.c.l.b16 %v320
  %v2305 = vunpack.c.l.b16 %v321
  %v2306 = vunpack.c.l.b16 %v322
  %v2307 = vunpack.c.l.b16 %v323
  %v2308 = vunpack.c.l.b16 %v324
  %v2309 = vunpack.c.l.b16 %v325
  %v2310 = vunpack.c.l.b16 %v326
  %v2311 = vunpack.c.l.b16 %v327
  %v2312 = vunpack.c.l.b16 %v328
  %v2313 = vunpack.c.l.b16 %v329
  %v2314 = vunpack.c.l.b16 %v330
  %v2315 = vunpack.c.l.b16 %v331
  %v2316 = vunpack.c.l.b16 %v332
  %v2317 = vunpack.c.l.b16 %v333
  %v2318 = vunpack.c.l.b16 %v334
  %v2319 = vunpack.c.l.b16 %v335
  %v2320 = vunpack.c.l.b16 %v336
  %v2321 = vunpack.c.l.b16 %v337
  %v2322 = vunpack.c.l.b16 %v338
  %v2323 = vunpack.c.l.b16 %v339
  %v2324 = vunpack.c.l.b16 %v340
  %v2325 = vunpack.c.l.b16 %v341
  %v2326 = vunpack.c.l.b16 %v342
  %v2327 = vunpack.c.l.b16 %v343
  %v2328 = vunpack.c.l.b16 %v344
  %v2329 = vunpack.c.l.b16 %v345
  %v2330 = vunpack.c.l.b16 %v346
  %v2331 = vunpack.c.l.b16 %v347
  %v2332 = vunpack.c.l.b16 %v348
  %v2333 = vunpack.c.l.b16 %v349
  %v2334 = vunpack.c.l.b16 %v350
  %v2335 = vunpack.c.l.b16 %v351
  %v2336 = vunpack.c.l.b16 %v352
  %v2337 = vunpack.c.l.b16 %v353
  %v2338 = vunpack.c.l.b16 %v354
  %v2339 = vunpack.c.l.b16 %v355
  %v2340 = vunpack.c.l.b16 %v356
  %v2341 = vunpack.c.l.b16 %v357
  %v2342 = vunpack.c.l.b16 %v358
  %v2343 = vunpack.c.l.b16 %v359
  %v2344 = vunpack.c.l.b16 %v360
  %v2345 = vunpack.c.l.b16 %v361
  %v2346 = vunpack.c.l.b16 %v362
  %v2347 = vunpack.c.l.b16 %v363
  %v2348 = vunpack.c.l.b16 %v364
  %v2349 = vunpack.c.l.b16 %v365
  %v2350 = vunpack.c.l.b16 %v366
  %v2351 = vunpack.c.l.b16 %v367
  %v2352 = vunpack.c.l.b16 %v368
  %v2353 = vunpack.c.l.b16 %v369
  %v2354 = vunpack.c.l.b16 %v370
  %v2355 = vunpack.c.l.b16 %v371
  %v2356 = vunpack.c.l.b16 %v372
  %v2357 = vunpack.c.l.b16 %v373
  %v2358 = vunpack.c.l.b16 %v374
  %v2359 = vunpack.c.l.b16 %v375
  %v2360 = vunpack.c.l.b16 %v376
  %v2361 = vunpack.c.l.b16 %v377
  %v2362 = vunpack.c.l.b16 %v378
  %v2363 = vunpack.c.l.b16 %v379
  %v2364 = vunpack.c.l.b16 %v380
  %v2365 = vunpack.c.l.b16 %v381
  %v2366 = vunpack.c.l.b16 %v382
  %v2367 = vunpack.c.l.b16 %v383
  %v2368 = vunpack.c.l.b16 %v384
  %v2369 = vunpack.c.l.b16 %v385
  %v2370 = vunpack.c.l.b16 %v386
  %v2371 = vunpack.c.l.b16 %v387
  %v2372 = vunpack.c.l.b16 %v388
  %v2373 = vunpack.c.l.b16 %v389
  %v2374 = vunpack.c.l.b16 %v390
  %v2375 = vunpack.c.l.b16 %v391
  %v2376 = vunpack.c.l.b16 %v392
  %v2377 = vunpack.c.l.b16 %v393
  %v2378 = vunpack.c.l.b16 %v394
  %v2379 = vunpack.c.l.b16 %v395
  %v2380 = vunpack.c.l.b16 %v396
  %v2381 = vunpack.c.l.b16 %v397
  %v2382 = vunpack.c.l.b16 %v398
  %v2383 = vunpack.c.l.b16 %v399
  %v2384 = vunpack.c.l.b16 %v400
  %v2385 = vunpack.c.l.b16 %v401
  %v2386 = vunpack.c.l.b16 %v402
  %v2387 = vunpack.c.l.b16 %v403
  %v2388 = vunpack.c.l.b16 %v404
  %v2389 = vunpack.c.l.b16 %v405
  %v2390 = vunpack.c.l.b16 %v406
  %v2391 = vunpack.c.l.b16 %v407
  %v2392 = vunpack.c.l.b16 %v408
  %v2393 = vunpack.c.l.b16 %v409
  %v2394 = vunpack.c.l.b16 %v410
  %v2395 = vunpack.c.l.b16 %v411
  %v2396 = vunpack.c.l.b16 %v412
  %v2397 = vunpack.c.l.b16 %v413
  %v2398 = vunpack.c.l.b16 %v414
  %v2399 = vunpack.c.l.b16 %v415
  %v2400 = vunpack.c.l.b16 %v416
  %v2401 = vunpack.c.l.b16 %v417
  %v2402 = vunpack.c.l.b16 %v418
  %v2403 = vunpack.c.l.b16 %v419
  %v2404 = vunpack.c.l.b16 %v420
  %v2405 = vunpack.c.l.b16 %v421
  %v2406 = vunpack.c.l.b16 %v422
  %v2407 = vunpack.c.l.b16 %v423
  %v2408 = vunpack.c.l.b16 %v424
  %v2409 = vunpack.c.l.b16 %v425
  %v2410 = vunpack.c.l.b16 %v426
  %v2411 = vunpack.c.l.b16 %v427
  %v2412 = vunpack.c.l.b16 %v428
  %v2413 = vunpack.c.l.b16 %v429
  %v2414 = vunpack.c.l.b16 %v430
  %v2415 = vunpack.c.l.b16 %v431
  %v2416 = vunpack.c.l.b16 %v432
  %v2417 = vunpack.c.l.b16 %v433
  %v2418 = vunpack.c.l.b16 %v434
  %v2419 = vunpack.c.l.b16 %v435
  %v2420 = vunpack.c.l.b16 %v436
  %v2421 = vunpack.c.l.b16 %v437
  %v2422 = vunpack.c.l.b16 %v438
  %v2423 = vunpack.c.l.b16 %v439
  %v2424 = vunpack.c.l.b16 %v440
  %v2425 = vunpack.c.l.b16 %v441
  %v2426 = vunpack.c.l.b16 %v442
  %v2427 = vunpack.c.l.b16 %v443
  %v2428 = vunpack.c.l.b16 %v444
  %v2429 = vunpack.c.l.b16 %v445
  %v2430 = vunpack.c.l.b16 %v446
  %v2431 = vunpack.c.l.b16 %v447
  %v2432 = vunpack.c.l.b16 %v448
  %v2433 = vunpack.c.l.b16 %v449
  %v2434 = vunpack.c.l.b16 %v450
  %v2435 = vunpack.c.l.b16 %v451
  %v2436 = vunpack.c.l.b16 %v452
  %v2437 = vunpack.c.l.b16 %v453
  %v2438 = vunpack.c.l.b16 %v454
  %v2439 = vunpack.c.l.b16 %v455
  %v2440 = vunpack.c.l.b16 %v456
  %v2441 = vunpack.c.l.b16 %v457
  %v2442 = vunpack.c.l.b16 %v458
  %v2443 = vunpack.c.l.b16 %v459
  %v2444 = vunpack.c.l.b16 %v460
  %v2445 = vunpack.c.l.b16 %v461
  %v2446 = vunpack.c.l.b16 %v462
  %v2447 = vunpack.c.l.b16 %v463
  %v2448 = vunpack.c.l.b16 %v464
  %v2449 = vunpack.c.l.b16 %v465
  %v2450 = vunpack.c.l.b16 %v466
  %v2451 = vunpack.c.l.b16 %v467
  %v2452 = vunpack.c.l.b16 %v468
  %v2453 = vunpack.c.l.b16 %v469
  %v2454 = vunpack.c.l.b16 %v470
  %v2455 = vunpack.c.l.b16 %v471
  %v2456 = vunpack.c.l.b16 %v472
  %v2457 = vunpack.c.l.b16 %v473
  %v2458 = vunpack.c.l.b16 %v474
  %v2459 = vunpack.c.l.b16 %v475
  %v2460 = vunpack.c.l.b16 %v476
  %v2461 = vunpack.c.l.b16 %v477
  %v2462 = vunpack.c.l.b16 %v478
  %v2463 = vunpack.c.l.b16 %v479
  %v2464 = vunpack.c.l.b16 %v480
  %v2465 = vunpack.c.l.b16 %v481
  %v2466 = vunpack.c.l.b16 %v482
  %v2467 = vunpack.c.l.b16 %v483
  %v2468 = vunpack.c.l.b16 %v484
  %v2469 = vunpack.c.l.b16 %v485
  %v2470 = vunpack.c.l.b16 %v486
  %v2471 = vunpack.c.l.b16 %v487
  %v2472 = vunpack.c.l.b16 %v488
  %v2473 = vunpack.c.l.b16 %v489
  %v2474 = vunpack.c.l.b16 %v490
  %v2475 = vunpack.c.l.b16 %v491
  %v2476 = vunpack.c.l.b16 %v492
  %v2477 = vunpack.c.l.b16 %v493
  %v2478 = vunpack.c.l.b16 %v494
  %v2479 = vunpack.c.l.b16 %v495
  %v2480 = vunpack.c.l.b16 %v496
  %v2481 = vunpack.c.l.b16 %v497
  %v2482 = vunpack.c.l.b16 %v498
  %v2483 = vunpack.c.l.b16 %v499
  %v2484 = vunpack.c.l.b16 %v500
  %v2485 = vunpack.c.l.b16 %v501
  %v2486 = vunpack.c.l.b16 %v502
  %v2487 = vunpack.c.l.b16 %v503
  %v2488 = vunpack.c.l.b16 %v504
  %v2489 = vunpack.c.l.b16 %v505
  %v2490 = vunpack.c.l.b16 %v506
  %v2491 = vunpack.c.l.b16 %v507
  %v2492 = vunpack.c.l.b16 %v508
  %v2493 = vunpack.c.l.b16 %v509
  %v2494 = vunpack.c.l.b16 %v510
  %v2495 = vunpack.c.l.b16 %v511
  %v2496 = vunpack.c.l.b16 %v512
  %v2497 = vunpack.c.l.b16 %v513
  %v2498 = vunpack.c.l.b16 %v514
  %v2499 = vunpack.c.l.b16 %v515
  %v2500 = vunpack.c.l.b16 %v516
  %v2501 = vunpack.c.l.b16 %v517
  %v2502 = vunpack.c.l.b16 %v518
  %v2503 = vunpack.c.l.b16 %v519
  %v2504 = vunpack.c.l.b16 %v520
  %v2505 = vunpack.c.l.b16 %v521
  %v2506 = vunpack.c.l.b16 %v522
  %v2507 = vunpack.c.l.b16 %v523
  %v2508 = vunpack.c.l.b16 %v524
  %v2509 = vunpack.c.l.b16 %v525
  %v2510 = vunpack.c.l.b16 %v526
  %v2511 = vunpack.c.l.b16 %v527
  %v2512 = vunpack.c.l.b16 %v528
  %v2513 = vunpack.c.l.b16 %v529
  %v2514 = vunpack.c.l.b16 %v530
  %v2515 = vunpack.c.l.b16 %v531
  %v2516 = vunpack.c.l.b16 %v532
  %v2517 = vunpack.c.l.b16 %v533
  %v2518 = vunpack.c.l.b16 %v534
  %v2519 = vunpack.c.l.b16 %v535
  %v2520 = vunpack.c.l.b16 %v536
  %v2521 = vunpack.c.l.b16 %v537
  %v2522 = vunpack.c.l.b16 %v538
  %v2523 = vunpack.c.l.b16 %v539
  %v2524 = vunpack.c.l.b16 %v540
  %v2525 = vunpack.c.l.b16 %v541
  %v2526 = vunpack.c.l.b16 %v542
  %v2527 = vunpack.c.l.b16 %v543
  %v2528 = vunpack.c.l.b16 %v544
  %v2529 = vunpack.c.l.b16 %v545
  %v2530 = vunpack.c.l.b16 %v546
  %v2531 = vunpack.c.l.b16 %v547
  %v2532 = vunpack.c.l.b16 %v548
  %v2533 = vunpack.c.l.b16 %v549
  %v2534 = vunpack.c.l.b16 %v550
  %v2535 = vunpack.c.l.b16 %v551
  %v2536 = vunpack.c.l.b16 %v552
  %v2537 = vunpack.c.l.b16 %v553
  %v2538 = vunpack.c.l.b16 %v554
  %v2539 = vunpack.c.l.b16 %v555
  %v2540 = vunpack.c.l.b16 %v556
  %v2541 = vunpack.c.l.b16 %v557
  %v2542 = vunpack.c.l.b16 %v558
  %v2543 = vunpack.c.l.b16 %v559
  %v2544 = vunpack.c.l.b16 %v560
  %v2545 = vunpack.c.l.b16 %v561
  %v2546 = vunpack.c.l.b16 %v562
  %v2547 = vunpack.c.l.b16 %v563
  %v2548 = vunpack.c.l.b16 %v564
  %v2549 = vunpack.c.l.b16 %v565
  %v2550 = vunpack.c.l.b16 %v566
  %v2551 = vunpack.c.l.b16 %v567
  %v2552 = vunpack.c.l.b16 %v568
  %v2553 = vunpack.c.l.b16 %v569
  %v2554 = vunpack.c.l.b16 %v570
  %v2555 = vunpack.c.l.b16 %v571
  %v2556 = vunpack.c.l.b16 %v572
  %v2557 = vunpack.c.l.b16 %v573
  %v2558 = vunpack.c.l.b16 %v574
  %v2559 = vunpack.c.l.b16 %v575
  %v2560 = vunpack.c.l.b16 %v576
  %v2561 = vunpack.c.l.b16 %v577
  %v2562 = vunpack.c.l.b16 %v578
  %v2563 = vunpack.c.l.b16 %v579
  %v2564 = vunpack.c.l.b16 %v580
  %v2565 = vunpack.c.l.b16 %v581
  %v2566 = vunpack.c.l.b16 %v582
  %v2567 = vunpack.c.l.b16 %v583
  %v2568 = vunpack.c.l.b16 %v584
  %v2569 = vunpack.c.l.b16 %v585
  %v2570 = vpack.c.b16 %v2291, %v2290
  %v2571 = vpack.c.b16 %v2293, %v2292
  %v2572 = vpack.c.b16 %v2295, %v2294
  %v2573 = vpack.c.b16 %v2297, %v2296
  %v2574 = vpack.c.b16 %v2299, %v2298
  %v2575 = vpack.c.b16 %v2301, %v2300
  %v2576 = vpack.c.b16 %v2303, %v2302
  %v2577 = vpack.c.b16 %v2305, %v2304
  %v2578 = vpack.c.b16 %v2307, %v2306
  %v2579 = vpack.c.b16 %v2309, %v2308
  %v2580 = vpack.c.b16 %v2311, %v2310
  %v2581 = vpack.c.b16 %v2313, %v2312
  %v2582 = vpack.c.b16 %v2315, %v2314
  %v2583 = vpack.c.b16 %v2317, %v2316
  %v2584 = vpack.c.b16 %v2319, %v2318
  %v2585 = vpack.c.b16 %v2321, %v2320
  %v2586 = vpack.c.b16 %v2323, %v2322
  %v2587 = vpack.c.b16 %v2325, %v2324
  %v2588 = vpack.c.b16 %v2327, %v2326
  %v2589 = vpack.c.b16 %v2329, %v2328
  %v2590 = vpack.c.b16 %v2331, %v2330
  %v2591 = vpack.c.b16 %v2333, %v2332
  %v2592 = vpack.c.b16 %v2335, %v2334
  %v2593 = vpack.c.b16 %v2337, %v2336
  %v2594 = vpack.c.b16 %v2339, %v2338
  %v2595 = vpack.c.b16 %v2341, %v2340
  %v2596 = vpack.c.b16 %v2343, %v2342
  %v2597 = vpack.c.b16 %v2345, %v2344
  %v2598 = vpack.c.b16 %v2347, %v2346
  %v2599 = vpack.c.b16 %v2349, %v2348
  %v2600 = vpack.c.b16 %v2351, %v2350
  %v2601 = vpack.c.b16 %v2353, %v2352
  %v2602 = vpack.c.b16 %v2355, %v2354
  %v2603 = vpack.c.b16 %v2357, %v2356
  %v2604 = vpack.c.b16 %v2359, %v2358
  %v2605 = vpack.c.b16 %v2361, %v2360
  %v2606 = vpack.c.b16 %v2363, %v2362
  %v2607 = vpack.c.b16 %v2365, %v2364
  %v2608 = vpack.c.b16 %v2367, %v2366
  %v2609 = vpack.c.b16 %v2369, %v2368
  %v2610 = vpack.c.b16 %v2371, %v2370
  %v2611 = vpack.c.b16 %v2373, %v2372
  %v2612 = vpack.c.b16 %v2375, %v2374
  %v2613 = vpack.c.b16 %v2377, %v2376
  %v2614 = vpack.c.b16 %v2379, %v2378
  %v2615 = vpack.c.b16 %v2381, %v2380
  %v2616 = vpack.c.b16 %v2383, %v2382
  %v2617 = vpack.c.b16 %v2385, %v2384
  %v2618 = vpack.c.b16 %v2387, %v2386
  %v2619 = vpack.c.b16 %v2389, %v2388
  %v2620 = vpack.c.b16 %v2391, %v2390
  %v2621 = vpack.c.b16 %v2393, %v2392
  %v2622 = vpack.c.b16 %v2395, %v2394
  %v2623 = vpack.c.b16 %v2397, %v2396
  %v2624 = vpack.c.b16 %v2399, %v2398
  %v2625 = vpack.c.b16 %v2401, %v2400
  %v2626 = vpack.c.b16 %v2403, %v2402
  %v2627 = vpack.c.b16 %v2405, %v2404
  %v2628 = vpack.c.b16 %v2407, %v2406
  %v2629 = vpack.c.b16 %v2409, %v2408
  %v2630 = vpack.c.b16 %v2411, %v2410
  %v2631 = vpack.c.b16 %v2413, %v2412
  %v2632 = vpack.c.b16 %v2415, %v2414
  %v2633 = vpack.c.b16 %v2417, %v2416
  %v2634 = vpack.c.b16 %v2419, %v2418
  %v2635 = vpack.c.b16 %v2421, %v2420
  %v2636 = vpack.c.b16 %v2423, %v2422
  %v2637 = vpack.c.b16 %v2425, %v2424
  %v2638 = vpack.c.b16 %v2427, %v2426
  %v2639 = vpack.c.b16 %v2429, %v2428
  %v2640 = vpack.c.b16 %v2431, %v2430
  %v2641 = vpack.c.b16 %v2433, %v2432
  %v2642 = vpack.c.b16 %v2435, %v2434
  %v2643 = vpack.c.b16 %v2437, %v2436
  %v2644 = vpack.c.b16 %v2439, %v2438
  %v2645 = vpack.c.b16 %v2441, %v2440
  %v2646 = vpack.c.b16 %v2443, %v2442
  %v2647 = vpack.c.b16 %v2445, %v2444
  %v2648 = vpack.c.b16 %v2447, %v2446
  %v2649 = vpack.c.b16 %v2449, %v2448
  %v2650 = vpack.c.b16 %v2451, %v2450
  %v2651 = vpack.c.b16 %v2453, %v2452
  %v2652 = vpack.c.b16 %v2455, %v2454
  %v2653 = vpack.c.b16 %v2457, %v2456
  %v2654 = vpack.c.b16 %v2459, %v2458
  %v2655 = vpack.c.b16 %v2461, %v2460
  %v2656 = vpack.c.b16 %v2463, %v2462
  %v2657 = vpack.c.b16 %v2465, %v2464
  %v2658 = vpack.c.b16 %v2467, %v2466
  %v2659 = vpack.c.b16 %v2469, %v2468
  %v2660 = vpack.c.b16 %v2471, %v2470
  %v2661 = vpack.c.b16 %v2473, %v2472
  %v2662 = vpack.c.b16 %v2475, %v2474
  %v2663 = vpack.c.b16 %v2477, %v2476
  %v2664 = vpack.c.b16 %v2479, %v2478
  %v2665 = vpack.c.b16 %v2481, %v2480
  %v2666 = vpack.c.b16 %v2483, %v2482
  %v2667 = vpack.c.b16 %v2485, %v2484
  %v2668 = vpack.c.b16 %v2487, %v2486
  %v2669 = vpack.c.b16 %v2489, %v2488
  %v2670 = vpack.c.b16 %v2491, %v2490
  %v2671 = vpack.c.b16 %v2493, %v2492
  %v2672 = vpack.c.b16 %v2495, %v2494
  %v2673 = vpack.c.b16 %v2497, %v2496
  %v2674 = vpack.c.b16 %v2499, %v2498
  %v2675 = vpack.c.b16 %v2501, %v2500
  %v2676 = vpack.c.b16 %v2503, %v2502
  %v2677 = vpack.c.b16 %v2505, %v2504
  %v2678 = vpack.c.b16 %v2507, %v2506
  %v2679 = vpack.c.b16 %v2509, %v2508
  %v2680 = vpack.c.b16 %v2511, %v2510
  %v2681 = vpack.c.b16 %v2513, %v2512
  %v2682 = vpack.c.b16 %v2515, %v2514
  %v2683 = vpack.c.b16 %v2517, %v2516
  %v2684 = vpack.c.b16 %v2519, %v2518
  %v2685 = vpack.c.b16 %v2521, %v2520
  %v2686 = vpack.c.b16 %v2523, %v2522
  %v2687 = vpack.c.b16 %v2525, %v2524
  %v2688 = vpack.c.b16 %v2527, %v2526
  %v2689 = vpack.c.b16 %v2529, %v2528
  %v2690 = vpack.c.b16 %v2531, %v2530
  %v2691 = vpack.c.b16 %v2533, %v2532
  %v2692 = vpack.c.b16 %v2535, %v2534
  %v2693 = vpack.c.b16 %v2537, %v2536
  %v2694 = vpack.c.b16 %v2539, %v2538
  %v2695 = vpack.c.b16 %v2541, %v2540
  %v2696 = vpack.c.b16 %v2543, %v2542
  %v2697 = vpack.c.b16 %v2545, %v2544
  %v2698 = vpack.c.b16 %v2547, %v2546
  %v2699 = vpack.c.b16 %v2549, %v2548
  %v2700 = vpack.c.b16 %v2551, %v2550
  %v2701 = vpack.c.b16 %v2553, %v2552
  %v2702 = vpack.c.b16 %v2555, %v2554
  %v2703 = vpack.c.b16 %v2557, %v2556
  %v2704 = vpack.c.b16 %v2559, %v2558
  %v2705 = vpack.c.b16 %v2561, %v2560
  %v2706 = vpack.c.b16 %v2563, %v2562
  %v2707 = vpack.c.b16 %v2565, %v2564
  %v2708 = vpack.c.b16 %v2567, %v2566
  %v2709 = vpack.c.b16 %v2569, %v2568
  %vm2850 = vcmask 523264
  %v2852 = vsel %vm2850, %v1467, 0
  %v2855 = vsel %vm2850, %v1485, 0
  %v2858 = vsel %vm2850, %v1503, 0
  %v2861 = vsel %vm2850, %v1521, 0
  %v2864 = vsel %vm2850, %v1539, 0
  %v2867 = vsel %vm2850, %v1557, 0
  %v2870 = vsel %vm2850, %v1575, 0
  %v2873 = vsel %vm2850, %v1593, 0
  %v2876 = vsel %vm2850, %v1611, 0
  %v2879 = vsel %vm2850, %v1629, 0
  %v2882 = vsel %vm2850, %v1647, 0
  %v2885 = vsel %vm2850, %v1665, 0
  %v2888 = vsel %vm2850, %v1683, 0
  %v2891 = vsel %vm2850, %v1701, 0
  %v2894 = vsel %vm2850, %v1719, 0
  %v2897 = vsel %vm2850, %v1737, 0
  %2899 = vmatprep.subr.bf16.mxu0 0
  %2900 = vmatpush1.bf16.msra.mxu0 %v2570
  %2901 = vmatprep.subr.bf16.mxu0 0
  %2902 = vmatpush1.bf16.msra.mxu0 %v2571
  %2903 = vmatprep.subr.bf16.mxu0 0
  %2904 = vmatpush1.bf16.msra.mxu0 %v2572
  %2905 = vmatprep.subr.bf16.mxu0 0
  %2906 = vmatpush1.bf16.msra.mxu0 %v2573
  %2907 = vmatprep.subr.bf16.mxu0 0
  %2908 = vmatpush1.bf16.msra.mxu0 %v2574
  %2909 = vmatprep.subr.bf16.mxu0 0
  %2910 = vmatpush1.bf16.msra.mxu0 %v2575
  %2911 = vmatprep.subr.bf16.mxu0 0
  %2912 = vmatpush1.bf16.msra.mxu0 %v2576
  %2913 = vmatprep.subr.bf16.mxu0 0
  %2914 = vmatpush1.bf16.msra.mxu0 %v2577
  %2915 = vmatprep.subr.bf16.mxu0 0
  %2916 = vmatpush1.bf16.msra.mxu0 %v2578
  %2917 = vmatprep.subr.bf16.mxu0 0
  %2918 = vmatpush1.bf16.msra.mxu0 %v2579
  %2919 = vmatprep.subr.bf16.mxu0 0
  %2920 = vmatpush1.bf16.msra.mxu0 %v2580
  %2921 = vmatprep.subr.bf16.mxu0 0
  %2922 = vmatpush1.bf16.msra.mxu0 %v2581
  %2923 = vmatprep.subr.bf16.mxu0 0
  %2924 = vmatpush1.bf16.msra.mxu0 %v2582
  %2925 = vmatprep.subr.bf16.mxu0 0
  %2926 = vmatpush1.bf16.msra.mxu0 %v2583
  %2927 = vmatprep.subr.bf16.mxu0 0
  %2928 = vmatpush1.bf16.msra.mxu0 %v2584
  %2929 = vmatprep.subr.bf16.mxu0 0
  %2930 = vmatpush1.bf16.msra.mxu0 %v2585
  %2931 = vmatprep.mubr.bf16.mxu0 %v1451
  %2932 = vmatmul.mubr.bf16.gmra.mrb[0].mxu0 %v1450
  %v2933 = vpop.f32.mrb[0].mxu0
  %v2934 = vadd.f32 0.0, %v2933
  %v2935 = vpop.f32.mrb[0].mxu0
  %v2936 = vpop.f32.mrb[0].mxu0
  %v2937 = vadd.f32 0.0, %v2936
  %v2938 = vpop.f32.mrb[0].mxu0
  %2939 = vmatprep.mubr.bf16.mxu0 %v1469
  %2940 = vmatmul.mubr.bf16.gmra.mrb[0].mxu0 %v1468
  %v2941 = vpop.f32.mrb[0].mxu0
  %v2942 = vadd.f32 0.0, %v2941
  %v2943 = vpop.f32.mrb[0].mxu0
  %v2944 = vpop.f32.mrb[0].mxu0
  %v2945 = vadd.f32 0.0, %v2944
  %v2946 = vpop.f32.mrb[0].mxu0
  %2947 = vmatprep.mubr.bf16.mxu0 %v1487
  %2948 = vmatmul.mubr.bf16.gmra.mrb[0].mxu0 %v1486
  %v2949 = vpop.f32.mrb[0].mxu0
  %v2950 = vadd.f32 0.0, %v2949
  %v2951 = vpop.f32.mrb[0].mxu0
  %v2952 = vpop.f32.mrb[0].mxu0
  %v2953 = vadd.f32 0.0, %v2952
  %v2954 = vpop.f32.mrb[0].mxu0
  %2955 = vmatprep.mubr.bf16.mxu0 %v1505
  %2956 = vmatmul.mubr.bf16.gmra.mrb[0].mxu0 %v1504
  %v2957 = vpop.f32.mrb[0].mxu0
  %v2958 = vadd.f32 0.0, %v2957
  %v2959 = vpop.f32.mrb[0].mxu0
  %v2960 = vpop.f32.mrb[0].mxu0
  %v2961 = vadd.f32 0.0, %v2960
  %v2962 = vpop.f32.mrb[0].mxu0
  %2963 = vmatprep.mubr.bf16.mxu0 %v1523
  %2964 = vmatmul.mubr.bf16.gmra.mrb[0].mxu0 %v1522
  %v2965 = vpop.f32.mrb[0].mxu0
  %v2966 = vadd.f32 0.0, %v2965
  %v2967 = vpop.f32.mrb[0].mxu0
  %v2968 = vpop.f32.mrb[0].mxu0
  %v2969 = vadd.f32 0.0, %v2968
  %v2970 = vpop.f32.mrb[0].mxu0
  %2971 = vmatprep.mubr.bf16.mxu0 %v1541
  %2972 = vmatmul.mubr.bf16.gmra.mrb[0].mxu0 %v1540
  %v2973 = vpop.f32.mrb[0].mxu0
  %v2974 = vadd.f32 0.0, %v2973
  %v2975 = vpop.f32.mrb[0].mxu0
  %v2976 = vpop.f32.mrb[0].mxu0
  %v2977 = vadd.f32 0.0, %v2976
  %v2978 = vpop.f32.mrb[0].mxu0
  %2979 = vmatprep.mubr.bf16.mxu0 %v1559
  %2980 = vmatmul.mubr.bf16.gmra.mrb[0].mxu0 %v1558
  %v2981 = vpop.f32.mrb[0].mxu0
  %v2982 = vadd.f32 0.0, %v2981
  %v2983 = vpop.f32.mrb[0].mxu0
  %v2984 = vpop.f32.mrb[0].mxu0
  %v2985 = vadd.f32 0.0, %v2984
  %v2986 = vpop.f32.mrb[0].mxu0
  %2987 = vmatprep.mubr.bf16.mxu0 %v1577
  %2988 = vmatmul.mubr.bf16.gmra.mrb[0].mxu0 %v1576
  %v2989 = vpop.f32.mrb[0].mxu0
  %v2990 = vadd.f32 0.0, %v2989
  %v2991 = vpop.f32.mrb[0].mxu0
  %v2992 = vpop.f32.mrb[0].mxu0
  %v2993 = vadd.f32 0.0, %v2992
  %v2994 = vpop.f32.mrb[0].mxu0
  %2995 = vmatprep.mubr.bf16.mxu0 %v1595
  %2996 = vmatmul.mubr.bf16.gmra.mrb[0].mxu0 %v1594
  %v2997 = vpop.f32.mrb[0].mxu0
  %v2998 = vadd.f32 0.0, %v2997
  %v2999 = vpop.f32.mrb[0].mxu0
  %v3000 = vpop.f32.mrb[0].mxu0
  %v3001 = vadd.f32 0.0, %v3000
  %v3002 = vpop.f32.mrb[0].mxu0
  %3003 = vmatprep.mubr.bf16.mxu0 %v1613
  %3004 = vmatmul.mubr.bf16.gmra.mrb[0].mxu0 %v1612
  %v3005 = vpop.f32.mrb[0].mxu0
  %v3006 = vadd.f32 0.0, %v3005
  %v3007 = vpop.f32.mrb[0].mxu0
  %v3008 = vpop.f32.mrb[0].mxu0
  %v3009 = vadd.f32 0.0, %v3008
  %v3010 = vpop.f32.mrb[0].mxu0
  %3011 = vmatprep.mubr.bf16.mxu0 %v1631
  %3012 = vmatmul.mubr.bf16.gmra.mrb[0].mxu0 %v1630
  %v3013 = vpop.f32.mrb[0].mxu0
  %v3014 = vadd.f32 0.0, %v3013
  %v3015 = vpop.f32.mrb[0].mxu0
  %v3016 = vpop.f32.mrb[0].mxu0
  %v3017 = vadd.f32 0.0, %v3016
  %v3018 = vpop.f32.mrb[0].mxu0
  %3019 = vmatprep.mubr.bf16.mxu0 %v1649
  %3020 = vmatmul.mubr.bf16.gmra.mrb[0].mxu0 %v1648
  %v3021 = vpop.f32.mrb[0].mxu0
  %v3022 = vadd.f32 0.0, %v3021
  %v3023 = vpop.f32.mrb[0].mxu0
  %v3024 = vpop.f32.mrb[0].mxu0
  %v3025 = vadd.f32 0.0, %v3024
  %v3026 = vpop.f32.mrb[0].mxu0
  %3027 = vmatprep.mubr.bf16.mxu0 %v1667
  %3028 = vmatmul.mubr.bf16.gmra.mrb[0].mxu0 %v1666
  %v3029 = vpop.f32.mrb[0].mxu0
  %v3030 = vadd.f32 0.0, %v3029
  %v3031 = vpop.f32.mrb[0].mxu0
  %v3032 = vpop.f32.mrb[0].mxu0
  %v3033 = vadd.f32 0.0, %v3032
  %v3034 = vpop.f32.mrb[0].mxu0
  %3035 = vmatprep.mubr.bf16.mxu0 %v1685
  %3036 = vmatmul.mubr.bf16.gmra.mrb[0].mxu0 %v1684
  %v3037 = vpop.f32.mrb[0].mxu0
  %v3038 = vadd.f32 0.0, %v3037
  %v3039 = vpop.f32.mrb[0].mxu0
  %v3040 = vpop.f32.mrb[0].mxu0
  %v3041 = vadd.f32 0.0, %v3040
  %v3042 = vpop.f32.mrb[0].mxu0
  %3043 = vmatprep.mubr.bf16.mxu0 %v1703
  %3044 = vmatmul.mubr.bf16.gmra.mrb[0].mxu0 %v1702
  %v3045 = vpop.f32.mrb[0].mxu0
  %v3046 = vadd.f32 0.0, %v3045
  %v3047 = vpop.f32.mrb[0].mxu0
  %v3048 = vpop.f32.mrb[0].mxu0
  %v3049 = vadd.f32 0.0, %v3048
  %v3050 = vpop.f32.mrb[0].mxu0
  %3051 = vmatprep.mubr.bf16.mxu0 %v1721
  %3052 = vmatmul.mubr.bf16.gmra.mrb[0].mxu0 %v1720
  %v3053 = vpop.f32.mrb[0].mxu0
  %v3054 = vadd.f32 0.0, %v3053
  %v3055 = vpop.f32.mrb[0].mxu0
  %v3056 = vpop.f32.mrb[0].mxu0
  %v3057 = vadd.f32 0.0, %v3056
  %v3058 = vpop.f32.mrb[0].mxu0
  %3059 = vdwg.mxu0
  %3060 = vmatprep.subr.bf16.mxu0 0
  %3061 = vmatpush1.bf16.msra.mxu0 %v2586
  %3062 = vmatprep.subr.bf16.mxu0 0
  %3063 = vmatpush1.bf16.msra.mxu0 %v2587
  %3064 = vmatprep.subr.bf16.mxu0 0
  %3065 = vmatpush1.bf16.msra.mxu0 %v2588
  %3066 = vmatprep.subr.bf16.mxu0 0
  %3067 = vmatpush1.bf16.msra.mxu0 %v2589
  %3068 = vmatprep.subr.bf16.mxu0 0
  %3069 = vmatpush1.bf16.msra.mxu0 %v2590
  %3070 = vmatprep.subr.bf16.mxu0 0
  %3071 = vmatpush1.bf16.msra.mxu0 %v2591
  %3072 = vmatprep.subr.bf16.mxu0 0
  %3073 = vmatpush1.bf16.msra.mxu0 %v2592
  %3074 = vmatprep.subr.bf16.mxu0 0
  %3075 = vmatpush1.bf16.msra.mxu0 %v2593
  %3076 = vmatprep.subr.bf16.mxu0 0
  %3077 = vmatpush1.bf16.msra.mxu0 %v2594
  %3078 = vmatprep.subr.bf16.mxu0 0
  %3079 = vmatpush1.bf16.msra.mxu0 %v2595
  %3080 = vmatprep.subr.bf16.mxu0 0
  %3081 = vmatpush1.bf16.msra.mxu0 %v2596
  %3082 = vmatprep.subr.bf16.mxu0 0
  %3083 = vmatpush1.bf16.msra.mxu0 %v2597
  %3084 = vmatprep.subr.bf16.mxu0 0
  %3085 = vmatpush1.bf16.msra.mxu0 %v2598
  %3086 = vmatprep.subr.bf16.mxu0 0
  %3087 = vmatpush1.bf16.msra.mxu0 %v2599
  %3088 = vmatprep.subr.bf16.mxu0 0
  %3089 = vmatpush1.bf16.msra.mxu0 %v2600
  %3090 = vmatprep.subr.bf16.mxu0 0
  %3091 = vmatpush1.bf16.msra.mxu0 %v2601
  %3092 = vmatprep.mubr.bf16.mxu0 %v1453
  %3093 = vmatmul.mubr.bf16.gmra.mrb[0].mxu0 %v1452
  %v3094 = vpop.f32.mrb[0].mxu0
  %v3095 = vadd.f32 %v2934, %v3094
  %v3096 = vpop.f32.mrb[0].mxu0
  %v3097 = vpop.f32.mrb[0].mxu0
  %v3098 = vadd.f32 %v2937, %v3097
  %v3099 = vpop.f32.mrb[0].mxu0
  %3100 = vmatprep.mubr.bf16.mxu0 %v1471
  %3101 = vmatmul.mubr.bf16.gmra.mrb[0].mxu0 %v1470
  %v3102 = vpop.f32.mrb[0].mxu0
  %v3103 = vadd.f32 %v2942, %v3102
  %v3104 = vpop.f32.mrb[0].mxu0
  %v3105 = vpop.f32.mrb[0].mxu0
  %v3106 = vadd.f32 %v2945, %v3105
  %v3107 = vpop.f32.mrb[0].mxu0
  %3108 = vmatprep.mubr.bf16.mxu0 %v1489
  %3109 = vmatmul.mubr.bf16.gmra.mrb[0].mxu0 %v1488
  %v3110 = vpop.f32.mrb[0].mxu0
  %v3111 = vadd.f32 %v2950, %v3110
  %v3112 = vpop.f32.mrb[0].mxu0
  %v3113 = vpop.f32.mrb[0].mxu0
  %v3114 = vadd.f32 %v2953, %v3113
  %v3115 = vpop.f32.mrb[0].mxu0
  %3116 = vmatprep.mubr.bf16.mxu0 %v1507
  %3117 = vmatmul.mubr.bf16.gmra.mrb[0].mxu0 %v1506
  %v3118 = vpop.f32.mrb[0].mxu0
  %v3119 = vadd.f32 %v2958, %v3118
  %v3120 = vpop.f32.mrb[0].mxu0
  %v3121 = vpop.f32.mrb[0].mxu0
  %v3122 = vadd.f32 %v2961, %v3121
  %v3123 = vpop.f32.mrb[0].mxu0
  %3124 = vmatprep.mubr.bf16.mxu0 %v1525
  %3125 = vmatmul.mubr.bf16.gmra.mrb[0].mxu0 %v1524
  %v3126 = vpop.f32.mrb[0].mxu0
  %v3127 = vadd.f32 %v2966, %v3126
  %v3128 = vpop.f32.mrb[0].mxu0
  %v3129 = vpop.f32.mrb[0].mxu0
  %v3130 = vadd.f32 %v2969, %v3129
  %v3131 = vpop.f32.mrb[0].mxu0
  %3132 = vmatprep.mubr.bf16.mxu0 %v1543
  %3133 = vmatmul.mubr.bf16.gmra.mrb[0].mxu0 %v1542
  %v3134 = vpop.f32.mrb[0].mxu0
  %v3135 = vadd.f32 %v2974, %v3134
  %v3136 = vpop.f32.mrb[0].mxu0
  %v3137 = vpop.f32.mrb[0].mxu0
  %v3138 = vadd.f32 %v2977, %v3137
  %v3139 = vpop.f32.mrb[0].mxu0
  %3140 = vmatprep.mubr.bf16.mxu0 %v1561
  %3141 = vmatmul.mubr.bf16.gmra.mrb[0].mxu0 %v1560
  %v3142 = vpop.f32.mrb[0].mxu0
  %v3143 = vadd.f32 %v2982, %v3142
  %v3144 = vpop.f32.mrb[0].mxu0
  %v3145 = vpop.f32.mrb[0].mxu0
  %v3146 = vadd.f32 %v2985, %v3145
  %v3147 = vpop.f32.mrb[0].mxu0
  %3148 = vmatprep.mubr.bf16.mxu0 %v1579
  %3149 = vmatmul.mubr.bf16.gmra.mrb[0].mxu0 %v1578
  %v3150 = vpop.f32.mrb[0].mxu0
  %v3151 = vadd.f32 %v2990, %v3150
  %v3152 = vpop.f32.mrb[0].mxu0
  %v3153 = vpop.f32.mrb[0].mxu0
  %v3154 = vadd.f32 %v2993, %v3153
  %v3155 = vpop.f32.mrb[0].mxu0
  %3156 = vmatprep.mubr.bf16.mxu0 %v1597
  %3157 = vmatmul.mubr.bf16.gmra.mrb[0].mxu0 %v1596
  %v3158 = vpop.f32.mrb[0].mxu0
  %v3159 = vadd.f32 %v2998, %v3158
  %v3160 = vpop.f32.mrb[0].mxu0
  %v3161 = vpop.f32.mrb[0].mxu0
  %v3162 = vadd.f32 %v3001, %v3161
  %v3163 = vpop.f32.mrb[0].mxu0
  %3164 = vmatprep.mubr.bf16.mxu0 %v1615
  %3165 = vmatmul.mubr.bf16.gmra.mrb[0].mxu0 %v1614
  %v3166 = vpop.f32.mrb[0].mxu0
  %v3167 = vadd.f32 %v3006, %v3166
  %v3168 = vpop.f32.mrb[0].mxu0
  %v3169 = vpop.f32.mrb[0].mxu0
  %v3170 = vadd.f32 %v3009, %v3169
  %v3171 = vpop.f32.mrb[0].mxu0
  %3172 = vmatprep.mubr.bf16.mxu0 %v1633
  %3173 = vmatmul.mubr.bf16.gmra.mrb[0].mxu0 %v1632
  %v3174 = vpop.f32.mrb[0].mxu0
  %v3175 = vadd.f32 %v3014, %v3174
  %v3176 = vpop.f32.mrb[0].mxu0
  %v3177 = vpop.f32.mrb[0].mxu0
  %v3178 = vadd.f32 %v3017, %v3177
  %v3179 = vpop.f32.mrb[0].mxu0
  %3180 = vmatprep.mubr.bf16.mxu0 %v1651
  %3181 = vmatmul.mubr.bf16.gmra.mrb[0].mxu0 %v1650
  %v3182 = vpop.f32.mrb[0].mxu0
  %v3183 = vadd.f32 %v3022, %v3182
  %v3184 = vpop.f32.mrb[0].mxu0
  %v3185 = vpop.f32.mrb[0].mxu0
  %v3186 = vadd.f32 %v3025, %v3185
  %v3187 = vpop.f32.mrb[0].mxu0
  %3188 = vmatprep.mubr.bf16.mxu0 %v1669
  %3189 = vmatmul.mubr.bf16.gmra.mrb[0].mxu0 %v1668
  %v3190 = vpop.f32.mrb[0].mxu0
  %v3191 = vadd.f32 %v3030, %v3190
  %v3192 = vpop.f32.mrb[0].mxu0
  %v3193 = vpop.f32.mrb[0].mxu0
  %v3194 = vadd.f32 %v3033, %v3193
  %v3195 = vpop.f32.mrb[0].mxu0
  %3196 = vmatprep.mubr.bf16.mxu0 %v1687
  %3197 = vmatmul.mubr.bf16.gmra.mrb[0].mxu0 %v1686
  %v3198 = vpop.f32.mrb[0].mxu0
  %v3199 = vadd.f32 %v3038, %v3198
  %v3200 = vpop.f32.mrb[0].mxu0
  %v3201 = vpop.f32.mrb[0].mxu0
  %v3202 = vadd.f32 %v3041, %v3201
  %v3203 = vpop.f32.mrb[0].mxu0
  %3204 = vmatprep.mubr.bf16.mxu0 %v1705
  %3205 = vmatmul.mubr.bf16.gmra.mrb[0].mxu0 %v1704
  %v3206 = vpop.f32.mrb[0].mxu0
  %v3207 = vadd.f32 %v3046, %v3206
  %v3208 = vpop.f32.mrb[0].mxu0
  %v3209 = vpop.f32.mrb[0].mxu0
  %v3210 = vadd.f32 %v3049, %v3209
  %v3211 = vpop.f32.mrb[0].mxu0
  %3212 = vmatprep.mubr.bf16.mxu0 %v1723
  %3213 = vmatmul.mubr.bf16.gmra.mrb[0].mxu0 %v1722
  %v3214 = vpop.f32.mrb[0].mxu0
  %v3215 = vadd.f32 %v3054, %v3214
  %v3216 = vpop.f32.mrb[0].mxu0
  %v3217 = vpop.f32.mrb[0].mxu0
  %v3218 = vadd.f32 %v3057, %v3217
  %v3219 = vpop.f32.mrb[0].mxu0
  %3220 = vdwg.mxu0
  %3221 = vmatprep.subr.bf16.mxu0 0
  %3222 = vmatpush1.bf16.msra.mxu0 %v2602
  %3223 = vmatprep.subr.bf16.mxu0 0
  %3224 = vmatpush1.bf16.msra.mxu0 %v2603
  %3225 = vmatprep.subr.bf16.mxu0 0
  %3226 = vmatpush1.bf16.msra.mxu0 %v2604
  %3227 = vmatprep.subr.bf16.mxu0 0
  %3228 = vmatpush1.bf16.msra.mxu0 %v2605
  %3229 = vmatprep.subr.bf16.mxu0 0
  %3230 = vmatpush1.bf16.msra.mxu0 %v2606
  %3231 = vmatprep.subr.bf16.mxu0 0
  %3232 = vmatpush1.bf16.msra.mxu0 %v2607
  %3233 = vmatprep.subr.bf16.mxu0 0
  %3234 = vmatpush1.bf16.msra.mxu0 %v2608
  %3235 = vmatprep.subr.bf16.mxu0 0
  %3236 = vmatpush1.bf16.msra.mxu0 %v2609
  %3237 = vmatprep.subr.bf16.mxu0 0
  %3238 = vmatpush1.bf16.msra.mxu0 %v2610
  %3239 = vmatprep.subr.bf16.mxu0 0
  %3240 = vmatpush1.bf16.msra.mxu0 %v2611
  %3241 = vmatprep.subr.bf16.mxu0 0
  %3242 = vmatpush1.bf16.msra.mxu0 %v2612
  %3243 = vmatprep.subr.bf16.mxu0 0
  %3244 = vmatpush1.bf16.msra.mxu0 %v2613
  %3245 = vmatprep.subr.bf16.mxu0 0
  %3246 = vmatpush1.bf16.msra.mxu0 %v2614
  %3247 = vmatprep.subr.bf16.mxu0 0
  %3248 = vmatpush1.bf16.msra.mxu0 %v2615
  %3249 = vmatprep.subr.bf16.mxu0 0
  %3250 = vmatpush1.bf16.msra.mxu0 %v2616
  %3251 = vmatprep.subr.bf16.mxu0 0
  %3252 = vmatpush1.bf16.msra.mxu0 %v2617
  %3253 = vmatprep.mubr.bf16.mxu0 %v1455
  %3254 = vmatmul.mubr.bf16.gmra.mrb[0].mxu0 %v1454
  %v3255 = vpop.f32.mrb[0].mxu0
  %v3256 = vadd.f32 %v3095, %v3255
  %v3257 = vpop.f32.mrb[0].mxu0
  %v3258 = vpop.f32.mrb[0].mxu0
  %v3259 = vadd.f32 %v3098, %v3258
  %v3260 = vpop.f32.mrb[0].mxu0
  %3261 = vmatprep.mubr.bf16.mxu0 %v1473
  %3262 = vmatmul.mubr.bf16.gmra.mrb[0].mxu0 %v1472
  %v3263 = vpop.f32.mrb[0].mxu0
  %v3264 = vadd.f32 %v3103, %v3263
  %v3265 = vpop.f32.mrb[0].mxu0
  %v3266 = vpop.f32.mrb[0].mxu0
  %v3267 = vadd.f32 %v3106, %v3266
  %v3268 = vpop.f32.mrb[0].mxu0
  %3269 = vmatprep.mubr.bf16.mxu0 %v1491
  %3270 = vmatmul.mubr.bf16.gmra.mrb[0].mxu0 %v1490
  %v3271 = vpop.f32.mrb[0].mxu0
  %v3272 = vadd.f32 %v3111, %v3271
  %v3273 = vpop.f32.mrb[0].mxu0
  %v3274 = vpop.f32.mrb[0].mxu0
  %v3275 = vadd.f32 %v3114, %v3274
  %v3276 = vpop.f32.mrb[0].mxu0
  %3277 = vmatprep.mubr.bf16.mxu0 %v1509
  %3278 = vmatmul.mubr.bf16.gmra.mrb[0].mxu0 %v1508
  %v3279 = vpop.f32.mrb[0].mxu0
  %v3280 = vadd.f32 %v3119, %v3279
  %v3281 = vpop.f32.mrb[0].mxu0
  %v3282 = vpop.f32.mrb[0].mxu0
  %v3283 = vadd.f32 %v3122, %v3282
  %v3284 = vpop.f32.mrb[0].mxu0
  %3285 = vmatprep.mubr.bf16.mxu0 %v1527
  %3286 = vmatmul.mubr.bf16.gmra.mrb[0].mxu0 %v1526
  %v3287 = vpop.f32.mrb[0].mxu0
  %v3288 = vadd.f32 %v3127, %v3287
  %v3289 = vpop.f32.mrb[0].mxu0
  %v3290 = vpop.f32.mrb[0].mxu0
  %v3291 = vadd.f32 %v3130, %v3290
  %v3292 = vpop.f32.mrb[0].mxu0
  %3293 = vmatprep.mubr.bf16.mxu0 %v1545
  %3294 = vmatmul.mubr.bf16.gmra.mrb[0].mxu0 %v1544
  %v3295 = vpop.f32.mrb[0].mxu0
  %v3296 = vadd.f32 %v3135, %v3295
  %v3297 = vpop.f32.mrb[0].mxu0
  %v3298 = vpop.f32.mrb[0].mxu0
  %v3299 = vadd.f32 %v3138, %v3298
  %v3300 = vpop.f32.mrb[0].mxu0
  %3301 = vmatprep.mubr.bf16.mxu0 %v1563
  %3302 = vmatmul.mubr.bf16.gmra.mrb[0].mxu0 %v1562
  %v3303 = vpop.f32.mrb[0].mxu0
  %v3304 = vadd.f32 %v3143, %v3303
  %v3305 = vpop.f32.mrb[0].mxu0
  %v3306 = vpop.f32.mrb[0].mxu0
  %v3307 = vadd.f32 %v3146, %v3306
  %v3308 = vpop.f32.mrb[0].mxu0
  %3309 = vmatprep.mubr.bf16.mxu0 %v1581
  %3310 = vmatmul.mubr.bf16.gmra.mrb[0].mxu0 %v1580
  %v3311 = vpop.f32.mrb[0].mxu0
  %v3312 = vadd.f32 %v3151, %v3311
  %v3313 = vpop.f32.mrb[0].mxu0
  %v3314 = vpop.f32.mrb[0].mxu0
  %v3315 = vadd.f32 %v3154, %v3314
  %v3316 = vpop.f32.mrb[0].mxu0
  %3317 = vmatprep.mubr.bf16.mxu0 %v1599
  %3318 = vmatmul.mubr.bf16.gmra.mrb[0].mxu0 %v1598
  %v3319 = vpop.f32.mrb[0].mxu0
  %v3320 = vadd.f32 %v3159, %v3319
  %v3321 = vpop.f32.mrb[0].mxu0
  %v3322 = vpop.f32.mrb[0].mxu0
  %v3323 = vadd.f32 %v3162, %v3322
  %v3324 = vpop.f32.mrb[0].mxu0
  %3325 = vmatprep.mubr.bf16.mxu0 %v1617
  %3326 = vmatmul.mubr.bf16.gmra.mrb[0].mxu0 %v1616
  %v3327 = vpop.f32.mrb[0].mxu0
  %v3328 = vadd.f32 %v3167, %v3327
  %v3329 = vpop.f32.mrb[0].mxu0
  %v3330 = vpop.f32.mrb[0].mxu0
  %v3331 = vadd.f32 %v3170, %v3330
  %v3332 = vpop.f32.mrb[0].mxu0
  %3333 = vmatprep.mubr.bf16.mxu0 %v1635
  %3334 = vmatmul.mubr.bf16.gmra.mrb[0].mxu0 %v1634
  %v3335 = vpop.f32.mrb[0].mxu0
  %v3336 = vadd.f32 %v3175, %v3335
  %v3337 = vpop.f32.mrb[0].mxu0
  %v3338 = vpop.f32.mrb[0].mxu0
  %v3339 = vadd.f32 %v3178, %v3338
  %v3340 = vpop.f32.mrb[0].mxu0
  %3341 = vmatprep.mubr.bf16.mxu0 %v1653
  %3342 = vmatmul.mubr.bf16.gmra.mrb[0].mxu0 %v1652
  %v3343 = vpop.f32.mrb[0].mxu0
  %v3344 = vadd.f32 %v3183, %v3343
  %v3345 = vpop.f32.mrb[0].mxu0
  %v3346 = vpop.f32.mrb[0].mxu0
  %v3347 = vadd.f32 %v3186, %v3346
  %v3348 = vpop.f32.mrb[0].mxu0
  %3349 = vmatprep.mubr.bf16.mxu0 %v1671
  %3350 = vmatmul.mubr.bf16.gmra.mrb[0].mxu0 %v1670
  %v3351 = vpop.f32.mrb[0].mxu0
  %v3352 = vadd.f32 %v3191, %v3351
  %v3353 = vpop.f32.mrb[0].mxu0
  %v3354 = vpop.f32.mrb[0].mxu0
  %v3355 = vadd.f32 %v3194, %v3354
  %v3356 = vpop.f32.mrb[0].mxu0
  %3357 = vmatprep.mubr.bf16.mxu0 %v1689
  %3358 = vmatmul.mubr.bf16.gmra.mrb[0].mxu0 %v1688
  %v3359 = vpop.f32.mrb[0].mxu0
  %v3360 = vadd.f32 %v3199, %v3359
  %v3361 = vpop.f32.mrb[0].mxu0
  %v3362 = vpop.f32.mrb[0].mxu0
  %v3363 = vadd.f32 %v3202, %v3362
  %v3364 = vpop.f32.mrb[0].mxu0
  %3365 = vmatprep.mubr.bf16.mxu0 %v1707
  %3366 = vmatmul.mubr.bf16.gmra.mrb[0].mxu0 %v1706
  %v3367 = vpop.f32.mrb[0].mxu0
  %v3368 = vadd.f32 %v3207, %v3367
  %v3369 = vpop.f32.mrb[0].mxu0
  %v3370 = vpop.f32.mrb[0].mxu0
  %v3371 = vadd.f32 %v3210, %v3370
  %v3372 = vpop.f32.mrb[0].mxu0
  %3373 = vmatprep.mubr.bf16.mxu0 %v1725
  %3374 = vmatmul.mubr.bf16.gmra.mrb[0].mxu0 %v1724
  %v3375 = vpop.f32.mrb[0].mxu0
  %v3376 = vadd.f32 %v3215, %v3375
  %v3377 = vpop.f32.mrb[0].mxu0
  %v3378 = vpop.f32.mrb[0].mxu0
  %v3379 = vadd.f32 %v3218, %v3378
  %v3380 = vpop.f32.mrb[0].mxu0
  %3381 = vdwg.mxu0
  %3382 = vmatprep.subr.bf16.mxu0 0
  %3383 = vmatpush1.bf16.msra.mxu0 %v2618
  %3384 = vmatprep.subr.bf16.mxu0 0
  %3385 = vmatpush1.bf16.msra.mxu0 %v2619
  %3386 = vmatprep.subr.bf16.mxu0 0
  %3387 = vmatpush1.bf16.msra.mxu0 %v2620
  %3388 = vmatprep.subr.bf16.mxu0 0
  %3389 = vmatpush1.bf16.msra.mxu0 %v2621
  %3390 = vmatprep.subr.bf16.mxu0 0
  %3391 = vmatpush1.bf16.msra.mxu0 %v2622
  %3392 = vmatprep.subr.bf16.mxu0 0
  %3393 = vmatpush1.bf16.msra.mxu0 %v2623
  %3394 = vmatprep.subr.bf16.mxu0 0
  %3395 = vmatpush1.bf16.msra.mxu0 %v2624
  %3396 = vmatprep.subr.bf16.mxu0 0
  %3397 = vmatpush1.bf16.msra.mxu0 %v2625
  %3398 = vmatprep.subr.bf16.mxu0 0
  %3399 = vmatpush1.bf16.msra.mxu0 %v2626
  %3400 = vmatprep.subr.bf16.mxu0 0
  %3401 = vmatpush1.bf16.msra.mxu0 %v2627
  %3402 = vmatprep.subr.bf16.mxu0 0
  %3403 = vmatpush1.bf16.msra.mxu0 %v2628
  %3404 = vmatprep.subr.bf16.mxu0 0
  %3405 = vmatpush1.bf16.msra.mxu0 %v2629
  %3406 = vmatprep.subr.bf16.mxu0 0
  %3407 = vmatpush1.bf16.msra.mxu0 %v2630
  %3408 = vmatprep.subr.bf16.mxu0 0
  %3409 = vmatpush1.bf16.msra.mxu0 %v2631
  %3410 = vmatprep.subr.bf16.mxu0 0
  %3411 = vmatpush1.bf16.msra.mxu0 %v2632
  %3412 = vmatprep.subr.bf16.mxu0 0
  %3413 = vmatpush1.bf16.msra.mxu0 %v2633
  %3414 = vmatprep.mubr.bf16.mxu0 %v1457
  %3415 = vmatmul.mubr.bf16.gmra.mrb[0].mxu0 %v1456
  %v3416 = vpop.f32.mrb[0].mxu0
  %v3417 = vadd.f32 %v3256, %v3416
  %v3418 = vpop.f32.mrb[0].mxu0
  %v3419 = vpop.f32.mrb[0].mxu0
  %v3420 = vadd.f32 %v3259, %v3419
  %v3421 = vpop.f32.mrb[0].mxu0
  %3422 = vmatprep.mubr.bf16.mxu0 %v1475
  %3423 = vmatmul.mubr.bf16.gmra.mrb[0].mxu0 %v1474
  %v3424 = vpop.f32.mrb[0].mxu0
  %v3425 = vadd.f32 %v3264, %v3424
  %v3426 = vpop.f32.mrb[0].mxu0
  %v3427 = vpop.f32.mrb[0].mxu0
  %v3428 = vadd.f32 %v3267, %v3427
  %v3429 = vpop.f32.mrb[0].mxu0
  %3430 = vmatprep.mubr.bf16.mxu0 %v1493
  %3431 = vmatmul.mubr.bf16.gmra.mrb[0].mxu0 %v1492
  %v3432 = vpop.f32.mrb[0].mxu0
  %v3433 = vadd.f32 %v3272, %v3432
  %v3434 = vpop.f32.mrb[0].mxu0
  %v3435 = vpop.f32.mrb[0].mxu0
  %v3436 = vadd.f32 %v3275, %v3435
  %v3437 = vpop.f32.mrb[0].mxu0
  %3438 = vmatprep.mubr.bf16.mxu0 %v1511
  %3439 = vmatmul.mubr.bf16.gmra.mrb[0].mxu0 %v1510
  %v3440 = vpop.f32.mrb[0].mxu0
  %v3441 = vadd.f32 %v3280, %v3440
  %v3442 = vpop.f32.mrb[0].mxu0
  %v3443 = vpop.f32.mrb[0].mxu0
  %v3444 = vadd.f32 %v3283, %v3443
  %v3445 = vpop.f32.mrb[0].mxu0
  %3446 = vmatprep.mubr.bf16.mxu0 %v1529
  %3447 = vmatmul.mubr.bf16.gmra.mrb[0].mxu0 %v1528
  %v3448 = vpop.f32.mrb[0].mxu0
  %v3449 = vadd.f32 %v3288, %v3448
  %v3450 = vpop.f32.mrb[0].mxu0
  %v3451 = vpop.f32.mrb[0].mxu0
  %v3452 = vadd.f32 %v3291, %v3451
  %v3453 = vpop.f32.mrb[0].mxu0
  %3454 = vmatprep.mubr.bf16.mxu0 %v1547
  %3455 = vmatmul.mubr.bf16.gmra.mrb[0].mxu0 %v1546
  %v3456 = vpop.f32.mrb[0].mxu0
  %v3457 = vadd.f32 %v3296, %v3456
  %v3458 = vpop.f32.mrb[0].mxu0
  %v3459 = vpop.f32.mrb[0].mxu0
  %v3460 = vadd.f32 %v3299, %v3459
  %v3461 = vpop.f32.mrb[0].mxu0
  %3462 = vmatprep.mubr.bf16.mxu0 %v1565
  %3463 = vmatmul.mubr.bf16.gmra.mrb[0].mxu0 %v1564
  %v3464 = vpop.f32.mrb[0].mxu0
  %v3465 = vadd.f32 %v3304, %v3464
  %v3466 = vpop.f32.mrb[0].mxu0
  %v3467 = vpop.f32.mrb[0].mxu0
  %v3468 = vadd.f32 %v3307, %v3467
  %v3469 = vpop.f32.mrb[0].mxu0
  %3470 = vmatprep.mubr.bf16.mxu0 %v1583
  %3471 = vmatmul.mubr.bf16.gmra.mrb[0].mxu0 %v1582
  %v3472 = vpop.f32.mrb[0].mxu0
  %v3473 = vadd.f32 %v3312, %v3472
  %v3474 = vpop.f32.mrb[0].mxu0
  %v3475 = vpop.f32.mrb[0].mxu0
  %v3476 = vadd.f32 %v3315, %v3475
  %v3477 = vpop.f32.mrb[0].mxu0
  %3478 = vmatprep.mubr.bf16.mxu0 %v1601
  %3479 = vmatmul.mubr.bf16.gmra.mrb[0].mxu0 %v1600
  %v3480 = vpop.f32.mrb[0].mxu0
  %v3481 = vadd.f32 %v3320, %v3480
  %v3482 = vpop.f32.mrb[0].mxu0
  %v3483 = vpop.f32.mrb[0].mxu0
  %v3484 = vadd.f32 %v3323, %v3483
  %v3485 = vpop.f32.mrb[0].mxu0
  %3486 = vmatprep.mubr.bf16.mxu0 %v1619
  %3487 = vmatmul.mubr.bf16.gmra.mrb[0].mxu0 %v1618
  %v3488 = vpop.f32.mrb[0].mxu0
  %v3489 = vadd.f32 %v3328, %v3488
  %v3490 = vpop.f32.mrb[0].mxu0
  %v3491 = vpop.f32.mrb[0].mxu0
  %v3492 = vadd.f32 %v3331, %v3491
  %v3493 = vpop.f32.mrb[0].mxu0
  %3494 = vmatprep.mubr.bf16.mxu0 %v1637
  %3495 = vmatmul.mubr.bf16.gmra.mrb[0].mxu0 %v1636
  %v3496 = vpop.f32.mrb[0].mxu0
  %v3497 = vadd.f32 %v3336, %v3496
  %v3498 = vpop.f32.mrb[0].mxu0
  %v3499 = vpop.f32.mrb[0].mxu0
  %v3500 = vadd.f32 %v3339, %v3499
  %v3501 = vpop.f32.mrb[0].mxu0
  %3502 = vmatprep.mubr.bf16.mxu0 %v1655
  %3503 = vmatmul.mubr.bf16.gmra.mrb[0].mxu0 %v1654
  %v3504 = vpop.f32.mrb[0].mxu0
  %v3505 = vadd.f32 %v3344, %v3504
  %v3506 = vpop.f32.mrb[0].mxu0
  %v3507 = vpop.f32.mrb[0].mxu0
  %v3508 = vadd.f32 %v3347, %v3507
  %v3509 = vpop.f32.mrb[0].mxu0
  %3510 = vmatprep.mubr.bf16.mxu0 %v1673
  %3511 = vmatmul.mubr.bf16.gmra.mrb[0].mxu0 %v1672
  %v3512 = vpop.f32.mrb[0].mxu0
  %v3513 = vadd.f32 %v3352, %v3512
  %v3514 = vpop.f32.mrb[0].mxu0
  %v3515 = vpop.f32.mrb[0].mxu0
  %v3516 = vadd.f32 %v3355, %v3515
  %v3517 = vpop.f32.mrb[0].mxu0
  %3518 = vmatprep.mubr.bf16.mxu0 %v1691
  %3519 = vmatmul.mubr.bf16.gmra.mrb[0].mxu0 %v1690
  %v3520 = vpop.f32.mrb[0].mxu0
  %v3521 = vadd.f32 %v3360, %v3520
  %v3522 = vpop.f32.mrb[0].mxu0
  %v3523 = vpop.f32.mrb[0].mxu0
  %v3524 = vadd.f32 %v3363, %v3523
  %v3525 = vpop.f32.mrb[0].mxu0
  %3526 = vmatprep.mubr.bf16.mxu0 %v1709
  %3527 = vmatmul.mubr.bf16.gmra.mrb[0].mxu0 %v1708
  %v3528 = vpop.f32.mrb[0].mxu0
  %v3529 = vadd.f32 %v3368, %v3528
  %v3530 = vpop.f32.mrb[0].mxu0
  %v3531 = vpop.f32.mrb[0].mxu0
  %v3532 = vadd.f32 %v3371, %v3531
  %v3533 = vpop.f32.mrb[0].mxu0
  %3534 = vmatprep.mubr.bf16.mxu0 %v1727
  %3535 = vmatmul.mubr.bf16.gmra.mrb[0].mxu0 %v1726
  %v3536 = vpop.f32.mrb[0].mxu0
  %v3537 = vadd.f32 %v3376, %v3536
  %v3538 = vpop.f32.mrb[0].mxu0
  %v3539 = vpop.f32.mrb[0].mxu0
  %v3540 = vadd.f32 %v3379, %v3539
  %v3541 = vpop.f32.mrb[0].mxu0
  %3542 = vdwg.mxu0
  %3543 = vmatprep.subr.bf16.mxu0 0
  %3544 = vmatpush1.bf16.msra.mxu0 %v2634
  %3545 = vmatprep.subr.bf16.mxu0 0
  %3546 = vmatpush1.bf16.msra.mxu0 %v2635
  %3547 = vmatprep.subr.bf16.mxu0 0
  %3548 = vmatpush1.bf16.msra.mxu0 %v2636
  %3549 = vmatprep.subr.bf16.mxu0 0
  %3550 = vmatpush1.bf16.msra.mxu0 %v2637
  %3551 = vmatprep.subr.bf16.mxu0 0
  %3552 = vmatpush1.bf16.msra.mxu0 %v2638
  %3553 = vmatprep.subr.bf16.mxu0 0
  %3554 = vmatpush1.bf16.msra.mxu0 %v2639
  %3555 = vmatprep.subr.bf16.mxu0 0
  %3556 = vmatpush1.bf16.msra.mxu0 %v2640
  %3557 = vmatprep.subr.bf16.mxu0 0
  %3558 = vmatpush1.bf16.msra.mxu0 %v2641
  %3559 = vmatprep.subr.bf16.mxu0 0
  %3560 = vmatpush1.bf16.msra.mxu0 %v2642
  %3561 = vmatprep.subr.bf16.mxu0 0
  %3562 = vmatpush1.bf16.msra.mxu0 %v2643
  %3563 = vmatprep.subr.bf16.mxu0 0
  %3564 = vmatpush1.bf16.msra.mxu0 %v2644
  %3565 = vmatprep.subr.bf16.mxu0 0
  %3566 = vmatpush1.bf16.msra.mxu0 %v2645
  %3567 = vmatprep.subr.bf16.mxu0 0
  %3568 = vmatpush1.bf16.msra.mxu0 %v2646
  %3569 = vmatprep.subr.bf16.mxu0 0
  %3570 = vmatpush1.bf16.msra.mxu0 %v2647
  %3571 = vmatprep.subr.bf16.mxu0 0
  %3572 = vmatpush1.bf16.msra.mxu0 %v2648
  %3573 = vmatprep.subr.bf16.mxu0 0
  %3574 = vmatpush1.bf16.msra.mxu0 %v2649
  %3575 = vmatprep.mubr.bf16.mxu0 %v1459
  %3576 = vmatmul.mubr.bf16.gmra.mrb[0].mxu0 %v1458
  %v3577 = vpop.f32.mrb[0].mxu0
  %v3578 = vadd.f32 %v3417, %v3577
  %v3579 = vpop.f32.mrb[0].mxu0
  %v3580 = vpop.f32.mrb[0].mxu0
  %v3581 = vadd.f32 %v3420, %v3580
  %v3582 = vpop.f32.mrb[0].mxu0
  %3583 = vmatprep.mubr.bf16.mxu0 %v1477
  %3584 = vmatmul.mubr.bf16.gmra.mrb[0].mxu0 %v1476
  %v3585 = vpop.f32.mrb[0].mxu0
  %v3586 = vadd.f32 %v3425, %v3585
  %v3587 = vpop.f32.mrb[0].mxu0
  %v3588 = vpop.f32.mrb[0].mxu0
  %v3589 = vadd.f32 %v3428, %v3588
  %v3590 = vpop.f32.mrb[0].mxu0
  %3591 = vmatprep.mubr.bf16.mxu0 %v1495
  %3592 = vmatmul.mubr.bf16.gmra.mrb[0].mxu0 %v1494
  %v3593 = vpop.f32.mrb[0].mxu0
  %v3594 = vadd.f32 %v3433, %v3593
  %v3595 = vpop.f32.mrb[0].mxu0
  %v3596 = vpop.f32.mrb[0].mxu0
  %v3597 = vadd.f32 %v3436, %v3596
  %v3598 = vpop.f32.mrb[0].mxu0
  %3599 = vmatprep.mubr.bf16.mxu0 %v1513
  %3600 = vmatmul.mubr.bf16.gmra.mrb[0].mxu0 %v1512
  %v3601 = vpop.f32.mrb[0].mxu0
  %v3602 = vadd.f32 %v3441, %v3601
  %v3603 = vpop.f32.mrb[0].mxu0
  %v3604 = vpop.f32.mrb[0].mxu0
  %v3605 = vadd.f32 %v3444, %v3604
  %v3606 = vpop.f32.mrb[0].mxu0
  %3607 = vmatprep.mubr.bf16.mxu0 %v1531
  %3608 = vmatmul.mubr.bf16.gmra.mrb[0].mxu0 %v1530
  %v3609 = vpop.f32.mrb[0].mxu0
  %v3610 = vadd.f32 %v3449, %v3609
  %v3611 = vpop.f32.mrb[0].mxu0
  %v3612 = vpop.f32.mrb[0].mxu0
  %v3613 = vadd.f32 %v3452, %v3612
  %v3614 = vpop.f32.mrb[0].mxu0
  %3615 = vmatprep.mubr.bf16.mxu0 %v1549
  %3616 = vmatmul.mubr.bf16.gmra.mrb[0].mxu0 %v1548
  %v3617 = vpop.f32.mrb[0].mxu0
  %v3618 = vadd.f32 %v3457, %v3617
  %v3619 = vpop.f32.mrb[0].mxu0
  %v3620 = vpop.f32.mrb[0].mxu0
  %v3621 = vadd.f32 %v3460, %v3620
  %v3622 = vpop.f32.mrb[0].mxu0
  %3623 = vmatprep.mubr.bf16.mxu0 %v1567
  %3624 = vmatmul.mubr.bf16.gmra.mrb[0].mxu0 %v1566
  %v3625 = vpop.f32.mrb[0].mxu0
  %v3626 = vadd.f32 %v3465, %v3625
  %v3627 = vpop.f32.mrb[0].mxu0
  %v3628 = vpop.f32.mrb[0].mxu0
  %v3629 = vadd.f32 %v3468, %v3628
  %v3630 = vpop.f32.mrb[0].mxu0
  %3631 = vmatprep.mubr.bf16.mxu0 %v1585
  %3632 = vmatmul.mubr.bf16.gmra.mrb[0].mxu0 %v1584
  %v3633 = vpop.f32.mrb[0].mxu0
  %v3634 = vadd.f32 %v3473, %v3633
  %v3635 = vpop.f32.mrb[0].mxu0
  %v3636 = vpop.f32.mrb[0].mxu0
  %v3637 = vadd.f32 %v3476, %v3636
  %v3638 = vpop.f32.mrb[0].mxu0
  %3639 = vmatprep.mubr.bf16.mxu0 %v1603
  %3640 = vmatmul.mubr.bf16.gmra.mrb[0].mxu0 %v1602
  %v3641 = vpop.f32.mrb[0].mxu0
  %v3642 = vadd.f32 %v3481, %v3641
  %v3643 = vpop.f32.mrb[0].mxu0
  %v3644 = vpop.f32.mrb[0].mxu0
  %v3645 = vadd.f32 %v3484, %v3644
  %v3646 = vpop.f32.mrb[0].mxu0
  %3647 = vmatprep.mubr.bf16.mxu0 %v1621
  %3648 = vmatmul.mubr.bf16.gmra.mrb[0].mxu0 %v1620
  %v3649 = vpop.f32.mrb[0].mxu0
  %v3650 = vadd.f32 %v3489, %v3649
  %v3651 = vpop.f32.mrb[0].mxu0
  %v3652 = vpop.f32.mrb[0].mxu0
  %v3653 = vadd.f32 %v3492, %v3652
  %v3654 = vpop.f32.mrb[0].mxu0
  %3655 = vmatprep.mubr.bf16.mxu0 %v1639
  %3656 = vmatmul.mubr.bf16.gmra.mrb[0].mxu0 %v1638
  %v3657 = vpop.f32.mrb[0].mxu0
  %v3658 = vadd.f32 %v3497, %v3657
  %v3659 = vpop.f32.mrb[0].mxu0
  %v3660 = vpop.f32.mrb[0].mxu0
  %v3661 = vadd.f32 %v3500, %v3660
  %v3662 = vpop.f32.mrb[0].mxu0
  %3663 = vmatprep.mubr.bf16.mxu0 %v1657
  %3664 = vmatmul.mubr.bf16.gmra.mrb[0].mxu0 %v1656
  %v3665 = vpop.f32.mrb[0].mxu0
  %v3666 = vadd.f32 %v3505, %v3665
  %v3667 = vpop.f32.mrb[0].mxu0
  %v3668 = vpop.f32.mrb[0].mxu0
  %v3669 = vadd.f32 %v3508, %v3668
  %v3670 = vpop.f32.mrb[0].mxu0
  %3671 = vmatprep.mubr.bf16.mxu0 %v1675
  %3672 = vmatmul.mubr.bf16.gmra.mrb[0].mxu0 %v1674
  %v3673 = vpop.f32.mrb[0].mxu0
  %v3674 = vadd.f32 %v3513, %v3673
  %v3675 = vpop.f32.mrb[0].mxu0
  %v3676 = vpop.f32.mrb[0].mxu0
  %v3677 = vadd.f32 %v3516, %v3676
  %v3678 = vpop.f32.mrb[0].mxu0
  %3679 = vmatprep.mubr.bf16.mxu0 %v1693
  %3680 = vmatmul.mubr.bf16.gmra.mrb[0].mxu0 %v1692
  %v3681 = vpop.f32.mrb[0].mxu0
  %v3682 = vadd.f32 %v3521, %v3681
  %v3683 = vpop.f32.mrb[0].mxu0
  %v3684 = vpop.f32.mrb[0].mxu0
  %v3685 = vadd.f32 %v3524, %v3684
  %v3686 = vpop.f32.mrb[0].mxu0
  %3687 = vmatprep.mubr.bf16.mxu0 %v1711
  %3688 = vmatmul.mubr.bf16.gmra.mrb[0].mxu0 %v1710
  %v3689 = vpop.f32.mrb[0].mxu0
  %v3690 = vadd.f32 %v3529, %v3689
  %v3691 = vpop.f32.mrb[0].mxu0
  %v3692 = vpop.f32.mrb[0].mxu0
  %v3693 = vadd.f32 %v3532, %v3692
  %v3694 = vpop.f32.mrb[0].mxu0
  %3695 = vmatprep.mubr.bf16.mxu0 %v1729
  %3696 = vmatmul.mubr.bf16.gmra.mrb[0].mxu0 %v1728
  %v3697 = vpop.f32.mrb[0].mxu0
  %v3698 = vadd.f32 %v3537, %v3697
  %v3699 = vpop.f32.mrb[0].mxu0
  %v3700 = vpop.f32.mrb[0].mxu0
  %v3701 = vadd.f32 %v3540, %v3700
  %v3702 = vpop.f32.mrb[0].mxu0
  %3703 = vdwg.mxu0
  %3704 = vmatprep.subr.bf16.mxu0 0
  %3705 = vmatpush1.bf16.msra.mxu0 %v2650
  %3706 = vmatprep.subr.bf16.mxu0 0
  %3707 = vmatpush1.bf16.msra.mxu0 %v2651
  %3708 = vmatprep.subr.bf16.mxu0 0
  %3709 = vmatpush1.bf16.msra.mxu0 %v2652
  %3710 = vmatprep.subr.bf16.mxu0 0
  %3711 = vmatpush1.bf16.msra.mxu0 %v2653
  %3712 = vmatprep.subr.bf16.mxu0 0
  %3713 = vmatpush1.bf16.msra.mxu0 %v2654
  %3714 = vmatprep.subr.bf16.mxu0 0
  %3715 = vmatpush1.bf16.msra.mxu0 %v2655
  %3716 = vmatprep.subr.bf16.mxu0 0
  %3717 = vmatpush1.bf16.msra.mxu0 %v2656
  %3718 = vmatprep.subr.bf16.mxu0 0
  %3719 = vmatpush1.bf16.msra.mxu0 %v2657
  %3720 = vmatprep.subr.bf16.mxu0 0
  %3721 = vmatpush1.bf16.msra.mxu0 %v2658
  %3722 = vmatprep.subr.bf16.mxu0 0
  %3723 = vmatpush1.bf16.msra.mxu0 %v2659
  %3724 = vmatprep.subr.bf16.mxu0 0
  %3725 = vmatpush1.bf16.msra.mxu0 %v2660
  %3726 = vmatprep.subr.bf16.mxu0 0
  %3727 = vmatpush1.bf16.msra.mxu0 %v2661
  %3728 = vmatprep.subr.bf16.mxu0 0
  %3729 = vmatpush1.bf16.msra.mxu0 %v2662
  %3730 = vmatprep.subr.bf16.mxu0 0
  %3731 = vmatpush1.bf16.msra.mxu0 %v2663
  %3732 = vmatprep.subr.bf16.mxu0 0
  %3733 = vmatpush1.bf16.msra.mxu0 %v2664
  %3734 = vmatprep.subr.bf16.mxu0 0
  %3735 = vmatpush1.bf16.msra.mxu0 %v2665
  %3736 = vmatprep.mubr.bf16.mxu0 %v1461
  %3737 = vmatmul.mubr.bf16.gmra.mrb[0].mxu0 %v1460
  %v3738 = vpop.f32.mrb[0].mxu0
  %v3739 = vadd.f32 %v3578, %v3738
  %v3740 = vpop.f32.mrb[0].mxu0
  %v3741 = vpop.f32.mrb[0].mxu0
  %v3742 = vadd.f32 %v3581, %v3741
  %v3743 = vpop.f32.mrb[0].mxu0
  %3744 = vmatprep.mubr.bf16.mxu0 %v1479
  %3745 = vmatmul.mubr.bf16.gmra.mrb[0].mxu0 %v1478
  %v3746 = vpop.f32.mrb[0].mxu0
  %v3747 = vadd.f32 %v3586, %v3746
  %v3748 = vpop.f32.mrb[0].mxu0
  %v3749 = vpop.f32.mrb[0].mxu0
  %v3750 = vadd.f32 %v3589, %v3749
  %v3751 = vpop.f32.mrb[0].mxu0
  %3752 = vmatprep.mubr.bf16.mxu0 %v1497
  %3753 = vmatmul.mubr.bf16.gmra.mrb[0].mxu0 %v1496
  %v3754 = vpop.f32.mrb[0].mxu0
  %v3755 = vadd.f32 %v3594, %v3754
  %v3756 = vpop.f32.mrb[0].mxu0
  %v3757 = vpop.f32.mrb[0].mxu0
  %v3758 = vadd.f32 %v3597, %v3757
  %v3759 = vpop.f32.mrb[0].mxu0
  %3760 = vmatprep.mubr.bf16.mxu0 %v1515
  %3761 = vmatmul.mubr.bf16.gmra.mrb[0].mxu0 %v1514
  %v3762 = vpop.f32.mrb[0].mxu0
  %v3763 = vadd.f32 %v3602, %v3762
  %v3764 = vpop.f32.mrb[0].mxu0
  %v3765 = vpop.f32.mrb[0].mxu0
  %v3766 = vadd.f32 %v3605, %v3765
  %v3767 = vpop.f32.mrb[0].mxu0
  %3768 = vmatprep.mubr.bf16.mxu0 %v1533
  %3769 = vmatmul.mubr.bf16.gmra.mrb[0].mxu0 %v1532
  %v3770 = vpop.f32.mrb[0].mxu0
  %v3771 = vadd.f32 %v3610, %v3770
  %v3772 = vpop.f32.mrb[0].mxu0
  %v3773 = vpop.f32.mrb[0].mxu0
  %v3774 = vadd.f32 %v3613, %v3773
  %v3775 = vpop.f32.mrb[0].mxu0
  %3776 = vmatprep.mubr.bf16.mxu0 %v1551
  %3777 = vmatmul.mubr.bf16.gmra.mrb[0].mxu0 %v1550
  %v3778 = vpop.f32.mrb[0].mxu0
  %v3779 = vadd.f32 %v3618, %v3778
  %v3780 = vpop.f32.mrb[0].mxu0
  %v3781 = vpop.f32.mrb[0].mxu0
  %v3782 = vadd.f32 %v3621, %v3781
  %v3783 = vpop.f32.mrb[0].mxu0
  %3784 = vmatprep.mubr.bf16.mxu0 %v1569
  %3785 = vmatmul.mubr.bf16.gmra.mrb[0].mxu0 %v1568
  %v3786 = vpop.f32.mrb[0].mxu0
  %v3787 = vadd.f32 %v3626, %v3786
  %v3788 = vpop.f32.mrb[0].mxu0
  %v3789 = vpop.f32.mrb[0].mxu0
  %v3790 = vadd.f32 %v3629, %v3789
  %v3791 = vpop.f32.mrb[0].mxu0
  %3792 = vmatprep.mubr.bf16.mxu0 %v1587
  %3793 = vmatmul.mubr.bf16.gmra.mrb[0].mxu0 %v1586
  %v3794 = vpop.f32.mrb[0].mxu0
  %v3795 = vadd.f32 %v3634, %v3794
  %v3796 = vpop.f32.mrb[0].mxu0
  %v3797 = vpop.f32.mrb[0].mxu0
  %v3798 = vadd.f32 %v3637, %v3797
  %v3799 = vpop.f32.mrb[0].mxu0
  %3800 = vmatprep.mubr.bf16.mxu0 %v1605
  %3801 = vmatmul.mubr.bf16.gmra.mrb[0].mxu0 %v1604
  %v3802 = vpop.f32.mrb[0].mxu0
  %v3803 = vadd.f32 %v3642, %v3802
  %v3804 = vpop.f32.mrb[0].mxu0
  %v3805 = vpop.f32.mrb[0].mxu0
  %v3806 = vadd.f32 %v3645, %v3805
  %v3807 = vpop.f32.mrb[0].mxu0
  %3808 = vmatprep.mubr.bf16.mxu0 %v1623
  %3809 = vmatmul.mubr.bf16.gmra.mrb[0].mxu0 %v1622
  %v3810 = vpop.f32.mrb[0].mxu0
  %v3811 = vadd.f32 %v3650, %v3810
  %v3812 = vpop.f32.mrb[0].mxu0
  %v3813 = vpop.f32.mrb[0].mxu0
  %v3814 = vadd.f32 %v3653, %v3813
  %v3815 = vpop.f32.mrb[0].mxu0
  %3816 = vmatprep.mubr.bf16.mxu0 %v1641
  %3817 = vmatmul.mubr.bf16.gmra.mrb[0].mxu0 %v1640
  %v3818 = vpop.f32.mrb[0].mxu0
  %v3819 = vadd.f32 %v3658, %v3818
  %v3820 = vpop.f32.mrb[0].mxu0
  %v3821 = vpop.f32.mrb[0].mxu0
  %v3822 = vadd.f32 %v3661, %v3821
  %v3823 = vpop.f32.mrb[0].mxu0
  %3824 = vmatprep.mubr.bf16.mxu0 %v1659
  %3825 = vmatmul.mubr.bf16.gmra.mrb[0].mxu0 %v1658
  %v3826 = vpop.f32.mrb[0].mxu0
  %v3827 = vadd.f32 %v3666, %v3826
  %v3828 = vpop.f32.mrb[0].mxu0
  %v3829 = vpop.f32.mrb[0].mxu0
  %v3830 = vadd.f32 %v3669, %v3829
  %v3831 = vpop.f32.mrb[0].mxu0
  %3832 = vmatprep.mubr.bf16.mxu0 %v1677
  %3833 = vmatmul.mubr.bf16.gmra.mrb[0].mxu0 %v1676
  %v3834 = vpop.f32.mrb[0].mxu0
  %v3835 = vadd.f32 %v3674, %v3834
  %v3836 = vpop.f32.mrb[0].mxu0
  %v3837 = vpop.f32.mrb[0].mxu0
  %v3838 = vadd.f32 %v3677, %v3837
  %v3839 = vpop.f32.mrb[0].mxu0
  %3840 = vmatprep.mubr.bf16.mxu0 %v1695
  %3841 = vmatmul.mubr.bf16.gmra.mrb[0].mxu0 %v1694
  %v3842 = vpop.f32.mrb[0].mxu0
  %v3843 = vadd.f32 %v3682, %v3842
  %v3844 = vpop.f32.mrb[0].mxu0
  %v3845 = vpop.f32.mrb[0].mxu0
  %v3846 = vadd.f32 %v3685, %v3845
  %v3847 = vpop.f32.mrb[0].mxu0
  %3848 = vmatprep.mubr.bf16.mxu0 %v1713
  %3849 = vmatmul.mubr.bf16.gmra.mrb[0].mxu0 %v1712
  %v3850 = vpop.f32.mrb[0].mxu0
  %v3851 = vadd.f32 %v3690, %v3850
  %v3852 = vpop.f32.mrb[0].mxu0
  %v3853 = vpop.f32.mrb[0].mxu0
  %v3854 = vadd.f32 %v3693, %v3853
  %v3855 = vpop.f32.mrb[0].mxu0
  %3856 = vmatprep.mubr.bf16.mxu0 %v1731
  %3857 = vmatmul.mubr.bf16.gmra.mrb[0].mxu0 %v1730
  %v3858 = vpop.f32.mrb[0].mxu0
  %v3859 = vadd.f32 %v3698, %v3858
  %v3860 = vpop.f32.mrb[0].mxu0
  %v3861 = vpop.f32.mrb[0].mxu0
  %v3862 = vadd.f32 %v3701, %v3861
  %v3863 = vpop.f32.mrb[0].mxu0
  %3864 = vdwg.mxu0
  %3865 = vmatprep.subr.bf16.mxu0 0
  %3866 = vmatpush1.bf16.msra.mxu0 %v2666
  %3867 = vmatprep.subr.bf16.mxu0 0
  %3868 = vmatpush1.bf16.msra.mxu0 %v2667
  %3869 = vmatprep.subr.bf16.mxu0 0
  %3870 = vmatpush1.bf16.msra.mxu0 %v2668
  %3871 = vmatprep.subr.bf16.mxu0 0
  %3872 = vmatpush1.bf16.msra.mxu0 %v2669
  %3873 = vmatprep.subr.bf16.mxu0 0
  %3874 = vmatpush1.bf16.msra.mxu0 %v2670
  %3875 = vmatprep.subr.bf16.mxu0 0
  %3876 = vmatpush1.bf16.msra.mxu0 %v2671
  %3877 = vmatprep.subr.bf16.mxu0 0
  %3878 = vmatpush1.bf16.msra.mxu0 %v2672
  %3879 = vmatprep.subr.bf16.mxu0 0
  %3880 = vmatpush1.bf16.msra.mxu0 %v2673
  %3881 = vmatprep.subr.bf16.mxu0 0
  %3882 = vmatpush1.bf16.msra.mxu0 %v2674
  %3883 = vmatprep.subr.bf16.mxu0 0
  %3884 = vmatpush1.bf16.msra.mxu0 %v2675
  %3885 = vmatprep.subr.bf16.mxu0 0
  %3886 = vmatpush1.bf16.msra.mxu0 %v2676
  %3887 = vmatprep.subr.bf16.mxu0 0
  %3888 = vmatpush1.bf16.msra.mxu0 %v2677
  %3889 = vmatprep.subr.bf16.mxu0 0
  %3890 = vmatpush1.bf16.msra.mxu0 %v2678
  %3891 = vmatprep.subr.bf16.mxu0 0
  %3892 = vmatpush1.bf16.msra.mxu0 %v2679
  %3893 = vmatprep.subr.bf16.mxu0 0
  %3894 = vmatpush1.bf16.msra.mxu0 %v2680
  %3895 = vmatprep.subr.bf16.mxu0 0
  %3896 = vmatpush1.bf16.msra.mxu0 %v2681
  %3897 = vmatprep.mubr.bf16.mxu0 %v1463
  %3898 = vmatmul.mubr.bf16.gmra.mrb[0].mxu0 %v1462
  %v3899 = vpop.f32.mrb[0].mxu0
  %v3900 = vadd.f32 %v3739, %v3899
  %v3901 = vpop.f32.mrb[0].mxu0
  %v3902 = vpop.f32.mrb[0].mxu0
  %v3903 = vadd.f32 %v3742, %v3902
  %v3904 = vpop.f32.mrb[0].mxu0
  %3905 = vmatprep.mubr.bf16.mxu0 %v1481
  %3906 = vmatmul.mubr.bf16.gmra.mrb[0].mxu0 %v1480
  %v3907 = vpop.f32.mrb[0].mxu0
  %v3908 = vadd.f32 %v3747, %v3907
  %v3909 = vpop.f32.mrb[0].mxu0
  %v3910 = vpop.f32.mrb[0].mxu0
  %v3911 = vadd.f32 %v3750, %v3910
  %v3912 = vpop.f32.mrb[0].mxu0
  %3913 = vmatprep.mubr.bf16.mxu0 %v1499
  %3914 = vmatmul.mubr.bf16.gmra.mrb[0].mxu0 %v1498
  %v3915 = vpop.f32.mrb[0].mxu0
  %v3916 = vadd.f32 %v3755, %v3915
  %v3917 = vpop.f32.mrb[0].mxu0
  %v3918 = vpop.f32.mrb[0].mxu0
  %v3919 = vadd.f32 %v3758, %v3918
  %v3920 = vpop.f32.mrb[0].mxu0
  %3921 = vmatprep.mubr.bf16.mxu0 %v1517
  %3922 = vmatmul.mubr.bf16.gmra.mrb[0].mxu0 %v1516
  %v3923 = vpop.f32.mrb[0].mxu0
  %v3924 = vadd.f32 %v3763, %v3923
  %v3925 = vpop.f32.mrb[0].mxu0
  %v3926 = vpop.f32.mrb[0].mxu0
  %v3927 = vadd.f32 %v3766, %v3926
  %v3928 = vpop.f32.mrb[0].mxu0
  %3929 = vmatprep.mubr.bf16.mxu0 %v1535
  %3930 = vmatmul.mubr.bf16.gmra.mrb[0].mxu0 %v1534
  %v3931 = vpop.f32.mrb[0].mxu0
  %v3932 = vadd.f32 %v3771, %v3931
  %v3933 = vpop.f32.mrb[0].mxu0
  %v3934 = vpop.f32.mrb[0].mxu0
  %v3935 = vadd.f32 %v3774, %v3934
  %v3936 = vpop.f32.mrb[0].mxu0
  %3937 = vmatprep.mubr.bf16.mxu0 %v1553
  %3938 = vmatmul.mubr.bf16.gmra.mrb[0].mxu0 %v1552
  %v3939 = vpop.f32.mrb[0].mxu0
  %v3940 = vadd.f32 %v3779, %v3939
  %v3941 = vpop.f32.mrb[0].mxu0
  %v3942 = vpop.f32.mrb[0].mxu0
  %v3943 = vadd.f32 %v3782, %v3942
  %v3944 = vpop.f32.mrb[0].mxu0
  %3945 = vmatprep.mubr.bf16.mxu0 %v1571
  %3946 = vmatmul.mubr.bf16.gmra.mrb[0].mxu0 %v1570
  %v3947 = vpop.f32.mrb[0].mxu0
  %v3948 = vadd.f32 %v3787, %v3947
  %v3949 = vpop.f32.mrb[0].mxu0
  %v3950 = vpop.f32.mrb[0].mxu0
  %v3951 = vadd.f32 %v3790, %v3950
  %v3952 = vpop.f32.mrb[0].mxu0
  %3953 = vmatprep.mubr.bf16.mxu0 %v1589
  %3954 = vmatmul.mubr.bf16.gmra.mrb[0].mxu0 %v1588
  %v3955 = vpop.f32.mrb[0].mxu0
  %v3956 = vadd.f32 %v3795, %v3955
  %v3957 = vpop.f32.mrb[0].mxu0
  %v3958 = vpop.f32.mrb[0].mxu0
  %v3959 = vadd.f32 %v3798, %v3958
  %v3960 = vpop.f32.mrb[0].mxu0
  %3961 = vmatprep.mubr.bf16.mxu0 %v1607
  %3962 = vmatmul.mubr.bf16.gmra.mrb[0].mxu0 %v1606
  %v3963 = vpop.f32.mrb[0].mxu0
  %v3964 = vadd.f32 %v3803, %v3963
  %v3965 = vpop.f32.mrb[0].mxu0
  %v3966 = vpop.f32.mrb[0].mxu0
  %v3967 = vadd.f32 %v3806, %v3966
  %v3968 = vpop.f32.mrb[0].mxu0
  %3969 = vmatprep.mubr.bf16.mxu0 %v1625
  %3970 = vmatmul.mubr.bf16.gmra.mrb[0].mxu0 %v1624
  %v3971 = vpop.f32.mrb[0].mxu0
  %v3972 = vadd.f32 %v3811, %v3971
  %v3973 = vpop.f32.mrb[0].mxu0
  %v3974 = vpop.f32.mrb[0].mxu0
  %v3975 = vadd.f32 %v3814, %v3974
  %v3976 = vpop.f32.mrb[0].mxu0
  %3977 = vmatprep.mubr.bf16.mxu0 %v1643
  %3978 = vmatmul.mubr.bf16.gmra.mrb[0].mxu0 %v1642
  %v3979 = vpop.f32.mrb[0].mxu0
  %v3980 = vadd.f32 %v3819, %v3979
  %v3981 = vpop.f32.mrb[0].mxu0
  %v3982 = vpop.f32.mrb[0].mxu0
  %v3983 = vadd.f32 %v3822, %v3982
  %v3984 = vpop.f32.mrb[0].mxu0
  %3985 = vmatprep.mubr.bf16.mxu0 %v1661
  %3986 = vmatmul.mubr.bf16.gmra.mrb[0].mxu0 %v1660
  %v3987 = vpop.f32.mrb[0].mxu0
  %v3988 = vadd.f32 %v3827, %v3987
  %v3989 = vpop.f32.mrb[0].mxu0
  %v3990 = vpop.f32.mrb[0].mxu0
  %v3991 = vadd.f32 %v3830, %v3990
  %v3992 = vpop.f32.mrb[0].mxu0
  %3993 = vmatprep.mubr.bf16.mxu0 %v1679
  %3994 = vmatmul.mubr.bf16.gmra.mrb[0].mxu0 %v1678
  %v3995 = vpop.f32.mrb[0].mxu0
  %v3996 = vadd.f32 %v3835, %v3995
  %v3997 = vpop.f32.mrb[0].mxu0
  %v3998 = vpop.f32.mrb[0].mxu0
  %v3999 = vadd.f32 %v3838, %v3998
  %v4000 = vpop.f32.mrb[0].mxu0
  %4001 = vmatprep.mubr.bf16.mxu0 %v1697
  %4002 = vmatmul.mubr.bf16.gmra.mrb[0].mxu0 %v1696
  %v4003 = vpop.f32.mrb[0].mxu0
  %v4004 = vadd.f32 %v3843, %v4003
  %v4005 = vpop.f32.mrb[0].mxu0
  %v4006 = vpop.f32.mrb[0].mxu0
  %v4007 = vadd.f32 %v3846, %v4006
  %v4008 = vpop.f32.mrb[0].mxu0
  %4009 = vmatprep.mubr.bf16.mxu0 %v1715
  %4010 = vmatmul.mubr.bf16.gmra.mrb[0].mxu0 %v1714
  %v4011 = vpop.f32.mrb[0].mxu0
  %v4012 = vadd.f32 %v3851, %v4011
  %v4013 = vpop.f32.mrb[0].mxu0
  %v4014 = vpop.f32.mrb[0].mxu0
  %v4015 = vadd.f32 %v3854, %v4014
  %v4016 = vpop.f32.mrb[0].mxu0
  %4017 = vmatprep.mubr.bf16.mxu0 %v1733
  %4018 = vmatmul.mubr.bf16.gmra.mrb[0].mxu0 %v1732
  %v4019 = vpop.f32.mrb[0].mxu0
  %v4020 = vadd.f32 %v3859, %v4019
  %v4021 = vpop.f32.mrb[0].mxu0
  %v4022 = vpop.f32.mrb[0].mxu0
  %v4023 = vadd.f32 %v3862, %v4022
  %v4024 = vpop.f32.mrb[0].mxu0
  %4025 = vdwg.mxu0
  %4026 = vmatprep.subr.bf16.mxu0 0
  %4027 = vmatpush1.bf16.msra.mxu0 %v2682
  %4028 = vmatprep.subr.bf16.mxu0 0
  %4029 = vmatpush1.bf16.msra.mxu0 %v2683
  %4030 = vmatprep.subr.bf16.mxu0 0
  %4031 = vmatpush1.bf16.msra.mxu0 %v2684
  %4032 = vmatprep.subr.bf16.mxu0 0
  %4033 = vmatpush1.bf16.msra.mxu0 %v2685
  %4034 = vmatprep.subr.bf16.mxu0 0
  %4035 = vmatpush1.bf16.msra.mxu0 %v2686
  %4036 = vmatprep.subr.bf16.mxu0 0
  %4037 = vmatpush1.bf16.msra.mxu0 %v2687
  %4038 = vmatprep.subr.bf16.mxu0 0
  %4039 = vmatpush1.bf16.msra.mxu0 %v2688
  %4040 = vmatprep.subr.bf16.mxu0 0
  %4041 = vmatpush1.bf16.msra.mxu0 %v2689
  %4042 = vmatprep.subr.bf16.mxu0 0
  %4043 = vmatpush1.bf16.msra.mxu0 %v2690
  %4044 = vmatprep.subr.bf16.mxu0 0
  %4045 = vmatpush1.bf16.msra.mxu0 %v2691
  %4046 = vmatprep.subr.bf16.mxu0 0
  %4047 = vmatpush1.bf16.msra.mxu0 %v2692
  %4048 = vmatprep.subr.bf16.mxu0 0
  %4049 = vmatpush1.bf16.msra.mxu0 %v2693
  %4050 = vmatprep.subr.bf16.mxu0 0
  %4051 = vmatpush1.bf16.msra.mxu0 %v2694
  %4052 = vmatprep.subr.bf16.mxu0 0
  %4053 = vmatpush1.bf16.msra.mxu0 %v2695
  %4054 = vmatprep.subr.bf16.mxu0 0
  %4055 = vmatpush1.bf16.msra.mxu0 %v2696
  %4056 = vmatprep.subr.bf16.mxu0 0
  %4057 = vmatpush1.bf16.msra.mxu0 %v2697
  %4058 = vmatprep.mubr.bf16.mxu0 %v1465
  %4059 = vmatmul.mubr.bf16.gmra.mrb[0].mxu0 %v1464
  %v4060 = vpop.f32.mrb[0].mxu0
  %v4061 = vadd.f32 %v3900, %v4060
  %v4062 = vpop.f32.mrb[0].mxu0
  %v4063 = vpop.f32.mrb[0].mxu0
  %v4064 = vadd.f32 %v3903, %v4063
  %v4065 = vpop.f32.mrb[0].mxu0
  %4066 = vmatprep.mubr.bf16.mxu0 %v1483
  %4067 = vmatmul.mubr.bf16.gmra.mrb[0].mxu0 %v1482
  %v4068 = vpop.f32.mrb[0].mxu0
  %v4069 = vadd.f32 %v3908, %v4068
  %v4070 = vpop.f32.mrb[0].mxu0
  %v4071 = vpop.f32.mrb[0].mxu0
  %v4072 = vadd.f32 %v3911, %v4071
  %v4073 = vpop.f32.mrb[0].mxu0
  %4074 = vmatprep.mubr.bf16.mxu0 %v1501
  %4075 = vmatmul.mubr.bf16.gmra.mrb[0].mxu0 %v1500
  %v4076 = vpop.f32.mrb[0].mxu0
  %v4077 = vadd.f32 %v3916, %v4076
  %v4078 = vpop.f32.mrb[0].mxu0
  %v4079 = vpop.f32.mrb[0].mxu0
  %v4080 = vadd.f32 %v3919, %v4079
  %v4081 = vpop.f32.mrb[0].mxu0
  %4082 = vmatprep.mubr.bf16.mxu0 %v1519
  %4083 = vmatmul.mubr.bf16.gmra.mrb[0].mxu0 %v1518
  %v4084 = vpop.f32.mrb[0].mxu0
  %v4085 = vadd.f32 %v3924, %v4084
  %v4086 = vpop.f32.mrb[0].mxu0
  %v4087 = vpop.f32.mrb[0].mxu0
  %v4088 = vadd.f32 %v3927, %v4087
  %v4089 = vpop.f32.mrb[0].mxu0
  %4090 = vmatprep.mubr.bf16.mxu0 %v1537
  %4091 = vmatmul.mubr.bf16.gmra.mrb[0].mxu0 %v1536
  %v4092 = vpop.f32.mrb[0].mxu0
  %v4093 = vadd.f32 %v3932, %v4092
  %v4094 = vpop.f32.mrb[0].mxu0
  %v4095 = vpop.f32.mrb[0].mxu0
  %v4096 = vadd.f32 %v3935, %v4095
  %v4097 = vpop.f32.mrb[0].mxu0
  %4098 = vmatprep.mubr.bf16.mxu0 %v1555
  %4099 = vmatmul.mubr.bf16.gmra.mrb[0].mxu0 %v1554
  %v4100 = vpop.f32.mrb[0].mxu0
  %v4101 = vadd.f32 %v3940, %v4100
  %v4102 = vpop.f32.mrb[0].mxu0
  %v4103 = vpop.f32.mrb[0].mxu0
  %v4104 = vadd.f32 %v3943, %v4103
  %v4105 = vpop.f32.mrb[0].mxu0
  %4106 = vmatprep.mubr.bf16.mxu0 %v1573
  %4107 = vmatmul.mubr.bf16.gmra.mrb[0].mxu0 %v1572
  %v4108 = vpop.f32.mrb[0].mxu0
  %v4109 = vadd.f32 %v3948, %v4108
  %v4110 = vpop.f32.mrb[0].mxu0
  %v4111 = vpop.f32.mrb[0].mxu0
  %v4112 = vadd.f32 %v3951, %v4111
  %v4113 = vpop.f32.mrb[0].mxu0
  %4114 = vmatprep.mubr.bf16.mxu0 %v1591
  %4115 = vmatmul.mubr.bf16.gmra.mrb[0].mxu0 %v1590
  %v4116 = vpop.f32.mrb[0].mxu0
  %v4117 = vadd.f32 %v3956, %v4116
  %v4118 = vpop.f32.mrb[0].mxu0
  %v4119 = vpop.f32.mrb[0].mxu0
  %v4120 = vadd.f32 %v3959, %v4119
  %v4121 = vpop.f32.mrb[0].mxu0
  %4122 = vmatprep.mubr.bf16.mxu0 %v1609
  %4123 = vmatmul.mubr.bf16.gmra.mrb[0].mxu0 %v1608
  %v4124 = vpop.f32.mrb[0].mxu0
  %v4125 = vadd.f32 %v3964, %v4124
  %v4126 = vpop.f32.mrb[0].mxu0
  %v4127 = vpop.f32.mrb[0].mxu0
  %v4128 = vadd.f32 %v3967, %v4127
  %v4129 = vpop.f32.mrb[0].mxu0
  %4130 = vmatprep.mubr.bf16.mxu0 %v1627
  %4131 = vmatmul.mubr.bf16.gmra.mrb[0].mxu0 %v1626
  %v4132 = vpop.f32.mrb[0].mxu0
  %v4133 = vadd.f32 %v3972, %v4132
  %v4134 = vpop.f32.mrb[0].mxu0
  %v4135 = vpop.f32.mrb[0].mxu0
  %v4136 = vadd.f32 %v3975, %v4135
  %v4137 = vpop.f32.mrb[0].mxu0
  %4138 = vmatprep.mubr.bf16.mxu0 %v1645
  %4139 = vmatmul.mubr.bf16.gmra.mrb[0].mxu0 %v1644
  %v4140 = vpop.f32.mrb[0].mxu0
  %v4141 = vadd.f32 %v3980, %v4140
  %v4142 = vpop.f32.mrb[0].mxu0
  %v4143 = vpop.f32.mrb[0].mxu0
  %v4144 = vadd.f32 %v3983, %v4143
  %v4145 = vpop.f32.mrb[0].mxu0
  %4146 = vmatprep.mubr.bf16.mxu0 %v1663
  %4147 = vmatmul.mubr.bf16.gmra.mrb[0].mxu0 %v1662
  %v4148 = vpop.f32.mrb[0].mxu0
  %v4149 = vadd.f32 %v3988, %v4148
  %v4150 = vpop.f32.mrb[0].mxu0
  %v4151 = vpop.f32.mrb[0].mxu0
  %v4152 = vadd.f32 %v3991, %v4151
  %v4153 = vpop.f32.mrb[0].mxu0
  %4154 = vmatprep.mubr.bf16.mxu0 %v1681
  %4155 = vmatmul.mubr.bf16.gmra.mrb[0].mxu0 %v1680
  %v4156 = vpop.f32.mrb[0].mxu0
  %v4157 = vadd.f32 %v3996, %v4156
  %v4158 = vpop.f32.mrb[0].mxu0
  %v4159 = vpop.f32.mrb[0].mxu0
  %v4160 = vadd.f32 %v3999, %v4159
  %v4161 = vpop.f32.mrb[0].mxu0
  %4162 = vmatprep.mubr.bf16.mxu0 %v1699
  %4163 = vmatmul.mubr.bf16.gmra.mrb[0].mxu0 %v1698
  %v4164 = vpop.f32.mrb[0].mxu0
  %v4165 = vadd.f32 %v4004, %v4164
  %v4166 = vpop.f32.mrb[0].mxu0
  %v4167 = vpop.f32.mrb[0].mxu0
  %v4168 = vadd.f32 %v4007, %v4167
  %v4169 = vpop.f32.mrb[0].mxu0
  %4170 = vmatprep.mubr.bf16.mxu0 %v1717
  %4171 = vmatmul.mubr.bf16.gmra.mrb[0].mxu0 %v1716
  %v4172 = vpop.f32.mrb[0].mxu0
  %v4173 = vadd.f32 %v4012, %v4172
  %v4174 = vpop.f32.mrb[0].mxu0
  %v4175 = vpop.f32.mrb[0].mxu0
  %v4176 = vadd.f32 %v4015, %v4175
  %v4177 = vpop.f32.mrb[0].mxu0
  %4178 = vmatprep.mubr.bf16.mxu0 %v1735
  %4179 = vmatmul.mubr.bf16.gmra.mrb[0].mxu0 %v1734
  %v4180 = vpop.f32.mrb[0].mxu0
  %v4181 = vadd.f32 %v4020, %v4180
  %v4182 = vpop.f32.mrb[0].mxu0
  %v4183 = vpop.f32.mrb[0].mxu0
  %v4184 = vadd.f32 %v4023, %v4183
  %v4185 = vpop.f32.mrb[0].mxu0
  %4186 = vdwg.mxu0
  %4187 = vmatprep.subr.bf16.mxu0 0
  %4188 = vmatpush1.bf16.msra.mxu0 %v2698
  %4189 = vmatprep.subr.bf16.mxu0 0
  %4190 = vmatpush1.bf16.msra.mxu0 %v2699
  %4191 = vmatprep.subr.bf16.mxu0 0
  %4192 = vmatpush1.bf16.msra.mxu0 %v2700
  %4193 = vmatprep.subr.bf16.mxu0 0
  %4194 = vmatpush1.bf16.msra.mxu0 %v2701
  %4195 = vmatprep.subr.bf16.mxu0 0
  %4196 = vmatpush1.bf16.msra.mxu0 %v2702
  %4197 = vmatprep.subr.bf16.mxu0 0
  %4198 = vmatpush1.bf16.msra.mxu0 %v2703
  %4199 = vmatprep.subr.bf16.mxu0 0
  %4200 = vmatpush1.bf16.msra.mxu0 %v2704
  %4201 = vmatprep.subr.bf16.mxu0 0
  %4202 = vmatpush1.bf16.msra.mxu0 %v2705
  %4203 = vmatprep.subr.bf16.mxu0 0
  %4204 = vmatpush1.bf16.msra.mxu0 %v2706
  %4205 = vmatprep.subr.bf16.mxu0 0
  %4206 = vmatpush1.bf16.msra.mxu0 %v2707
  %4207 = vmatprep.subr.bf16.mxu0 0
  %4208 = vmatpush1.bf16.msra.mxu0 %v2708
  %4209 = vmatprep.subr.bf16.mxu0 0
  %4210 = vmatpush1.bf16.msra.mxu0 %v2709
  %4211 = vmatprep.subr.bf16.mxu0 0
  %4212 = vmatpush1.bf16.msra.mxu0 0
  %4213 = vmatprep.subr.bf16.mxu0 0
  %4214 = vmatpush1.bf16.msra.mxu0 0
  %4215 = vmatprep.subr.bf16.mxu0 0
  %4216 = vmatpush1.bf16.msra.mxu0 0
  %4217 = vmatprep.subr.bf16.mxu0 0
  %4218 = vmatpush1.bf16.msra.mxu0 0
  %4219 = vmatprep.mubr.bf16.mxu0 %v2852
  %4220 = vmatmul.mubr.bf16.gmra.mrb[0].mxu0 %v1466
  %v4221 = vpop.f32.mrb[0].mxu0
  %v4222 = vadd.f32 %v4061, %v4221
  %v4223 = vpop.f32.mrb[0].mxu0
  %v4224 = vpop.f32.mrb[0].mxu0
  %v4225 = vadd.f32 %v4064, %v4224
  %v4226 = vpop.f32.mrb[0].mxu0
  %4227 = vmatprep.mubr.bf16.mxu0 %v2855
  %4228 = vmatmul.mubr.bf16.gmra.mrb[0].mxu0 %v1484
  %v4229 = vpop.f32.mrb[0].mxu0
  %v4230 = vadd.f32 %v4069, %v4229
  %v4231 = vpop.f32.mrb[0].mxu0
  %v4232 = vpop.f32.mrb[0].mxu0
  %v4233 = vadd.f32 %v4072, %v4232
  %v4234 = vpop.f32.mrb[0].mxu0
  %4235 = vmatprep.mubr.bf16.mxu0 %v2858
  %4236 = vmatmul.mubr.bf16.gmra.mrb[0].mxu0 %v1502
  %v4237 = vpop.f32.mrb[0].mxu0
  %v4238 = vadd.f32 %v4077, %v4237
  %v4239 = vpop.f32.mrb[0].mxu0
  %v4240 = vpop.f32.mrb[0].mxu0
  %v4241 = vadd.f32 %v4080, %v4240
  %v4242 = vpop.f32.mrb[0].mxu0
  %4243 = vmatprep.mubr.bf16.mxu0 %v2861
  %4244 = vmatmul.mubr.bf16.gmra.mrb[0].mxu0 %v1520
  %v4245 = vpop.f32.mrb[0].mxu0
  %v4246 = vadd.f32 %v4085, %v4245
  %v4247 = vpop.f32.mrb[0].mxu0
  %v4248 = vpop.f32.mrb[0].mxu0
  %v4249 = vadd.f32 %v4088, %v4248
  %v4250 = vpop.f32.mrb[0].mxu0
  %4251 = vmatprep.mubr.bf16.mxu0 %v2864
  %4252 = vmatmul.mubr.bf16.gmra.mrb[0].mxu0 %v1538
  %v4253 = vpop.f32.mrb[0].mxu0
  %v4254 = vadd.f32 %v4093, %v4253
  %v4255 = vpop.f32.mrb[0].mxu0
  %v4256 = vpop.f32.mrb[0].mxu0
  %v4257 = vadd.f32 %v4096, %v4256
  %v4258 = vpop.f32.mrb[0].mxu0
  %4259 = vmatprep.mubr.bf16.mxu0 %v2867
  %4260 = vmatmul.mubr.bf16.gmra.mrb[0].mxu0 %v1556
  %v4261 = vpop.f32.mrb[0].mxu0
  %v4262 = vadd.f32 %v4101, %v4261
  %v4263 = vpop.f32.mrb[0].mxu0
  %v4264 = vpop.f32.mrb[0].mxu0
  %v4265 = vadd.f32 %v4104, %v4264
  %v4266 = vpop.f32.mrb[0].mxu0
  %4267 = vmatprep.mubr.bf16.mxu0 %v2870
  %4268 = vmatmul.mubr.bf16.gmra.mrb[0].mxu0 %v1574
  %v4269 = vpop.f32.mrb[0].mxu0
  %v4270 = vadd.f32 %v4109, %v4269
  %v4271 = vpop.f32.mrb[0].mxu0
  %v4272 = vpop.f32.mrb[0].mxu0
  %v4273 = vadd.f32 %v4112, %v4272
  %v4274 = vpop.f32.mrb[0].mxu0
  %4275 = vmatprep.mubr.bf16.mxu0 %v2873
  %4276 = vmatmul.mubr.bf16.gmra.mrb[0].mxu0 %v1592
  %v4277 = vpop.f32.mrb[0].mxu0
  %v4278 = vadd.f32 %v4117, %v4277
  %v4279 = vpop.f32.mrb[0].mxu0
  %v4280 = vpop.f32.mrb[0].mxu0
  %v4281 = vadd.f32 %v4120, %v4280
  %v4282 = vpop.f32.mrb[0].mxu0
  %4283 = vmatprep.mubr.bf16.mxu0 %v2876
  %4284 = vmatmul.mubr.bf16.gmra.mrb[0].mxu0 %v1610
  %v4285 = vpop.f32.mrb[0].mxu0
  %v4286 = vadd.f32 %v4125, %v4285
  %v4287 = vpop.f32.mrb[0].mxu0
  %v4288 = vpop.f32.mrb[0].mxu0
  %v4289 = vadd.f32 %v4128, %v4288
  %v4290 = vpop.f32.mrb[0].mxu0
  %4291 = vmatprep.mubr.bf16.mxu0 %v2879
  %4292 = vmatmul.mubr.bf16.gmra.mrb[0].mxu0 %v1628
  %v4293 = vpop.f32.mrb[0].mxu0
  %v4294 = vadd.f32 %v4133, %v4293
  %v4295 = vpop.f32.mrb[0].mxu0
  %v4296 = vpop.f32.mrb[0].mxu0
  %v4297 = vadd.f32 %v4136, %v4296
  %v4298 = vpop.f32.mrb[0].mxu0
  %4299 = vmatprep.mubr.bf16.mxu0 %v2882
  %4300 = vmatmul.mubr.bf16.gmra.mrb[0].mxu0 %v1646
  %v4301 = vpop.f32.mrb[0].mxu0
  %v4302 = vadd.f32 %v4141, %v4301
  %v4303 = vpop.f32.mrb[0].mxu0
  %v4304 = vpop.f32.mrb[0].mxu0
  %v4305 = vadd.f32 %v4144, %v4304
  %v4306 = vpop.f32.mrb[0].mxu0
  %4307 = vmatprep.mubr.bf16.mxu0 %v2885
  %4308 = vmatmul.mubr.bf16.gmra.mrb[0].mxu0 %v1664
  %v4309 = vpop.f32.mrb[0].mxu0
  %v4310 = vadd.f32 %v4149, %v4309
  %v4311 = vpop.f32.mrb[0].mxu0
  %v4312 = vpop.f32.mrb[0].mxu0
  %v4313 = vadd.f32 %v4152, %v4312
  %v4314 = vpop.f32.mrb[0].mxu0
  %4315 = vmatprep.mubr.bf16.mxu0 %v2888
  %4316 = vmatmul.mubr.bf16.gmra.mrb[0].mxu0 %v1682
  %v4317 = vpop.f32.mrb[0].mxu0
  %v4318 = vadd.f32 %v4157, %v4317
  %v4319 = vpop.f32.mrb[0].mxu0
  %v4320 = vpop.f32.mrb[0].mxu0
  %v4321 = vadd.f32 %v4160, %v4320
  %v4322 = vpop.f32.mrb[0].mxu0
  %4323 = vmatprep.mubr.bf16.mxu0 %v2891
  %4324 = vmatmul.mubr.bf16.gmra.mrb[0].mxu0 %v1700
  %v4325 = vpop.f32.mrb[0].mxu0
  %v4326 = vadd.f32 %v4165, %v4325
  %v4327 = vpop.f32.mrb[0].mxu0
  %v4328 = vpop.f32.mrb[0].mxu0
  %v4329 = vadd.f32 %v4168, %v4328
  %v4330 = vpop.f32.mrb[0].mxu0
  %4331 = vmatprep.mubr.bf16.mxu0 %v2894
  %4332 = vmatmul.mubr.bf16.gmra.mrb[0].mxu0 %v1718
  %v4333 = vpop.f32.mrb[0].mxu0
  %v4334 = vadd.f32 %v4173, %v4333
  %v4335 = vpop.f32.mrb[0].mxu0
  %v4336 = vpop.f32.mrb[0].mxu0
  %v4337 = vadd.f32 %v4176, %v4336
  %v4338 = vpop.f32.mrb[0].mxu0
  %4339 = vmatprep.mubr.bf16.mxu0 %v2897
  %4340 = vmatmul.mubr.bf16.gmra.mrb[0].mxu0 %v1736
  %v4341 = vpop.f32.mrb[0].mxu0
  %v4342 = vadd.f32 %v4181, %v4341
  %v4343 = vpop.f32.mrb[0].mxu0
  %v4344 = vpop.f32.mrb[0].mxu0
  %v4345 = vadd.f32 %v4184, %v4344
  %v4346 = vpop.f32.mrb[0].mxu0
  %4347 = vdwg.mxu0
  %v4348 = vld [vmem:[%s2] sm:$0x1]
  %v4350 = vlaneseq
  %v4351 = vshrl.u32 %v4350, 7
  %v4352 = vsub.s32 0, %v4351
  %v4353 = vrot.slane %v4348, %v4352
  %v4355 = vmul.f32 %v4222, %v4353
  %v4356 = vmul.f32 %v4225, %v4353
  %v4357 = vmul.f32 %v4230, %v4353
  %v4358 = vmul.f32 %v4233, %v4353
  %v4359 = vmul.f32 %v4238, %v4353
  %v4360 = vmul.f32 %v4241, %v4353
  %v4361 = vmul.f32 %v4246, %v4353
  %v4362 = vmul.f32 %v4249, %v4353
  %v4363 = vmul.f32 %v4254, %v4353
  %v4364 = vmul.f32 %v4257, %v4353
  %v4365 = vmul.f32 %v4262, %v4353
  %v4366 = vmul.f32 %v4265, %v4353
  %v4367 = vmul.f32 %v4270, %v4353
  %v4368 = vmul.f32 %v4273, %v4353
  %v4369 = vmul.f32 %v4278, %v4353
  %v4370 = vmul.f32 %v4281, %v4353
  %v4371 = vmul.f32 %v4286, %v4353
  %v4372 = vmul.f32 %v4289, %v4353
  %v4373 = vmul.f32 %v4294, %v4353
  %v4374 = vmul.f32 %v4297, %v4353
  %v4375 = vmul.f32 %v4302, %v4353
  %v4376 = vmul.f32 %v4305, %v4353
  %v4377 = vmul.f32 %v4310, %v4353
  %v4378 = vmul.f32 %v4313, %v4353
  %v4379 = vmul.f32 %v4318, %v4353
  %v4380 = vmul.f32 %v4321, %v4353
  %v4381 = vmul.f32 %v4326, %v4353
  %v4382 = vmul.f32 %v4329, %v4353
  %v4383 = vmul.f32 %v4334, %v4353
  %v4384 = vmul.f32 %v4337, %v4353
  %v4385 = vmul.f32 %v4342, %v4353
  %v4386 = vmul.f32 %v4345, %v4353
  %v4387 = vld [vmem:[%s3] sm:$0x1]
  %v4389 = vlaneseq
  %v4390 = vshrl.u32 %v4389, 7
  %v4391 = vsub.s32 0, %v4390
  %v4392 = vrot.slane %v4387, %v4391
  %v4394 = vadd.f32 %v4355, %v4392
  %v4395 = vadd.f32 %v4356, %v4392
  %v4396 = vadd.f32 %v4357, %v4392
  %v4397 = vadd.f32 %v4358, %v4392
  %v4398 = vadd.f32 %v4359, %v4392
  %v4399 = vadd.f32 %v4360, %v4392
  %v4400 = vadd.f32 %v4361, %v4392
  %v4401 = vadd.f32 %v4362, %v4392
  %v4402 = vadd.f32 %v4363, %v4392
  %v4403 = vadd.f32 %v4364, %v4392
  %v4404 = vadd.f32 %v4365, %v4392
  %v4405 = vadd.f32 %v4366, %v4392
  %v4406 = vadd.f32 %v4367, %v4392
  %v4407 = vadd.f32 %v4368, %v4392
  %v4408 = vadd.f32 %v4369, %v4392
  %v4409 = vadd.f32 %v4370, %v4392
  %v4410 = vadd.f32 %v4371, %v4392
  %v4411 = vadd.f32 %v4372, %v4392
  %v4412 = vadd.f32 %v4373, %v4392
  %v4413 = vadd.f32 %v4374, %v4392
  %v4414 = vadd.f32 %v4375, %v4392
  %v4415 = vadd.f32 %v4376, %v4392
  %v4416 = vadd.f32 %v4377, %v4392
  %v4417 = vadd.f32 %v4378, %v4392
  %v4418 = vadd.f32 %v4379, %v4392
  %v4419 = vadd.f32 %v4380, %v4392
  %v4420 = vadd.f32 %v4381, %v4392
  %v4421 = vadd.f32 %v4382, %v4392
  %v4422 = vadd.f32 %v4383, %v4392
  %v4423 = vadd.f32 %v4384, %v4392
  %v4424 = vadd.f32 %v4385, %v4392
  %v4425 = vadd.f32 %v4386, %v4392
  %v4426 = vmax.f32 %v4394, 0.0
  %v4427 = vmax.f32 %v4395, 0.0
  %v4428 = vmax.f32 %v4396, 0.0
  %v4429 = vmax.f32 %v4397, 0.0
  %v4430 = vmax.f32 %v4398, 0.0
  %v4431 = vmax.f32 %v4399, 0.0
  %v4432 = vmax.f32 %v4400, 0.0
  %v4433 = vmax.f32 %v4401, 0.0
  %v4434 = vmax.f32 %v4402, 0.0
  %v4435 = vmax.f32 %v4403, 0.0
  %v4436 = vmax.f32 %v4404, 0.0
  %v4437 = vmax.f32 %v4405, 0.0
  %v4438 = vmax.f32 %v4406, 0.0
  %v4439 = vmax.f32 %v4407, 0.0
  %v4440 = vmax.f32 %v4408, 0.0
  %v4441 = vmax.f32 %v4409, 0.0
  %v4442 = vmax.f32 %v4410, 0.0
  %v4443 = vmax.f32 %v4411, 0.0
  %v4444 = vmax.f32 %v4412, 0.0
  %v4445 = vmax.f32 %v4413, 0.0
  %v4446 = vmax.f32 %v4414, 0.0
  %v4447 = vmax.f32 %v4415, 0.0
  %v4448 = vmax.f32 %v4416, 0.0
  %v4449 = vmax.f32 %v4417, 0.0
  %v4450 = vmax.f32 %v4418, 0.0
  %v4451 = vmax.f32 %v4419, 0.0
  %v4452 = vmax.f32 %v4420, 0.0
  %v4453 = vmax.f32 %v4421, 0.0
  %v4454 = vmax.f32 %v4422, 0.0
  %v4455 = vmax.f32 %v4423, 0.0
  %v4456 = vmax.f32 %v4424, 0.0
  %v4457 = vmax.f32 %v4425, 0.0
  %v4458 = vpack.c.bf16 %v4427, %v4426
  %v4459 = vpack.c.bf16 %v4429, %v4428
  %v4460 = vpack.c.bf16 %v4431, %v4430
  %v4461 = vpack.c.bf16 %v4433, %v4432
  %v4462 = vpack.c.bf16 %v4435, %v4434
  %v4463 = vpack.c.bf16 %v4437, %v4436
  %v4464 = vpack.c.bf16 %v4439, %v4438
  %v4465 = vpack.c.bf16 %v4441, %v4440
  %v4466 = vpack.c.bf16 %v4443, %v4442
  %v4467 = vpack.c.bf16 %v4445, %v4444
  %v4468 = vpack.c.bf16 %v4447, %v4446
  %v4469 = vpack.c.bf16 %v4449, %v4448
  %v4470 = vpack.c.bf16 %v4451, %v4450
  %v4471 = vpack.c.bf16 %v4453, %v4452
  %v4472 = vpack.c.bf16 %v4455, %v4454
  %v4473 = vpack.c.bf16 %v4457, %v4456
  %v4490 = vunpack.c.l.b16 %v4458
  %v4491 = vunpack.c.h.b16 %v4458
  %v4492 = vunpack.c.l.b16 %v4459
  %v4493 = vunpack.c.h.b16 %v4459
  %v4494 = vunpack.c.l.b16 %v4460
  %v4495 = vunpack.c.h.b16 %v4460
  %v4496 = vunpack.c.l.b16 %v4461
  %v4497 = vunpack.c.h.b16 %v4461
  %v4498 = vunpack.c.l.b16 %v4462
  %v4499 = vunpack.c.h.b16 %v4462
  %v4500 = vunpack.c.l.b16 %v4463
  %v4501 = vunpack.c.h.b16 %v4463
  %v4502 = vunpack.c.l.b16 %v4464
  %v4503 = vunpack.c.h.b16 %v4464
  %v4504 = vunpack.c.l.b16 %v4465
  %v4505 = vunpack.c.h.b16 %v4465
  %v4506 = vunpack.c.l.b16 %v4466
  %v4507 = vunpack.c.h.b16 %v4466
  %v4508 = vunpack.c.l.b16 %v4467
  %v4509 = vunpack.c.h.b16 %v4467
  %v4510 = vunpack.c.l.b16 %v4468
  %v4511 = vunpack.c.h.b16 %v4468
  %v4512 = vunpack.c.l.b16 %v4469
  %v4513 = vunpack.c.h.b16 %v4469
  %v4514 = vunpack.c.l.b16 %v4470
  %v4515 = vunpack.c.h.b16 %v4470
  %v4516 = vunpack.c.l.b16 %v4471
  %v4517 = vunpack.c.h.b16 %v4471
  %v4518 = vunpack.c.l.b16 %v4472
  %v4519 = vunpack.c.h.b16 %v4472
  %v4520 = vunpack.c.l.b16 %v4473
  %v4521 = vunpack.c.h.b16 %v4473
  %v4522 = vpack.c.b16 %v4490, %v4490
  %v4523 = vpack.c.b16 %v4491, %v4491
  %v4524 = vpack.c.b16 %v4492, %v4492
  %v4525 = vpack.c.b16 %v4493, %v4493
  %v4526 = vpack.c.b16 %v4494, %v4494
  %v4527 = vpack.c.b16 %v4495, %v4495
  %v4528 = vpack.c.b16 %v4496, %v4496
  %v4529 = vpack.c.b16 %v4497, %v4497
  %v4530 = vpack.c.b16 %v4498, %v4498
  %v4531 = vpack.c.b16 %v4499, %v4499
  %v4532 = vpack.c.b16 %v4500, %v4500
  %v4533 = vpack.c.b16 %v4501, %v4501
  %v4534 = vpack.c.b16 %v4502, %v4502
  %v4535 = vpack.c.b16 %v4503, %v4503
  %v4536 = vpack.c.b16 %v4504, %v4504
  %v4537 = vpack.c.b16 %v4505, %v4505
  %v4538 = vpack.c.b16 %v4506, %v4506
  %v4539 = vpack.c.b16 %v4507, %v4507
  %v4540 = vpack.c.b16 %v4508, %v4508
  %v4541 = vpack.c.b16 %v4509, %v4509
  %v4542 = vpack.c.b16 %v4510, %v4510
  %v4543 = vpack.c.b16 %v4511, %v4511
  %v4544 = vpack.c.b16 %v4512, %v4512
  %v4545 = vpack.c.b16 %v4513, %v4513
  %v4546 = vpack.c.b16 %v4514, %v4514
  %v4547 = vpack.c.b16 %v4515, %v4515
  %v4548 = vpack.c.b16 %v4516, %v4516
  %v4549 = vpack.c.b16 %v4517, %v4517
  %v4550 = vpack.c.b16 %v4518, %v4518
  %v4551 = vpack.c.b16 %v4519, %v4519
  %v4552 = vpack.c.b16 %v4520, %v4520
  %v4553 = vpack.c.b16 %v4521, %v4521
  %4586 = vst [vmem:[%s4] sm:$0xf] %v4522
  %4587 = vst [vmem:[%s4 + $0x4] sm:$0xf] %v4523
  %4588 = vst [vmem:[%s4 + $0x8] sm:$0xf] %v4524
  %4589 = vst [vmem:[%s4 + $0xc] sm:$0xf] %v4525
  %4590 = vst [vmem:[%s4 + $0x10] sm:$0xf] %v4526
  %4591 = vst [vmem:[%s4 + $0x14] sm:$0xf] %v4527
  %4592 = vst [vmem:[%s4 + $0x18] sm:$0xf] %v4528
  %4593 = vst [vmem:[%s4 + $0x1c] sm:$0xf] %v4529
  %4594 = vst [vmem:[%s4 + $0x20] sm:$0xf] %v4530
  %4595 = vst [vmem:[%s4 + $0x24] sm:$0xf] %v4531
  %4596 = vst [vmem:[%s4 + $0x28] sm:$0xf] %v4532
  %4597 = vst [vmem:[%s4 + $0x2c] sm:$0xf] %v4533
  %4598 = vst [vmem:[%s4 + $0x30] sm:$0xf] %v4534
  %4599 = vst [vmem:[%s4 + $0x34] sm:$0xf] %v4535
  %4600 = vst [vmem:[%s4 + $0x38] sm:$0xf] %v4536
  %4601 = vst [vmem:[%s4 + $0x3c] sm:$0xf] %v4537
  %4602 = vst [vmem:[%s4 + $0x40] sm:$0xf] %v4538
  %4603 = vst [vmem:[%s4 + $0x44] sm:$0xf] %v4539
  %4604 = vst [vmem:[%s4 + $0x48] sm:$0xf] %v4540
  %4605 = vst [vmem:[%s4 + $0x4c] sm:$0xf] %v4541
  %4606 = vst [vmem:[%s4 + $0x50] sm:$0xf] %v4542
  %4607 = vst [vmem:[%s4 + $0x54] sm:$0xf] %v4543
  %4608 = vst [vmem:[%s4 + $0x58] sm:$0xf] %v4544
  %4609 = vst [vmem:[%s4 + $0x5c] sm:$0xf] %v4545
  %4610 = vst [vmem:[%s4 + $0x60] sm:$0xf] %v4546
  %4611 = vst [vmem:[%s4 + $0x64] sm:$0xf] %v4547
  %4612 = vst [vmem:[%s4 + $0x68] sm:$0xf] %v4548
  %4613 = vst [vmem:[%s4 + $0x6c] sm:$0xf] %v4549
  %4614 = vst [vmem:[%s4 + $0x70] sm:$0xf] %v4550
  %4615 = vst [vmem:[%s4 + $0x74] sm:$0xf] %v4551
  %4616 = vst [vmem:[%s4 + $0x78] sm:$0xf] %v4552
  %4617 = vst [vmem:[%s4 + $0x7c] sm:$0xf] %v4553
  // Predicated region
  $region18: #{forward.7} parent=0 // pred_check
    _
  $region19: #{forward.7} parent=0 // pred_check_branch
    %4619 = sbr.rel (0) target = $region21
  $region20: #{forward.7} parent=0 // pred_region
    _
  $region21: #{forward.7} parent=0 // pred_fallthru
    _
  // Predicated region
  $region22: #{forward.7} parent=0 // pred_check
    _
  $region23: #{forward.7} parent=0 // pred_check_branch
    %4621 = sbr.rel (0) target = $region25
  $region24: #{forward.7} parent=0 // pred_region
    _
  $region25: #{forward.7} parent=0 // pred_fallthru
    _

// kernel: forward.10
$region0: #{forward.10}
  #allocation0 [shape = 'u32[]', space=smem, size = 0x4, offset = 0x4, fixed_abs, tag = 'smem constant byte address 0x4 - core index']
  #allocation1 [shape = 'u32[144,128]{1,0:T(1,128)}', space=vmem, size = 0x12000, scoped, tag = 'internal scratch']
  %s0 = inlined_call_operand.vmem [shape: bf16[256,64], index: 0, kind: input, shape index: {}]
  %s1 = inlined_call_operand.vmem [shape: bf16[64,256], index: 1, kind: input, shape index: {}]
  %s2 = inlined_call_operand.vmem [shape: f32[1,256], index: 2, kind: input, shape index: {}]
  %s3 = inlined_call_operand.vmem [shape: f32[256,256], index: 3, kind: output, shape index: {}]
  %s4 = sld [smem:[#allocation0]]
  $region22: #{forward.10} parent=0
    _
  %s6 = ssub.s32 1, %s4
  %s7 = scalar_select 0, %s6, %s4
  // Predicated region
  $region2: #{forward.10} parent=0 // pred_check
    _
  $region3: #{forward.10} parent=0 // pred_check_branch
    %9 = sbr.rel (0) target = $region5
  $region4: #{forward.10} parent=0 // pred_region
    _
  $region5: #{forward.10} parent=0 // pred_fallthru
    _
  // Predicated region
  $region6: #{forward.10} parent=0 // pred_check
    _
  $region7: #{forward.10} parent=0 // pred_check_branch
    %11 = sbr.rel (0) target = $region9
  $region8: #{forward.10} parent=0 // pred_region
    _
  $region9: #{forward.10} parent=0 // pred_fallthru
    _
  // Predicated region
  $region10: #{forward.10} parent=0 // pred_check
    _
  $region11: #{forward.10} parent=0 // pred_check_branch
    %13 = sbr.rel (0) target = $region13
  $region12: #{forward.10} parent=0 // pred_region
    _
  $region13: #{forward.10} parent=0 // pred_fallthru
    _
  %v15 = vld [vmem:[%s0] sm:$0xf]
  %v16 = vld [vmem:[%s0 + $0x4] sm:$0xf]
  %v17 = vld [vmem:[%s0 + $0x8] sm:$0xf]
  %v18 = vld [vmem:[%s0 + $0xc] sm:$0xf]
  %v19 = vld [vmem:[%s0 + $0x10] sm:$0xf]
  %v20 = vld [vmem:[%s0 + $0x14] sm:$0xf]
  %v21 = vld [vmem:[%s0 + $0x18] sm:$0xf]
  %v22 = vld [vmem:[%s0 + $0x1c] sm:$0xf]
  %v23 = vld [vmem:[%s0 + $0x20] sm:$0xf]
  %v24 = vld [vmem:[%s0 + $0x24] sm:$0xf]
  %v25 = vld [vmem:[%s0 + $0x28] sm:$0xf]
  %v26 = vld [vmem:[%s0 + $0x2c] sm:$0xf]
  %v27 = vld [vmem:[%s0 + $0x30] sm:$0xf]
  %v28 = vld [vmem:[%s0 + $0x34] sm:$0xf]
  %v29 = vld [vmem:[%s0 + $0x38] sm:$0xf]
  %v30 = vld [vmem:[%s0 + $0x3c] sm:$0xf]
  %v31 = vld [vmem:[%s0 + $0x40] sm:$0xf]
  %v32 = vld [vmem:[%s0 + $0x44] sm:$0xf]
  %v33 = vld [vmem:[%s0 + $0x48] sm:$0xf]
  %v34 = vld [vmem:[%s0 + $0x4c] sm:$0xf]
  %v35 = vld [vmem:[%s0 + $0x50] sm:$0xf]
  %v36 = vld [vmem:[%s0 + $0x54] sm:$0xf]
  %v37 = vld [vmem:[%s0 + $0x58] sm:$0xf]
  %v38 = vld [vmem:[%s0 + $0x5c] sm:$0xf]
  %v39 = vld [vmem:[%s0 + $0x60] sm:$0xf]
  %v40 = vld [vmem:[%s0 + $0x64] sm:$0xf]
  %v41 = vld [vmem:[%s0 + $0x68] sm:$0xf]
  %v42 = vld [vmem:[%s0 + $0x6c] sm:$0xf]
  %v43 = vld [vmem:[%s0 + $0x70] sm:$0xf]
  %v44 = vld [vmem:[%s0 + $0x74] sm:$0xf]
  %v45 = vld [vmem:[%s0 + $0x78] sm:$0xf]
  %v46 = vld [vmem:[%s0 + $0x7c] sm:$0xf]
  %v47 = vld [vmem:[%s1] sm:$0xff]
  %v48 = vld [vmem:[%s1 + $0x8] sm:$0xff]
  %v49 = vld [vmem:[%s1 + $0x10] sm:$0xff]
  %v50 = vld [vmem:[%s1 + $0x18] sm:$0xff]
  %v51 = vld [vmem:[%s1 + $0x20] sm:$0xff]
  %v52 = vld [vmem:[%s1 + $0x28] sm:$0xff]
  %v53 = vld [vmem:[%s1 + $0x30] sm:$0xff]
  %v54 = vld [vmem:[%s1 + $0x38] sm:$0xff]
  %v55 = vld [vmem:[%s2] sm:$0x3]
  %v57 = vlaneseq
  %v58 = vshrl.u32 %v57, 7
  %v59 = vsub.s32 0, %v58
  %v60 = vrot.slane %v55, %v59
  %v61 = vlaneseq
  %v62 = vshrl.u32 %v61, 7
  %v63 = vsub.s32 1, %v62
  %v64 = vrot.slane %v55, %v63
  %v99 = vunpack.c.l.b16 %v15
  %v100 = vunpack.c.l.b16 %v16
  %v101 = vunpack.c.l.b16 %v17
  %v102 = vunpack.c.l.b16 %v18
  %v103 = vunpack.c.l.b16 %v19
  %v104 = vunpack.c.l.b16 %v20
  %v105 = vunpack.c.l.b16 %v21
  %v106 = vunpack.c.l.b16 %v22
  %v107 = vunpack.c.l.b16 %v23
  %v108 = vunpack.c.l.b16 %v24
  %v109 = vunpack.c.l.b16 %v25
  %v110 = vunpack.c.l.b16 %v26
  %v111 = vunpack.c.l.b16 %v27
  %v112 = vunpack.c.l.b16 %v28
  %v113 = vunpack.c.l.b16 %v29
  %v114 = vunpack.c.l.b16 %v30
  %v115 = vunpack.c.l.b16 %v31
  %v116 = vunpack.c.l.b16 %v32
  %v117 = vunpack.c.l.b16 %v33
  %v118 = vunpack.c.l.b16 %v34
  %v119 = vunpack.c.l.b16 %v35
  %v120 = vunpack.c.l.b16 %v36
  %v121 = vunpack.c.l.b16 %v37
  %v122 = vunpack.c.l.b16 %v38
  %v123 = vunpack.c.l.b16 %v39
  %v124 = vunpack.c.l.b16 %v40
  %v125 = vunpack.c.l.b16 %v41
  %v126 = vunpack.c.l.b16 %v42
  %v127 = vunpack.c.l.b16 %v43
  %v128 = vunpack.c.l.b16 %v44
  %v129 = vunpack.c.l.b16 %v45
  %v130 = vunpack.c.l.b16 %v46
  %v131 = vpack.c.b16 %v100, %v99
  %v132 = vpack.c.b16 %v102, %v101
  %v133 = vpack.c.b16 %v104, %v103
  %v134 = vpack.c.b16 %v106, %v105
  %v135 = vpack.c.b16 %v108, %v107
  %v136 = vpack.c.b16 %v110, %v109
  %v137 = vpack.c.b16 %v112, %v111
  %v138 = vpack.c.b16 %v114, %v113
  %v139 = vpack.c.b16 %v116, %v115
  %v140 = vpack.c.b16 %v118, %v117
  %v141 = vpack.c.b16 %v120, %v119
  %v142 = vpack.c.b16 %v122, %v121
  %v143 = vpack.c.b16 %v124, %v123
  %v144 = vpack.c.b16 %v126, %v125
  %v145 = vpack.c.b16 %v128, %v127
  %v146 = vpack.c.b16 %v130, %v129
  %v155 = vunpack.c.l.b16 %v47
  %v156 = vunpack.c.h.b16 %v47
  %v157 = vunpack.c.l.b16 %v48
  %v158 = vunpack.c.h.b16 %v48
  %v159 = vunpack.c.l.b16 %v49
  %v160 = vunpack.c.h.b16 %v49
  %v161 = vunpack.c.l.b16 %v50
  %v162 = vunpack.c.h.b16 %v50
  %v163 = vunpack.c.l.b16 %v51
  %v164 = vunpack.c.h.b16 %v51
  %v165 = vunpack.c.l.b16 %v52
  %v166 = vunpack.c.h.b16 %v52
  %v167 = vunpack.c.l.b16 %v53
  %v168 = vunpack.c.h.b16 %v53
  %v169 = vunpack.c.l.b16 %v54
  %v170 = vunpack.c.h.b16 %v54
  %v171 = vpack.c.b16 %v157, %v155
  %v172 = vpack.c.b16 %v158, %v156
  %v173 = vpack.c.b16 %v161, %v159
  %v174 = vpack.c.b16 %v162, %v160
  %v175 = vpack.c.b16 %v165, %v163
  %v176 = vpack.c.b16 %v166, %v164
  %v177 = vpack.c.b16 %v169, %v167
  %v178 = vpack.c.b16 %v170, %v168
  %vm187 = vcmask 523264
  %v189 = vsel %vm187, %v131, 0
  %v192 = vsel %vm187, %v132, 0
  %v195 = vsel %vm187, %v133, 0
  %v198 = vsel %vm187, %v134, 0
  %v201 = vsel %vm187, %v135, 0
  %v204 = vsel %vm187, %v136, 0
  %v207 = vsel %vm187, %v137, 0
  %v210 = vsel %vm187, %v138, 0
  %v213 = vsel %vm187, %v139, 0
  %v216 = vsel %vm187, %v140, 0
  %v219 = vsel %vm187, %v141, 0
  %v222 = vsel %vm187, %v142, 0
  %v225 = vsel %vm187, %v143, 0
  %v228 = vsel %vm187, %v144, 0
  %v231 = vsel %vm187, %v145, 0
  %v234 = vsel %vm187, %v146, 0
  %236 = vmatprep.subr.bf16.mxu0 %v172
  %237 = vmatpush1.bf16.msra.mxu0 %v171
  %238 = vmatprep.subr.bf16.mxu0 %v174
  %239 = vmatpush1.bf16.msra.mxu0 %v173
  %240 = vmatprep.subr.bf16.mxu0 %v176
  %241 = vmatpush1.bf16.msra.mxu0 %v175
  %242 = vmatprep.subr.bf16.mxu0 %v178
  %243 = vmatpush1.bf16.msra.mxu0 %v177
  %244 = vmatprep.subr.bf16.mxu0 0
  %245 = vmatpush1.bf16.msra.mxu0 0
  %246 = vmatprep.subr.bf16.mxu0 0
  %247 = vmatpush1.bf16.msra.mxu0 0
  %248 = vmatprep.subr.bf16.mxu0 0
  %249 = vmatpush1.bf16.msra.mxu0 0
  %250 = vmatprep.subr.bf16.mxu0 0
  %251 = vmatpush1.bf16.msra.mxu0 0
  %252 = vmatprep.subr.bf16.mxu0 0
  %253 = vmatpush1.bf16.msra.mxu0 0
  %254 = vmatprep.subr.bf16.mxu0 0
  %255 = vmatpush1.bf16.msra.mxu0 0
  %256 = vmatprep.subr.bf16.mxu0 0
  %257 = vmatpush1.bf16.msra.mxu0 0
  %258 = vmatprep.subr.bf16.mxu0 0
  %259 = vmatpush1.bf16.msra.mxu0 0
  %260 = vmatprep.subr.bf16.mxu0 0
  %261 = vmatpush1.bf16.msra.mxu0 0
  %262 = vmatprep.subr.bf16.mxu0 0
  %263 = vmatpush1.bf16.msra.mxu0 0
  %264 = vmatprep.subr.bf16.mxu0 0
  %265 = vmatpush1.bf16.msra.mxu0 0
  %266 = vmatprep.subr.bf16.mxu0 0
  %267 = vmatpush1.bf16.msra.mxu0 0
  %268 = vmatprep.mubr.bf16.mxu0 0
  %269 = vmatmul.mubr.bf16.gmra.mrb[0].mxu0 %v189
  %v270 = vpop.f32.mrb[0].mxu0
  %v271 = vadd.f32 %v60, %v270
  %v272 = vpop.f32.mrb[0].mxu0
  %v273 = vadd.f32 %v64, %v272
  %v274 = vpop.f32.mrb[0].mxu0
  %v275 = vadd.f32 %v60, %v274
  %v276 = vpop.f32.mrb[0].mxu0
  %v277 = vadd.f32 %v64, %v276
  %278 = vmatprep.mubr.bf16.mxu0 0
  %279 = vmatmul.mubr.bf16.gmra.mrb[0].mxu0 %v192
  %v280 = vpop.f32.mrb[0].mxu0
  %v281 = vadd.f32 %v60, %v280
  %v282 = vpop.f32.mrb[0].mxu0
  %v283 = vadd.f32 %v64, %v282
  %v284 = vpop.f32.mrb[0].mxu0
  %v285 = vadd.f32 %v60, %v284
  %v286 = vpop.f32.mrb[0].mxu0
  %v287 = vadd.f32 %v64, %v286
  %288 = vmatprep.mubr.bf16.mxu0 0
  %289 = vmatmul.mubr.bf16.gmra.mrb[0].mxu0 %v195
  %v290 = vpop.f32.mrb[0].mxu0
  %v291 = vadd.f32 %v60, %v290
  %v292 = vpop.f32.mrb[0].mxu0
  %v293 = vadd.f32 %v64, %v292
  %v294 = vpop.f32.mrb[0].mxu0
  %v295 = vadd.f32 %v60, %v294
  %v296 = vpop.f32.mrb[0].mxu0
  %v297 = vadd.f32 %v64, %v296
  %298 = vmatprep.mubr.bf16.mxu0 0
  %299 = vmatmul.mubr.bf16.gmra.mrb[0].mxu0 %v198
  %v300 = vpop.f32.mrb[0].mxu0
  %v301 = vadd.f32 %v60, %v300
  %v302 = vpop.f32.mrb[0].mxu0
  %v303 = vadd.f32 %v64, %v302
  %v304 = vpop.f32.mrb[0].mxu0
  %v305 = vadd.f32 %v60, %v304
  %v306 = vpop.f32.mrb[0].mxu0
  %v307 = vadd.f32 %v64, %v306
  %308 = vmatprep.mubr.bf16.mxu0 0
  %309 = vmatmul.mubr.bf16.gmra.mrb[0].mxu0 %v201
  %v310 = vpop.f32.mrb[0].mxu0
  %v311 = vadd.f32 %v60, %v310
  %v312 = vpop.f32.mrb[0].mxu0
  %v313 = vadd.f32 %v64, %v312
  %v314 = vpop.f32.mrb[0].mxu0
  %v315 = vadd.f32 %v60, %v314
  %v316 = vpop.f32.mrb[0].mxu0
  %v317 = vadd.f32 %v64, %v316
  %318 = vmatprep.mubr.bf16.mxu0 0
  %319 = vmatmul.mubr.bf16.gmra.mrb[0].mxu0 %v204
  %v320 = vpop.f32.mrb[0].mxu0
  %v321 = vadd.f32 %v60, %v320
  %v322 = vpop.f32.mrb[0].mxu0
  %v323 = vadd.f32 %v64, %v322
  %v324 = vpop.f32.mrb[0].mxu0
  %v325 = vadd.f32 %v60, %v324
  %v326 = vpop.f32.mrb[0].mxu0
  %v327 = vadd.f32 %v64, %v326
  %328 = vmatprep.mubr.bf16.mxu0 0
  %329 = vmatmul.mubr.bf16.gmra.mrb[0].mxu0 %v207
  %v330 = vpop.f32.mrb[0].mxu0
  %v331 = vadd.f32 %v60, %v330
  %v332 = vpop.f32.mrb[0].mxu0
  %v333 = vadd.f32 %v64, %v332
  %v334 = vpop.f32.mrb[0].mxu0
  %v335 = vadd.f32 %v60, %v334
  %v336 = vpop.f32.mrb[0].mxu0
  %v337 = vadd.f32 %v64, %v336
  %338 = vmatprep.mubr.bf16.mxu0 0
  %339 = vmatmul.mubr.bf16.gmra.mrb[0].mxu0 %v210
  %v340 = vpop.f32.mrb[0].mxu0
  %v341 = vadd.f32 %v60, %v340
  %v342 = vpop.f32.mrb[0].mxu0
  %v343 = vadd.f32 %v64, %v342
  %v344 = vpop.f32.mrb[0].mxu0
  %v345 = vadd.f32 %v60, %v344
  %v346 = vpop.f32.mrb[0].mxu0
  %v347 = vadd.f32 %v64, %v346
  %348 = vmatprep.mubr.bf16.mxu0 0
  %349 = vmatmul.mubr.bf16.gmra.mrb[0].mxu0 %v213
  %v350 = vpop.f32.mrb[0].mxu0
  %v351 = vadd.f32 %v60, %v350
  %v352 = vpop.f32.mrb[0].mxu0
  %v353 = vadd.f32 %v64, %v352
  %v354 = vpop.f32.mrb[0].mxu0
  %v355 = vadd.f32 %v60, %v354
  %v356 = vpop.f32.mrb[0].mxu0
  %v357 = vadd.f32 %v64, %v356
  %358 = vmatprep.mubr.bf16.mxu0 0
  %359 = vmatmul.mubr.bf16.gmra.mrb[0].mxu0 %v216
  %v360 = vpop.f32.mrb[0].mxu0
  %v361 = vadd.f32 %v60, %v360
  %v362 = vpop.f32.mrb[0].mxu0
  %v363 = vadd.f32 %v64, %v362
  %v364 = vpop.f32.mrb[0].mxu0
  %v365 = vadd.f32 %v60, %v364
  %v366 = vpop.f32.mrb[0].mxu0
  %v367 = vadd.f32 %v64, %v366
  %368 = vmatprep.mubr.bf16.mxu0 0
  %369 = vmatmul.mubr.bf16.gmra.mrb[0].mxu0 %v219
  %v370 = vpop.f32.mrb[0].mxu0
  %v371 = vadd.f32 %v60, %v370
  %v372 = vpop.f32.mrb[0].mxu0
  %v373 = vadd.f32 %v64, %v372
  %v374 = vpop.f32.mrb[0].mxu0
  %v375 = vadd.f32 %v60, %v374
  %v376 = vpop.f32.mrb[0].mxu0
  %v377 = vadd.f32 %v64, %v376
  %378 = vmatprep.mubr.bf16.mxu0 0
  %379 = vmatmul.mubr.bf16.gmra.mrb[0].mxu0 %v222
  %v380 = vpop.f32.mrb[0].mxu0
  %v381 = vadd.f32 %v60, %v380
  %v382 = vpop.f32.mrb[0].mxu0
  %v383 = vadd.f32 %v64, %v382
  %v384 = vpop.f32.mrb[0].mxu0
  %v385 = vadd.f32 %v60, %v384
  %v386 = vpop.f32.mrb[0].mxu0
  %v387 = vadd.f32 %v64, %v386
  %388 = vmatprep.mubr.bf16.mxu0 0
  %389 = vmatmul.mubr.bf16.gmra.mrb[0].mxu0 %v225
  %v390 = vpop.f32.mrb[0].mxu0
  %v391 = vadd.f32 %v60, %v390
  %v392 = vpop.f32.mrb[0].mxu0
  %v393 = vadd.f32 %v64, %v392
  %v394 = vpop.f32.mrb[0].mxu0
  %v395 = vadd.f32 %v60, %v394
  %v396 = vpop.f32.mrb[0].mxu0
  %v397 = vadd.f32 %v64, %v396
  %398 = vmatprep.mubr.bf16.mxu0 0
  %399 = vmatmul.mubr.bf16.gmra.mrb[0].mxu0 %v228
  %v400 = vpop.f32.mrb[0].mxu0
  %v401 = vadd.f32 %v60, %v400
  %v402 = vpop.f32.mrb[0].mxu0
  %v403 = vadd.f32 %v64, %v402
  %v404 = vpop.f32.mrb[0].mxu0
  %v405 = vadd.f32 %v60, %v404
  %v406 = vpop.f32.mrb[0].mxu0
  %v407 = vadd.f32 %v64, %v406
  %408 = vmatprep.mubr.bf16.mxu0 0
  %409 = vmatmul.mubr.bf16.gmra.mrb[0].mxu0 %v231
  %v410 = vpop.f32.mrb[0].mxu0
  %v411 = vadd.f32 %v60, %v410
  %v412 = vpop.f32.mrb[0].mxu0
  %v413 = vadd.f32 %v64, %v412
  %v414 = vpop.f32.mrb[0].mxu0
  %v415 = vadd.f32 %v60, %v414
  %v416 = vpop.f32.mrb[0].mxu0
  %v417 = vadd.f32 %v64, %v416
  %418 = vmatprep.mubr.bf16.mxu0 0
  %419 = vmatmul.mubr.bf16.gmra.mrb[0].mxu0 %v234
  %v420 = vpop.f32.mrb[0].mxu0
  %v421 = vadd.f32 %v60, %v420
  %v422 = vpop.f32.mrb[0].mxu0
  %v423 = vadd.f32 %v64, %v422
  %v424 = vpop.f32.mrb[0].mxu0
  %v425 = vadd.f32 %v60, %v424
  %v426 = vpop.f32.mrb[0].mxu0
  %v427 = vadd.f32 %v64, %v426
  %428 = vdwg.mxu0
  %429 = vst [vmem:[%s3] sm:$0xff] %v271
  %430 = vst [vmem:[%s3 + $0x8] sm:$0xff] %v273
  %431 = vst [vmem:[%s3 + $0x10] sm:$0xff] %v275
  %432 = vst [vmem:[%s3 + $0x18] sm:$0xff] %v277
  %433 = vst [vmem:[%s3 + $0x20] sm:$0xff] %v281
  %434 = vst [vmem:[%s3 + $0x28] sm:$0xff] %v283
  %435 = vst [vmem:[%s3 + $0x30] sm:$0xff] %v285
  %436 = vst [vmem:[%s3 + $0x38] sm:$0xff] %v287
  %437 = vst [vmem:[%s3 + $0x40] sm:$0xff] %v291
  %438 = vst [vmem:[%s3 + $0x48] sm:$0xff] %v293
  %439 = vst [vmem:[%s3 + $0x50] sm:$0xff] %v295
  %440 = vst [vmem:[%s3 + $0x58] sm:$0xff] %v297
  %441 = vst [vmem:[%s3 + $0x60] sm:$0xff] %v301
  %442 = vst [vmem:[%s3 + $0x68] sm:$0xff] %v303
  %443 = vst [vmem:[%s3 + $0x70] sm:$0xff] %v305
  %444 = vst [vmem:[%s3 + $0x78] sm:$0xff] %v307
  %445 = vst [vmem:[%s3 + $0x80] sm:$0xff] %v311
  %446 = vst [vmem:[%s3 + $0x88] sm:$0xff] %v313
  %447 = vst [vmem:[%s3 + $0x90] sm:$0xff] %v315
  %448 = vst [vmem:[%s3 + $0x98] sm:$0xff] %v317
  %449 = vst [vmem:[%s3 + $0xa0] sm:$0xff] %v321
  %450 = vst [vmem:[%s3 + $0xa8] sm:$0xff] %v323
  %451 = vst [vmem:[%s3 + $0xb0] sm:$0xff] %v325
  %452 = vst [vmem:[%s3 + $0xb8] sm:$0xff] %v327
  %453 = vst [vmem:[%s3 + $0xc0] sm:$0xff] %v331
  %454 = vst [vmem:[%s3 + $0xc8] sm:$0xff] %v333
  %455 = vst [vmem:[%s3 + $0xd0] sm:$0xff] %v335
  %456 = vst [vmem:[%s3 + $0xd8] sm:$0xff] %v337
  %457 = vst [vmem:[%s3 + $0xe0] sm:$0xff] %v341
  %458 = vst [vmem:[%s3 + $0xe8] sm:$0xff] %v343
  %459 = vst [vmem:[%s3 + $0xf0] sm:$0xff] %v345
  %460 = vst [vmem:[%s3 + $0xf8] sm:$0xff] %v347
  %461 = vst [vmem:[%s3 + $0x100] sm:$0xff] %v351
  %462 = vst [vmem:[%s3 + $0x108] sm:$0xff] %v353
  %463 = vst [vmem:[%s3 + $0x110] sm:$0xff] %v355
  %464 = vst [vmem:[%s3 + $0x118] sm:$0xff] %v357
  %465 = vst [vmem:[%s3 + $0x120] sm:$0xff] %v361
  %466 = vst [vmem:[%s3 + $0x128] sm:$0xff] %v363
  %467 = vst [vmem:[%s3 + $0x130] sm:$0xff] %v365
  %468 = vst [vmem:[%s3 + $0x138] sm:$0xff] %v367
  %469 = vst [vmem:[%s3 + $0x140] sm:$0xff] %v371
  %470 = vst [vmem:[%s3 + $0x148] sm:$0xff] %v373
  %471 = vst [vmem:[%s3 + $0x150] sm:$0xff] %v375
  %472 = vst [vmem:[%s3 + $0x158] sm:$0xff] %v377
  %473 = vst [vmem:[%s3 + $0x160] sm:$0xff] %v381
  %474 = vst [vmem:[%s3 + $0x168] sm:$0xff] %v383
  %475 = vst [vmem:[%s3 + $0x170] sm:$0xff] %v385
  %476 = vst [vmem:[%s3 + $0x178] sm:$0xff] %v387
  %477 = vst [vmem:[%s3 + $0x180] sm:$0xff] %v391
  %478 = vst [vmem:[%s3 + $0x188] sm:$0xff] %v393
  %479 = vst [vmem:[%s3 + $0x190] sm:$0xff] %v395
  %480 = vst [vmem:[%s3 + $0x198] sm:$0xff] %v397
  %481 = vst [vmem:[%s3 + $0x1a0] sm:$0xff] %v401
  %482 = vst [vmem:[%s3 + $0x1a8] sm:$0xff] %v403
  %483 = vst [vmem:[%s3 + $0x1b0] sm:$0xff] %v405
  %484 = vst [vmem:[%s3 + $0x1b8] sm:$0xff] %v407
  %485 = vst [vmem:[%s3 + $0x1c0] sm:$0xff] %v411
  %486 = vst [vmem:[%s3 + $0x1c8] sm:$0xff] %v413
  %487 = vst [vmem:[%s3 + $0x1d0] sm:$0xff] %v415
  %488 = vst [vmem:[%s3 + $0x1d8] sm:$0xff] %v417
  %489 = vst [vmem:[%s3 + $0x1e0] sm:$0xff] %v421
  %490 = vst [vmem:[%s3 + $0x1e8] sm:$0xff] %v423
  %491 = vst [vmem:[%s3 + $0x1f0] sm:$0xff] %v425
  %492 = vst [vmem:[%s3 + $0x1f8] sm:$0xff] %v427
  // Predicated region
  $region14: #{forward.10} parent=0 // pred_check
    _
  $region15: #{forward.10} parent=0 // pred_check_branch
    %494 = sbr.rel (0) target = $region17
  $region16: #{forward.10} parent=0 // pred_region
    _
  $region17: #{forward.10} parent=0 // pred_fallthru
    _
  // Predicated region
  $region18: #{forward.10} parent=0 // pred_check
    _
  $region19: #{forward.10} parent=0 // pred_check_branch
    %496 = sbr.rel (0) target = $region21
  $region20: #{forward.10} parent=0 // pred_region
    _
  $region21: #{forward.10} parent=0 // pred_fallthru
    _

// kernel: forward.11
$region0: #{forward.11}
  #allocation0 [shape = 'u32[]', space=smem, size = 0x4, offset = 0x4, fixed_abs, tag = 'smem constant byte address 0x4 - core index']
  #allocation1 [shape = 'u32[144,128]{1,0:T(1,128)}', space=vmem, size = 0x12000, scoped, tag = 'internal scratch']
  %s0 = inlined_call_operand.vmem [shape: f32[14,2,256], index: 0, kind: input, shape index: {}]
  %s1 = inlined_call_operand.vmem [shape: f32[64,256], index: 1, kind: input, shape index: {}]
  %s2 = inlined_call_operand.vmem [shape: f32[64,32], index: 2, kind: input, shape index: {}]
  %s3 = inlined_call_operand.vmem [shape: f32[1,32], index: 3, kind: input, shape index: {}]
  %s4 = inlined_call_operand.vmem [shape: f32[32,4], index: 4, kind: input, shape index: {}]
  %s5 = inlined_call_operand.vmem [shape: f32[1,4], index: 5, kind: input, shape index: {}]
  %s6 = inlined_call_operand.hbm [shape: f32[2,4], index: 6, kind: output, shape index: {}]
  %s7 = sld [smem:[#allocation0]]
  $region41: #{forward.11} parent=0
    _
  %s9 = ssub.s32 1, %s7
  %s10 = scalar_select 0, %s9, %s7
  $region1: #{forward.11} parent=0
    #allocation2 [shape = 'u8[1024]{0}', space=vmem, size = 0x400, scoped, tag = 'output window, operand 0, single buffered']
    #allocation3 [shape = 's32[1]{0}', space=sflag, size = 0x4, scoped, tag = 'scoped memory for forward.11']
    %11 = vsyncpa [#allocation3], 0
    // Predicated region
    $region2: #{forward.11} parent=1 // pred_check
      _
    $region3: #{forward.11} parent=1 // pred_check_branch
      %13 = sbr.rel (0) target = $region5
    $region4: #{forward.11} parent=1 // pred_region
      _
    $region5: #{forward.11} parent=1 // pred_fallthru
      _
    // Predicated region
    $region6: #{forward.11} parent=1 // pred_check
      _
    $region7: #{forward.11} parent=1 // pred_check_branch
      %15 = sbr.rel (0) target = $region9
    $region8: #{forward.11} parent=1 // pred_region
      _
    $region9: #{forward.11} parent=1 // pred_fallthru
      _
    // Predicated region
    $region10: #{forward.11} parent=1 // pred_check
      _
    $region11: #{forward.11} parent=1 // pred_check_branch
      %17 = sbr.rel (0) target = $region13
    $region12: #{forward.11} parent=1 // pred_region
      _
    $region13: #{forward.11} parent=1 // pred_fallthru
      _
    // Predicated region
    $region14: #{forward.11} parent=1 // pred_check
      _
    $region15: #{forward.11} parent=1 // pred_check_branch
      %19 = sbr.rel (0) target = $region17
    $region16: #{forward.11} parent=1 // pred_region
      _
    $region17: #{forward.11} parent=1 // pred_fallthru
      _
    // Predicated region
    $region18: #{forward.11} parent=1 // pred_check
      _
    $region19: #{forward.11} parent=1 // pred_check_branch
      %21 = sbr.rel (0) target = $region21
    $region20: #{forward.11} parent=1 // pred_region
      _
    $region21: #{forward.11} parent=1 // pred_fallthru
      _
    // Predicated region
    $region22: #{forward.11} parent=1 // pred_check
      _
    $region23: #{forward.11} parent=1 // pred_check_branch
      %23 = sbr.rel (0) target = $region25
    $region24: #{forward.11} parent=1 // pred_region
      _
    $region25: #{forward.11} parent=1 // pred_fallthru
      _
    %v24 = vld [vmem:[%s0] sm:$0x3]
    %s25 = scalar_lea.vmem %s0, 52
    %v26 = vld [vmem:[%s25 + $0x2] sm:$0x3]
    %v27 = vld [vmem:[%s1] sm:$0xff]
    %v28 = vld [vmem:[%s1 + $0x8] sm:$0xff]
    %v29 = vld [vmem:[%s1 + $0x10] sm:$0xff]
    %v30 = vld [vmem:[%s1 + $0x18] sm:$0xff]
    %v31 = vld [vmem:[%s1 + $0x20] sm:$0xff]
    %v32 = vld [vmem:[%s1 + $0x28] sm:$0xff]
    %v33 = vld [vmem:[%s1 + $0x30] sm:$0xff]
    %v34 = vld [vmem:[%s1 + $0x38] sm:$0xff]
    %v35 = vld [vmem:[%s1 + $0x40] sm:$0xff]
    %v36 = vld [vmem:[%s1 + $0x48] sm:$0xff]
    %v37 = vld [vmem:[%s1 + $0x50] sm:$0xff]
    %v38 = vld [vmem:[%s1 + $0x58] sm:$0xff]
    %v39 = vld [vmem:[%s1 + $0x60] sm:$0xff]
    %v40 = vld [vmem:[%s1 + $0x68] sm:$0xff]
    %v41 = vld [vmem:[%s1 + $0x70] sm:$0xff]
    %v42 = vld [vmem:[%s1 + $0x78] sm:$0xff]
    %vm43 = vcmask 523264
    %v45 = vsel %vm43, 0.0, 0
    %47 = vmatprep.subr.mxu0 %v28
    %48 = vmatpush1.msra.mxu0 %v27
    %49 = vmatprep.subr.mxu0 %v30
    %50 = vmatpush1.msra.mxu0 %v29
    %51 = vmatprep.subr.mxu0 %v32
    %52 = vmatpush1.msra.mxu0 %v31
    %53 = vmatprep.subr.mxu0 %v34
    %54 = vmatpush1.msra.mxu0 %v33
    %55 = vmatprep.subr.mxu0 %v36
    %56 = vmatpush1.msra.mxu0 %v35
    %57 = vmatprep.subr.mxu0 %v38
    %58 = vmatpush1.msra.mxu0 %v37
    %59 = vmatprep.subr.mxu0 %v40
    %60 = vmatpush1.msra.mxu0 %v39
    %61 = vmatprep.subr.mxu0 %v42
    %62 = vmatpush1.msra.mxu0 %v41
    %63 = vmatprep.subr.mxu0 0.0
    %64 = vmatpush1.msra.mxu0 0.0
    %65 = vmatprep.subr.mxu0 0.0
    %66 = vmatpush1.msra.mxu0 0.0
    %67 = vmatprep.subr.mxu0 0.0
    %68 = vmatpush1.msra.mxu0 0.0
    %69 = vmatprep.subr.mxu0 0.0
    %70 = vmatpush1.msra.mxu0 0.0
    %71 = vmatprep.subr.mxu0 0.0
    %72 = vmatpush1.msra.mxu0 0.0
    %73 = vmatprep.subr.mxu0 0.0
    %74 = vmatpush1.msra.mxu0 0.0
    %75 = vmatprep.subr.mxu0 0.0
    %76 = vmatpush1.msra.mxu0 0.0
    %77 = vmatprep.subr.mxu0 0.0
    %78 = vmatpush1.msra.mxu0 0.0
    %79 = vmatprep.subr.mxu0 0.0
    %80 = vmatpush1.msra.mxu0 0.0
    %81 = vmatprep.subr.mxu0 0.0
    %82 = vmatpush1.msra.mxu0 0.0
    %83 = vmatprep.subr.mxu0 0.0
    %84 = vmatpush1.msra.mxu0 0.0
    %85 = vmatprep.subr.mxu0 0.0
    %86 = vmatpush1.msra.mxu0 0.0
    %87 = vmatprep.subr.mxu0 0.0
    %88 = vmatpush1.msra.mxu0 0.0
    %89 = vmatprep.subr.mxu0 0.0
    %90 = vmatpush1.msra.mxu0 0.0
    %91 = vmatprep.subr.mxu0 0.0
    %92 = vmatpush1.msra.mxu0 0.0
    %93 = vmatprep.subr.mxu0 0.0
    %94 = vmatpush1.msra.mxu0 0.0
    %95 = vmatprep.subr.mxu0 0.0
    %96 = vmatpush1.msra.mxu0 0.0
    %97 = vmatprep.subr.mxu0 0.0
    %98 = vmatpush1.msra.mxu0 0.0
    %99 = vmatprep.subr.mxu0 0.0
    %100 = vmatpush1.msra.mxu0 0.0
    %101 = vmatprep.subr.mxu0 0.0
    %102 = vmatpush1.msra.mxu0 0.0
    %103 = vmatprep.subr.mxu0 0.0
    %104 = vmatpush1.msra.mxu0 0.0
    %105 = vmatprep.subr.mxu0 0.0
    %106 = vmatpush1.msra.mxu0 0.0
    %107 = vmatprep.subr.mxu0 0.0
    %108 = vmatpush1.msra.mxu0 0.0
    %109 = vmatprep.subr.mxu0 0.0
    %110 = vmatpush1.msra.mxu0 0.0
    %111 = vmatprep.mubr.f32.mxu0 0.0
    %112 = vmatmul.mubr.f32.gmra.mrb[0].mxu0 %v45
    %v113 = vpop.f32.mrb[0].mxu0
    %v114 = vadd.f32 0.0, %v113
    %v115 = vpop.f32.mrb[0].mxu0
    %v116 = vadd.f32 0.0, %v115
    %117 = vdwg.mxu0
    %v118 = vadd.f32 %v24, %v114
    %v119 = vxor.u32 %v118, 2147483648
    %v120 = vmul.f32 %v119, 1.442695
    %v121 = vpow.pop %v120
    %v122 = vadd.f32 %v121, 1.0
    %v123 = vrcp.pop %v122
    %v124 = vmul.f32 1.0, %v123
    %v125 = vtanh.pop %v118
    %v126 = vmul.f32 %v124, 0.0
    %128 = vrot.lane.b32.xlu0 %v125, 64
    %v129 = vpop.permute.xlu0 %128
    %v131 = vmul.f32 %v124, %v129
    %133 = vrot.lane.b32.xlu0 %v131, 32
    %v134 = vpop.permute.xlu0 %133
    %v136 = vadd.f32 %v126, %v134
    %v137 = vtanh.pop %v136
    %139 = vrot.lane.b32.xlu0 %v137, 64
    %v140 = vpop.permute.xlu0 %139
    %v142 = vmul.f32 %v124, %v140
    %v143 = vadd.f32 %v26, %v116
    %v144 = vxor.u32 %v143, 2147483648
    %v145 = vmul.f32 %v144, 1.442695
    %v146 = vpow.pop %v145
    %v147 = vadd.f32 %v146, 1.0
    %v148 = vrcp.pop %v147
    %v149 = vmul.f32 1.0, %v148
    %v150 = vtanh.pop %v143
    %v151 = vmul.f32 %v149, 0.0
    %153 = vrot.lane.b32.xlu0 %v150, 64
    %v154 = vpop.permute.xlu0 %153
    %v156 = vmul.f32 %v149, %v154
    %158 = vrot.lane.b32.xlu0 %v156, 32
    %v159 = vpop.permute.xlu0 %158
    %v161 = vadd.f32 %v151, %v159
    %v162 = vtanh.pop %v161
    %164 = vrot.lane.b32.xlu0 %v162, 64
    %v165 = vpop.permute.xlu0 %164
    %v167 = vmul.f32 %v149, %v165
    %v170 = vunpack.c.l.s4 1983009808
    %v171 = vunpack.c.0.s8 %v170
    %v172 = vlaneseq
    %v173 = vshrl.u32 %v172, 7
    %v174 = vsub.s32 %v171, %v173
    %v175 = vrot.slane %v142, %v174
    %176 = vrot.lane.b32.xlu0 %v175, 32
    %v177 = vpop.permute.xlu0 %176
    %v181 = vunpack.c.l.s4 1983009808
    %v182 = vunpack.c.0.s8 %v181
    %v183 = vlaneseq
    %v184 = vshrl.u32 %v183, 7
    %v185 = vsub.s32 %v182, %v184
    %v186 = vrot.slane %v167, %v185
    %187 = vrot.lane.b32.xlu0 %v186, 64
    %v188 = vpop.permute.xlu0 %187
    %vm190 = vcmask 261120
    %v191 = vsel %vm190, %v177, %v188
    %v194 = vunpack.c.l.s4 1983009808
    %v195 = vunpack.c.0.s8 %v194
    %v196 = vlaneseq
    %v197 = vshrl.u32 %v196, 7
    %v198 = vsub.s32 %v195, %v197
    %v199 = vrot.slane %v136, %v198
    %200 = vrot.lane.b32.xlu0 %v199, 96
    %v201 = vpop.permute.xlu0 %200
    %v203 = vsel %vm190, %v201, %v161
    loop: start=1, step=1, limit=14
    $region26: #{forward.11} parent=1 // loop_pre_header
      _
    $region27: #{forward.11} parent=1 // loop_header
      %s205 = sphi 1, %s209
      %p206 = scmp.ge.s32.totalorder %s205, 14
      %v210 = vphi %v191, %v394
      %v211 = vphi %v203, %v406
    $region28: #{forward.11} parent=1 // loop_header_branch
      %208 = sbr.rel (%p206) target = $region32
    $region29: #{forward.11} parent=1 // loop_body
      %s212 = smul.u32 %s205, 2
      %s213 = smul.addr %s212, 2
      %s214 = scalar_lea.vmem %s0, %s213
      %v215 = vld [vmem:[%s214] sm:$0x3]
      %s216 = ssub.s32 13, %s205
      %s217 = smul.u32 %s216, 2
      %s218 = smul.addr %s217, 2
      %s219 = scalar_lea.vmem %s0, %s218
      %v220 = vld [vmem:[%s219 + $0x2] sm:$0x3]
      %v221 = vld [vmem:[%s1] sm:$0xff]
      %v222 = vld [vmem:[%s1 + $0x8] sm:$0xff]
      %v223 = vld [vmem:[%s1 + $0x10] sm:$0xff]
      %v224 = vld [vmem:[%s1 + $0x18] sm:$0xff]
      %v225 = vld [vmem:[%s1 + $0x20] sm:$0xff]
      %v226 = vld [vmem:[%s1 + $0x28] sm:$0xff]
      %v227 = vld [vmem:[%s1 + $0x30] sm:$0xff]
      %v228 = vld [vmem:[%s1 + $0x38] sm:$0xff]
      %v229 = vld [vmem:[%s1 + $0x40] sm:$0xff]
      %v230 = vld [vmem:[%s1 + $0x48] sm:$0xff]
      %v231 = vld [vmem:[%s1 + $0x50] sm:$0xff]
      %v232 = vld [vmem:[%s1 + $0x58] sm:$0xff]
      %v233 = vld [vmem:[%s1 + $0x60] sm:$0xff]
      %v234 = vld [vmem:[%s1 + $0x68] sm:$0xff]
      %v235 = vld [vmem:[%s1 + $0x70] sm:$0xff]
      %v236 = vld [vmem:[%s1 + $0x78] sm:$0xff]
      %v238 = vsel %vm43, %v210, 0
      %240 = vmatprep.subr.mxu0 %v222
      %241 = vmatpush1.msra.mxu0 %v221
      %242 = vmatprep.subr.mxu0 %v224
      %243 = vmatpush1.msra.mxu0 %v223
      %244 = vmatprep.subr.mxu0 %v226
      %245 = vmatpush1.msra.mxu0 %v225
      %246 = vmatprep.subr.mxu0 %v228
      %247 = vmatpush1.msra.mxu0 %v227
      %248 = vmatprep.subr.mxu0 %v230
      %249 = vmatpush1.msra.mxu0 %v229
      %250 = vmatprep.subr.mxu0 %v232
      %251 = vmatpush1.msra.mxu0 %v231
      %252 = vmatprep.subr.mxu0 %v234
      %253 = vmatpush1.msra.mxu0 %v233
      %254 = vmatprep.subr.mxu0 %v236
      %255 = vmatpush1.msra.mxu0 %v235
      %256 = vmatprep.subr.mxu0 0.0
      %257 = vmatpush1.msra.mxu0 0.0
      %258 = vmatprep.subr.mxu0 0.0
      %259 = vmatpush1.msra.mxu0 0.0
      %260 = vmatprep.subr.mxu0 0.0
      %261 = vmatpush1.msra.mxu0 0.0
      %262 = vmatprep.subr.mxu0 0.0
      %263 = vmatpush1.msra.mxu0 0.0
      %264 = vmatprep.subr.mxu0 0.0
      %265 = vmatpush1.msra.mxu0 0.0
      %266 = vmatprep.subr.mxu0 0.0
      %267 = vmatpush1.msra.mxu0 0.0
      %268 = vmatprep.subr.mxu0 0.0
      %269 = vmatpush1.msra.mxu0 0.0
      %270 = vmatprep.subr.mxu0 0.0
      %271 = vmatpush1.msra.mxu0 0.0
      %272 = vmatprep.subr.mxu0 0.0
      %273 = vmatpush1.msra.mxu0 0.0
      %274 = vmatprep.subr.mxu0 0.0
      %275 = vmatpush1.msra.mxu0 0.0
      %276 = vmatprep.subr.mxu0 0.0
      %277 = vmatpush1.msra.mxu0 0.0
      %278 = vmatprep.subr.mxu0 0.0
      %279 = vmatpush1.msra.mxu0 0.0
      %280 = vmatprep.subr.mxu0 0.0
      %281 = vmatpush1.msra.mxu0 0.0
      %282 = vmatprep.subr.mxu0 0.0
      %283 = vmatpush1.msra.mxu0 0.0
      %284 = vmatprep.subr.mxu0 0.0
      %285 = vmatpush1.msra.mxu0 0.0
      %286 = vmatprep.subr.mxu0 0.0
      %287 = vmatpush1.msra.mxu0 0.0
      %288 = vmatprep.subr.mxu0 0.0
      %289 = vmatpush1.msra.mxu0 0.0
      %290 = vmatprep.subr.mxu0 0.0
      %291 = vmatpush1.msra.mxu0 0.0
      %292 = vmatprep.subr.mxu0 0.0
      %293 = vmatpush1.msra.mxu0 0.0
      %294 = vmatprep.subr.mxu0 0.0
      %295 = vmatpush1.msra.mxu0 0.0
      %296 = vmatprep.subr.mxu0 0.0
      %297 = vmatpush1.msra.mxu0 0.0
      %298 = vmatprep.subr.mxu0 0.0
      %299 = vmatpush1.msra.mxu0 0.0
      %300 = vmatprep.subr.mxu0 0.0
      %301 = vmatpush1.msra.mxu0 0.0
      %302 = vmatprep.subr.mxu0 0.0
      %303 = vmatpush1.msra.mxu0 0.0
      %304 = vmatprep.mubr.f32.mxu0 0.0
      %305 = vmatmul.mubr.f32.gmra.mrb[0].mxu0 %v238
      %v306 = vpop.f32.mrb[0].mxu0
      %v307 = vadd.f32 0.0, %v306
      %v308 = vpop.f32.mrb[0].mxu0
      %v309 = vadd.f32 0.0, %v308
      %310 = vdwg.mxu0
      %v311 = vadd.f32 %v215, %v307
      %v312 = vxor.u32 %v311, 2147483648
      %v313 = vmul.f32 %v312, 1.442695
      %v314 = vpow.pop %v313
      %v315 = vadd.f32 %v314, 1.0
      %v316 = vrcp.pop %v315
      %v317 = vmul.f32 1.0, %v316
      %v318 = vtanh.pop %v311
      %v321 = vunpack.c.l.s4 1983009808
      %v322 = vunpack.c.0.s8 %v321
      %v323 = vlaneseq
      %v324 = vshrl.u32 %v323, 7
      %v325 = vsub.s32 %v322, %v324
      %v326 = vrot.slane %v211, %v325
      %327 = vrot.lane.b32.xlu0 %v326, 32
      %v328 = vpop.permute.xlu0 %327
      %v330 = vmul.f32 %v317, %v328
      %332 = vrot.lane.b32.xlu0 %v318, 64
      %v333 = vpop.permute.xlu0 %332
      %v335 = vmul.f32 %v317, %v333
      %337 = vrot.lane.b32.xlu0 %v335, 32
      %v338 = vpop.permute.xlu0 %337
      %v340 = vadd.f32 %v330, %v338
      %v341 = vtanh.pop %v340
      %343 = vrot.lane.b32.xlu0 %v341, 64
      %v344 = vpop.permute.xlu0 %343
      %v346 = vmul.f32 %v317, %v344
      %v347 = vadd.f32 %v220, %v309
      %v348 = vxor.u32 %v347, 2147483648
      %v349 = vmul.f32 %v348, 1.442695
      %v350 = vpow.pop %v349
      %v351 = vadd.f32 %v350, 1.0
      %v352 = vrcp.pop %v351
      %v353 = vmul.f32 1.0, %v352
      %v354 = vtanh.pop %v347
      %v355 = vmul.f32 %v353, %v211
      %357 = vrot.lane.b32.xlu0 %v354, 64
      %v358 = vpop.permute.xlu0 %357
      %v360 = vmul.f32 %v353, %v358
      %362 = vrot.lane.b32.xlu0 %v360, 32
      %v363 = vpop.permute.xlu0 %362
      %v365 = vadd.f32 %v355, %v363
      %v366 = vtanh.pop %v365
      %368 = vrot.lane.b32.xlu0 %v366, 64
      %v369 = vpop.permute.xlu0 %368
      %v371 = vmul.f32 %v353, %v369
      %v374 = vunpack.c.l.s4 1983009808
      %v375 = vunpack.c.0.s8 %v374
      %v376 = vlaneseq
      %v377 = vshrl.u32 %v376, 7
      %v378 = vsub.s32 %v375, %v377
      %v379 = vrot.slane %v346, %v378
      %380 = vrot.lane.b32.xlu0 %v379, 32
      %v381 = vpop.permute.xlu0 %380
      %v385 = vunpack.c.l.s4 1983009808
      %v386 = vunpack.c.0.s8 %v385
      %v387 = vlaneseq
      %v388 = vshrl.u32 %v387, 7
      %v389 = vsub.s32 %v386, %v388
      %v390 = vrot.slane %v371, %v389
      %391 = vrot.lane.b32.xlu0 %v390, 64
      %v392 = vpop.permute.xlu0 %391
      %v394 = vsel %vm190, %v381, %v392
      %v397 = vunpack.c.l.s4 1983009808
      %v398 = vunpack.c.0.s8 %v397
      %v399 = vlaneseq
      %v400 = vshrl.u32 %v399, 7
      %v401 = vsub.s32 %v398, %v400
      %v402 = vrot.slane %v340, %v401
      %403 = vrot.lane.b32.xlu0 %v402, 96
      %v404 = vpop.permute.xlu0 %403
      %v406 = vsel %vm190, %v404, %v365
    $region30: #{forward.11} parent=1 // loop_footer
      %s209 = sadd.s32 1, %s205
    $region31: #{forward.11} parent=1 // loop_footer_branch
      %204 = sbr.rel target = $region27
    $region32: #{forward.11} parent=1 // loop_exit
      _
    %v407 = vsel %vm190, %v210, %v191
    %v408 = vld [vmem:[%s2] sm:$0xff]
    %v409 = vld [vmem:[%s2 + $0x8] sm:$0xff]
    %v410 = vld [vmem:[%s2 + $0x10] sm:$0xff]
    %v411 = vld [vmem:[%s2 + $0x18] sm:$0xff]
    %v412 = vld [vmem:[%s2 + $0x20] sm:$0xff]
    %v413 = vld [vmem:[%s2 + $0x28] sm:$0xff]
    %v414 = vld [vmem:[%s2 + $0x30] sm:$0xff]
    %v415 = vld [vmem:[%s2 + $0x38] sm:$0xff]
    %v416 = vld [vmem:[%s3] sm:$0x1]
    %v418 = vlaneseq
    %v419 = vshrl.u32 %v418, 7
    %v420 = vsub.s32 0, %v419
    %v421 = vrot.slane %v416, %v420
    %v424 = vsel %vm43, %v407, 0
    %426 = vmatprep.subr.mxu0 0.0
    %427 = vmatpush1.msra.mxu0 %v408
    %428 = vmatprep.subr.mxu0 0.0
    %429 = vmatpush1.msra.mxu0 %v409
    %430 = vmatprep.subr.mxu0 0.0
    %431 = vmatpush1.msra.mxu0 %v410
    %432 = vmatprep.subr.mxu0 0.0
    %433 = vmatpush1.msra.mxu0 %v411
    %434 = vmatprep.subr.mxu0 0.0
    %435 = vmatpush1.msra.mxu0 %v412
    %436 = vmatprep.subr.mxu0 0.0
    %437 = vmatpush1.msra.mxu0 %v413
    %438 = vmatprep.subr.mxu0 0.0
    %439 = vmatpush1.msra.mxu0 %v414
    %440 = vmatprep.subr.mxu0 0.0
    %441 = vmatpush1.msra.mxu0 %v415
    %442 = vmatprep.subr.mxu0 0.0
    %443 = vmatpush1.msra.mxu0 0.0
    %444 = vmatprep.subr.mxu0 0.0
    %445 = vmatpush1.msra.mxu0 0.0
    %446 = vmatprep.subr.mxu0 0.0
    %447 = vmatpush1.msra.mxu0 0.0
    %448 = vmatprep.subr.mxu0 0.0
    %449 = vmatpush1.msra.mxu0 0.0
    %450 = vmatprep.subr.mxu0 0.0
    %451 = vmatpush1.msra.mxu0 0.0
    %452 = vmatprep.subr.mxu0 0.0
    %453 = vmatpush1.msra.mxu0 0.0
    %454 = vmatprep.subr.mxu0 0.0
    %455 = vmatpush1.msra.mxu0 0.0
    %456 = vmatprep.subr.mxu0 0.0
    %457 = vmatpush1.msra.mxu0 0.0
    %458 = vmatprep.subr.mxu0 0.0
    %459 = vmatpush1.msra.mxu0 0.0
    %460 = vmatprep.subr.mxu0 0.0
    %461 = vmatpush1.msra.mxu0 0.0
    %462 = vmatprep.subr.mxu0 0.0
    %463 = vmatpush1.msra.mxu0 0.0
    %464 = vmatprep.subr.mxu0 0.0
    %465 = vmatpush1.msra.mxu0 0.0
    %466 = vmatprep.subr.mxu0 0.0
    %467 = vmatpush1.msra.mxu0 0.0
    %468 = vmatprep.subr.mxu0 0.0
    %469 = vmatpush1.msra.mxu0 0.0
    %470 = vmatprep.subr.mxu0 0.0
    %471 = vmatpush1.msra.mxu0 0.0
    %472 = vmatprep.subr.mxu0 0.0
    %473 = vmatpush1.msra.mxu0 0.0
    %474 = vmatprep.subr.mxu0 0.0
    %475 = vmatpush1.msra.mxu0 0.0
    %476 = vmatprep.subr.mxu0 0.0
    %477 = vmatpush1.msra.mxu0 0.0
    %478 = vmatprep.subr.mxu0 0.0
    %479 = vmatpush1.msra.mxu0 0.0
    %480 = vmatprep.subr.mxu0 0.0
    %481 = vmatpush1.msra.mxu0 0.0
    %482 = vmatprep.subr.mxu0 0.0
    %483 = vmatpush1.msra.mxu0 0.0
    %484 = vmatprep.subr.mxu0 0.0
    %485 = vmatpush1.msra.mxu0 0.0
    %486 = vmatprep.subr.mxu0 0.0
    %487 = vmatpush1.msra.mxu0 0.0
    %488 = vmatprep.subr.mxu0 0.0
    %489 = vmatpush1.msra.mxu0 0.0
    %490 = vmatprep.mubr.f32.mxu0 0.0
    %491 = vmatmul.mubr.f32.gmra.mrb[0].mxu0 %v424
    %v492 = vpop.f32.mrb[0].mxu0
    %v493 = vadd.f32 %v421, %v492
    %v494 = vpop.f32.mrb[0].mxu0
    %495 = vdwg.mxu0
    %v496 = vmax.f32 %v493, 0.0
    %v497 = vld [vmem:[%s4] sm:$0xff]
    %v498 = vld [vmem:[%s4 + $0x8] sm:$0xff]
    %v499 = vld [vmem:[%s4 + $0x10] sm:$0xff]
    %v500 = vld [vmem:[%s4 + $0x18] sm:$0xff]
    %v501 = vld [vmem:[%s5] sm:$0x1]
    %v503 = vlaneseq
    %v504 = vshrl.u32 %v503, 7
    %v505 = vsub.s32 0, %v504
    %v506 = vrot.slane %v501, %v505
    %v509 = vsel %vm190, %v496, 0
    %511 = vmatprep.subr.mxu0 0.0
    %512 = vmatpush1.msra.mxu0 %v497
    %513 = vmatprep.subr.mxu0 0.0
    %514 = vmatpush1.msra.mxu0 %v498
    %515 = vmatprep.subr.mxu0 0.0
    %516 = vmatpush1.msra.mxu0 %v499
    %517 = vmatprep.subr.mxu0 0.0
    %518 = vmatpush1.msra.mxu0 %v500
    %519 = vmatprep.subr.mxu0 0.0
    %520 = vmatpush1.msra.mxu0 0.0
    %521 = vmatprep.subr.mxu0 0.0
    %522 = vmatpush1.msra.mxu0 0.0
    %523 = vmatprep.subr.mxu0 0.0
    %524 = vmatpush1.msra.mxu0 0.0
    %525 = vmatprep.subr.mxu0 0.0
    %526 = vmatpush1.msra.mxu0 0.0
    %527 = vmatprep.subr.mxu0 0.0
    %528 = vmatpush1.msra.mxu0 0.0
    %529 = vmatprep.subr.mxu0 0.0
    %530 = vmatpush1.msra.mxu0 0.0
    %531 = vmatprep.subr.mxu0 0.0
    %532 = vmatpush1.msra.mxu0 0.0
    %533 = vmatprep.subr.mxu0 0.0
    %534 = vmatpush1.msra.mxu0 0.0
    %535 = vmatprep.subr.mxu0 0.0
    %536 = vmatpush1.msra.mxu0 0.0
    %537 = vmatprep.subr.mxu0 0.0
    %538 = vmatpush1.msra.mxu0 0.0
    %539 = vmatprep.subr.mxu0 0.0
    %540 = vmatpush1.msra.mxu0 0.0
    %541 = vmatprep.subr.mxu0 0.0
    %542 = vmatpush1.msra.mxu0 0.0
    %543 = vmatprep.subr.mxu0 0.0
    %544 = vmatpush1.msra.mxu0 0.0
    %545 = vmatprep.subr.mxu0 0.0
    %546 = vmatpush1.msra.mxu0 0.0
    %547 = vmatprep.subr.mxu0 0.0
    %548 = vmatpush1.msra.mxu0 0.0
    %549 = vmatprep.subr.mxu0 0.0
    %550 = vmatpush1.msra.mxu0 0.0
    %551 = vmatprep.subr.mxu0 0.0
    %552 = vmatpush1.msra.mxu0 0.0
    %553 = vmatprep.subr.mxu0 0.0
    %554 = vmatpush1.msra.mxu0 0.0
    %555 = vmatprep.subr.mxu0 0.0
    %556 = vmatpush1.msra.mxu0 0.0
    %557 = vmatprep.subr.mxu0 0.0
    %558 = vmatpush1.msra.mxu0 0.0
    %559 = vmatprep.subr.mxu0 0.0
    %560 = vmatpush1.msra.mxu0 0.0
    %561 = vmatprep.subr.mxu0 0.0
    %562 = vmatpush1.msra.mxu0 0.0
    %563 = vmatprep.subr.mxu0 0.0
    %564 = vmatpush1.msra.mxu0 0.0
    %565 = vmatprep.subr.mxu0 0.0
    %566 = vmatpush1.msra.mxu0 0.0
    %567 = vmatprep.subr.mxu0 0.0
    %568 = vmatpush1.msra.mxu0 0.0
    %569 = vmatprep.subr.mxu0 0.0
    %570 = vmatpush1.msra.mxu0 0.0
    %571 = vmatprep.subr.mxu0 0.0
    %572 = vmatpush1.msra.mxu0 0.0
    %573 = vmatprep.subr.mxu0 0.0
    %574 = vmatpush1.msra.mxu0 0.0
    %575 = vmatprep.mubr.f32.mxu0 0.0
    %576 = vmatmul.mubr.f32.gmra.mrb[0].mxu0 %v509
    %v577 = vpop.f32.mrb[0].mxu0
    %v578 = vadd.f32 %v506, %v577
    %v579 = vpop.f32.mrb[0].mxu0
    %580 = vdwg.mxu0
    %vm581 = vcmask 25600
    %582 = vst.msk [vmem:[#allocation2] sm:$0x3] %vm581, %v578
    // Predicated region
    $region33: #{forward.11} parent=1 // pred_check
      _
    $region34: #{forward.11} parent=1 // pred_check_branch
      %584 = sbr.rel (0) target = $region36
    $region35: #{forward.11} parent=1 // pred_region
      %s586 = ssub.s32 32, 32
      %587 = vsyncadd [#allocation3], %s586
      %s589 = sshll.u32 [#allocation2], 4
      %s590 = int_to_ptr.vmem [resolvable:$true] %s589
      %592 = dma.vmem_to_hbm [thread:$0]  %s590, 32, %s6, [#allocation3]
    $region36: #{forward.11} parent=1 // pred_fallthru
      _
    // Predicated region
    $region37: #{forward.11} parent=1 // pred_check
      _
    $region38: #{forward.11} parent=1 // pred_check_branch
      %594 = sbr.rel (0) target = $region40
    $region39: #{forward.11} parent=1 // pred_region
      %595 = dma.done [#allocation3], 32
    $region40: #{forward.11} parent=1 // pred_fallthru
      _
    %596 = vsyncpa [#allocation3], 1

</llo_original>
